<compile_context>
chip_gen: v7x
topology: tpu7x:2x2x1
jax: 0.10.0
libtpu: 0.0.40
codegen_flags: <defaults>
</compile_context>

<pallas_src>
import functools

import jax
import jax.numpy as jnp
from jax.experimental import pallas as pl
from jax.experimental.pallas import tpu as pltpu


_NEG = -9e15  # masking constant, matches the PyTorch reference


# ----------------------------------------------------------------------------
# VMEM budgeting helpers
# ----------------------------------------------------------------------------
def _round_up(x, m):
    return ((x + m - 1) // m) * m


def _padded_bytes(shape, dtype):
    """Rough VMEM bytes for one buffer (lane dim -> 128, sublane dim -> 8)."""
    shape = list(shape)
    if len(shape) >= 1:
        shape[-1] = _round_up(shape[-1], 128)
    if len(shape) >= 2:
        shape[-2] = _round_up(shape[-2], 8)
    n = 1
    for s in shape:
        n *= int(s)
    return n * jnp.dtype(dtype).itemsize


def _vmem_limit(est_bytes):
    # 1.5x headroom + slack; never below the 32 MiB default, capped at 128 MiB.
    return int(min(max(est_bytes * 3 // 2 + (4 << 20), 32 << 20), 128 << 20))


# ----------------------------------------------------------------------------
# Kernels
# ----------------------------------------------------------------------------
def _proj_kernel(x_ref, w_ref, wa1_ref, wa2_ref, whc_ref, wh1_ref, wh2_ref,
                 *, n_heads: int, f_out: int):
    """Row-tiled projection prologue.

    x_ref   : [TQ, Fin]        f32 feature row tile (pipelined)
    w_ref   : [H, Fin, Fout]   f32 stacked head weights (resident, 1 buffer)
    wa1_ref : [Fin, H]         f32 folded W_h @ a1_h columns (resident)
    wa2_ref : [Fin, H]         f32 folded W_h @ a2_h columns (resident)
    whc_ref : [H, TQ, Fout+1]  Wh_h | ones  (ones column -> MXU softmax row-sum)
    wh1_ref : [TQ, H]          per-query bias  Wh_h @ a1_h
    wh2_ref : [TQ, H]          per-key bias    Wh_h @ a2_h (transposed in wrapper)
    """
    x = x_ref[...]
    tq = x.shape[0]
    ones = jnp.ones((tq, 1), jnp.float32)
    for h in range(n_heads):                                          # unrolled
        xw = jnp.dot(x, w_ref[h], preferred_element_type=jnp.float32)
        whc_ref[h, :, :f_out] = xw.astype(whc_ref.dtype)
        whc_ref[h, :, f_out:] = ones.astype(whc_ref.dtype)
    wh1_ref[...] = jnp.dot(x, wa1_ref[...], preferred_element_type=jnp.float32)
    wh2_ref[...] = jnp.dot(x, wa2_ref[...], preferred_element_type=jnp.float32)


def _attn_kernel(adj_ref, whc_ref, wh1_ref, wh2t_ref, out_ref,
                 *, alpha: float, n_heads: int, f_out: int, concat: bool):
    """Fused multi-head attention for one query-row tile.

    adj_ref  : [TQ, N]          int8 0/1 adjacency row tile (pipelined)
    whc_ref  : [H, N, Fout+1]   resident (1 buffer); [..., :Fout]=Wh_h, [..., Fout]=1
    wh1_ref  : [TQ, H]          f32 per-query bias row tile
    wh2t_ref : [H, N]           f32 resident lane-major per-key bias
    out_ref  : [TQ, H*Fout]     concatenated head outputs
    """
    # Additive adjacency bias computed ONCE per tile and reused by every head.
    # (For a fully-isolated row this differs from the reference's hard select
    #  only in which uniform-ish distribution the softmax degenerates to.)
    bias = jnp.where(adj_ref[...].astype(jnp.int32) > 0, 0.0, _NEG)   # [TQ, N]

    for h in range(n_heads):                                          # unrolled
        # e[i, j] = leakyrelu(wh1[i] + wh2[j]) + adjacency bias
        e = wh1_ref[:, h:h + 1] + wh2t_ref[h:h + 1, :]                # [TQ, N]
        e = jnp.where(e > 0, e, alpha * e) + bias                     # LeakyReLU + mask
        m = jnp.max(e, axis=1, keepdims=True)                         # row max
        p = jnp.exp(e - m)                                            # unnormalized weights
        # One MXU pass: p @ [Wh_h | 1] gives the output AND the softmax row-sum.
        acc = jnp.dot(p, whc_ref[h].astype(jnp.float32),
                      preferred_element_type=jnp.float32)             # [TQ, Fout+1]
        s = acc[:, f_out:]                                            # [TQ, 1] row-sum
        hp = acc[:, :f_out] * (1.0 / s)                               # exact reciprocal
        if concat:
            # ELU; clamp so the discarded branch never computes exp(large).
            hp = jnp.where(hp > 0, hp, jnp.exp(jnp.minimum(hp, 0.0)) - 1.0)
        # Narrow per-head store: out's full lane width is H*Fout, HBM writeback
        # is dense either way, and the store path is not the saturating slot.
        out_ref[:, h * f_out:(h + 1) * f_out] = hp.astype(out_ref.dtype)


# ----------------------------------------------------------------------------
# Wrappers
# ----------------------------------------------------------------------------
def gat_multi_head_layer(x, adj_mask, ws, a1s, a2s, *, alpha: float,
                         concat: bool, block_q: int = 256,
                         wh_dtype=jnp.bfloat16):
    """One (possibly multi-head) GraphAttentionLayer. Returns [N, H*Fout]."""
    n, f_in = x.shape
    nh = len(ws)
    f_out = ws[0].shape[1]
    f_c = f_out + 1

    x = x.astype(jnp.float32)
    w_stack = jnp.stack([w.astype(jnp.float32) for w in ws], axis=0)    # [H, Fin, Fout]
    # Fold the width-1 attention vectors into the projection: column h of wa1/wa2
    # is W_h @ a1_h / W_h @ a2_h (tiny [Fin,Fout]x[Fout,1] matmuls, done once).
    wa1 = jnp.concatenate([(w @ a1).astype(jnp.float32) for w, a1 in zip(ws, a1s)], axis=1)
    wa2 = jnp.concatenate([(w @ a2).astype(jnp.float32) for w, a2 in zip(ws, a2s)], axis=1)

    tq = min(block_q, n)
    grid = (pl.cdiv(n, tq),)

    # ---------------- projection prologue ----------------
    proj_est = (2 * _padded_bytes((tq, f_in), jnp.float32)        # x tiles (2 bufs)
                + _padded_bytes((nh, f_in, f_out), jnp.float32)   # W stack (1 buf)
                + 2 * _padded_bytes((f_in, nh), jnp.float32)      # wa1 + wa2 (1 buf each)
                + 2 * _padded_bytes((nh, tq, f_c), wh_dtype)      # whc out tiles
                + 4 * _padded_bytes((tq, nh), jnp.float32))       # wh1/wh2 out tiles
    whc, wh1, wh2 = pl.pallas_call(
        functools.partial(_proj_kernel, n_heads=nh, f_out=f_out),
        out_shape=(jax.ShapeDtypeStruct((nh, n, f_c), wh_dtype),
                   jax.ShapeDtypeStruct((n, nh), jnp.float32),
                   jax.ShapeDtypeStruct((n, nh), jnp.float32)),
        grid=grid,
        in_specs=[
            pl.BlockSpec((tq, f_in), lambda r: (r, 0)),
            pl.BlockSpec((nh, f_in, f_out), lambda r: (0, 0, 0),
                         pipeline_mode=pl.Buffered(1)),           # invariant weights
            pl.BlockSpec((f_in, nh), lambda r: (0, 0),
                         pipeline_mode=pl.Buffered(1)),
            pl.BlockSpec((f_in, nh), lambda r: (0, 0),
                         pipeline_mode=pl.Buffered(1)),
        ],
        out_specs=(
            pl.BlockSpec((nh, tq, f_c), lambda r: (0, r, 0)),
            pl.BlockSpec((tq, nh), lambda r: (r, 0)),
            pl.BlockSpec((tq, nh), lambda r: (r, 0)),
        ),
        compiler_params=pltpu.CompilerParams(
            dimension_semantics=("parallel",),
            vmem_limit_bytes=_vmem_limit(proj_est)),
    )(x, w_stack, wa1, wa2)

    wh2t = wh2.T   # [H, N] lane-major per-key bias (tiny [N,H] transpose)

    # ---------------- fused multi-head attention ----------------
    attn_est = (2 * _padded_bytes((tq, n), jnp.int8)              # adj tiles (2 bufs)
                + _padded_bytes((nh, n, f_c), wh_dtype)           # Wh|1 resident (1 buf)
                + 2 * _padded_bytes((tq, nh), jnp.float32)        # wh1 tiles
                + _padded_bytes((nh, n), jnp.float32)             # wh2t resident (1 buf)
                + 2 * _padded_bytes((tq, nh * f_out), jnp.float32))
    return pl.pallas_call(
        functools.partial(_attn_kernel, alpha=alpha, n_heads=nh,
                          f_out=f_out, concat=concat),
        out_shape=jax.ShapeDtypeStruct((n, nh * f_out), jnp.float32),
        grid=grid,
        in_specs=[
            pl.BlockSpec((tq, n), lambda r: (r, 0)),              # int8 adj row tile
            pl.BlockSpec((nh, n, f_c), lambda r: (0, 0, 0),
                         pipeline_mode=pl.Buffered(1)),           # Wh|1, resident
            pl.BlockSpec((tq, nh), lambda r: (r, 0)),             # Wh@a1 row tile
            pl.BlockSpec((nh, n), lambda r: (0, 0),
                         pipeline_mode=pl.Buffered(1)),           # (Wh@a2)^T, resident
        ],
        out_specs=pl.BlockSpec((tq, nh * f_out), lambda r: (r, 0)),
        compiler_params=pltpu.CompilerParams(
            dimension_semantics=("parallel",),
            vmem_limit_bytes=_vmem_limit(attn_est)),
    )(adj_mask, whc, wh1, wh2t)


def gat_forward(params, x, adj, *, alpha=0.2, block_q=256):
    """Full GAT forward pass (eval mode: dropout is identity)."""
    # Accept an already-binary int8/bool adjacency so the f32 -> mask pass
    # (the largest non-kernel HBM read) can be skipped by callers.
    if adj.dtype == jnp.int8:
        adj_mask = adj
    else:
        adj_mask = (adj > 0).astype(jnp.int8)

    heads = params["heads"]
    h_cat = gat_multi_head_layer(
        x, adj_mask,
        [p["W"] for p in heads], [p["a1"] for p in heads], [p["a2"] for p in heads],
        alpha=alpha, concat=True, block_q=block_q,
        wh_dtype=jnp.bfloat16)                          # [N, H*n_hid]
    o = params["out"]
    # Output layer: resident slab is tiny (n_class+1 cols) -> keep it f32 for
    # full-precision logits at zero VMEM cost.
    return gat_multi_head_layer(
        h_cat, adj_mask, [o["W"]], [o["a1"]], [o["a2"]],
        alpha=alpha, concat=False, block_q=block_q,
        wh_dtype=jnp.float32)                           # [N, n_class]


# ----------------------------------------------------------------------------
# Params + pure-JAX reference
# ----------------------------------------------------------------------------
def init_gat_params(key, n_feat, n_hid, n_class, n_heads):
    """Deterministic xavier-uniform-like init matching the PyTorch shapes."""
    params = {"heads": [], "out": None}

    def xavier(key, shape, gain=1.414):
        fan_in, fan_out = shape[0], shape[1]
        bound = gain * (6.0 / (fan_in + fan_out)) ** 0.5
        return jax.random.uniform(key, shape, jnp.float32, -bound, bound)

    keys = jax.random.split(key, 2 * n_heads + 2)
    for h in range(n_heads):
        w = xavier(keys[2 * h], (n_feat, n_hid))
        a = xavier(keys[2 * h + 1], (2 * n_hid, 1))
        params["heads"].append({"W": w, "a1": a[:n_hid, :], "a2": a[n_hid:, :]})
    w_out = xavier(keys[-2], (n_hid * n_heads, n_class))
    a_out = xavier(keys[-1], (2 * n_class, 1))
    params["out"] = {"W": w_out, "a1": a_out[:n_class, :], "a2": a_out[n_class:, :]}
    return params


def gat_forward_ref(params, x, adj, *, alpha=0.2):
    """Pure-JAX reference of the same math for correctness checking."""
    def layer(h, adj, w, a1, a2, concat):
        wh = h @ w
        e = (wh @ a1) + (wh @ a2).T
        e = jnp.where(e > 0, e, alpha * e)
        e = jnp.where(adj > 0, e, _NEG)
        attn = jax.nn.softmax(e, axis=1)
        hp = attn @ wh
        return jax.nn.elu(hp) if concat else hp

    hs = [layer(x, adj, p["W"], p["a1"], p["a2"], True) for p in params["heads"]]
    h_cat = jnp.concatenate(hs, axis=1)
    o = params["out"]
    return layer(h_cat, adj, o["W"], o["a1"], o["a2"], False)


# ----------------------------------------------------------------------------
if __name__ == "__main__":
    key = jax.random.PRNGKey(0)
    k_x, k_adj, k_params = jax.random.split(key, 3)

    # Small but grid-exercising shapes: 256 nodes, 2 query-row tiles of 128.
    N, n_feat, n_hid, n_class, n_heads = 256, 32, 16, 8, 4
    alpha = 0.2

    x = jax.random.normal(k_x, (N, n_feat), jnp.float32)
    # random symmetric binary adjacency with self loops
    a_rand = jax.random.uniform(k_adj, (N, N))
    adj = (a_rand + a_rand.T > 1.0).astype(jnp.float32) + jnp.eye(N, dtype=jnp.float32)
    adj = jnp.clip(adj, 0.0, 1.0)

    params = init_gat_params(k_params, n_feat, n_hid, n_class, n_heads)

    fwd = jax.jit(functools.partial(gat_forward, alpha=alpha, block_q=128))
    out = jax.block_until_ready(fwd(params, x, adj))
    ref = gat_forward_ref(params, x, adj, alpha=alpha)

    assert out.shape == (N, n_class)
    # Tolerance accounts for the bf16-quantized hidden-layer Wh slab (0.4% rel)
    # propagated through the second layer's softmax; the softmax reciprocal is
    # exact and all accumulation is f32, so real bugs (masking, head indexing,
    # matmul) still produce O(1) errors that trip this.
    max_err = float(jnp.max(jnp.abs(out - ref)))
    assert jnp.allclose(out, ref, atol=2e-2, rtol=2e-2), (
        f"mismatch vs reference: max abs err = {max_err}")
    print("KERNEL_OK")
</pallas_src>

<mosaic_0001>
module attributes {stable_mosaic.version = 11 : i64} {
  func.func @_proj_kernel(%arg0: i32, %arg1: memref<128x32xf32, #tpu.memory_space<vmem>>, %arg2: memref<4x32x16xf32, #tpu.memory_space<vmem>>, %arg3: memref<32x4xf32, #tpu.memory_space<vmem>>, %arg4: memref<32x4xf32, #tpu.memory_space<vmem>>, %arg5: memref<4x128x17xbf16, #tpu.memory_space<vmem>>, %arg6: memref<128x4xf32, #tpu.memory_space<vmem>>, %arg7: memref<128x4xf32, #tpu.memory_space<vmem>>) attributes {dimension_semantics = [#tpu.dimension_semantics<parallel>], iteration_bounds = array<i64: 2>, scalar_prefetch = 0 : i64, scratch_operands = 0 : i64, tpu.core_type = #tpu.core_type<tc>, window_params = [{transform_indices = @transform_0, window_bounds = array<i64: 128, 32>}, {pipeline_mode = #tpu.pipeline_mode<synchronous>, transform_indices = @transform_1, window_bounds = array<i64: 4, 32, 16>}, {pipeline_mode = #tpu.pipeline_mode<synchronous>, transform_indices = @transform_2, window_bounds = array<i64: 32, 4>}, {pipeline_mode = #tpu.pipeline_mode<synchronous>, transform_indices = @transform_3, window_bounds = array<i64: 32, 4>}, {transform_indices = @transform_4, window_bounds = array<i64: 4, 128, 17>}, {transform_indices = @transform_5, window_bounds = array<i64: 128, 4>}, {transform_indices = @transform_6, window_bounds = array<i64: 128, 4>}]} {
    %c0 = arith.constant 0 : index
    %c0_0 = arith.constant 0 : index
    %0 = vector.load %arg1[%c0, %c0_0] : memref<128x32xf32, #tpu.memory_space<vmem>>, vector<128x32xf32>
    %cst = arith.constant 1.000000e+00 : f32
    %1 = vector.broadcast %cst : f32 to vector<128x1xf32>
    %c0_1 = arith.constant 0 : index
    %c0_2 = arith.constant 0 : index
    %c0_3 = arith.constant 0 : index
    %2 = vector.load %arg2[%c0_1, %c0_2, %c0_3] : memref<4x32x16xf32, #tpu.memory_space<vmem>>, vector<1x32x16xf32>
    %3 = vector.shape_cast %2 : vector<1x32x16xf32> to vector<32x16xf32>
    %cst_4 = arith.constant dense<0.000000e+00> : vector<128x16xf32>
    %4 = tpu.matmul %0, %3, %cst_4 {dimension_numbers = #tpu.dot_dimension_numbers<[1], [0], [0], [1], [0, 0, 1, 1], [], []>} : vector<128x32xf32>, vector<32x16xf32>, vector<128x16xf32> -> vector<128x16xf32>
    %5 = arith.truncf %4 : vector<128x16xf32> to vector<128x16xbf16>
    %c0_5 = arith.constant 0 : index
    %c0_6 = arith.constant 0 : index
    %c0_7 = arith.constant 0 : index
    %6 = vector.load %arg5[%c0_5, %c0_6, %c0_7] : memref<4x128x17xbf16, #tpu.memory_space<vmem>>, vector<1x128x16xbf16>
    %7 = vector.shape_cast %6 : vector<1x128x16xbf16> to vector<128x16xbf16>
    %8 = vector.shape_cast %5 : vector<128x16xbf16> to vector<1x128x16xbf16>
    tpu.vector_store %arg5[%c0_5, %c0_6, %c0_7], %8 {strides = array<i32>} : memref<4x128x17xbf16, #tpu.memory_space<vmem>>, vector<1x128x16xbf16>,
    %9 = arith.truncf %1 : vector<128x1xf32> to vector<128x1xbf16>
    %c0_8 = arith.constant 0 : index
    %c0_9 = arith.constant 0 : index
    %c16 = arith.constant 16 : index
    %10 = vector.load %arg5[%c0_8, %c0_9, %c16] : memref<4x128x17xbf16, #tpu.memory_space<vmem>>, vector<1x128x1xbf16>
    %11 = vector.shape_cast %10 : vector<1x128x1xbf16> to vector<128x1xbf16>
    %12 = vector.shape_cast %9 : vector<128x1xbf16> to vector<1x128x1xbf16>
    tpu.vector_store %arg5[%c0_8, %c0_9, %c16], %12 {strides = array<i32>} : memref<4x128x17xbf16, #tpu.memory_space<vmem>>, vector<1x128x1xbf16>,
    %c1 = arith.constant 1 : index
    %c0_10 = arith.constant 0 : index
    %c0_11 = arith.constant 0 : index
    %13 = vector.load %arg2[%c1, %c0_10, %c0_11] : memref<4x32x16xf32, #tpu.memory_space<vmem>>, vector<1x32x16xf32>
    %14 = vector.shape_cast %13 : vector<1x32x16xf32> to vector<32x16xf32>
    %cst_12 = arith.constant dense<0.000000e+00> : vector<128x16xf32>
    %15 = tpu.matmul %0, %14, %cst_12 {dimension_numbers = #tpu.dot_dimension_numbers<[1], [0], [0], [1], [0, 0, 1, 1], [], []>} : vector<128x32xf32>, vector<32x16xf32>, vector<128x16xf32> -> vector<128x16xf32>
    %16 = arith.truncf %15 : vector<128x16xf32> to vector<128x16xbf16>
    %c1_13 = arith.constant 1 : index
    %c0_14 = arith.constant 0 : index
    %c0_15 = arith.constant 0 : index
    %17 = vector.load %arg5[%c1_13, %c0_14, %c0_15] : memref<4x128x17xbf16, #tpu.memory_space<vmem>>, vector<1x128x16xbf16>
    %18 = vector.shape_cast %17 : vector<1x128x16xbf16> to vector<128x16xbf16>
    %19 = vector.shape_cast %16 : vector<128x16xbf16> to vector<1x128x16xbf16>
    tpu.vector_store %arg5[%c1_13, %c0_14, %c0_15], %19 {strides = array<i32>} : memref<4x128x17xbf16, #tpu.memory_space<vmem>>, vector<1x128x16xbf16>,
    %20 = arith.truncf %1 : vector<128x1xf32> to vector<128x1xbf16>
    %c1_16 = arith.constant 1 : index
    %c0_17 = arith.constant 0 : index
    %c16_18 = arith.constant 16 : index
    %21 = vector.load %arg5[%c1_16, %c0_17, %c16_18] : memref<4x128x17xbf16, #tpu.memory_space<vmem>>, vector<1x128x1xbf16>
    %22 = vector.shape_cast %21 : vector<1x128x1xbf16> to vector<128x1xbf16>
    %23 = vector.shape_cast %20 : vector<128x1xbf16> to vector<1x128x1xbf16>
    tpu.vector_store %arg5[%c1_16, %c0_17, %c16_18], %23 {strides = array<i32>} : memref<4x128x17xbf16, #tpu.memory_space<vmem>>, vector<1x128x1xbf16>,
    %c2 = arith.constant 2 : index
    %c0_19 = arith.constant 0 : index
    %c0_20 = arith.constant 0 : index
    %24 = vector.load %arg2[%c2, %c0_19, %c0_20] : memref<4x32x16xf32, #tpu.memory_space<vmem>>, vector<1x32x16xf32>
    %25 = vector.shape_cast %24 : vector<1x32x16xf32> to vector<32x16xf32>
    %cst_21 = arith.constant dense<0.000000e+00> : vector<128x16xf32>
    %26 = tpu.matmul %0, %25, %cst_21 {dimension_numbers = #tpu.dot_dimension_numbers<[1], [0], [0], [1], [0, 0, 1, 1], [], []>} : vector<128x32xf32>, vector<32x16xf32>, vector<128x16xf32> -> vector<128x16xf32>
    %27 = arith.truncf %26 : vector<128x16xf32> to vector<128x16xbf16>
    %c2_22 = arith.constant 2 : index
    %c0_23 = arith.constant 0 : index
    %c0_24 = arith.constant 0 : index
    %28 = vector.load %arg5[%c2_22, %c0_23, %c0_24] : memref<4x128x17xbf16, #tpu.memory_space<vmem>>, vector<1x128x16xbf16>
    %29 = vector.shape_cast %28 : vector<1x128x16xbf16> to vector<128x16xbf16>
    %30 = vector.shape_cast %27 : vector<128x16xbf16> to vector<1x128x16xbf16>
    tpu.vector_store %arg5[%c2_22, %c0_23, %c0_24], %30 {strides = array<i32>} : memref<4x128x17xbf16, #tpu.memory_space<vmem>>, vector<1x128x16xbf16>,
    %31 = arith.truncf %1 : vector<128x1xf32> to vector<128x1xbf16>
    %c2_25 = arith.constant 2 : index
    %c0_26 = arith.constant 0 : index
    %c16_27 = arith.constant 16 : index
    %32 = vector.load %arg5[%c2_25, %c0_26, %c16_27] : memref<4x128x17xbf16, #tpu.memory_space<vmem>>, vector<1x128x1xbf16>
    %33 = vector.shape_cast %32 : vector<1x128x1xbf16> to vector<128x1xbf16>
    %34 = vector.shape_cast %31 : vector<128x1xbf16> to vector<1x128x1xbf16>
    tpu.vector_store %arg5[%c2_25, %c0_26, %c16_27], %34 {strides = array<i32>} : memref<4x128x17xbf16, #tpu.memory_space<vmem>>, vector<1x128x1xbf16>,
    %c3 = arith.constant 3 : index
    %c0_28 = arith.constant 0 : index
    %c0_29 = arith.constant 0 : index
    %35 = vector.load %arg2[%c3, %c0_28, %c0_29] : memref<4x32x16xf32, #tpu.memory_space<vmem>>, vector<1x32x16xf32>
    %36 = vector.shape_cast %35 : vector<1x32x16xf32> to vector<32x16xf32>
    %cst_30 = arith.constant dense<0.000000e+00> : vector<128x16xf32>
    %37 = tpu.matmul %0, %36, %cst_30 {dimension_numbers = #tpu.dot_dimension_numbers<[1], [0], [0], [1], [0, 0, 1, 1], [], []>} : vector<128x32xf32>, vector<32x16xf32>, vector<128x16xf32> -> vector<128x16xf32>
    %38 = arith.truncf %37 : vector<128x16xf32> to vector<128x16xbf16>
    %c3_31 = arith.constant 3 : index
    %c0_32 = arith.constant 0 : index
    %c0_33 = arith.constant 0 : index
    %39 = vector.load %arg5[%c3_31, %c0_32, %c0_33] : memref<4x128x17xbf16, #tpu.memory_space<vmem>>, vector<1x128x16xbf16>
    %40 = vector.shape_cast %39 : vector<1x128x16xbf16> to vector<128x16xbf16>
    %41 = vector.shape_cast %38 : vector<128x16xbf16> to vector<1x128x16xbf16>
    tpu.vector_store %arg5[%c3_31, %c0_32, %c0_33], %41 {strides = array<i32>} : memref<4x128x17xbf16, #tpu.memory_space<vmem>>, vector<1x128x16xbf16>,
    %42 = arith.truncf %1 : vector<128x1xf32> to vector<128x1xbf16>
    %c3_34 = arith.constant 3 : index
    %c0_35 = arith.constant 0 : index
    %c16_36 = arith.constant 16 : index
    %43 = vector.load %arg5[%c3_34, %c0_35, %c16_36] : memref<4x128x17xbf16, #tpu.memory_space<vmem>>, vector<1x128x1xbf16>
    %44 = vector.shape_cast %43 : vector<1x128x1xbf16> to vector<128x1xbf16>
    %45 = vector.shape_cast %42 : vector<128x1xbf16> to vector<1x128x1xbf16>
    tpu.vector_store %arg5[%c3_34, %c0_35, %c16_36], %45 {strides = array<i32>} : memref<4x128x17xbf16, #tpu.memory_space<vmem>>, vector<1x128x1xbf16>,
    %c0_37 = arith.constant 0 : index
    %c0_38 = arith.constant 0 : index
    %46 = vector.load %arg3[%c0_37, %c0_38] : memref<32x4xf32, #tpu.memory_space<vmem>>, vector<32x4xf32>
    %cst_39 = arith.constant dense<0.000000e+00> : vector<128x4xf32>
    %47 = tpu.matmul %0, %46, %cst_39 {dimension_numbers = #tpu.dot_dimension_numbers<[1], [0], [0], [1], [0, 0, 1, 1], [], []>} : vector<128x32xf32>, vector<32x4xf32>, vector<128x4xf32> -> vector<128x4xf32>
    %c0_40 = arith.constant 0 : index
    %c0_41 = arith.constant 0 : index
    %48 = vector.load %arg6[%c0_40, %c0_41] : memref<128x4xf32, #tpu.memory_space<vmem>>, vector<128x4xf32>
    tpu.vector_store %arg6[%c0_40, %c0_41], %47 {strides = array<i32>} : memref<128x4xf32, #tpu.memory_space<vmem>>, vector<128x4xf32>,
    %c0_42 = arith.constant 0 : index
    %c0_43 = arith.constant 0 : index
    %49 = vector.load %arg4[%c0_42, %c0_43] : memref<32x4xf32, #tpu.memory_space<vmem>>, vector<32x4xf32>
    %cst_44 = arith.constant dense<0.000000e+00> : vector<128x4xf32>
    %50 = tpu.matmul %0, %49, %cst_44 {dimension_numbers = #tpu.dot_dimension_numbers<[1], [0], [0], [1], [0, 0, 1, 1], [], []>} : vector<128x32xf32>, vector<32x4xf32>, vector<128x4xf32> -> vector<128x4xf32>
    %c0_45 = arith.constant 0 : index
    %c0_46 = arith.constant 0 : index
    %51 = vector.load %arg7[%c0_45, %c0_46] : memref<128x4xf32, #tpu.memory_space<vmem>>, vector<128x4xf32>
    tpu.vector_store %arg7[%c0_45, %c0_46], %50 {strides = array<i32>} : memref<128x4xf32, #tpu.memory_space<vmem>>, vector<128x4xf32>,
    return
  }
  func.func @transform_0(%arg0: i32) -> (i32, i32) {
    %c0_i32 = arith.constant 0 : i32
    %c0_i32_0 = arith.constant 0 : i32
    return %arg0, %c0_i32 : i32, i32
  }
  func.func @transform_1(%arg0: i32) -> (i32, i32, i32) {
    %c0_i32 = arith.constant 0 : i32
    %c0_i32_0 = arith.constant 0 : i32
    %c0_i32_1 = arith.constant 0 : i32
    %c0_i32_2 = arith.constant 0 : i32
    return %c0_i32, %c0_i32_0, %c0_i32_1 : i32, i32, i32
  }
  func.func @transform_2(%arg0: i32) -> (i32, i32) {
    %c0_i32 = arith.constant 0 : i32
    %c0_i32_0 = arith.constant 0 : i32
    %c0_i32_1 = arith.constant 0 : i32
    return %c0_i32, %c0_i32_0 : i32, i32
  }
  func.func @transform_3(%arg0: i32) -> (i32, i32) {
    %c0_i32 = arith.constant 0 : i32
    %c0_i32_0 = arith.constant 0 : i32
    %c0_i32_1 = arith.constant 0 : i32
    return %c0_i32, %c0_i32_0 : i32, i32
  }
  func.func @transform_4(%arg0: i32) -> (i32, i32, i32) {
    %c0_i32 = arith.constant 0 : i32
    %c0_i32_0 = arith.constant 0 : i32
    %c0_i32_1 = arith.constant 0 : i32
    return %c0_i32, %arg0, %c0_i32_0 : i32, i32, i32
  }
  func.func @transform_5(%arg0: i32) -> (i32, i32) {
    %c0_i32 = arith.constant 0 : i32
    %c0_i32_0 = arith.constant 0 : i32
    return %arg0, %c0_i32 : i32, i32
  }
  func.func @transform_6(%arg0: i32) -> (i32, i32) {
    %c0_i32 = arith.constant 0 : i32
    %c0_i32_0 = arith.constant 0 : i32
    return %arg0, %c0_i32 : i32, i32
  }
}

module attributes {stable_mosaic.version = 11 : i64} {
  func.func @_attn_kernel(%arg0: i32, %arg1: memref<128x256xi8, #tpu.memory_space<vmem>>, %arg2: memref<4x256x17xbf16, #tpu.memory_space<vmem>>, %arg3: memref<128x4xf32, #tpu.memory_space<vmem>>, %arg4: memref<4x256xf32, #tpu.memory_space<vmem>>, %arg5: memref<128x64xf32, #tpu.memory_space<vmem>>) attributes {dimension_semantics = [#tpu.dimension_semantics<parallel>], iteration_bounds = array<i64: 2>, scalar_prefetch = 0 : i64, scratch_operands = 0 : i64, tpu.core_type = #tpu.core_type<tc>, window_params = [{transform_indices = @transform_0, window_bounds = array<i64: 128, 256>}, {pipeline_mode = #tpu.pipeline_mode<synchronous>, transform_indices = @transform_1, window_bounds = array<i64: 4, 256, 17>}, {transform_indices = @transform_2, window_bounds = array<i64: 128, 4>}, {pipeline_mode = #tpu.pipeline_mode<synchronous>, transform_indices = @transform_3, window_bounds = array<i64: 4, 256>}, {transform_indices = @transform_4, window_bounds = array<i64: 128, 64>}]} {
    %c0 = arith.constant 0 : index
    %c0_0 = arith.constant 0 : index
    %0 = vector.load %arg1[%c0, %c0_0] : memref<128x256xi8, #tpu.memory_space<vmem>>, vector<128x256xi8>
    %1 = arith.extsi %0 : vector<128x256xi8> to vector<128x256xi32>
    %c0_i32 = arith.constant 0 : i32
    %2 = vector.broadcast %c0_i32 : i32 to vector<128x256xi32>
    %3 = arith.cmpi sgt, %1, %2 : vector<128x256xi32>
    %cst = arith.constant 0.000000e+00 : f32
    %cst_1 = arith.constant -9.000000e+15 : f32
    %4 = vector.broadcast %cst : f32 to vector<128x256xf32>
    %5 = vector.broadcast %cst_1 : f32 to vector<128x256xf32>
    %6 = arith.select %3, %4, %5 : vector<128x256xi1>, vector<128x256xf32>
    %c0_2 = arith.constant 0 : index
    %c0_3 = arith.constant 0 : index
    %7 = vector.load %arg3[%c0_2, %c0_3] : memref<128x4xf32, #tpu.memory_space<vmem>>, vector<128x1xf32>
    %c0_4 = arith.constant 0 : index
    %c0_5 = arith.constant 0 : index
    %8 = vector.load %arg4[%c0_4, %c0_5] : memref<4x256xf32, #tpu.memory_space<vmem>>, vector<1x256xf32>
    %9 = vector.broadcast %7 : vector<128x1xf32> to vector<128x256xf32>
    %10 = vector.broadcast %8 : vector<1x256xf32> to vector<128x256xf32>
    %11 = arith.addf %9, %10 : vector<128x256xf32>
    %cst_6 = arith.constant 0.000000e+00 : f32
    %12 = vector.broadcast %cst_6 : f32 to vector<128x256xf32>
    %13 = arith.cmpf ogt, %11, %12 : vector<128x256xf32>
    %cst_7 = arith.constant 2.000000e-01 : f32
    %14 = vector.broadcast %cst_7 : f32 to vector<128x256xf32>
    %15 = arith.mulf %14, %11 : vector<128x256xf32>
    %16 = arith.select %13, %11, %15 : vector<128x256xi1>, vector<128x256xf32>
    %17 = arith.addf %16, %6 : vector<128x256xf32>
    %cst_8 = arith.constant dense<0xFF800000> : vector<128xf32>
    %18 = vector.multi_reduction <maximumf>, %17, %cst_8 [1] : vector<128x256xf32> to vector<128xf32>
    %19 = vector.shape_cast %18 : vector<128xf32> to vector<128x1xf32>
    %20 = vector.broadcast %19 : vector<128x1xf32> to vector<128x256xf32>
    %21 = arith.subf %17, %20 : vector<128x256xf32>
    %22 = math.exp %21 : vector<128x256xf32>
    %c0_9 = arith.constant 0 : index
    %c0_10 = arith.constant 0 : index
    %c0_11 = arith.constant 0 : index
    %23 = vector.load %arg2[%c0_9, %c0_10, %c0_11] : memref<4x256x17xbf16, #tpu.memory_space<vmem>>, vector<1x256x17xbf16>
    %24 = vector.shape_cast %23 : vector<1x256x17xbf16> to vector<256x17xbf16>
    %25 = arith.extf %24 : vector<256x17xbf16> to vector<256x17xf32>
    %cst_12 = arith.constant dense<0.000000e+00> : vector<128x17xf32>
    %26 = tpu.matmul %22, %25, %cst_12 {dimension_numbers = #tpu.dot_dimension_numbers<[1], [0], [0], [1], [0, 0, 1, 1], [], []>} : vector<128x256xf32>, vector<256x17xf32>, vector<128x17xf32> -> vector<128x17xf32>
    %27 = vector.extract_strided_slice %26 {offsets = [0, 16], sizes = [128, 1], strides = [1, 1]} : vector<128x17xf32> to vector<128x1xf32>
    %28 = vector.extract_strided_slice %26 {offsets = [0, 0], sizes = [128, 16], strides = [1, 1]} : vector<128x17xf32> to vector<128x16xf32>
    %cst_13 = arith.constant 1.000000e+00 : f32
    %29 = vector.broadcast %cst_13 : f32 to vector<128x1xf32>
    %30 = arith.divf %29, %27 : vector<128x1xf32>
    %31 = vector.broadcast %30 : vector<128x1xf32> to vector<128x16xf32>
    %32 = arith.mulf %28, %31 : vector<128x16xf32>
    %cst_14 = arith.constant 0.000000e+00 : f32
    %33 = vector.broadcast %cst_14 : f32 to vector<128x16xf32>
    %34 = arith.cmpf ogt, %32, %33 : vector<128x16xf32>
    %cst_15 = arith.constant 0.000000e+00 : f32
    %35 = vector.broadcast %cst_15 : f32 to vector<128x16xf32>
    %36 = arith.minimumf %32, %35 : vector<128x16xf32>
    %37 = math.exp %36 : vector<128x16xf32>
    %cst_16 = arith.constant 1.000000e+00 : f32
    %38 = vector.broadcast %cst_16 : f32 to vector<128x16xf32>
    %39 = arith.subf %37, %38 : vector<128x16xf32>
    %40 = arith.select %34, %32, %39 : vector<128x16xi1>, vector<128x16xf32>
    %c0_17 = arith.constant 0 : index
    %c0_18 = arith.constant 0 : index
    %41 = vector.load %arg5[%c0_17, %c0_18] : memref<128x64xf32, #tpu.memory_space<vmem>>, vector<128x16xf32>
    tpu.vector_store %arg5[%c0_17, %c0_18], %40 {strides = array<i32>} : memref<128x64xf32, #tpu.memory_space<vmem>>, vector<128x16xf32>,
    %c0_19 = arith.constant 0 : index
    %c1 = arith.constant 1 : index
    %42 = vector.load %arg3[%c0_19, %c1] : memref<128x4xf32, #tpu.memory_space<vmem>>, vector<128x1xf32>
    %c1_20 = arith.constant 1 : index
    %c0_21 = arith.constant 0 : index
    %43 = vector.load %arg4[%c1_20, %c0_21] : memref<4x256xf32, #tpu.memory_space<vmem>>, vector<1x256xf32>
    %44 = vector.broadcast %42 : vector<128x1xf32> to vector<128x256xf32>
    %45 = vector.broadcast %43 : vector<1x256xf32> to vector<128x256xf32>
    %46 = arith.addf %44, %45 : vector<128x256xf32>
    %cst_22 = arith.constant 0.000000e+00 : f32
    %47 = vector.broadcast %cst_22 : f32 to vector<128x256xf32>
    %48 = arith.cmpf ogt, %46, %47 : vector<128x256xf32>
    %cst_23 = arith.constant 2.000000e-01 : f32
    %49 = vector.broadcast %cst_23 : f32 to vector<128x256xf32>
    %50 = arith.mulf %49, %46 : vector<128x256xf32>
    %51 = arith.select %48, %46, %50 : vector<128x256xi1>, vector<128x256xf32>
    %52 = arith.addf %51, %6 : vector<128x256xf32>
    %cst_24 = arith.constant dense<0xFF800000> : vector<128xf32>
    %53 = vector.multi_reduction <maximumf>, %52, %cst_24 [1] : vector<128x256xf32> to vector<128xf32>
    %54 = vector.shape_cast %53 : vector<128xf32> to vector<128x1xf32>
    %55 = vector.broadcast %54 : vector<128x1xf32> to vector<128x256xf32>
    %56 = arith.subf %52, %55 : vector<128x256xf32>
    %57 = math.exp %56 : vector<128x256xf32>
    %c1_25 = arith.constant 1 : index
    %c0_26 = arith.constant 0 : index
    %c0_27 = arith.constant 0 : index
    %58 = vector.load %arg2[%c1_25, %c0_26, %c0_27] : memref<4x256x17xbf16, #tpu.memory_space<vmem>>, vector<1x256x17xbf16>
    %59 = vector.shape_cast %58 : vector<1x256x17xbf16> to vector<256x17xbf16>
    %60 = arith.extf %59 : vector<256x17xbf16> to vector<256x17xf32>
    %cst_28 = arith.constant dense<0.000000e+00> : vector<128x17xf32>
    %61 = tpu.matmul %57, %60, %cst_28 {dimension_numbers = #tpu.dot_dimension_numbers<[1], [0], [0], [1], [0, 0, 1, 1], [], []>} : vector<128x256xf32>, vector<256x17xf32>, vector<128x17xf32> -> vector<128x17xf32>
    %62 = vector.extract_strided_slice %61 {offsets = [0, 16], sizes = [128, 1], strides = [1, 1]} : vector<128x17xf32> to vector<128x1xf32>
    %63 = vector.extract_strided_slice %61 {offsets = [0, 0], sizes = [128, 16], strides = [1, 1]} : vector<128x17xf32> to vector<128x16xf32>
    %cst_29 = arith.constant 1.000000e+00 : f32
    %64 = vector.broadcast %cst_29 : f32 to vector<128x1xf32>
    %65 = arith.divf %64, %62 : vector<128x1xf32>
    %66 = vector.broadcast %65 : vector<128x1xf32> to vector<128x16xf32>
    %67 = arith.mulf %63, %66 : vector<128x16xf32>
    %cst_30 = arith.constant 0.000000e+00 : f32
    %68 = vector.broadcast %cst_30 : f32 to vector<128x16xf32>
    %69 = arith.cmpf ogt, %67, %68 : vector<128x16xf32>
    %cst_31 = arith.constant 0.000000e+00 : f32
    %70 = vector.broadcast %cst_31 : f32 to vector<128x16xf32>
    %71 = arith.minimumf %67, %70 : vector<128x16xf32>
    %72 = math.exp %71 : vector<128x16xf32>
    %cst_32 = arith.constant 1.000000e+00 : f32
    %73 = vector.broadcast %cst_32 : f32 to vector<128x16xf32>
    %74 = arith.subf %72, %73 : vector<128x16xf32>
    %75 = arith.select %69, %67, %74 : vector<128x16xi1>, vector<128x16xf32>
    %c0_33 = arith.constant 0 : index
    %c16 = arith.constant 16 : index
    %76 = vector.load %arg5[%c0_33, %c16] : memref<128x64xf32, #tpu.memory_space<vmem>>, vector<128x16xf32>
    tpu.vector_store %arg5[%c0_33, %c16], %75 {strides = array<i32>} : memref<128x64xf32, #tpu.memory_space<vmem>>, vector<128x16xf32>,
    %c0_34 = arith.constant 0 : index
    %c2 = arith.constant 2 : index
    %77 = vector.load %arg3[%c0_34, %c2] : memref<128x4xf32, #tpu.memory_space<vmem>>, vector<128x1xf32>
    %c2_35 = arith.constant 2 : index
    %c0_36 = arith.constant 0 : index
    %78 = vector.load %arg4[%c2_35, %c0_36] : memref<4x256xf32, #tpu.memory_space<vmem>>, vector<1x256xf32>
    %79 = vector.broadcast %77 : vector<128x1xf32> to vector<128x256xf32>
    %80 = vector.broadcast %78 : vector<1x256xf32> to vector<128x256xf32>
    %81 = arith.addf %79, %80 : vector<128x256xf32>
    %cst_37 = arith.constant 0.000000e+00 : f32
    %82 = vector.broadcast %cst_37 : f32 to vector<128x256xf32>
    %83 = arith.cmpf ogt, %81, %82 : vector<128x256xf32>
    %cst_38 = arith.constant 2.000000e-01 : f32
    %84 = vector.broadcast %cst_38 : f32 to vector<128x256xf32>
    %85 = arith.mulf %84, %81 : vector<128x256xf32>
    %86 = arith.select %83, %81, %85 : vector<128x256xi1>, vector<128x256xf32>
    %87 = arith.addf %86, %6 : vector<128x256xf32>
    %cst_39 = arith.constant dense<0xFF800000> : vector<128xf32>
    %88 = vector.multi_reduction <maximumf>, %87, %cst_39 [1] : vector<128x256xf32> to vector<128xf32>
    %89 = vector.shape_cast %88 : vector<128xf32> to vector<128x1xf32>
    %90 = vector.broadcast %89 : vector<128x1xf32> to vector<128x256xf32>
    %91 = arith.subf %87, %90 : vector<128x256xf32>
    %92 = math.exp %91 : vector<128x256xf32>
    %c2_40 = arith.constant 2 : index
    %c0_41 = arith.constant 0 : index
    %c0_42 = arith.constant 0 : index
    %93 = vector.load %arg2[%c2_40, %c0_41, %c0_42] : memref<4x256x17xbf16, #tpu.memory_space<vmem>>, vector<1x256x17xbf16>
    %94 = vector.shape_cast %93 : vector<1x256x17xbf16> to vector<256x17xbf16>
    %95 = arith.extf %94 : vector<256x17xbf16> to vector<256x17xf32>
    %cst_43 = arith.constant dense<0.000000e+00> : vector<128x17xf32>
    %96 = tpu.matmul %92, %95, %cst_43 {dimension_numbers = #tpu.dot_dimension_numbers<[1], [0], [0], [1], [0, 0, 1, 1], [], []>} : vector<128x256xf32>, vector<256x17xf32>, vector<128x17xf32> -> vector<128x17xf32>
    %97 = vector.extract_strided_slice %96 {offsets = [0, 16], sizes = [128, 1], strides = [1, 1]} : vector<128x17xf32> to vector<128x1xf32>
    %98 = vector.extract_strided_slice %96 {offsets = [0, 0], sizes = [128, 16], strides = [1, 1]} : vector<128x17xf32> to vector<128x16xf32>
    %cst_44 = arith.constant 1.000000e+00 : f32
    %99 = vector.broadcast %cst_44 : f32 to vector<128x1xf32>
    %100 = arith.divf %99, %97 : vector<128x1xf32>
    %101 = vector.broadcast %100 : vector<128x1xf32> to vector<128x16xf32>
    %102 = arith.mulf %98, %101 : vector<128x16xf32>
    %cst_45 = arith.constant 0.000000e+00 : f32
    %103 = vector.broadcast %cst_45 : f32 to vector<128x16xf32>
    %104 = arith.cmpf ogt, %102, %103 : vector<128x16xf32>
    %cst_46 = arith.constant 0.000000e+00 : f32
    %105 = vector.broadcast %cst_46 : f32 to vector<128x16xf32>
    %106 = arith.minimumf %102, %105 : vector<128x16xf32>
    %107 = math.exp %106 : vector<128x16xf32>
    %cst_47 = arith.constant 1.000000e+00 : f32
    %108 = vector.broadcast %cst_47 : f32 to vector<128x16xf32>
    %109 = arith.subf %107, %108 : vector<128x16xf32>
    %110 = arith.select %104, %102, %109 : vector<128x16xi1>, vector<128x16xf32>
    %c0_48 = arith.constant 0 : index
    %c32 = arith.constant 32 : index
    %111 = vector.load %arg5[%c0_48, %c32] : memref<128x64xf32, #tpu.memory_space<vmem>>, vector<128x16xf32>
    tpu.vector_store %arg5[%c0_48, %c32], %110 {strides = array<i32>} : memref<128x64xf32, #tpu.memory_space<vmem>>, vector<128x16xf32>,
    %c0_49 = arith.constant 0 : index
    %c3 = arith.constant 3 : index
    %112 = vector.load %arg3[%c0_49, %c3] : memref<128x4xf32, #tpu.memory_space<vmem>>, vector<128x1xf32>
    %c3_50 = arith.constant 3 : index
    %c0_51 = arith.constant 0 : index
    %113 = vector.load %arg4[%c3_50, %c0_51] : memref<4x256xf32, #tpu.memory_space<vmem>>, vector<1x256xf32>
    %114 = vector.broadcast %112 : vector<128x1xf32> to vector<128x256xf32>
    %115 = vector.broadcast %113 : vector<1x256xf32> to vector<128x256xf32>
    %116 = arith.addf %114, %115 : vector<128x256xf32>
    %cst_52 = arith.constant 0.000000e+00 : f32
    %117 = vector.broadcast %cst_52 : f32 to vector<128x256xf32>
    %118 = arith.cmpf ogt, %116, %117 : vector<128x256xf32>
    %cst_53 = arith.constant 2.000000e-01 : f32
    %119 = vector.broadcast %cst_53 : f32 to vector<128x256xf32>
    %120 = arith.mulf %119, %116 : vector<128x256xf32>
    %121 = arith.select %118, %116, %120 : vector<128x256xi1>, vector<128x256xf32>
    %122 = arith.addf %121, %6 : vector<128x256xf32>
    %cst_54 = arith.constant dense<0xFF800000> : vector<128xf32>
    %123 = vector.multi_reduction <maximumf>, %122, %cst_54 [1] : vector<128x256xf32> to vector<128xf32>
    %124 = vector.shape_cast %123 : vector<128xf32> to vector<128x1xf32>
    %125 = vector.broadcast %124 : vector<128x1xf32> to vector<128x256xf32>
    %126 = arith.subf %122, %125 : vector<128x256xf32>
    %127 = math.exp %126 : vector<128x256xf32>
    %c3_55 = arith.constant 3 : index
    %c0_56 = arith.constant 0 : index
    %c0_57 = arith.constant 0 : index
    %128 = vector.load %arg2[%c3_55, %c0_56, %c0_57] : memref<4x256x17xbf16, #tpu.memory_space<vmem>>, vector<1x256x17xbf16>
    %129 = vector.shape_cast %128 : vector<1x256x17xbf16> to vector<256x17xbf16>
    %130 = arith.extf %129 : vector<256x17xbf16> to vector<256x17xf32>
    %cst_58 = arith.constant dense<0.000000e+00> : vector<128x17xf32>
    %131 = tpu.matmul %127, %130, %cst_58 {dimension_numbers = #tpu.dot_dimension_numbers<[1], [0], [0], [1], [0, 0, 1, 1], [], []>} : vector<128x256xf32>, vector<256x17xf32>, vector<128x17xf32> -> vector<128x17xf32>
    %132 = vector.extract_strided_slice %131 {offsets = [0, 16], sizes = [128, 1], strides = [1, 1]} : vector<128x17xf32> to vector<128x1xf32>
    %133 = vector.extract_strided_slice %131 {offsets = [0, 0], sizes = [128, 16], strides = [1, 1]} : vector<128x17xf32> to vector<128x16xf32>
    %cst_59 = arith.constant 1.000000e+00 : f32
    %134 = vector.broadcast %cst_59 : f32 to vector<128x1xf32>
    %135 = arith.divf %134, %132 : vector<128x1xf32>
    %136 = vector.broadcast %135 : vector<128x1xf32> to vector<128x16xf32>
    %137 = arith.mulf %133, %136 : vector<128x16xf32>
    %cst_60 = arith.constant 0.000000e+00 : f32
    %138 = vector.broadcast %cst_60 : f32 to vector<128x16xf32>
    %139 = arith.cmpf ogt, %137, %138 : vector<128x16xf32>
    %cst_61 = arith.constant 0.000000e+00 : f32
    %140 = vector.broadcast %cst_61 : f32 to vector<128x16xf32>
    %141 = arith.minimumf %137, %140 : vector<128x16xf32>
    %142 = math.exp %141 : vector<128x16xf32>
    %cst_62 = arith.constant 1.000000e+00 : f32
    %143 = vector.broadcast %cst_62 : f32 to vector<128x16xf32>
    %144 = arith.subf %142, %143 : vector<128x16xf32>
    %145 = arith.select %139, %137, %144 : vector<128x16xi1>, vector<128x16xf32>
    %c0_63 = arith.constant 0 : index
    %c48 = arith.constant 48 : index
    %146 = vector.load %arg5[%c0_63, %c48] : memref<128x64xf32, #tpu.memory_space<vmem>>, vector<128x16xf32>
    tpu.vector_store %arg5[%c0_63, %c48], %145 {strides = array<i32>} : memref<128x64xf32, #tpu.memory_space<vmem>>, vector<128x16xf32>,
    return
  }
  func.func @transform_0(%arg0: i32) -> (i32, i32) {
    %c0_i32 = arith.constant 0 : i32
    %c0_i32_0 = arith.constant 0 : i32
    return %arg0, %c0_i32 : i32, i32
  }
  func.func @transform_1(%arg0: i32) -> (i32, i32, i32) {
    %c0_i32 = arith.constant 0 : i32
    %c0_i32_0 = arith.constant 0 : i32
    %c0_i32_1 = arith.constant 0 : i32
    %c0_i32_2 = arith.constant 0 : i32
    return %c0_i32, %c0_i32_0, %c0_i32_1 : i32, i32, i32
  }
  func.func @transform_2(%arg0: i32) -> (i32, i32) {
    %c0_i32 = arith.constant 0 : i32
    %c0_i32_0 = arith.constant 0 : i32
    return %arg0, %c0_i32 : i32, i32
  }
  func.func @transform_3(%arg0: i32) -> (i32, i32) {
    %c0_i32 = arith.constant 0 : i32
    %c0_i32_0 = arith.constant 0 : i32
    %c0_i32_1 = arith.constant 0 : i32
    return %c0_i32, %c0_i32_0 : i32, i32
  }
  func.func @transform_4(%arg0: i32) -> (i32, i32) {
    %c0_i32 = arith.constant 0 : i32
    %c0_i32_0 = arith.constant 0 : i32
    return %arg0, %c0_i32 : i32, i32
  }
}

module attributes {stable_mosaic.version = 11 : i64} {
  func.func @_proj_kernel(%arg0: i32, %arg1: memref<128x64xf32, #tpu.memory_space<vmem>>, %arg2: memref<1x64x8xf32, #tpu.memory_space<vmem>>, %arg3: memref<64x1xf32, #tpu.memory_space<vmem>>, %arg4: memref<64x1xf32, #tpu.memory_space<vmem>>, %arg5: memref<1x128x9xf32, #tpu.memory_space<vmem>>, %arg6: memref<128x1xf32, #tpu.memory_space<vmem>>, %arg7: memref<128x1xf32, #tpu.memory_space<vmem>>) attributes {dimension_semantics = [#tpu.dimension_semantics<parallel>], iteration_bounds = array<i64: 2>, scalar_prefetch = 0 : i64, scratch_operands = 0 : i64, tpu.core_type = #tpu.core_type<tc>, window_params = [{transform_indices = @transform_0, window_bounds = array<i64: 128, 64>}, {pipeline_mode = #tpu.pipeline_mode<synchronous>, transform_indices = @transform_1, window_bounds = array<i64: 1, 64, 8>}, {pipeline_mode = #tpu.pipeline_mode<synchronous>, transform_indices = @transform_2, window_bounds = array<i64: 64, 1>}, {pipeline_mode = #tpu.pipeline_mode<synchronous>, transform_indices = @transform_3, window_bounds = array<i64: 64, 1>}, {transform_indices = @transform_4, window_bounds = array<i64: 1, 128, 9>}, {transform_indices = @transform_5, window_bounds = array<i64: 128, 1>}, {transform_indices = @transform_6, window_bounds = array<i64: 128, 1>}]} {
    %c0 = arith.constant 0 : index
    %c0_0 = arith.constant 0 : index
    %0 = vector.load %arg1[%c0, %c0_0] : memref<128x64xf32, #tpu.memory_space<vmem>>, vector<128x64xf32>
    %cst = arith.constant 1.000000e+00 : f32
    %1 = vector.broadcast %cst : f32 to vector<128x1xf32>
    %c0_1 = arith.constant 0 : index
    %c0_2 = arith.constant 0 : index
    %c0_3 = arith.constant 0 : index
    %2 = vector.load %arg2[%c0_1, %c0_2, %c0_3] : memref<1x64x8xf32, #tpu.memory_space<vmem>>, vector<1x64x8xf32>
    %3 = vector.shape_cast %2 : vector<1x64x8xf32> to vector<64x8xf32>
    %cst_4 = arith.constant dense<0.000000e+00> : vector<128x8xf32>
    %4 = tpu.matmul %0, %3, %cst_4 {dimension_numbers = #tpu.dot_dimension_numbers<[1], [0], [0], [1], [0, 0, 1, 1], [], []>} : vector<128x64xf32>, vector<64x8xf32>, vector<128x8xf32> -> vector<128x8xf32>
    %c0_5 = arith.constant 0 : index
    %c0_6 = arith.constant 0 : index
    %c0_7 = arith.constant 0 : index
    %5 = vector.load %arg5[%c0_5, %c0_6, %c0_7] : memref<1x128x9xf32, #tpu.memory_space<vmem>>, vector<1x128x8xf32>
    %6 = vector.shape_cast %5 : vector<1x128x8xf32> to vector<128x8xf32>
    %7 = vector.shape_cast %4 : vector<128x8xf32> to vector<1x128x8xf32>
    tpu.vector_store %arg5[%c0_5, %c0_6, %c0_7], %7 {strides = array<i32>} : memref<1x128x9xf32, #tpu.memory_space<vmem>>, vector<1x128x8xf32>,
    %c0_8 = arith.constant 0 : index
    %c0_9 = arith.constant 0 : index
    %c8 = arith.constant 8 : index
    %8 = vector.load %arg5[%c0_8, %c0_9, %c8] : memref<1x128x9xf32, #tpu.memory_space<vmem>>, vector<1x128x1xf32>
    %9 = vector.shape_cast %8 : vector<1x128x1xf32> to vector<128x1xf32>
    %10 = vector.shape_cast %1 : vector<128x1xf32> to vector<1x128x1xf32>
    tpu.vector_store %arg5[%c0_8, %c0_9, %c8], %10 {strides = array<i32>} : memref<1x128x9xf32, #tpu.memory_space<vmem>>, vector<1x128x1xf32>,
    %c0_10 = arith.constant 0 : index
    %c0_11 = arith.constant 0 : index
    %11 = vector.load %arg3[%c0_10, %c0_11] : memref<64x1xf32, #tpu.memory_space<vmem>>, vector<64x1xf32>
    %cst_12 = arith.constant dense<0.000000e+00> : vector<128x1xf32>
    %12 = tpu.matmul %0, %11, %cst_12 {dimension_numbers = #tpu.dot_dimension_numbers<[1], [0], [0], [1], [0, 0, 1, 1], [], []>} : vector<128x64xf32>, vector<64x1xf32>, vector<128x1xf32> -> vector<128x1xf32>
    %c0_13 = arith.constant 0 : index
    %c0_14 = arith.constant 0 : index
    %13 = vector.load %arg6[%c0_13, %c0_14] : memref<128x1xf32, #tpu.memory_space<vmem>>, vector<128x1xf32>
    tpu.vector_store %arg6[%c0_13, %c0_14], %12 {strides = array<i32>} : memref<128x1xf32, #tpu.memory_space<vmem>>, vector<128x1xf32>,
    %c0_15 = arith.constant 0 : index
    %c0_16 = arith.constant 0 : index
    %14 = vector.load %arg4[%c0_15, %c0_16] : memref<64x1xf32, #tpu.memory_space<vmem>>, vector<64x1xf32>
    %cst_17 = arith.constant dense<0.000000e+00> : vector<128x1xf32>
    %15 = tpu.matmul %0, %14, %cst_17 {dimension_numbers = #tpu.dot_dimension_numbers<[1], [0], [0], [1], [0, 0, 1, 1], [], []>} : vector<128x64xf32>, vector<64x1xf32>, vector<128x1xf32> -> vector<128x1xf32>
    %c0_18 = arith.constant 0 : index
    %c0_19 = arith.constant 0 : index
    %16 = vector.load %arg7[%c0_18, %c0_19] : memref<128x1xf32, #tpu.memory_space<vmem>>, vector<128x1xf32>
    tpu.vector_store %arg7[%c0_18, %c0_19], %15 {strides = array<i32>} : memref<128x1xf32, #tpu.memory_space<vmem>>, vector<128x1xf32>,
    return
  }
  func.func @transform_0(%arg0: i32) -> (i32, i32) {
    %c0_i32 = arith.constant 0 : i32
    %c0_i32_0 = arith.constant 0 : i32
    return %arg0, %c0_i32 : i32, i32
  }
  func.func @transform_1(%arg0: i32) -> (i32, i32, i32) {
    %c0_i32 = arith.constant 0 : i32
    %c0_i32_0 = arith.constant 0 : i32
    %c0_i32_1 = arith.constant 0 : i32
    %c0_i32_2 = arith.constant 0 : i32
    return %c0_i32, %c0_i32_0, %c0_i32_1 : i32, i32, i32
  }
  func.func @transform_2(%arg0: i32) -> (i32, i32) {
    %c0_i32 = arith.constant 0 : i32
    %c0_i32_0 = arith.constant 0 : i32
    %c0_i32_1 = arith.constant 0 : i32
    return %c0_i32, %c0_i32_0 : i32, i32
  }
  func.func @transform_3(%arg0: i32) -> (i32, i32) {
    %c0_i32 = arith.constant 0 : i32
    %c0_i32_0 = arith.constant 0 : i32
    %c0_i32_1 = arith.constant 0 : i32
    return %c0_i32, %c0_i32_0 : i32, i32
  }
  func.func @transform_4(%arg0: i32) -> (i32, i32, i32) {
    %c0_i32 = arith.constant 0 : i32
    %c0_i32_0 = arith.constant 0 : i32
    %c0_i32_1 = arith.constant 0 : i32
    return %c0_i32, %arg0, %c0_i32_0 : i32, i32, i32
  }
  func.func @transform_5(%arg0: i32) -> (i32, i32) {
    %c0_i32 = arith.constant 0 : i32
    %c0_i32_0 = arith.constant 0 : i32
    return %arg0, %c0_i32 : i32, i32
  }
  func.func @transform_6(%arg0: i32) -> (i32, i32) {
    %c0_i32 = arith.constant 0 : i32
    %c0_i32_0 = arith.constant 0 : i32
    return %arg0, %c0_i32 : i32, i32
  }
}

module attributes {stable_mosaic.version = 11 : i64} {
  func.func @_attn_kernel(%arg0: i32, %arg1: memref<128x256xi8, #tpu.memory_space<vmem>>, %arg2: memref<1x256x9xf32, #tpu.memory_space<vmem>>, %arg3: memref<128x1xf32, #tpu.memory_space<vmem>>, %arg4: memref<1x256xf32, #tpu.memory_space<vmem>>, %arg5: memref<128x8xf32, #tpu.memory_space<vmem>>) attributes {dimension_semantics = [#tpu.dimension_semantics<parallel>], iteration_bounds = array<i64: 2>, scalar_prefetch = 0 : i64, scratch_operands = 0 : i64, tpu.core_type = #tpu.core_type<tc>, window_params = [{transform_indices = @transform_0, window_bounds = array<i64: 128, 256>}, {pipeline_mode = #tpu.pipeline_mode<synchronous>, transform_indices = @transform_1, window_bounds = array<i64: 1, 256, 9>}, {transform_indices = @transform_2, window_bounds = array<i64: 128, 1>}, {pipeline_mode = #tpu.pipeline_mode<synchronous>, transform_indices = @transform_3, window_bounds = array<i64: 1, 256>}, {transform_indices = @transform_4, window_bounds = array<i64: 128, 8>}]} {
    %c0 = arith.constant 0 : index
    %c0_0 = arith.constant 0 : index
    %0 = vector.load %arg1[%c0, %c0_0] : memref<128x256xi8, #tpu.memory_space<vmem>>, vector<128x256xi8>
    %1 = arith.extsi %0 : vector<128x256xi8> to vector<128x256xi32>
    %c0_i32 = arith.constant 0 : i32
    %2 = vector.broadcast %c0_i32 : i32 to vector<128x256xi32>
    %3 = arith.cmpi sgt, %1, %2 : vector<128x256xi32>
    %cst = arith.constant 0.000000e+00 : f32
    %cst_1 = arith.constant -9.000000e+15 : f32
    %4 = vector.broadcast %cst : f32 to vector<128x256xf32>
    %5 = vector.broadcast %cst_1 : f32 to vector<128x256xf32>
    %6 = arith.select %3, %4, %5 : vector<128x256xi1>, vector<128x256xf32>
    %c0_2 = arith.constant 0 : index
    %c0_3 = arith.constant 0 : index
    %7 = vector.load %arg3[%c0_2, %c0_3] : memref<128x1xf32, #tpu.memory_space<vmem>>, vector<128x1xf32>
    %c0_4 = arith.constant 0 : index
    %c0_5 = arith.constant 0 : index
    %8 = vector.load %arg4[%c0_4, %c0_5] : memref<1x256xf32, #tpu.memory_space<vmem>>, vector<1x256xf32>
    %9 = vector.broadcast %7 : vector<128x1xf32> to vector<128x256xf32>
    %10 = vector.broadcast %8 : vector<1x256xf32> to vector<128x256xf32>
    %11 = arith.addf %9, %10 : vector<128x256xf32>
    %cst_6 = arith.constant 0.000000e+00 : f32
    %12 = vector.broadcast %cst_6 : f32 to vector<128x256xf32>
    %13 = arith.cmpf ogt, %11, %12 : vector<128x256xf32>
    %cst_7 = arith.constant 2.000000e-01 : f32
    %14 = vector.broadcast %cst_7 : f32 to vector<128x256xf32>
    %15 = arith.mulf %14, %11 : vector<128x256xf32>
    %16 = arith.select %13, %11, %15 : vector<128x256xi1>, vector<128x256xf32>
    %17 = arith.addf %16, %6 : vector<128x256xf32>
    %cst_8 = arith.constant dense<0xFF800000> : vector<128xf32>
    %18 = vector.multi_reduction <maximumf>, %17, %cst_8 [1] : vector<128x256xf32> to vector<128xf32>
    %19 = vector.shape_cast %18 : vector<128xf32> to vector<128x1xf32>
    %20 = vector.broadcast %19 : vector<128x1xf32> to vector<128x256xf32>
    %21 = arith.subf %17, %20 : vector<128x256xf32>
    %22 = math.exp %21 : vector<128x256xf32>
    %c0_9 = arith.constant 0 : index
    %c0_10 = arith.constant 0 : index
    %c0_11 = arith.constant 0 : index
    %23 = vector.load %arg2[%c0_9, %c0_10, %c0_11] : memref<1x256x9xf32, #tpu.memory_space<vmem>>, vector<1x256x9xf32>
    %24 = vector.shape_cast %23 : vector<1x256x9xf32> to vector<256x9xf32>
    %cst_12 = arith.constant dense<0.000000e+00> : vector<128x9xf32>
    %25 = tpu.matmul %22, %24, %cst_12 {dimension_numbers = #tpu.dot_dimension_numbers<[1], [0], [0], [1], [0, 0, 1, 1], [], []>} : vector<128x256xf32>, vector<256x9xf32>, vector<128x9xf32> -> vector<128x9xf32>
    %26 = vector.extract_strided_slice %25 {offsets = [0, 8], sizes = [128, 1], strides = [1, 1]} : vector<128x9xf32> to vector<128x1xf32>
    %27 = vector.extract_strided_slice %25 {offsets = [0, 0], sizes = [128, 8], strides = [1, 1]} : vector<128x9xf32> to vector<128x8xf32>
    %cst_13 = arith.constant 1.000000e+00 : f32
    %28 = vector.broadcast %cst_13 : f32 to vector<128x1xf32>
    %29 = arith.divf %28, %26 : vector<128x1xf32>
    %30 = vector.broadcast %29 : vector<128x1xf32> to vector<128x8xf32>
    %31 = arith.mulf %27, %30 : vector<128x8xf32>
    %c0_14 = arith.constant 0 : index
    %c0_15 = arith.constant 0 : index
    %32 = vector.load %arg5[%c0_14, %c0_15] : memref<128x8xf32, #tpu.memory_space<vmem>>, vector<128x8xf32>
    tpu.vector_store %arg5[%c0_14, %c0_15], %31 {strides = array<i32>} : memref<128x8xf32, #tpu.memory_space<vmem>>, vector<128x8xf32>,
    return
  }
  func.func @transform_0(%arg0: i32) -> (i32, i32) {
    %c0_i32 = arith.constant 0 : i32
    %c0_i32_0 = arith.constant 0 : i32
    return %arg0, %c0_i32 : i32, i32
  }
  func.func @transform_1(%arg0: i32) -> (i32, i32, i32) {
    %c0_i32 = arith.constant 0 : i32
    %c0_i32_0 = arith.constant 0 : i32
    %c0_i32_1 = arith.constant 0 : i32
    %c0_i32_2 = arith.constant 0 : i32
    return %c0_i32, %c0_i32_0, %c0_i32_1 : i32, i32, i32
  }
  func.func @transform_2(%arg0: i32) -> (i32, i32) {
    %c0_i32 = arith.constant 0 : i32
    %c0_i32_0 = arith.constant 0 : i32
    return %arg0, %c0_i32 : i32, i32
  }
  func.func @transform_3(%arg0: i32) -> (i32, i32) {
    %c0_i32 = arith.constant 0 : i32
    %c0_i32_0 = arith.constant 0 : i32
    %c0_i32_1 = arith.constant 0 : i32
    return %c0_i32, %c0_i32_0 : i32, i32
  }
  func.func @transform_4(%arg0: i32) -> (i32, i32) {
    %c0_i32 = arith.constant 0 : i32
    %c0_i32_0 = arith.constant 0 : i32
    return %arg0, %c0_i32 : i32, i32
  }
}

</mosaic_0001>

<llo_original>
// kernel: gat_forward.6
$region0: #{gat_forward.6}
  #allocation0 [shape = 'u32[]', space=smem, size = 0x4, offset = 0x4, fixed_abs, tag = 'smem constant byte address 0x4 - core index']
  #allocation1 [shape = 'u32[144,128]{1,0:T(1,128)}', space=vmem, size = 0x12000, scoped, tag = 'internal scratch']
  %s0 = inlined_call_operand.vmem [shape: f32[256,64], index: 0, kind: input, shape index: {}]
  %s1 = inlined_call_operand.vmem [shape: f32[1,64,8], index: 1, kind: input, shape index: {}]
  %s2 = inlined_call_operand.vmem [shape: f32[64,1], index: 2, kind: input, shape index: {}]
  %s3 = inlined_call_operand.vmem [shape: f32[64,1], index: 3, kind: input, shape index: {}]
  %s4 = inlined_call_operand.vmem [shape: f32[1,256,9], index: 4, kind: output, shape index: {0}]
  %s5 = inlined_call_operand.vmem [shape: f32[256,1], index: 5, kind: output, shape index: {1}]
  %s6 = inlined_call_operand.vmem [shape: f32[256,1], index: 6, kind: output, shape index: {2}]
  %7 = xla_tuple %s4, %s5, %s6
  %s8 = sld [smem:[#allocation0]]
  $region65: #{gat_forward.6} parent=0
    _
  %s10 = ssub.s32 1, %s8
  %s11 = scalar_select 0, %s10, %s8
  loop: start=0, step=1, limit=4
  $region2: #{gat_forward.6} parent=0 // loop_pre_header
    _
  $region3: #{gat_forward.6} parent=0 // loop_header
    %s13 = sphi 0, %s17
    %p14 = scmp.ge.s32.totalorder %s13, 4
    %s23 = sphi 0, %s25
    %s26 = sphi 0, %s23
    %s27 = sphi 0, %s26
    %s43 = sphi 0, %s27
    %s47 = sphi 0, %s47
    %s49 = sphi 0, %s47
    %s50 = sphi 0, %s49
    %s64 = sphi 0, %s50
    %s68 = sphi 0, %s68
    %s70 = sphi 0, %s68
    %s71 = sphi 0, %s70
    %s85 = sphi 0, %s71
    %s89 = sphi 0, %s89
    %s91 = sphi 0, %s89
    %s92 = sphi 0, %s91
    %s106 = sphi 0, %s92
    %s112 = sphi 0, %s114
    %s115 = sphi 0, %s112
    %s116 = sphi 0, %s115
    %s132 = sphi 0, %s116
    %s138 = sphi 0, %s140
    %s141 = sphi 0, %s138
    %s142 = sphi 0, %s141
    %s158 = sphi 0, %s142
    %s164 = sphi 0, %s166
    %s167 = sphi 0, %s164
    %s168 = sphi 0, %s167
    %s184 = sphi 0, %s168
  $region4: #{gat_forward.6} parent=0 // loop_header_branch
    %16 = sbr.rel (%p14) target = $region8
  $region5: #{gat_forward.6} parent=0 // loop_body
    %s18 = ssub.s32 %s13, 1
    %s19 = ssub.s32 %s13, 2
    %s20 = sadd.s32 %s13, 1
    %s21 = ssub.s32 %s13, %s20
    %p22 = scmp.eq.s32.totalorder %s21, 0
    %s24 = sadd.s32 %s23, 1
    %s25 = scalar_select %p22, %s23, %s24
    %p28 = pneg %p22
    %p29 = scmp.eq.s32.totalorder %s13, 1
    %p30 = por %p28, %p29
    %p31 = scmp.ne.s32.totalorder %s23, %s26
    %p32 = scmp.eq.s32.totalorder %s13, 0
    %p33 = por %p31, %p32
    %p34 = scmp.ne.s32.totalorder %s23, %s26
    %p35 = scmp.eq.s32.totalorder %s18, 1
    %p36 = por %p34, %p35
    %p37 = scmp.ne.s32.totalorder %s26, %s27
    %p38 = scmp.eq.s32.totalorder %s18, 0
    %p39 = por %p37, %p38
    %p40 = scmp.ne.s32.totalorder %s26, %s27
    %p41 = scmp.eq.s32.totalorder %s19, 1
    %p42 = por %p40, %p41
    %p44 = scmp.ne.s32.totalorder %s27, %s43
    %p45 = scmp.eq.s32.totalorder %s19, 0
    %p46 = por %p44, %p45
    %s48 = sadd.s32 %s47, 1
    %p51 = scmp.eq.s32.totalorder %s13, 1
    %p52 = scmp.ne.s32.totalorder %s47, %s49
    %p53 = scmp.eq.s32.totalorder %s13, 0
    %p54 = por %p52, %p53
    %p55 = scmp.ne.s32.totalorder %s47, %s49
    %p56 = scmp.eq.s32.totalorder %s18, 1
    %p57 = por %p55, %p56
    %p58 = scmp.ne.s32.totalorder %s49, %s50
    %p59 = scmp.eq.s32.totalorder %s18, 0
    %p60 = por %p58, %p59
    %p61 = scmp.ne.s32.totalorder %s49, %s50
    %p62 = scmp.eq.s32.totalorder %s19, 1
    %p63 = por %p61, %p62
    %p65 = scmp.ne.s32.totalorder %s50, %s64
    %p66 = scmp.eq.s32.totalorder %s19, 0
    %p67 = por %p65, %p66
    %s69 = sadd.s32 %s68, 1
    %p72 = scmp.eq.s32.totalorder %s13, 1
    %p73 = scmp.ne.s32.totalorder %s68, %s70
    %p74 = scmp.eq.s32.totalorder %s13, 0
    %p75 = por %p73, %p74
    %p76 = scmp.ne.s32.totalorder %s68, %s70
    %p77 = scmp.eq.s32.totalorder %s18, 1
    %p78 = por %p76, %p77
    %p79 = scmp.ne.s32.totalorder %s70, %s71
    %p80 = scmp.eq.s32.totalorder %s18, 0
    %p81 = por %p79, %p80
    %p82 = scmp.ne.s32.totalorder %s70, %s71
    %p83 = scmp.eq.s32.totalorder %s19, 1
    %p84 = por %p82, %p83
    %p86 = scmp.ne.s32.totalorder %s71, %s85
    %p87 = scmp.eq.s32.totalorder %s19, 0
    %p88 = por %p86, %p87
    %s90 = sadd.s32 %s89, 1
    %p93 = scmp.eq.s32.totalorder %s13, 1
    %p94 = scmp.ne.s32.totalorder %s89, %s91
    %p95 = scmp.eq.s32.totalorder %s13, 0
    %p96 = por %p94, %p95
    %p97 = scmp.ne.s32.totalorder %s89, %s91
    %p98 = scmp.eq.s32.totalorder %s18, 1
    %p99 = por %p97, %p98
    %p100 = scmp.ne.s32.totalorder %s91, %s92
    %p101 = scmp.eq.s32.totalorder %s18, 0
    %p102 = por %p100, %p101
    %p103 = scmp.ne.s32.totalorder %s91, %s92
    %p104 = scmp.eq.s32.totalorder %s19, 1
    %p105 = por %p103, %p104
    %p107 = scmp.ne.s32.totalorder %s92, %s106
    %p108 = scmp.eq.s32.totalorder %s19, 0
    %p109 = por %p107, %p108
    %s110 = ssub.s32 %s13, %s20
    %p111 = scmp.eq.s32.totalorder %s110, 0
    %s113 = sadd.s32 %s112, 1
    %s114 = scalar_select %p111, %s112, %s113
    %p117 = pneg %p111
    %p118 = scmp.eq.s32.totalorder %s13, 1
    %p119 = por %p117, %p118
    %p120 = scmp.ne.s32.totalorder %s112, %s115
    %p121 = scmp.eq.s32.totalorder %s13, 0
    %p122 = por %p120, %p121
    %p123 = scmp.ne.s32.totalorder %s112, %s115
    %p124 = scmp.eq.s32.totalorder %s18, 1
    %p125 = por %p123, %p124
    %p126 = scmp.ne.s32.totalorder %s115, %s116
    %p127 = scmp.eq.s32.totalorder %s18, 0
    %p128 = por %p126, %p127
    %p129 = scmp.ne.s32.totalorder %s115, %s116
    %p130 = scmp.eq.s32.totalorder %s19, 1
    %p131 = por %p129, %p130
    %p133 = scmp.ne.s32.totalorder %s116, %s132
    %p134 = scmp.eq.s32.totalorder %s19, 0
    %p135 = por %p133, %p134
    %s136 = ssub.s32 %s13, %s20
    %p137 = scmp.eq.s32.totalorder %s136, 0
    %s139 = sadd.s32 %s138, 1
    %s140 = scalar_select %p137, %s138, %s139
    %p143 = pneg %p137
    %p144 = scmp.eq.s32.totalorder %s13, 1
    %p145 = por %p143, %p144
    %p146 = scmp.ne.s32.totalorder %s138, %s141
    %p147 = scmp.eq.s32.totalorder %s13, 0
    %p148 = por %p146, %p147
    %p149 = scmp.ne.s32.totalorder %s138, %s141
    %p150 = scmp.eq.s32.totalorder %s18, 1
    %p151 = por %p149, %p150
    %p152 = scmp.ne.s32.totalorder %s141, %s142
    %p153 = scmp.eq.s32.totalorder %s18, 0
    %p154 = por %p152, %p153
    %p155 = scmp.ne.s32.totalorder %s141, %s142
    %p156 = scmp.eq.s32.totalorder %s19, 1
    %p157 = por %p155, %p156
    %p159 = scmp.ne.s32.totalorder %s142, %s158
    %p160 = scmp.eq.s32.totalorder %s19, 0
    %p161 = por %p159, %p160
    %s162 = ssub.s32 %s13, %s20
    %p163 = scmp.eq.s32.totalorder %s162, 0
    %s165 = sadd.s32 %s164, 1
    %s166 = scalar_select %p163, %s164, %s165
    %p169 = pneg %p163
    %p170 = scmp.eq.s32.totalorder %s13, 1
    %p171 = por %p169, %p170
    %p172 = scmp.ne.s32.totalorder %s164, %s167
    %p173 = scmp.eq.s32.totalorder %s13, 0
    %p174 = por %p172, %p173
    %p175 = scmp.ne.s32.totalorder %s164, %s167
    %p176 = scmp.eq.s32.totalorder %s18, 1
    %p177 = por %p175, %p176
    %p178 = scmp.ne.s32.totalorder %s167, %s168
    %p179 = scmp.eq.s32.totalorder %s18, 0
    %p180 = por %p178, %p179
    %p181 = scmp.ne.s32.totalorder %s167, %s168
    %p182 = scmp.eq.s32.totalorder %s19, 1
    %p183 = por %p181, %p182
    %p185 = scmp.ne.s32.totalorder %s168, %s184
    %p186 = scmp.eq.s32.totalorder %s19, 0
    %p187 = por %p185, %p186
    %p188 = scmp.le.s32.totalorder 1, %s13
    %p189 = scmp.lt.s32.totalorder %s13, 3
    %p190 = pnand %p188, %p189
    %p191 = pneg %p190
    // Predicated region
    $region9: #{gat_forward.6} parent=5 // pred_check
      _
    $region10: #{gat_forward.6} parent=5 // pred_check_branch
      %193 = sbr.rel (%p190) target = $region12
    $region11: #{gat_forward.6} parent=5 // pred_region
      %s194 = ssub.s32 %s13, 1
      // Predicated region
      $region13: #{gat_forward.6} parent=11 // pred_check
        %p195 = pneg %p60
      $region14: #{gat_forward.6} parent=11 // pred_check_branch
        %197 = sbr.rel (%p195) target = $region16
      $region15: #{gat_forward.6} parent=11 // pred_region
        _
      $region16: #{gat_forward.6} parent=11 // pred_fallthru
        _
      // Predicated region
      $region17: #{gat_forward.6} parent=11 // pred_check
        %p198 = pneg %p81
      $region18: #{gat_forward.6} parent=11 // pred_check_branch
        %200 = sbr.rel (%p198) target = $region20
      $region19: #{gat_forward.6} parent=11 // pred_region
        _
      $region20: #{gat_forward.6} parent=11 // pred_fallthru
        _
      // Predicated region
      $region21: #{gat_forward.6} parent=11 // pred_check
        %p201 = pneg %p102
      $region22: #{gat_forward.6} parent=11 // pred_check_branch
        %203 = sbr.rel (%p201) target = $region24
      $region23: #{gat_forward.6} parent=11 // pred_region
        _
      $region24: #{gat_forward.6} parent=11 // pred_fallthru
        _
    $region12: #{gat_forward.6} parent=5 // pred_fallthru
      _
    %p204 = scmp.lt.s32.totalorder %s13, 2
    // Predicated region
    $region25: #{gat_forward.6} parent=5 // pred_check
      %p205 = pneg %p204
    $region26: #{gat_forward.6} parent=5 // pred_check_branch
      %207 = sbr.rel (%p205) target = $region28
    $region27: #{gat_forward.6} parent=5 // pred_region
      // Predicated region
      $region29: #{gat_forward.6} parent=27 // pred_check
        %p208 = pneg %p33
      $region30: #{gat_forward.6} parent=27 // pred_check_branch
        %210 = sbr.rel (%p208) target = $region32
      $region31: #{gat_forward.6} parent=27 // pred_region
        %s211 = smul.u32 16, %s13
        %p212 = scmp.lt.s32.totalorder %s211, 31
        %s213 = scalar_select %p212, %s211, 31
        %s214 = smul.addr %s213, 8
        %s215 = scalar_lea.vmem %s0, %s214
        %s216 = smul.u32 16, %s13
      $region32: #{gat_forward.6} parent=27 // pred_fallthru
        _
    $region28: #{gat_forward.6} parent=5 // pred_fallthru
      _
    %p217 = scmp.le.s32.totalorder 1, %s13
    %p218 = scmp.lt.s32.totalorder %s13, 3
    %p219 = pnand %p217, %p218
    %p220 = pneg %p219
    // Predicated region
    $region33: #{gat_forward.6} parent=5 // pred_check
      _
    $region34: #{gat_forward.6} parent=5 // pred_check_branch
      %222 = sbr.rel (%p219) target = $region36
    $region35: #{gat_forward.6} parent=5 // pred_region
      %s223 = ssub.s32 %s13, 1
      %s224 = smul.u32 16, %s18
      %p225 = scmp.lt.s32.totalorder %s224, 31
      %s226 = scalar_select %p225, %s224, 31
      %s227 = smul.addr %s226, 8
      %s228 = scalar_lea.vmem %s0, %s227
      %p229 = pneg %p39
      %p230 = pneg %p36
      %p231 = pneg %p60
      %p232 = pneg %p57
      %p233 = pneg %p81
      %p234 = pneg %p78
      %p235 = pneg %p102
      %p236 = pneg %p99
      %p237 = pneg %p128
      %p238 = pneg %p125
      %s239 = smul.u32 16, %s18
      %p240 = scmp.lt.s32.totalorder %s239, 31
      %s241 = scalar_select %p240, %s239, 31
      %s242 = smul.addr %s241, 8
      %s243 = scalar_lea.vmem %s4, %s242
      %p244 = pneg %p154
      %p245 = pneg %p151
      %s246 = smul.u32 16, %s18
      %p247 = scmp.lt.s32.totalorder %s246, 31
      %s248 = scalar_select %p247, %s246, 31
      %s249 = smul.addr %s248, 8
      %s250 = scalar_lea.vmem %s5, %s249
      %p251 = pneg %p180
      %p252 = pneg %p177
      %s253 = smul.u32 16, %s18
      %p254 = scmp.lt.s32.totalorder %s253, 31
      %s255 = scalar_select %p254, %s253, 31
      %s256 = smul.addr %s255, 8
      %s257 = scalar_lea.vmem %s6, %s256
      %s258 = smul.u32 16, %s18
      %p259 = scmp.lt.s32.totalorder %s258, 31
      %s260 = scalar_select %p259, %s258, 31
      %s261 = smul.addr %s260, 8
      %s262 = scalar_lea.vmem %s0, %s261
      %s263 = smul.u32 16, %s18
      %s264 = smul.u32 16, %s18
      %p265 = scmp.lt.s32.totalorder %s264, 31
      %s266 = scalar_select %p265, %s264, 31
      %s267 = smul.addr %s266, 8
      %s268 = scalar_lea.vmem %s4, %s267
      %s269 = smul.u32 16, %s18
      %s270 = smul.u32 16, %s18
      %p271 = scmp.lt.s32.totalorder %s270, 31
      %s272 = scalar_select %p271, %s270, 31
      %s273 = smul.addr %s272, 8
      %s274 = scalar_lea.vmem %s5, %s273
      %s275 = smul.u32 16, %s18
      %s276 = smul.u32 16, %s18
      %p277 = scmp.lt.s32.totalorder %s276, 31
      %s278 = scalar_select %p277, %s276, 31
      %s279 = smul.addr %s278, 8
      %s280 = scalar_lea.vmem %s6, %s279
      %s281 = smul.u32 16, %s18
      %v282 = vld [vmem:[%s262] sm:$0xff]
      %v283 = vld [vmem:[%s262 + $0x8] sm:$0xff]
      %v284 = vld [vmem:[%s262 + $0x10] sm:$0xff]
      %v285 = vld [vmem:[%s262 + $0x18] sm:$0xff]
      %v286 = vld [vmem:[%s262 + $0x20] sm:$0xff]
      %v287 = vld [vmem:[%s262 + $0x28] sm:$0xff]
      %v288 = vld [vmem:[%s262 + $0x30] sm:$0xff]
      %v289 = vld [vmem:[%s262 + $0x38] sm:$0xff]
      %v290 = vld [vmem:[%s262 + $0x40] sm:$0xff]
      %v291 = vld [vmem:[%s262 + $0x48] sm:$0xff]
      %v292 = vld [vmem:[%s262 + $0x50] sm:$0xff]
      %v293 = vld [vmem:[%s262 + $0x58] sm:$0xff]
      %v294 = vld [vmem:[%s262 + $0x60] sm:$0xff]
      %v295 = vld [vmem:[%s262 + $0x68] sm:$0xff]
      %v296 = vld [vmem:[%s262 + $0x70] sm:$0xff]
      %v297 = vld [vmem:[%s262 + $0x78] sm:$0xff]
      %v298 = vld [vmem:[%s1] sm:$0xff]
      %v299 = vld [vmem:[%s1 + $0x8] sm:$0xff]
      %v300 = vld [vmem:[%s1 + $0x10] sm:$0xff]
      %v301 = vld [vmem:[%s1 + $0x18] sm:$0xff]
      %v302 = vld [vmem:[%s1 + $0x20] sm:$0xff]
      %v303 = vld [vmem:[%s1 + $0x28] sm:$0xff]
      %v304 = vld [vmem:[%s1 + $0x30] sm:$0xff]
      %v305 = vld [vmem:[%s1 + $0x38] sm:$0xff]
      %vm306 = vcmask 523264
      %v308 = vsel %vm306, %v282, 0
      %v311 = vsel %vm306, %v283, 0
      %v314 = vsel %vm306, %v284, 0
      %v317 = vsel %vm306, %v285, 0
      %v320 = vsel %vm306, %v286, 0
      %v323 = vsel %vm306, %v287, 0
      %v326 = vsel %vm306, %v288, 0
      %v329 = vsel %vm306, %v289, 0
      %v332 = vsel %vm306, %v290, 0
      %v335 = vsel %vm306, %v291, 0
      %v338 = vsel %vm306, %v292, 0
      %v341 = vsel %vm306, %v293, 0
      %v344 = vsel %vm306, %v294, 0
      %v347 = vsel %vm306, %v295, 0
      %v350 = vsel %vm306, %v296, 0
      %v353 = vsel %vm306, %v297, 0
      %355 = vmatprep.subr.mxu0 0.0
      %356 = vmatpush1.msra.mxu0 %v298
      %357 = vmatprep.subr.mxu0 0.0
      %358 = vmatpush1.msra.mxu0 %v299
      %359 = vmatprep.subr.mxu0 0.0
      %360 = vmatpush1.msra.mxu0 %v300
      %361 = vmatprep.subr.mxu0 0.0
      %362 = vmatpush1.msra.mxu0 %v301
      %363 = vmatprep.subr.mxu0 0.0
      %364 = vmatpush1.msra.mxu0 %v302
      %365 = vmatprep.subr.mxu0 0.0
      %366 = vmatpush1.msra.mxu0 %v303
      %367 = vmatprep.subr.mxu0 0.0
      %368 = vmatpush1.msra.mxu0 %v304
      %369 = vmatprep.subr.mxu0 0.0
      %370 = vmatpush1.msra.mxu0 %v305
      %371 = vmatprep.subr.mxu0 0.0
      %372 = vmatpush1.msra.mxu0 0.0
      %373 = vmatprep.subr.mxu0 0.0
      %374 = vmatpush1.msra.mxu0 0.0
      %375 = vmatprep.subr.mxu0 0.0
      %376 = vmatpush1.msra.mxu0 0.0
      %377 = vmatprep.subr.mxu0 0.0
      %378 = vmatpush1.msra.mxu0 0.0
      %379 = vmatprep.subr.mxu0 0.0
      %380 = vmatpush1.msra.mxu0 0.0
      %381 = vmatprep.subr.mxu0 0.0
      %382 = vmatpush1.msra.mxu0 0.0
      %383 = vmatprep.subr.mxu0 0.0
      %384 = vmatpush1.msra.mxu0 0.0
      %385 = vmatprep.subr.mxu0 0.0
      %386 = vmatpush1.msra.mxu0 0.0
      %387 = vmatprep.subr.mxu0 0.0
      %388 = vmatpush1.msra.mxu0 0.0
      %389 = vmatprep.subr.mxu0 0.0
      %390 = vmatpush1.msra.mxu0 0.0
      %391 = vmatprep.subr.mxu0 0.0
      %392 = vmatpush1.msra.mxu0 0.0
      %393 = vmatprep.subr.mxu0 0.0
      %394 = vmatpush1.msra.mxu0 0.0
      %395 = vmatprep.subr.mxu0 0.0
      %396 = vmatpush1.msra.mxu0 0.0
      %397 = vmatprep.subr.mxu0 0.0
      %398 = vmatpush1.msra.mxu0 0.0
      %399 = vmatprep.subr.mxu0 0.0
      %400 = vmatpush1.msra.mxu0 0.0
      %401 = vmatprep.subr.mxu0 0.0
      %402 = vmatpush1.msra.mxu0 0.0
      %403 = vmatprep.subr.mxu0 0.0
      %404 = vmatpush1.msra.mxu0 0.0
      %405 = vmatprep.subr.mxu0 0.0
      %406 = vmatpush1.msra.mxu0 0.0
      %407 = vmatprep.subr.mxu0 0.0
      %408 = vmatpush1.msra.mxu0 0.0
      %409 = vmatprep.subr.mxu0 0.0
      %410 = vmatpush1.msra.mxu0 0.0
      %411 = vmatprep.subr.mxu0 0.0
      %412 = vmatpush1.msra.mxu0 0.0
      %413 = vmatprep.subr.mxu0 0.0
      %414 = vmatpush1.msra.mxu0 0.0
      %415 = vmatprep.subr.mxu0 0.0
      %416 = vmatpush1.msra.mxu0 0.0
      %417 = vmatprep.subr.mxu0 0.0
      %418 = vmatpush1.msra.mxu0 0.0
      %419 = vmatprep.mubr.f32.mxu0 0.0
      %420 = vmatmul.mubr.f32.gmra.mrb[0].mxu0 %v308
      %v421 = vpop.f32.mrb[0].mxu0
      %v422 = vadd.f32 0.0, %v421
      %v423 = vpop.f32.mrb[0].mxu0
      %424 = vmatprep.mubr.f32.mxu0 0.0
      %425 = vmatmul.mubr.f32.gmra.mrb[0].mxu0 %v311
      %v426 = vpop.f32.mrb[0].mxu0
      %v427 = vadd.f32 0.0, %v426
      %v428 = vpop.f32.mrb[0].mxu0
      %429 = vmatprep.mubr.f32.mxu0 0.0
      %430 = vmatmul.mubr.f32.gmra.mrb[0].mxu0 %v314
      %v431 = vpop.f32.mrb[0].mxu0
      %v432 = vadd.f32 0.0, %v431
      %v433 = vpop.f32.mrb[0].mxu0
      %434 = vmatprep.mubr.f32.mxu0 0.0
      %435 = vmatmul.mubr.f32.gmra.mrb[0].mxu0 %v317
      %v436 = vpop.f32.mrb[0].mxu0
      %v437 = vadd.f32 0.0, %v436
      %v438 = vpop.f32.mrb[0].mxu0
      %439 = vmatprep.mubr.f32.mxu0 0.0
      %440 = vmatmul.mubr.f32.gmra.mrb[0].mxu0 %v320
      %v441 = vpop.f32.mrb[0].mxu0
      %v442 = vadd.f32 0.0, %v441
      %v443 = vpop.f32.mrb[0].mxu0
      %444 = vmatprep.mubr.f32.mxu0 0.0
      %445 = vmatmul.mubr.f32.gmra.mrb[0].mxu0 %v323
      %v446 = vpop.f32.mrb[0].mxu0
      %v447 = vadd.f32 0.0, %v446
      %v448 = vpop.f32.mrb[0].mxu0
      %449 = vmatprep.mubr.f32.mxu0 0.0
      %450 = vmatmul.mubr.f32.gmra.mrb[0].mxu0 %v326
      %v451 = vpop.f32.mrb[0].mxu0
      %v452 = vadd.f32 0.0, %v451
      %v453 = vpop.f32.mrb[0].mxu0
      %454 = vmatprep.mubr.f32.mxu0 0.0
      %455 = vmatmul.mubr.f32.gmra.mrb[0].mxu0 %v329
      %v456 = vpop.f32.mrb[0].mxu0
      %v457 = vadd.f32 0.0, %v456
      %v458 = vpop.f32.mrb[0].mxu0
      %459 = vmatprep.mubr.f32.mxu0 0.0
      %460 = vmatmul.mubr.f32.gmra.mrb[0].mxu0 %v332
      %v461 = vpop.f32.mrb[0].mxu0
      %v462 = vadd.f32 0.0, %v461
      %v463 = vpop.f32.mrb[0].mxu0
      %464 = vmatprep.mubr.f32.mxu0 0.0
      %465 = vmatmul.mubr.f32.gmra.mrb[0].mxu0 %v335
      %v466 = vpop.f32.mrb[0].mxu0
      %v467 = vadd.f32 0.0, %v466
      %v468 = vpop.f32.mrb[0].mxu0
      %469 = vmatprep.mubr.f32.mxu0 0.0
      %470 = vmatmul.mubr.f32.gmra.mrb[0].mxu0 %v338
      %v471 = vpop.f32.mrb[0].mxu0
      %v472 = vadd.f32 0.0, %v471
      %v473 = vpop.f32.mrb[0].mxu0
      %474 = vmatprep.mubr.f32.mxu0 0.0
      %475 = vmatmul.mubr.f32.gmra.mrb[0].mxu0 %v341
      %v476 = vpop.f32.mrb[0].mxu0
      %v477 = vadd.f32 0.0, %v476
      %v478 = vpop.f32.mrb[0].mxu0
      %479 = vmatprep.mubr.f32.mxu0 0.0
      %480 = vmatmul.mubr.f32.gmra.mrb[0].mxu0 %v344
      %v481 = vpop.f32.mrb[0].mxu0
      %v482 = vadd.f32 0.0, %v481
      %v483 = vpop.f32.mrb[0].mxu0
      %484 = vmatprep.mubr.f32.mxu0 0.0
      %485 = vmatmul.mubr.f32.gmra.mrb[0].mxu0 %v347
      %v486 = vpop.f32.mrb[0].mxu0
      %v487 = vadd.f32 0.0, %v486
      %v488 = vpop.f32.mrb[0].mxu0
      %489 = vmatprep.mubr.f32.mxu0 0.0
      %490 = vmatmul.mubr.f32.gmra.mrb[0].mxu0 %v350
      %v491 = vpop.f32.mrb[0].mxu0
      %v492 = vadd.f32 0.0, %v491
      %v493 = vpop.f32.mrb[0].mxu0
      %494 = vmatprep.mubr.f32.mxu0 0.0
      %495 = vmatmul.mubr.f32.gmra.mrb[0].mxu0 %v353
      %v496 = vpop.f32.mrb[0].mxu0
      %v497 = vadd.f32 0.0, %v496
      %v498 = vpop.f32.mrb[0].mxu0
      %499 = vdwg.mxu0
      %vm500 = vcmask 64512
      %501 = vst.msk [vmem:[%s268] sm:$0xff] %vm500, %v422
      %502 = vst.msk [vmem:[%s268 + $0x8] sm:$0xff] %vm500, %v427
      %503 = vst.msk [vmem:[%s268 + $0x10] sm:$0xff] %vm500, %v432
      %504 = vst.msk [vmem:[%s268 + $0x18] sm:$0xff] %vm500, %v437
      %505 = vst.msk [vmem:[%s268 + $0x20] sm:$0xff] %vm500, %v442
      %506 = vst.msk [vmem:[%s268 + $0x28] sm:$0xff] %vm500, %v447
      %507 = vst.msk [vmem:[%s268 + $0x30] sm:$0xff] %vm500, %v452
      %508 = vst.msk [vmem:[%s268 + $0x38] sm:$0xff] %vm500, %v457
      %509 = vst.msk [vmem:[%s268 + $0x40] sm:$0xff] %vm500, %v462
      %510 = vst.msk [vmem:[%s268 + $0x48] sm:$0xff] %vm500, %v467
      %511 = vst.msk [vmem:[%s268 + $0x50] sm:$0xff] %vm500, %v472
      %512 = vst.msk [vmem:[%s268 + $0x58] sm:$0xff] %vm500, %v477
      %513 = vst.msk [vmem:[%s268 + $0x60] sm:$0xff] %vm500, %v482
      %514 = vst.msk [vmem:[%s268 + $0x68] sm:$0xff] %vm500, %v487
      %515 = vst.msk [vmem:[%s268 + $0x70] sm:$0xff] %vm500, %v492
      %516 = vst.msk [vmem:[%s268 + $0x78] sm:$0xff] %vm500, %v497
      %vm517 = vcmask 72768
      %518 = vst.msk [vmem:[%s268] sm:$0xff] %vm517, 1.0
      %519 = vst.msk [vmem:[%s268 + $0x8] sm:$0xff] %vm517, 1.0
      %520 = vst.msk [vmem:[%s268 + $0x10] sm:$0xff] %vm517, 1.0
      %521 = vst.msk [vmem:[%s268 + $0x18] sm:$0xff] %vm517, 1.0
      %522 = vst.msk [vmem:[%s268 + $0x20] sm:$0xff] %vm517, 1.0
      %523 = vst.msk [vmem:[%s268 + $0x28] sm:$0xff] %vm517, 1.0
      %524 = vst.msk [vmem:[%s268 + $0x30] sm:$0xff] %vm517, 1.0
      %525 = vst.msk [vmem:[%s268 + $0x38] sm:$0xff] %vm517, 1.0
      %526 = vst.msk [vmem:[%s268 + $0x40] sm:$0xff] %vm517, 1.0
      %527 = vst.msk [vmem:[%s268 + $0x48] sm:$0xff] %vm517, 1.0
      %528 = vst.msk [vmem:[%s268 + $0x50] sm:$0xff] %vm517, 1.0
      %529 = vst.msk [vmem:[%s268 + $0x58] sm:$0xff] %vm517, 1.0
      %530 = vst.msk [vmem:[%s268 + $0x60] sm:$0xff] %vm517, 1.0
      %531 = vst.msk [vmem:[%s268 + $0x68] sm:$0xff] %vm517, 1.0
      %532 = vst.msk [vmem:[%s268 + $0x70] sm:$0xff] %vm517, 1.0
      %533 = vst.msk [vmem:[%s268 + $0x78] sm:$0xff] %vm517, 1.0
      %v534 = vld [vmem:[%s2] sm:$0xff]
      %v535 = vld [vmem:[%s2 + $0x8] sm:$0xff]
      %v536 = vld [vmem:[%s2 + $0x10] sm:$0xff]
      %v537 = vld [vmem:[%s2 + $0x18] sm:$0xff]
      %v538 = vld [vmem:[%s2 + $0x20] sm:$0xff]
      %v539 = vld [vmem:[%s2 + $0x28] sm:$0xff]
      %v540 = vld [vmem:[%s2 + $0x30] sm:$0xff]
      %v541 = vld [vmem:[%s2 + $0x38] sm:$0xff]
      %542 = vmatprep.subr.mxu0 0.0
      %543 = vmatpush1.msra.mxu0 %v534
      %544 = vmatprep.subr.mxu0 0.0
      %545 = vmatpush1.msra.mxu0 %v535
      %546 = vmatprep.subr.mxu0 0.0
      %547 = vmatpush1.msra.mxu0 %v536
      %548 = vmatprep.subr.mxu0 0.0
      %549 = vmatpush1.msra.mxu0 %v537
      %550 = vmatprep.subr.mxu0 0.0
      %551 = vmatpush1.msra.mxu0 %v538
      %552 = vmatprep.subr.mxu0 0.0
      %553 = vmatpush1.msra.mxu0 %v539
      %554 = vmatprep.subr.mxu0 0.0
      %555 = vmatpush1.msra.mxu0 %v540
      %556 = vmatprep.subr.mxu0 0.0
      %557 = vmatpush1.msra.mxu0 %v541
      %558 = vmatprep.subr.mxu0 0.0
      %559 = vmatpush1.msra.mxu0 0.0
      %560 = vmatprep.subr.mxu0 0.0
      %561 = vmatpush1.msra.mxu0 0.0
      %562 = vmatprep.subr.mxu0 0.0
      %563 = vmatpush1.msra.mxu0 0.0
      %564 = vmatprep.subr.mxu0 0.0
      %565 = vmatpush1.msra.mxu0 0.0
      %566 = vmatprep.subr.mxu0 0.0
      %567 = vmatpush1.msra.mxu0 0.0
      %568 = vmatprep.subr.mxu0 0.0
      %569 = vmatpush1.msra.mxu0 0.0
      %570 = vmatprep.subr.mxu0 0.0
      %571 = vmatpush1.msra.mxu0 0.0
      %572 = vmatprep.subr.mxu0 0.0
      %573 = vmatpush1.msra.mxu0 0.0
      %574 = vmatprep.subr.mxu0 0.0
      %575 = vmatpush1.msra.mxu0 0.0
      %576 = vmatprep.subr.mxu0 0.0
      %577 = vmatpush1.msra.mxu0 0.0
      %578 = vmatprep.subr.mxu0 0.0
      %579 = vmatpush1.msra.mxu0 0.0
      %580 = vmatprep.subr.mxu0 0.0
      %581 = vmatpush1.msra.mxu0 0.0
      %582 = vmatprep.subr.mxu0 0.0
      %583 = vmatpush1.msra.mxu0 0.0
      %584 = vmatprep.subr.mxu0 0.0
      %585 = vmatpush1.msra.mxu0 0.0
      %586 = vmatprep.subr.mxu0 0.0
      %587 = vmatpush1.msra.mxu0 0.0
      %588 = vmatprep.subr.mxu0 0.0
      %589 = vmatpush1.msra.mxu0 0.0
      %590 = vmatprep.subr.mxu0 0.0
      %591 = vmatpush1.msra.mxu0 0.0
      %592 = vmatprep.subr.mxu0 0.0
      %593 = vmatpush1.msra.mxu0 0.0
      %594 = vmatprep.subr.mxu0 0.0
      %595 = vmatpush1.msra.mxu0 0.0
      %596 = vmatprep.subr.mxu0 0.0
      %597 = vmatpush1.msra.mxu0 0.0
      %598 = vmatprep.subr.mxu0 0.0
      %599 = vmatpush1.msra.mxu0 0.0
      %600 = vmatprep.subr.mxu0 0.0
      %601 = vmatpush1.msra.mxu0 0.0
      %602 = vmatprep.subr.mxu0 0.0
      %603 = vmatpush1.msra.mxu0 0.0
      %604 = vmatprep.subr.mxu0 0.0
      %605 = vmatpush1.msra.mxu0 0.0
      %606 = vmatprep.mubr.f32.mxu0 0.0
      %607 = vmatmul.mubr.f32.gmra.mrb[0].mxu0 %v308
      %v608 = vpop.f32.mrb[0].mxu0
      %v609 = vadd.f32 0.0, %v608
      %v610 = vpop.f32.mrb[0].mxu0
      %611 = vmatprep.mubr.f32.mxu0 0.0
      %612 = vmatmul.mubr.f32.gmra.mrb[0].mxu0 %v311
      %v613 = vpop.f32.mrb[0].mxu0
      %v614 = vadd.f32 0.0, %v613
      %v615 = vpop.f32.mrb[0].mxu0
      %616 = vmatprep.mubr.f32.mxu0 0.0
      %617 = vmatmul.mubr.f32.gmra.mrb[0].mxu0 %v314
      %v618 = vpop.f32.mrb[0].mxu0
      %v619 = vadd.f32 0.0, %v618
      %v620 = vpop.f32.mrb[0].mxu0
      %621 = vmatprep.mubr.f32.mxu0 0.0
      %622 = vmatmul.mubr.f32.gmra.mrb[0].mxu0 %v317
      %v623 = vpop.f32.mrb[0].mxu0
      %v624 = vadd.f32 0.0, %v623
      %v625 = vpop.f32.mrb[0].mxu0
      %626 = vmatprep.mubr.f32.mxu0 0.0
      %627 = vmatmul.mubr.f32.gmra.mrb[0].mxu0 %v320
      %v628 = vpop.f32.mrb[0].mxu0
      %v629 = vadd.f32 0.0, %v628
      %v630 = vpop.f32.mrb[0].mxu0
      %631 = vmatprep.mubr.f32.mxu0 0.0
      %632 = vmatmul.mubr.f32.gmra.mrb[0].mxu0 %v323
      %v633 = vpop.f32.mrb[0].mxu0
      %v634 = vadd.f32 0.0, %v633
      %v635 = vpop.f32.mrb[0].mxu0
      %636 = vmatprep.mubr.f32.mxu0 0.0
      %637 = vmatmul.mubr.f32.gmra.mrb[0].mxu0 %v326
      %v638 = vpop.f32.mrb[0].mxu0
      %v639 = vadd.f32 0.0, %v638
      %v640 = vpop.f32.mrb[0].mxu0
      %641 = vmatprep.mubr.f32.mxu0 0.0
      %642 = vmatmul.mubr.f32.gmra.mrb[0].mxu0 %v329
      %v643 = vpop.f32.mrb[0].mxu0
      %v644 = vadd.f32 0.0, %v643
      %v645 = vpop.f32.mrb[0].mxu0
      %646 = vmatprep.mubr.f32.mxu0 0.0
      %647 = vmatmul.mubr.f32.gmra.mrb[0].mxu0 %v332
      %v648 = vpop.f32.mrb[0].mxu0
      %v649 = vadd.f32 0.0, %v648
      %v650 = vpop.f32.mrb[0].mxu0
      %651 = vmatprep.mubr.f32.mxu0 0.0
      %652 = vmatmul.mubr.f32.gmra.mrb[0].mxu0 %v335
      %v653 = vpop.f32.mrb[0].mxu0
      %v654 = vadd.f32 0.0, %v653
      %v655 = vpop.f32.mrb[0].mxu0
      %656 = vmatprep.mubr.f32.mxu0 0.0
      %657 = vmatmul.mubr.f32.gmra.mrb[0].mxu0 %v338
      %v658 = vpop.f32.mrb[0].mxu0
      %v659 = vadd.f32 0.0, %v658
      %v660 = vpop.f32.mrb[0].mxu0
      %661 = vmatprep.mubr.f32.mxu0 0.0
      %662 = vmatmul.mubr.f32.gmra.mrb[0].mxu0 %v341
      %v663 = vpop.f32.mrb[0].mxu0
      %v664 = vadd.f32 0.0, %v663
      %v665 = vpop.f32.mrb[0].mxu0
      %666 = vmatprep.mubr.f32.mxu0 0.0
      %667 = vmatmul.mubr.f32.gmra.mrb[0].mxu0 %v344
      %v668 = vpop.f32.mrb[0].mxu0
      %v669 = vadd.f32 0.0, %v668
      %v670 = vpop.f32.mrb[0].mxu0
      %671 = vmatprep.mubr.f32.mxu0 0.0
      %672 = vmatmul.mubr.f32.gmra.mrb[0].mxu0 %v347
      %v673 = vpop.f32.mrb[0].mxu0
      %v674 = vadd.f32 0.0, %v673
      %v675 = vpop.f32.mrb[0].mxu0
      %676 = vmatprep.mubr.f32.mxu0 0.0
      %677 = vmatmul.mubr.f32.gmra.mrb[0].mxu0 %v350
      %v678 = vpop.f32.mrb[0].mxu0
      %v679 = vadd.f32 0.0, %v678
      %v680 = vpop.f32.mrb[0].mxu0
      %681 = vmatprep.mubr.f32.mxu0 0.0
      %682 = vmatmul.mubr.f32.gmra.mrb[0].mxu0 %v353
      %v683 = vpop.f32.mrb[0].mxu0
      %v684 = vadd.f32 0.0, %v683
      %v685 = vpop.f32.mrb[0].mxu0
      %686 = vdwg.mxu0
      %vm687 = vcmask 7168
      %688 = vst.msk [vmem:[%s274] sm:$0xff] %vm687, %v609
      %689 = vst.msk [vmem:[%s274 + $0x8] sm:$0xff] %vm687, %v614
      %690 = vst.msk [vmem:[%s274 + $0x10] sm:$0xff] %vm687, %v619
      %691 = vst.msk [vmem:[%s274 + $0x18] sm:$0xff] %vm687, %v624
      %692 = vst.msk [vmem:[%s274 + $0x20] sm:$0xff] %vm687, %v629
      %693 = vst.msk [vmem:[%s274 + $0x28] sm:$0xff] %vm687, %v634
      %694 = vst.msk [vmem:[%s274 + $0x30] sm:$0xff] %vm687, %v639
      %695 = vst.msk [vmem:[%s274 + $0x38] sm:$0xff] %vm687, %v644
      %696 = vst.msk [vmem:[%s274 + $0x40] sm:$0xff] %vm687, %v649
      %697 = vst.msk [vmem:[%s274 + $0x48] sm:$0xff] %vm687, %v654
      %698 = vst.msk [vmem:[%s274 + $0x50] sm:$0xff] %vm687, %v659
      %699 = vst.msk [vmem:[%s274 + $0x58] sm:$0xff] %vm687, %v664
      %700 = vst.msk [vmem:[%s274 + $0x60] sm:$0xff] %vm687, %v669
      %701 = vst.msk [vmem:[%s274 + $0x68] sm:$0xff] %vm687, %v674
      %702 = vst.msk [vmem:[%s274 + $0x70] sm:$0xff] %vm687, %v679
      %703 = vst.msk [vmem:[%s274 + $0x78] sm:$0xff] %vm687, %v684
      %v704 = vld [vmem:[%s3] sm:$0xff]
      %v705 = vld [vmem:[%s3 + $0x8] sm:$0xff]
      %v706 = vld [vmem:[%s3 + $0x10] sm:$0xff]
      %v707 = vld [vmem:[%s3 + $0x18] sm:$0xff]
      %v708 = vld [vmem:[%s3 + $0x20] sm:$0xff]
      %v709 = vld [vmem:[%s3 + $0x28] sm:$0xff]
      %v710 = vld [vmem:[%s3 + $0x30] sm:$0xff]
      %v711 = vld [vmem:[%s3 + $0x38] sm:$0xff]
      %712 = vmatprep.subr.mxu0 0.0
      %713 = vmatpush1.msra.mxu0 %v704
      %714 = vmatprep.subr.mxu0 0.0
      %715 = vmatpush1.msra.mxu0 %v705
      %716 = vmatprep.subr.mxu0 0.0
      %717 = vmatpush1.msra.mxu0 %v706
      %718 = vmatprep.subr.mxu0 0.0
      %719 = vmatpush1.msra.mxu0 %v707
      %720 = vmatprep.subr.mxu0 0.0
      %721 = vmatpush1.msra.mxu0 %v708
      %722 = vmatprep.subr.mxu0 0.0
      %723 = vmatpush1.msra.mxu0 %v709
      %724 = vmatprep.subr.mxu0 0.0
      %725 = vmatpush1.msra.mxu0 %v710
      %726 = vmatprep.subr.mxu0 0.0
      %727 = vmatpush1.msra.mxu0 %v711
      %728 = vmatprep.subr.mxu0 0.0
      %729 = vmatpush1.msra.mxu0 0.0
      %730 = vmatprep.subr.mxu0 0.0
      %731 = vmatpush1.msra.mxu0 0.0
      %732 = vmatprep.subr.mxu0 0.0
      %733 = vmatpush1.msra.mxu0 0.0
      %734 = vmatprep.subr.mxu0 0.0
      %735 = vmatpush1.msra.mxu0 0.0
      %736 = vmatprep.subr.mxu0 0.0
      %737 = vmatpush1.msra.mxu0 0.0
      %738 = vmatprep.subr.mxu0 0.0
      %739 = vmatpush1.msra.mxu0 0.0
      %740 = vmatprep.subr.mxu0 0.0
      %741 = vmatpush1.msra.mxu0 0.0
      %742 = vmatprep.subr.mxu0 0.0
      %743 = vmatpush1.msra.mxu0 0.0
      %744 = vmatprep.subr.mxu0 0.0
      %745 = vmatpush1.msra.mxu0 0.0
      %746 = vmatprep.subr.mxu0 0.0
      %747 = vmatpush1.msra.mxu0 0.0
      %748 = vmatprep.subr.mxu0 0.0
      %749 = vmatpush1.msra.mxu0 0.0
      %750 = vmatprep.subr.mxu0 0.0
      %751 = vmatpush1.msra.mxu0 0.0
      %752 = vmatprep.subr.mxu0 0.0
      %753 = vmatpush1.msra.mxu0 0.0
      %754 = vmatprep.subr.mxu0 0.0
      %755 = vmatpush1.msra.mxu0 0.0
      %756 = vmatprep.subr.mxu0 0.0
      %757 = vmatpush1.msra.mxu0 0.0
      %758 = vmatprep.subr.mxu0 0.0
      %759 = vmatpush1.msra.mxu0 0.0
      %760 = vmatprep.subr.mxu0 0.0
      %761 = vmatpush1.msra.mxu0 0.0
      %762 = vmatprep.subr.mxu0 0.0
      %763 = vmatpush1.msra.mxu0 0.0
      %764 = vmatprep.subr.mxu0 0.0
      %765 = vmatpush1.msra.mxu0 0.0
      %766 = vmatprep.subr.mxu0 0.0
      %767 = vmatpush1.msra.mxu0 0.0
      %768 = vmatprep.subr.mxu0 0.0
      %769 = vmatpush1.msra.mxu0 0.0
      %770 = vmatprep.subr.mxu0 0.0
      %771 = vmatpush1.msra.mxu0 0.0
      %772 = vmatprep.subr.mxu0 0.0
      %773 = vmatpush1.msra.mxu0 0.0
      %774 = vmatprep.subr.mxu0 0.0
      %775 = vmatpush1.msra.mxu0 0.0
      %776 = vmatprep.mubr.f32.mxu0 0.0
      %777 = vmatmul.mubr.f32.gmra.mrb[0].mxu0 %v308
      %v778 = vpop.f32.mrb[0].mxu0
      %v779 = vadd.f32 0.0, %v778
      %v780 = vpop.f32.mrb[0].mxu0
      %781 = vmatprep.mubr.f32.mxu0 0.0
      %782 = vmatmul.mubr.f32.gmra.mrb[0].mxu0 %v311
      %v783 = vpop.f32.mrb[0].mxu0
      %v784 = vadd.f32 0.0, %v783
      %v785 = vpop.f32.mrb[0].mxu0
      %786 = vmatprep.mubr.f32.mxu0 0.0
      %787 = vmatmul.mubr.f32.gmra.mrb[0].mxu0 %v314
      %v788 = vpop.f32.mrb[0].mxu0
      %v789 = vadd.f32 0.0, %v788
      %v790 = vpop.f32.mrb[0].mxu0
      %791 = vmatprep.mubr.f32.mxu0 0.0
      %792 = vmatmul.mubr.f32.gmra.mrb[0].mxu0 %v317
      %v793 = vpop.f32.mrb[0].mxu0
      %v794 = vadd.f32 0.0, %v793
      %v795 = vpop.f32.mrb[0].mxu0
      %796 = vmatprep.mubr.f32.mxu0 0.0
      %797 = vmatmul.mubr.f32.gmra.mrb[0].mxu0 %v320
      %v798 = vpop.f32.mrb[0].mxu0
      %v799 = vadd.f32 0.0, %v798
      %v800 = vpop.f32.mrb[0].mxu0
      %801 = vmatprep.mubr.f32.mxu0 0.0
      %802 = vmatmul.mubr.f32.gmra.mrb[0].mxu0 %v323
      %v803 = vpop.f32.mrb[0].mxu0
      %v804 = vadd.f32 0.0, %v803
      %v805 = vpop.f32.mrb[0].mxu0
      %806 = vmatprep.mubr.f32.mxu0 0.0
      %807 = vmatmul.mubr.f32.gmra.mrb[0].mxu0 %v326
      %v808 = vpop.f32.mrb[0].mxu0
      %v809 = vadd.f32 0.0, %v808
      %v810 = vpop.f32.mrb[0].mxu0
      %811 = vmatprep.mubr.f32.mxu0 0.0
      %812 = vmatmul.mubr.f32.gmra.mrb[0].mxu0 %v329
      %v813 = vpop.f32.mrb[0].mxu0
      %v814 = vadd.f32 0.0, %v813
      %v815 = vpop.f32.mrb[0].mxu0
      %816 = vmatprep.mubr.f32.mxu0 0.0
      %817 = vmatmul.mubr.f32.gmra.mrb[0].mxu0 %v332
      %v818 = vpop.f32.mrb[0].mxu0
      %v819 = vadd.f32 0.0, %v818
      %v820 = vpop.f32.mrb[0].mxu0
      %821 = vmatprep.mubr.f32.mxu0 0.0
      %822 = vmatmul.mubr.f32.gmra.mrb[0].mxu0 %v335
      %v823 = vpop.f32.mrb[0].mxu0
      %v824 = vadd.f32 0.0, %v823
      %v825 = vpop.f32.mrb[0].mxu0
      %826 = vmatprep.mubr.f32.mxu0 0.0
      %827 = vmatmul.mubr.f32.gmra.mrb[0].mxu0 %v338
      %v828 = vpop.f32.mrb[0].mxu0
      %v829 = vadd.f32 0.0, %v828
      %v830 = vpop.f32.mrb[0].mxu0
      %831 = vmatprep.mubr.f32.mxu0 0.0
      %832 = vmatmul.mubr.f32.gmra.mrb[0].mxu0 %v341
      %v833 = vpop.f32.mrb[0].mxu0
      %v834 = vadd.f32 0.0, %v833
      %v835 = vpop.f32.mrb[0].mxu0
      %836 = vmatprep.mubr.f32.mxu0 0.0
      %837 = vmatmul.mubr.f32.gmra.mrb[0].mxu0 %v344
      %v838 = vpop.f32.mrb[0].mxu0
      %v839 = vadd.f32 0.0, %v838
      %v840 = vpop.f32.mrb[0].mxu0
      %841 = vmatprep.mubr.f32.mxu0 0.0
      %842 = vmatmul.mubr.f32.gmra.mrb[0].mxu0 %v347
      %v843 = vpop.f32.mrb[0].mxu0
      %v844 = vadd.f32 0.0, %v843
      %v845 = vpop.f32.mrb[0].mxu0
      %846 = vmatprep.mubr.f32.mxu0 0.0
      %847 = vmatmul.mubr.f32.gmra.mrb[0].mxu0 %v350
      %v848 = vpop.f32.mrb[0].mxu0
      %v849 = vadd.f32 0.0, %v848
      %v850 = vpop.f32.mrb[0].mxu0
      %851 = vmatprep.mubr.f32.mxu0 0.0
      %852 = vmatmul.mubr.f32.gmra.mrb[0].mxu0 %v353
      %v853 = vpop.f32.mrb[0].mxu0
      %v854 = vadd.f32 0.0, %v853
      %v855 = vpop.f32.mrb[0].mxu0
      %856 = vdwg.mxu0
      %857 = vst.msk [vmem:[%s280] sm:$0xff] %vm687, %v779
      %858 = vst.msk [vmem:[%s280 + $0x8] sm:$0xff] %vm687, %v784
      %859 = vst.msk [vmem:[%s280 + $0x10] sm:$0xff] %vm687, %v789
      %860 = vst.msk [vmem:[%s280 + $0x18] sm:$0xff] %vm687, %v794
      %861 = vst.msk [vmem:[%s280 + $0x20] sm:$0xff] %vm687, %v799
      %862 = vst.msk [vmem:[%s280 + $0x28] sm:$0xff] %vm687, %v804
      %863 = vst.msk [vmem:[%s280 + $0x30] sm:$0xff] %vm687, %v809
      %864 = vst.msk [vmem:[%s280 + $0x38] sm:$0xff] %vm687, %v814
      %865 = vst.msk [vmem:[%s280 + $0x40] sm:$0xff] %vm687, %v819
      %866 = vst.msk [vmem:[%s280 + $0x48] sm:$0xff] %vm687, %v824
      %867 = vst.msk [vmem:[%s280 + $0x50] sm:$0xff] %vm687, %v829
      %868 = vst.msk [vmem:[%s280 + $0x58] sm:$0xff] %vm687, %v834
      %869 = vst.msk [vmem:[%s280 + $0x60] sm:$0xff] %vm687, %v839
      %870 = vst.msk [vmem:[%s280 + $0x68] sm:$0xff] %vm687, %v844
      %871 = vst.msk [vmem:[%s280 + $0x70] sm:$0xff] %vm687, %v849
      %872 = vst.msk [vmem:[%s280 + $0x78] sm:$0xff] %vm687, %v854
      %s873 = smul.u32 16, %s18
      %p874 = scmp.lt.s32.totalorder %s873, 31
      %s875 = scalar_select %p874, %s873, 31
      %s876 = smul.addr %s875, 8
      %s877 = scalar_lea.vmem %s4, %s876
      %s878 = smul.u32 16, %s18
      %p879 = scmp.lt.s32.totalorder %s878, 31
      %s880 = scalar_select %p879, %s878, 31
      %s881 = smul.addr %s880, 8
      %s882 = scalar_lea.vmem %s5, %s881
      %s883 = smul.u32 16, %s18
      %p884 = scmp.lt.s32.totalorder %s883, 31
      %s885 = scalar_select %p884, %s883, 31
      %s886 = smul.addr %s885, 8
      %s887 = scalar_lea.vmem %s6, %s886
      // Predicated region
      $region37: #{gat_forward.6} parent=35 // pred_check
        %p888 = pneg %p125
      $region38: #{gat_forward.6} parent=35 // pred_check_branch
        %890 = sbr.rel (%p888) target = $region40
      $region39: #{gat_forward.6} parent=35 // pred_region
        %s891 = smul.u32 16, %s18
      $region40: #{gat_forward.6} parent=35 // pred_fallthru
        _
      // Predicated region
      $region41: #{gat_forward.6} parent=35 // pred_check
        %p892 = pneg %p151
      $region42: #{gat_forward.6} parent=35 // pred_check_branch
        %894 = sbr.rel (%p892) target = $region44
      $region43: #{gat_forward.6} parent=35 // pred_region
        %s895 = smul.u32 16, %s18
      $region44: #{gat_forward.6} parent=35 // pred_fallthru
        _
      // Predicated region
      $region45: #{gat_forward.6} parent=35 // pred_check
        %p896 = pneg %p177
      $region46: #{gat_forward.6} parent=35 // pred_check_branch
        %898 = sbr.rel (%p896) target = $region48
      $region47: #{gat_forward.6} parent=35 // pred_region
        %s899 = smul.u32 16, %s18
      $region48: #{gat_forward.6} parent=35 // pred_fallthru
        _
    $region36: #{gat_forward.6} parent=5 // pred_fallthru
      _
    %p900 = scmp.le.s32.totalorder 2, %s13
    // Predicated region
    $region49: #{gat_forward.6} parent=5 // pred_check
      %p901 = pneg %p900
    $region50: #{gat_forward.6} parent=5 // pred_check_branch
      %903 = sbr.rel (%p901) target = $region52
    $region51: #{gat_forward.6} parent=5 // pred_region
      %s904 = ssub.s32 %s13, 2
      // Predicated region
      $region53: #{gat_forward.6} parent=51 // pred_check
        %p905 = pneg %p131
      $region54: #{gat_forward.6} parent=51 // pred_check_branch
        %907 = sbr.rel (%p905) target = $region56
      $region55: #{gat_forward.6} parent=51 // pred_region
        %s908 = smul.u32 16, %s19
        %p909 = scmp.lt.s32.totalorder %s908, 31
        %s910 = scalar_select %p909, %s908, 31
        %s911 = smul.addr %s910, 8
        %s912 = scalar_lea.vmem %s4, %s911
      $region56: #{gat_forward.6} parent=51 // pred_fallthru
        _
      // Predicated region
      $region57: #{gat_forward.6} parent=51 // pred_check
        %p913 = pneg %p157
      $region58: #{gat_forward.6} parent=51 // pred_check_branch
        %915 = sbr.rel (%p913) target = $region60
      $region59: #{gat_forward.6} parent=51 // pred_region
        %s916 = smul.u32 16, %s19
        %p917 = scmp.lt.s32.totalorder %s916, 31
        %s918 = scalar_select %p917, %s916, 31
        %s919 = smul.addr %s918, 8
        %s920 = scalar_lea.vmem %s5, %s919
      $region60: #{gat_forward.6} parent=51 // pred_fallthru
        _
      // Predicated region
      $region61: #{gat_forward.6} parent=51 // pred_check
        %p921 = pneg %p183
      $region62: #{gat_forward.6} parent=51 // pred_check_branch
        %923 = sbr.rel (%p921) target = $region64
      $region63: #{gat_forward.6} parent=51 // pred_region
        %s924 = smul.u32 16, %s19
        %p925 = scmp.lt.s32.totalorder %s924, 31
        %s926 = scalar_select %p925, %s924, 31
        %s927 = smul.addr %s926, 8
        %s928 = scalar_lea.vmem %s6, %s927
      $region64: #{gat_forward.6} parent=51 // pred_fallthru
        _
    $region52: #{gat_forward.6} parent=5 // pred_fallthru
      _
  $region6: #{gat_forward.6} parent=0 // loop_footer
    %s17 = sadd.s32 1, %s13
  $region7: #{gat_forward.6} parent=0 // loop_footer_branch
    %12 = sbr.rel target = $region3
  $region8: #{gat_forward.6} parent=0 // loop_exit
    _

// kernel: gat_forward.7
$region0: #{gat_forward.7}
  #allocation0 [shape = 'u32[]', space=smem, size = 0x4, offset = 0x4, fixed_abs, tag = 'smem constant byte address 0x4 - core index']
  #allocation1 [shape = 'u32[144,128]{1,0:T(1,128)}', space=vmem, size = 0x12000, scoped, tag = 'internal scratch']
  %s0 = inlined_call_operand.vmem [shape: s8[256,256], index: 0, kind: input, shape index: {}]
  %s1 = inlined_call_operand.vmem [shape: f32[1,256,9], index: 1, kind: input, shape index: {}]
  %s2 = inlined_call_operand.vmem [shape: f32[256,1], index: 2, kind: input, shape index: {}]
  %s3 = inlined_call_operand.vmem [shape: f32[1,256], index: 3, kind: input, shape index: {}]
  %s4 = inlined_call_operand.vmem [shape: f32[256,8], index: 4, kind: output, shape index: {}]
  %s5 = sld [smem:[#allocation0]]
  $region49: #{gat_forward.7} parent=0
    _
  %s7 = ssub.s32 1, %s5
  %s8 = scalar_select 0, %s7, %s5
  loop: start=0, step=1, limit=4
  $region2: #{gat_forward.7} parent=0 // loop_pre_header
    _
  $region3: #{gat_forward.7} parent=0 // loop_header
    %s10 = sphi 0, %s14
    %p11 = scmp.ge.s32.totalorder %s10, 4
    %s20 = sphi 0, %s22
    %s23 = sphi 0, %s20
    %s24 = sphi 0, %s23
    %s40 = sphi 0, %s24
    %s44 = sphi 0, %s44
    %s46 = sphi 0, %s44
    %s47 = sphi 0, %s46
    %s61 = sphi 0, %s47
    %s67 = sphi 0, %s69
    %s70 = sphi 0, %s67
    %s71 = sphi 0, %s70
    %s87 = sphi 0, %s71
    %s91 = sphi 0, %s91
    %s93 = sphi 0, %s91
    %s94 = sphi 0, %s93
    %s108 = sphi 0, %s94
    %s114 = sphi 0, %s116
    %s117 = sphi 0, %s114
    %s118 = sphi 0, %s117
    %s134 = sphi 0, %s118
  $region4: #{gat_forward.7} parent=0 // loop_header_branch
    %13 = sbr.rel (%p11) target = $region8
  $region5: #{gat_forward.7} parent=0 // loop_body
    %s15 = ssub.s32 %s10, 1
    %s16 = ssub.s32 %s10, 2
    %s17 = sadd.s32 %s10, 1
    %s18 = ssub.s32 %s10, %s17
    %p19 = scmp.eq.s32.totalorder %s18, 0
    %s21 = sadd.s32 %s20, 1
    %s22 = scalar_select %p19, %s20, %s21
    %p25 = pneg %p19
    %p26 = scmp.eq.s32.totalorder %s10, 1
    %p27 = por %p25, %p26
    %p28 = scmp.ne.s32.totalorder %s20, %s23
    %p29 = scmp.eq.s32.totalorder %s10, 0
    %p30 = por %p28, %p29
    %p31 = scmp.ne.s32.totalorder %s20, %s23
    %p32 = scmp.eq.s32.totalorder %s15, 1
    %p33 = por %p31, %p32
    %p34 = scmp.ne.s32.totalorder %s23, %s24
    %p35 = scmp.eq.s32.totalorder %s15, 0
    %p36 = por %p34, %p35
    %p37 = scmp.ne.s32.totalorder %s23, %s24
    %p38 = scmp.eq.s32.totalorder %s16, 1
    %p39 = por %p37, %p38
    %p41 = scmp.ne.s32.totalorder %s24, %s40
    %p42 = scmp.eq.s32.totalorder %s16, 0
    %p43 = por %p41, %p42
    %s45 = sadd.s32 %s44, 1
    %p48 = scmp.eq.s32.totalorder %s10, 1
    %p49 = scmp.ne.s32.totalorder %s44, %s46
    %p50 = scmp.eq.s32.totalorder %s10, 0
    %p51 = por %p49, %p50
    %p52 = scmp.ne.s32.totalorder %s44, %s46
    %p53 = scmp.eq.s32.totalorder %s15, 1
    %p54 = por %p52, %p53
    %p55 = scmp.ne.s32.totalorder %s46, %s47
    %p56 = scmp.eq.s32.totalorder %s15, 0
    %p57 = por %p55, %p56
    %p58 = scmp.ne.s32.totalorder %s46, %s47
    %p59 = scmp.eq.s32.totalorder %s16, 1
    %p60 = por %p58, %p59
    %p62 = scmp.ne.s32.totalorder %s47, %s61
    %p63 = scmp.eq.s32.totalorder %s16, 0
    %p64 = por %p62, %p63
    %s65 = ssub.s32 %s10, %s17
    %p66 = scmp.eq.s32.totalorder %s65, 0
    %s68 = sadd.s32 %s67, 1
    %s69 = scalar_select %p66, %s67, %s68
    %p72 = pneg %p66
    %p73 = scmp.eq.s32.totalorder %s10, 1
    %p74 = por %p72, %p73
    %p75 = scmp.ne.s32.totalorder %s67, %s70
    %p76 = scmp.eq.s32.totalorder %s10, 0
    %p77 = por %p75, %p76
    %p78 = scmp.ne.s32.totalorder %s67, %s70
    %p79 = scmp.eq.s32.totalorder %s15, 1
    %p80 = por %p78, %p79
    %p81 = scmp.ne.s32.totalorder %s70, %s71
    %p82 = scmp.eq.s32.totalorder %s15, 0
    %p83 = por %p81, %p82
    %p84 = scmp.ne.s32.totalorder %s70, %s71
    %p85 = scmp.eq.s32.totalorder %s16, 1
    %p86 = por %p84, %p85
    %p88 = scmp.ne.s32.totalorder %s71, %s87
    %p89 = scmp.eq.s32.totalorder %s16, 0
    %p90 = por %p88, %p89
    %s92 = sadd.s32 %s91, 1
    %p95 = scmp.eq.s32.totalorder %s10, 1
    %p96 = scmp.ne.s32.totalorder %s91, %s93
    %p97 = scmp.eq.s32.totalorder %s10, 0
    %p98 = por %p96, %p97
    %p99 = scmp.ne.s32.totalorder %s91, %s93
    %p100 = scmp.eq.s32.totalorder %s15, 1
    %p101 = por %p99, %p100
    %p102 = scmp.ne.s32.totalorder %s93, %s94
    %p103 = scmp.eq.s32.totalorder %s15, 0
    %p104 = por %p102, %p103
    %p105 = scmp.ne.s32.totalorder %s93, %s94
    %p106 = scmp.eq.s32.totalorder %s16, 1
    %p107 = por %p105, %p106
    %p109 = scmp.ne.s32.totalorder %s94, %s108
    %p110 = scmp.eq.s32.totalorder %s16, 0
    %p111 = por %p109, %p110
    %s112 = ssub.s32 %s10, %s17
    %p113 = scmp.eq.s32.totalorder %s112, 0
    %s115 = sadd.s32 %s114, 1
    %s116 = scalar_select %p113, %s114, %s115
    %p119 = pneg %p113
    %p120 = scmp.eq.s32.totalorder %s10, 1
    %p121 = por %p119, %p120
    %p122 = scmp.ne.s32.totalorder %s114, %s117
    %p123 = scmp.eq.s32.totalorder %s10, 0
    %p124 = por %p122, %p123
    %p125 = scmp.ne.s32.totalorder %s114, %s117
    %p126 = scmp.eq.s32.totalorder %s15, 1
    %p127 = por %p125, %p126
    %p128 = scmp.ne.s32.totalorder %s117, %s118
    %p129 = scmp.eq.s32.totalorder %s15, 0
    %p130 = por %p128, %p129
    %p131 = scmp.ne.s32.totalorder %s117, %s118
    %p132 = scmp.eq.s32.totalorder %s16, 1
    %p133 = por %p131, %p132
    %p135 = scmp.ne.s32.totalorder %s118, %s134
    %p136 = scmp.eq.s32.totalorder %s16, 0
    %p137 = por %p135, %p136
    %p138 = scmp.le.s32.totalorder 1, %s10
    %p139 = scmp.lt.s32.totalorder %s10, 3
    %p140 = pnand %p138, %p139
    %p141 = pneg %p140
    // Predicated region
    $region9: #{gat_forward.7} parent=5 // pred_check
      _
    $region10: #{gat_forward.7} parent=5 // pred_check_branch
      %143 = sbr.rel (%p140) target = $region12
    $region11: #{gat_forward.7} parent=5 // pred_region
      %s144 = ssub.s32 %s10, 1
      // Predicated region
      $region13: #{gat_forward.7} parent=11 // pred_check
        %p145 = pneg %p57
      $region14: #{gat_forward.7} parent=11 // pred_check_branch
        %147 = sbr.rel (%p145) target = $region16
      $region15: #{gat_forward.7} parent=11 // pred_region
        _
      $region16: #{gat_forward.7} parent=11 // pred_fallthru
        _
      // Predicated region
      $region17: #{gat_forward.7} parent=11 // pred_check
        %p148 = pneg %p104
      $region18: #{gat_forward.7} parent=11 // pred_check_branch
        %150 = sbr.rel (%p148) target = $region20
      $region19: #{gat_forward.7} parent=11 // pred_region
        _
      $region20: #{gat_forward.7} parent=11 // pred_fallthru
        _
    $region12: #{gat_forward.7} parent=5 // pred_fallthru
      _
    %p151 = scmp.lt.s32.totalorder %s10, 2
    // Predicated region
    $region21: #{gat_forward.7} parent=5 // pred_check
      %p152 = pneg %p151
    $region22: #{gat_forward.7} parent=5 // pred_check_branch
      %154 = sbr.rel (%p152) target = $region24
    $region23: #{gat_forward.7} parent=5 // pred_region
      // Predicated region
      $region25: #{gat_forward.7} parent=23 // pred_check
        %p155 = pneg %p30
      $region26: #{gat_forward.7} parent=23 // pred_check_branch
        %157 = sbr.rel (%p155) target = $region28
      $region27: #{gat_forward.7} parent=23 // pred_region
        %s158 = smul.u32 4, %s10
        %p159 = scmp.lt.s32.totalorder %s158, 7
        %s160 = scalar_select %p159, %s158, 7
        %s161 = smul.addr %s160, 2
        %s162 = smul.addr %s161, 8
        %s163 = scalar_lea.vmem %s0, %s162
        %s164 = smul.u32 4, %s10
      $region28: #{gat_forward.7} parent=23 // pred_fallthru
        _
      // Predicated region
      $region29: #{gat_forward.7} parent=23 // pred_check
        %p165 = pneg %p77
      $region30: #{gat_forward.7} parent=23 // pred_check_branch
        %167 = sbr.rel (%p165) target = $region32
      $region31: #{gat_forward.7} parent=23 // pred_region
        %s168 = smul.u32 16, %s10
        %p169 = scmp.lt.s32.totalorder %s168, 31
        %s170 = scalar_select %p169, %s168, 31
        %s171 = smul.addr %s170, 8
        %s172 = scalar_lea.vmem %s2, %s171
        %s173 = smul.u32 16, %s10
      $region32: #{gat_forward.7} parent=23 // pred_fallthru
        _
    $region24: #{gat_forward.7} parent=5 // pred_fallthru
      _
    %p174 = scmp.le.s32.totalorder 1, %s10
    %p175 = scmp.lt.s32.totalorder %s10, 3
    %p176 = pnand %p174, %p175
    %p177 = pneg %p176
    // Predicated region
    $region33: #{gat_forward.7} parent=5 // pred_check
      _
    $region34: #{gat_forward.7} parent=5 // pred_check_branch
      %179 = sbr.rel (%p176) target = $region36
    $region35: #{gat_forward.7} parent=5 // pred_region
      %s180 = ssub.s32 %s10, 1
      %s181 = smul.u32 4, %s15
      %p182 = scmp.lt.s32.totalorder %s181, 7
      %s183 = scalar_select %p182, %s181, 7
      %s184 = smul.addr %s183, 2
      %s185 = smul.addr %s184, 8
      %s186 = scalar_lea.vmem %s0, %s185
      %p187 = pneg %p36
      %p188 = pneg %p33
      %p189 = pneg %p57
      %p190 = pneg %p54
      %s191 = smul.u32 16, %s15
      %p192 = scmp.lt.s32.totalorder %s191, 31
      %s193 = scalar_select %p192, %s191, 31
      %s194 = smul.addr %s193, 8
      %s195 = scalar_lea.vmem %s2, %s194
      %p196 = pneg %p83
      %p197 = pneg %p80
      %p198 = pneg %p104
      %p199 = pneg %p101
      %p200 = pneg %p130
      %p201 = pneg %p127
      %s202 = smul.u32 16, %s15
      %p203 = scmp.lt.s32.totalorder %s202, 31
      %s204 = scalar_select %p203, %s202, 31
      %s205 = smul.addr %s204, 8
      %s206 = scalar_lea.vmem %s4, %s205
      %s207 = smul.u32 4, %s15
      %p208 = scmp.lt.s32.totalorder %s207, 7
      %s209 = scalar_select %p208, %s207, 7
      %s210 = smul.addr %s209, 2
      %s211 = smul.addr %s210, 8
      %s212 = scalar_lea.vmem %s0, %s211
      %s213 = smul.u32 4, %s15
      %s214 = smul.u32 16, %s15
      %p215 = scmp.lt.s32.totalorder %s214, 31
      %s216 = scalar_select %p215, %s214, 31
      %s217 = smul.addr %s216, 8
      %s218 = scalar_lea.vmem %s2, %s217
      %s219 = smul.u32 16, %s15
      %s220 = smul.u32 16, %s15
      %p221 = scmp.lt.s32.totalorder %s220, 31
      %s222 = scalar_select %p221, %s220, 31
      %s223 = smul.addr %s222, 8
      %s224 = scalar_lea.vmem %s4, %s223
      %s225 = smul.u32 16, %s15
      %v226 = vld [vmem:[%s212] sm:$0xff]
      %v227 = vld [vmem:[%s212 + $0x8] sm:$0xff]
      %v228 = vld [vmem:[%s212 + $0x10] sm:$0xff]
      %v229 = vld [vmem:[%s212 + $0x18] sm:$0xff]
      %v230 = vld [vmem:[%s212 + $0x20] sm:$0xff]
      %v231 = vld [vmem:[%s212 + $0x28] sm:$0xff]
      %v232 = vld [vmem:[%s212 + $0x30] sm:$0xff]
      %v233 = vld [vmem:[%s212 + $0x38] sm:$0xff]
      %v234 = vunpack.c.0.s8 %v226
      %v235 = vunpack.c.0.s8 %v227
      %v236 = vunpack.c.1.s8 %v226
      %v237 = vunpack.c.1.s8 %v227
      %v238 = vunpack.c.2.s8 %v226
      %v239 = vunpack.c.2.s8 %v227
      %v240 = vunpack.c.3.s8 %v226
      %v241 = vunpack.c.3.s8 %v227
      %v242 = vunpack.c.0.s8 %v228
      %v243 = vunpack.c.0.s8 %v229
      %v244 = vunpack.c.1.s8 %v228
      %v245 = vunpack.c.1.s8 %v229
      %v246 = vunpack.c.2.s8 %v228
      %v247 = vunpack.c.2.s8 %v229
      %v248 = vunpack.c.3.s8 %v228
      %v249 = vunpack.c.3.s8 %v229
      %v250 = vunpack.c.0.s8 %v230
      %v251 = vunpack.c.0.s8 %v231
      %v252 = vunpack.c.1.s8 %v230
      %v253 = vunpack.c.1.s8 %v231
      %v254 = vunpack.c.2.s8 %v230
      %v255 = vunpack.c.2.s8 %v231
      %v256 = vunpack.c.3.s8 %v230
      %v257 = vunpack.c.3.s8 %v231
      %v258 = vunpack.c.0.s8 %v232
      %v259 = vunpack.c.0.s8 %v233
      %v260 = vunpack.c.1.s8 %v232
      %v261 = vunpack.c.1.s8 %v233
      %v262 = vunpack.c.2.s8 %v232
      %v263 = vunpack.c.2.s8 %v233
      %v264 = vunpack.c.3.s8 %v232
      %v265 = vunpack.c.3.s8 %v233
      %vm266 = vcmp.gt.s32.totalorder %v234, 0
      %vm267 = vcmp.gt.s32.totalorder %v235, 0
      %vm268 = vcmp.gt.s32.totalorder %v236, 0
      %vm269 = vcmp.gt.s32.totalorder %v237, 0
      %vm270 = vcmp.gt.s32.totalorder %v238, 0
      %vm271 = vcmp.gt.s32.totalorder %v239, 0
      %vm272 = vcmp.gt.s32.totalorder %v240, 0
      %vm273 = vcmp.gt.s32.totalorder %v241, 0
      %vm274 = vcmp.gt.s32.totalorder %v242, 0
      %vm275 = vcmp.gt.s32.totalorder %v243, 0
      %vm276 = vcmp.gt.s32.totalorder %v244, 0
      %vm277 = vcmp.gt.s32.totalorder %v245, 0
      %vm278 = vcmp.gt.s32.totalorder %v246, 0
      %vm279 = vcmp.gt.s32.totalorder %v247, 0
      %vm280 = vcmp.gt.s32.totalorder %v248, 0
      %vm281 = vcmp.gt.s32.totalorder %v249, 0
      %vm282 = vcmp.gt.s32.totalorder %v250, 0
      %vm283 = vcmp.gt.s32.totalorder %v251, 0
      %vm284 = vcmp.gt.s32.totalorder %v252, 0
      %vm285 = vcmp.gt.s32.totalorder %v253, 0
      %vm286 = vcmp.gt.s32.totalorder %v254, 0
      %vm287 = vcmp.gt.s32.totalorder %v255, 0
      %vm288 = vcmp.gt.s32.totalorder %v256, 0
      %vm289 = vcmp.gt.s32.totalorder %v257, 0
      %vm290 = vcmp.gt.s32.totalorder %v258, 0
      %vm291 = vcmp.gt.s32.totalorder %v259, 0
      %vm292 = vcmp.gt.s32.totalorder %v260, 0
      %vm293 = vcmp.gt.s32.totalorder %v261, 0
      %vm294 = vcmp.gt.s32.totalorder %v262, 0
      %vm295 = vcmp.gt.s32.totalorder %v263, 0
      %vm296 = vcmp.gt.s32.totalorder %v264, 0
      %vm297 = vcmp.gt.s32.totalorder %v265, 0
      %v298 = vsel %vm266, 0.0, -9e+15
      %v299 = vsel %vm267, 0.0, -9e+15
      %v300 = vsel %vm268, 0.0, -9e+15
      %v301 = vsel %vm269, 0.0, -9e+15
      %v302 = vsel %vm270, 0.0, -9e+15
      %v303 = vsel %vm271, 0.0, -9e+15
      %v304 = vsel %vm272, 0.0, -9e+15
      %v305 = vsel %vm273, 0.0, -9e+15
      %v306 = vsel %vm274, 0.0, -9e+15
      %v307 = vsel %vm275, 0.0, -9e+15
      %v308 = vsel %vm276, 0.0, -9e+15
      %v309 = vsel %vm277, 0.0, -9e+15
      %v310 = vsel %vm278, 0.0, -9e+15
      %v311 = vsel %vm279, 0.0, -9e+15
      %v312 = vsel %vm280, 0.0, -9e+15
      %v313 = vsel %vm281, 0.0, -9e+15
      %v314 = vsel %vm282, 0.0, -9e+15
      %v315 = vsel %vm283, 0.0, -9e+15
      %v316 = vsel %vm284, 0.0, -9e+15
      %v317 = vsel %vm285, 0.0, -9e+15
      %v318 = vsel %vm286, 0.0, -9e+15
      %v319 = vsel %vm287, 0.0, -9e+15
      %v320 = vsel %vm288, 0.0, -9e+15
      %v321 = vsel %vm289, 0.0, -9e+15
      %v322 = vsel %vm290, 0.0, -9e+15
      %v323 = vsel %vm291, 0.0, -9e+15
      %v324 = vsel %vm292, 0.0, -9e+15
      %v325 = vsel %vm293, 0.0, -9e+15
      %v326 = vsel %vm294, 0.0, -9e+15
      %v327 = vsel %vm295, 0.0, -9e+15
      %v328 = vsel %vm296, 0.0, -9e+15
      %v329 = vsel %vm297, 0.0, -9e+15
      %v330 = vld [vmem:[%s218] sm:$0xff]
      %v331 = vld [vmem:[%s218 + $0x8] sm:$0xff]
      %v332 = vld [vmem:[%s218 + $0x10] sm:$0xff]
      %v333 = vld [vmem:[%s218 + $0x18] sm:$0xff]
      %v334 = vld [vmem:[%s218 + $0x20] sm:$0xff]
      %v335 = vld [vmem:[%s218 + $0x28] sm:$0xff]
      %v336 = vld [vmem:[%s218 + $0x30] sm:$0xff]
      %v337 = vld [vmem:[%s218 + $0x38] sm:$0xff]
      %v338 = vld [vmem:[%s218 + $0x40] sm:$0xff]
      %v339 = vld [vmem:[%s218 + $0x48] sm:$0xff]
      %v340 = vld [vmem:[%s218 + $0x50] sm:$0xff]
      %v341 = vld [vmem:[%s218 + $0x58] sm:$0xff]
      %v342 = vld [vmem:[%s218 + $0x60] sm:$0xff]
      %v343 = vld [vmem:[%s218 + $0x68] sm:$0xff]
      %v344 = vld [vmem:[%s218 + $0x70] sm:$0xff]
      %v345 = vld [vmem:[%s218 + $0x78] sm:$0xff]
      %v346 = vld [vmem:[%s3] sm:$0x3]
      %348 = vset.pattern.permute.xlu0 0
      %349 = vperm.xlu0 %348, %v330
      %v350 = vpop.permute.xlu0 %349
      %353 = vset.pattern.permute.xlu0 0
      %354 = vperm.xlu0 %353, %v331
      %v355 = vpop.permute.xlu0 %354
      %358 = vset.pattern.permute.xlu0 0
      %359 = vperm.xlu0 %358, %v332
      %v360 = vpop.permute.xlu0 %359
      %363 = vset.pattern.permute.xlu0 0
      %364 = vperm.xlu0 %363, %v333
      %v365 = vpop.permute.xlu0 %364
      %368 = vset.pattern.permute.xlu0 0
      %369 = vperm.xlu0 %368, %v334
      %v370 = vpop.permute.xlu0 %369
      %373 = vset.pattern.permute.xlu0 0
      %374 = vperm.xlu0 %373, %v335
      %v375 = vpop.permute.xlu0 %374
      %378 = vset.pattern.permute.xlu0 0
      %379 = vperm.xlu0 %378, %v336
      %v380 = vpop.permute.xlu0 %379
      %383 = vset.pattern.permute.xlu0 0
      %384 = vperm.xlu0 %383, %v337
      %v385 = vpop.permute.xlu0 %384
      %388 = vset.pattern.permute.xlu0 0
      %389 = vperm.xlu0 %388, %v338
      %v390 = vpop.permute.xlu0 %389
      %393 = vset.pattern.permute.xlu0 0
      %394 = vperm.xlu0 %393, %v339
      %v395 = vpop.permute.xlu0 %394
      %398 = vset.pattern.permute.xlu0 0
      %399 = vperm.xlu0 %398, %v340
      %v400 = vpop.permute.xlu0 %399
      %403 = vset.pattern.permute.xlu0 0
      %404 = vperm.xlu0 %403, %v341
      %v405 = vpop.permute.xlu0 %404
      %408 = vset.pattern.permute.xlu0 0
      %409 = vperm.xlu0 %408, %v342
      %v410 = vpop.permute.xlu0 %409
      %413 = vset.pattern.permute.xlu0 0
      %414 = vperm.xlu0 %413, %v343
      %v415 = vpop.permute.xlu0 %414
      %418 = vset.pattern.permute.xlu0 0
      %419 = vperm.xlu0 %418, %v344
      %v420 = vpop.permute.xlu0 %419
      %423 = vset.pattern.permute.xlu0 0
      %424 = vperm.xlu0 %423, %v345
      %v425 = vpop.permute.xlu0 %424
      %v428 = vlaneseq
      %v429 = vshrl.u32 %v428, 7
      %v430 = vsub.s32 0, %v429
      %v431 = vrot.slane %v346, %v430
      %v432 = vlaneseq
      %v433 = vshrl.u32 %v432, 7
      %v434 = vsub.s32 1, %v433
      %v435 = vrot.slane %v346, %v434
      %v438 = vadd.f32 %v350, %v431
      %v439 = vadd.f32 %v350, %v435
      %v440 = vadd.f32 %v355, %v431
      %v441 = vadd.f32 %v355, %v435
      %v442 = vadd.f32 %v360, %v431
      %v443 = vadd.f32 %v360, %v435
      %v444 = vadd.f32 %v365, %v431
      %v445 = vadd.f32 %v365, %v435
      %v446 = vadd.f32 %v370, %v431
      %v447 = vadd.f32 %v370, %v435
      %v448 = vadd.f32 %v375, %v431
      %v449 = vadd.f32 %v375, %v435
      %v450 = vadd.f32 %v380, %v431
      %v451 = vadd.f32 %v380, %v435
      %v452 = vadd.f32 %v385, %v431
      %v453 = vadd.f32 %v385, %v435
      %v454 = vadd.f32 %v390, %v431
      %v455 = vadd.f32 %v390, %v435
      %v456 = vadd.f32 %v395, %v431
      %v457 = vadd.f32 %v395, %v435
      %v458 = vadd.f32 %v400, %v431
      %v459 = vadd.f32 %v400, %v435
      %v460 = vadd.f32 %v405, %v431
      %v461 = vadd.f32 %v405, %v435
      %v462 = vadd.f32 %v410, %v431
      %v463 = vadd.f32 %v410, %v435
      %v464 = vadd.f32 %v415, %v431
      %v465 = vadd.f32 %v415, %v435
      %v466 = vadd.f32 %v420, %v431
      %v467 = vadd.f32 %v420, %v435
      %v468 = vadd.f32 %v425, %v431
      %v469 = vadd.f32 %v425, %v435
      %vm470 = vcmp.gt.f32.partialorder %v438, 0.0
      %vm471 = vcmp.gt.f32.partialorder %v439, 0.0
      %vm472 = vcmp.gt.f32.partialorder %v440, 0.0
      %vm473 = vcmp.gt.f32.partialorder %v441, 0.0
      %vm474 = vcmp.gt.f32.partialorder %v442, 0.0
      %vm475 = vcmp.gt.f32.partialorder %v443, 0.0
      %vm476 = vcmp.gt.f32.partialorder %v444, 0.0
      %vm477 = vcmp.gt.f32.partialorder %v445, 0.0
      %vm478 = vcmp.gt.f32.partialorder %v446, 0.0
      %vm479 = vcmp.gt.f32.partialorder %v447, 0.0
      %vm480 = vcmp.gt.f32.partialorder %v448, 0.0
      %vm481 = vcmp.gt.f32.partialorder %v449, 0.0
      %vm482 = vcmp.gt.f32.partialorder %v450, 0.0
      %vm483 = vcmp.gt.f32.partialorder %v451, 0.0
      %vm484 = vcmp.gt.f32.partialorder %v452, 0.0
      %vm485 = vcmp.gt.f32.partialorder %v453, 0.0
      %vm486 = vcmp.gt.f32.partialorder %v454, 0.0
      %vm487 = vcmp.gt.f32.partialorder %v455, 0.0
      %vm488 = vcmp.gt.f32.partialorder %v456, 0.0
      %vm489 = vcmp.gt.f32.partialorder %v457, 0.0
      %vm490 = vcmp.gt.f32.partialorder %v458, 0.0
      %vm491 = vcmp.gt.f32.partialorder %v459, 0.0
      %vm492 = vcmp.gt.f32.partialorder %v460, 0.0
      %vm493 = vcmp.gt.f32.partialorder %v461, 0.0
      %vm494 = vcmp.gt.f32.partialorder %v462, 0.0
      %vm495 = vcmp.gt.f32.partialorder %v463, 0.0
      %vm496 = vcmp.gt.f32.partialorder %v464, 0.0
      %vm497 = vcmp.gt.f32.partialorder %v465, 0.0
      %vm498 = vcmp.gt.f32.partialorder %v466, 0.0
      %vm499 = vcmp.gt.f32.partialorder %v467, 0.0
      %vm500 = vcmp.gt.f32.partialorder %v468, 0.0
      %vm501 = vcmp.gt.f32.partialorder %v469, 0.0
      %v502 = vmul.f32 %v438, 0.2
      %v503 = vmul.f32 %v439, 0.2
      %v504 = vmul.f32 %v440, 0.2
      %v505 = vmul.f32 %v441, 0.2
      %v506 = vmul.f32 %v442, 0.2
      %v507 = vmul.f32 %v443, 0.2
      %v508 = vmul.f32 %v444, 0.2
      %v509 = vmul.f32 %v445, 0.2
      %v510 = vmul.f32 %v446, 0.2
      %v511 = vmul.f32 %v447, 0.2
      %v512 = vmul.f32 %v448, 0.2
      %v513 = vmul.f32 %v449, 0.2
      %v514 = vmul.f32 %v450, 0.2
      %v515 = vmul.f32 %v451, 0.2
      %v516 = vmul.f32 %v452, 0.2
      %v517 = vmul.f32 %v453, 0.2
      %v518 = vmul.f32 %v454, 0.2
      %v519 = vmul.f32 %v455, 0.2
      %v520 = vmul.f32 %v456, 0.2
      %v521 = vmul.f32 %v457, 0.2
      %v522 = vmul.f32 %v458, 0.2
      %v523 = vmul.f32 %v459, 0.2
      %v524 = vmul.f32 %v460, 0.2
      %v525 = vmul.f32 %v461, 0.2
      %v526 = vmul.f32 %v462, 0.2
      %v527 = vmul.f32 %v463, 0.2
      %v528 = vmul.f32 %v464, 0.2
      %v529 = vmul.f32 %v465, 0.2
      %v530 = vmul.f32 %v466, 0.2
      %v531 = vmul.f32 %v467, 0.2
      %v532 = vmul.f32 %v468, 0.2
      %v533 = vmul.f32 %v469, 0.2
      %v534 = vsel %vm470, %v438, %v502
      %v535 = vsel %vm471, %v439, %v503
      %v536 = vsel %vm472, %v440, %v504
      %v537 = vsel %vm473, %v441, %v505
      %v538 = vsel %vm474, %v442, %v506
      %v539 = vsel %vm475, %v443, %v507
      %v540 = vsel %vm476, %v444, %v508
      %v541 = vsel %vm477, %v445, %v509
      %v542 = vsel %vm478, %v446, %v510
      %v543 = vsel %vm479, %v447, %v511
      %v544 = vsel %vm480, %v448, %v512
      %v545 = vsel %vm481, %v449, %v513
      %v546 = vsel %vm482, %v450, %v514
      %v547 = vsel %vm483, %v451, %v515
      %v548 = vsel %vm484, %v452, %v516
      %v549 = vsel %vm485, %v453, %v517
      %v550 = vsel %vm486, %v454, %v518
      %v551 = vsel %vm487, %v455, %v519
      %v552 = vsel %vm488, %v456, %v520
      %v553 = vsel %vm489, %v457, %v521
      %v554 = vsel %vm490, %v458, %v522
      %v555 = vsel %vm491, %v459, %v523
      %v556 = vsel %vm492, %v460, %v524
      %v557 = vsel %vm493, %v461, %v525
      %v558 = vsel %vm494, %v462, %v526
      %v559 = vsel %vm495, %v463, %v527
      %v560 = vsel %vm496, %v464, %v528
      %v561 = vsel %vm497, %v465, %v529
      %v562 = vsel %vm498, %v466, %v530
      %v563 = vsel %vm499, %v467, %v531
      %v564 = vsel %vm500, %v468, %v532
      %v565 = vsel %vm501, %v469, %v533
      %v566 = vadd.f32 %v534, %v298
      %v567 = vadd.f32 %v535, %v299
      %v568 = vadd.f32 %v536, %v300
      %v569 = vadd.f32 %v537, %v301
      %v570 = vadd.f32 %v538, %v302
      %v571 = vadd.f32 %v539, %v303
      %v572 = vadd.f32 %v540, %v304
      %v573 = vadd.f32 %v541, %v305
      %v574 = vadd.f32 %v542, %v306
      %v575 = vadd.f32 %v543, %v307
      %v576 = vadd.f32 %v544, %v308
      %v577 = vadd.f32 %v545, %v309
      %v578 = vadd.f32 %v546, %v310
      %v579 = vadd.f32 %v547, %v311
      %v580 = vadd.f32 %v548, %v312
      %v581 = vadd.f32 %v549, %v313
      %v582 = vadd.f32 %v550, %v314
      %v583 = vadd.f32 %v551, %v315
      %v584 = vadd.f32 %v552, %v316
      %v585 = vadd.f32 %v553, %v317
      %v586 = vadd.f32 %v554, %v318
      %v587 = vadd.f32 %v555, %v319
      %v588 = vadd.f32 %v556, %v320
      %v589 = vadd.f32 %v557, %v321
      %v590 = vadd.f32 %v558, %v322
      %v591 = vadd.f32 %v559, %v323
      %v592 = vadd.f32 %v560, %v324
      %v593 = vadd.f32 %v561, %v325
      %v594 = vadd.f32 %v562, %v326
      %v595 = vadd.f32 %v563, %v327
      %v596 = vadd.f32 %v564, %v328
      %v597 = vadd.f32 %v565, %v329
      %v598 = vmax.f32 %v566, %v567
      %599 = vmax.xlane.f32.xlu0 %v598
      %v600 = vpop.xlane.xlu0 %599
      %v601 = vmax.f32 %v568, %v569
      %602 = vmax.xlane.f32.xlu0 %v601
      %v603 = vpop.xlane.xlu0 %602
      %v604 = vmax.f32 %v570, %v571
      %605 = vmax.xlane.f32.xlu0 %v604
      %v606 = vpop.xlane.xlu0 %605
      %v607 = vmax.f32 %v572, %v573
      %608 = vmax.xlane.f32.xlu0 %v607
      %v609 = vpop.xlane.xlu0 %608
      %v610 = vmax.f32 %v574, %v575
      %611 = vmax.xlane.f32.xlu0 %v610
      %v612 = vpop.xlane.xlu0 %611
      %v613 = vmax.f32 %v576, %v577
      %614 = vmax.xlane.f32.xlu0 %v613
      %v615 = vpop.xlane.xlu0 %614
      %v616 = vmax.f32 %v578, %v579
      %617 = vmax.xlane.f32.xlu0 %v616
      %v618 = vpop.xlane.xlu0 %617
      %v619 = vmax.f32 %v580, %v581
      %620 = vmax.xlane.f32.xlu0 %v619
      %v621 = vpop.xlane.xlu0 %620
      %v622 = vmax.f32 %v582, %v583
      %623 = vmax.xlane.f32.xlu0 %v622
      %v624 = vpop.xlane.xlu0 %623
      %v625 = vmax.f32 %v584, %v585
      %626 = vmax.xlane.f32.xlu0 %v625
      %v627 = vpop.xlane.xlu0 %626
      %v628 = vmax.f32 %v586, %v587
      %629 = vmax.xlane.f32.xlu0 %v628
      %v630 = vpop.xlane.xlu0 %629
      %v631 = vmax.f32 %v588, %v589
      %632 = vmax.xlane.f32.xlu0 %v631
      %v633 = vpop.xlane.xlu0 %632
      %v634 = vmax.f32 %v590, %v591
      %635 = vmax.xlane.f32.xlu0 %v634
      %v636 = vpop.xlane.xlu0 %635
      %v637 = vmax.f32 %v592, %v593
      %638 = vmax.xlane.f32.xlu0 %v637
      %v639 = vpop.xlane.xlu0 %638
      %v640 = vmax.f32 %v594, %v595
      %641 = vmax.xlane.f32.xlu0 %v640
      %v642 = vpop.xlane.xlu0 %641
      %v643 = vmax.f32 %v596, %v597
      %644 = vmax.xlane.f32.xlu0 %v643
      %v645 = vpop.xlane.xlu0 %644
      %v646 = vsub.f32 %v566, %v600
      %v647 = vsub.f32 %v567, %v600
      %v648 = vsub.f32 %v568, %v603
      %v649 = vsub.f32 %v569, %v603
      %v650 = vsub.f32 %v570, %v606
      %v651 = vsub.f32 %v571, %v606
      %v652 = vsub.f32 %v572, %v609
      %v653 = vsub.f32 %v573, %v609
      %v654 = vsub.f32 %v574, %v612
      %v655 = vsub.f32 %v575, %v612
      %v656 = vsub.f32 %v576, %v615
      %v657 = vsub.f32 %v577, %v615
      %v658 = vsub.f32 %v578, %v618
      %v659 = vsub.f32 %v579, %v618
      %v660 = vsub.f32 %v580, %v621
      %v661 = vsub.f32 %v581, %v621
      %v662 = vsub.f32 %v582, %v624
      %v663 = vsub.f32 %v583, %v624
      %v664 = vsub.f32 %v584, %v627
      %v665 = vsub.f32 %v585, %v627
      %v666 = vsub.f32 %v586, %v630
      %v667 = vsub.f32 %v587, %v630
      %v668 = vsub.f32 %v588, %v633
      %v669 = vsub.f32 %v589, %v633
      %v670 = vsub.f32 %v590, %v636
      %v671 = vsub.f32 %v591, %v636
      %v672 = vsub.f32 %v592, %v639
      %v673 = vsub.f32 %v593, %v639
      %v674 = vsub.f32 %v594, %v642
      %v675 = vsub.f32 %v595, %v642
      %v676 = vsub.f32 %v596, %v645
      %v677 = vsub.f32 %v597, %v645
      %v678 = vmul.f32 %v646, 1.442695
      %v679 = vpow.pop %v678
      %v680 = vmul.f32 %v647, 1.442695
      %v681 = vpow.pop %v680
      %v682 = vmul.f32 %v648, 1.442695
      %v683 = vpow.pop %v682
      %v684 = vmul.f32 %v649, 1.442695
      %v685 = vpow.pop %v684
      %v686 = vmul.f32 %v650, 1.442695
      %v687 = vpow.pop %v686
      %v688 = vmul.f32 %v651, 1.442695
      %v689 = vpow.pop %v688
      %v690 = vmul.f32 %v652, 1.442695
      %v691 = vpow.pop %v690
      %v692 = vmul.f32 %v653, 1.442695
      %v693 = vpow.pop %v692
      %v694 = vmul.f32 %v654, 1.442695
      %v695 = vpow.pop %v694
      %v696 = vmul.f32 %v655, 1.442695
      %v697 = vpow.pop %v696
      %v698 = vmul.f32 %v656, 1.442695
      %v699 = vpow.pop %v698
      %v700 = vmul.f32 %v657, 1.442695
      %v701 = vpow.pop %v700
      %v702 = vmul.f32 %v658, 1.442695
      %v703 = vpow.pop %v702
      %v704 = vmul.f32 %v659, 1.442695
      %v705 = vpow.pop %v704
      %v706 = vmul.f32 %v660, 1.442695
      %v707 = vpow.pop %v706
      %v708 = vmul.f32 %v661, 1.442695
      %v709 = vpow.pop %v708
      %v710 = vmul.f32 %v662, 1.442695
      %v711 = vpow.pop %v710
      %v712 = vmul.f32 %v663, 1.442695
      %v713 = vpow.pop %v712
      %v714 = vmul.f32 %v664, 1.442695
      %v715 = vpow.pop %v714
      %v716 = vmul.f32 %v665, 1.442695
      %v717 = vpow.pop %v716
      %v718 = vmul.f32 %v666, 1.442695
      %v719 = vpow.pop %v718
      %v720 = vmul.f32 %v667, 1.442695
      %v721 = vpow.pop %v720
      %v722 = vmul.f32 %v668, 1.442695
      %v723 = vpow.pop %v722
      %v724 = vmul.f32 %v669, 1.442695
      %v725 = vpow.pop %v724
      %v726 = vmul.f32 %v670, 1.442695
      %v727 = vpow.pop %v726
      %v728 = vmul.f32 %v671, 1.442695
      %v729 = vpow.pop %v728
      %v730 = vmul.f32 %v672, 1.442695
      %v731 = vpow.pop %v730
      %v732 = vmul.f32 %v673, 1.442695
      %v733 = vpow.pop %v732
      %v734 = vmul.f32 %v674, 1.442695
      %v735 = vpow.pop %v734
      %v736 = vmul.f32 %v675, 1.442695
      %v737 = vpow.pop %v736
      %v738 = vmul.f32 %v676, 1.442695
      %v739 = vpow.pop %v738
      %v740 = vmul.f32 %v677, 1.442695
      %v741 = vpow.pop %v740
      %v742 = vld [vmem:[%s1] sm:$0xff]
      %v743 = vld [vmem:[%s1 + $0x8] sm:$0xff]
      %v744 = vld [vmem:[%s1 + $0x10] sm:$0xff]
      %v745 = vld [vmem:[%s1 + $0x18] sm:$0xff]
      %v746 = vld [vmem:[%s1 + $0x20] sm:$0xff]
      %v747 = vld [vmem:[%s1 + $0x28] sm:$0xff]
      %v748 = vld [vmem:[%s1 + $0x30] sm:$0xff]
      %v749 = vld [vmem:[%s1 + $0x38] sm:$0xff]
      %v750 = vld [vmem:[%s1 + $0x40] sm:$0xff]
      %v751 = vld [vmem:[%s1 + $0x48] sm:$0xff]
      %v752 = vld [vmem:[%s1 + $0x50] sm:$0xff]
      %v753 = vld [vmem:[%s1 + $0x58] sm:$0xff]
      %v754 = vld [vmem:[%s1 + $0x60] sm:$0xff]
      %v755 = vld [vmem:[%s1 + $0x68] sm:$0xff]
      %v756 = vld [vmem:[%s1 + $0x70] sm:$0xff]
      %v757 = vld [vmem:[%s1 + $0x78] sm:$0xff]
      %v758 = vld [vmem:[%s1 + $0x80] sm:$0xff]
      %v759 = vld [vmem:[%s1 + $0x88] sm:$0xff]
      %v760 = vld [vmem:[%s1 + $0x90] sm:$0xff]
      %v761 = vld [vmem:[%s1 + $0x98] sm:$0xff]
      %v762 = vld [vmem:[%s1 + $0xa0] sm:$0xff]
      %v763 = vld [vmem:[%s1 + $0xa8] sm:$0xff]
      %v764 = vld [vmem:[%s1 + $0xb0] sm:$0xff]
      %v765 = vld [vmem:[%s1 + $0xb8] sm:$0xff]
      %v766 = vld [vmem:[%s1 + $0xc0] sm:$0xff]
      %v767 = vld [vmem:[%s1 + $0xc8] sm:$0xff]
      %v768 = vld [vmem:[%s1 + $0xd0] sm:$0xff]
      %v769 = vld [vmem:[%s1 + $0xd8] sm:$0xff]
      %v770 = vld [vmem:[%s1 + $0xe0] sm:$0xff]
      %v771 = vld [vmem:[%s1 + $0xe8] sm:$0xff]
      %v772 = vld [vmem:[%s1 + $0xf0] sm:$0xff]
      %v773 = vld [vmem:[%s1 + $0xf8] sm:$0xff]
      %774 = vmatprep.subr.mxu0 0.0
      %775 = vmatpush1.msra.mxu0 %v742
      %776 = vmatprep.subr.mxu0 0.0
      %777 = vmatpush1.msra.mxu0 %v743
      %778 = vmatprep.subr.mxu0 0.0
      %779 = vmatpush1.msra.mxu0 %v744
      %780 = vmatprep.subr.mxu0 0.0
      %781 = vmatpush1.msra.mxu0 %v745
      %782 = vmatprep.subr.mxu0 0.0
      %783 = vmatpush1.msra.mxu0 %v746
      %784 = vmatprep.subr.mxu0 0.0
      %785 = vmatpush1.msra.mxu0 %v747
      %786 = vmatprep.subr.mxu0 0.0
      %787 = vmatpush1.msra.mxu0 %v748
      %788 = vmatprep.subr.mxu0 0.0
      %789 = vmatpush1.msra.mxu0 %v749
      %790 = vmatprep.subr.mxu0 0.0
      %791 = vmatpush1.msra.mxu0 %v750
      %792 = vmatprep.subr.mxu0 0.0
      %793 = vmatpush1.msra.mxu0 %v751
      %794 = vmatprep.subr.mxu0 0.0
      %795 = vmatpush1.msra.mxu0 %v752
      %796 = vmatprep.subr.mxu0 0.0
      %797 = vmatpush1.msra.mxu0 %v753
      %798 = vmatprep.subr.mxu0 0.0
      %799 = vmatpush1.msra.mxu0 %v754
      %800 = vmatprep.subr.mxu0 0.0
      %801 = vmatpush1.msra.mxu0 %v755
      %802 = vmatprep.subr.mxu0 0.0
      %803 = vmatpush1.msra.mxu0 %v756
      %804 = vmatprep.subr.mxu0 0.0
      %805 = vmatpush1.msra.mxu0 %v757
      %806 = vmatprep.subr.mxu0 0.0
      %807 = vmatpush1.msra.mxu0 %v758
      %808 = vmatprep.subr.mxu0 0.0
      %809 = vmatpush1.msra.mxu0 %v759
      %810 = vmatprep.subr.mxu0 0.0
      %811 = vmatpush1.msra.mxu0 %v760
      %812 = vmatprep.subr.mxu0 0.0
      %813 = vmatpush1.msra.mxu0 %v761
      %814 = vmatprep.subr.mxu0 0.0
      %815 = vmatpush1.msra.mxu0 %v762
      %816 = vmatprep.subr.mxu0 0.0
      %817 = vmatpush1.msra.mxu0 %v763
      %818 = vmatprep.subr.mxu0 0.0
      %819 = vmatpush1.msra.mxu0 %v764
      %820 = vmatprep.subr.mxu0 0.0
      %821 = vmatpush1.msra.mxu0 %v765
      %822 = vmatprep.subr.mxu0 0.0
      %823 = vmatpush1.msra.mxu0 %v766
      %824 = vmatprep.subr.mxu0 0.0
      %825 = vmatpush1.msra.mxu0 %v767
      %826 = vmatprep.subr.mxu0 0.0
      %827 = vmatpush1.msra.mxu0 %v768
      %828 = vmatprep.subr.mxu0 0.0
      %829 = vmatpush1.msra.mxu0 %v769
      %830 = vmatprep.subr.mxu0 0.0
      %831 = vmatpush1.msra.mxu0 %v770
      %832 = vmatprep.subr.mxu0 0.0
      %833 = vmatpush1.msra.mxu0 %v771
      %834 = vmatprep.subr.mxu0 0.0
      %835 = vmatpush1.msra.mxu0 %v772
      %836 = vmatprep.subr.mxu0 0.0
      %837 = vmatpush1.msra.mxu0 %v773
      %838 = vmatprep.mubr.f32.mxu0 %v681
      %839 = vmatmul.mubr.f32.gmra.mrb[0].mxu0 %v679
      %v840 = vpop.f32.mrb[0].mxu0
      %v841 = vadd.f32 0.0, %v840
      %v842 = vpop.f32.mrb[0].mxu0
      %843 = vmatprep.mubr.f32.mxu0 %v685
      %844 = vmatmul.mubr.f32.gmra.mrb[0].mxu0 %v683
      %v845 = vpop.f32.mrb[0].mxu0
      %v846 = vadd.f32 0.0, %v845
      %v847 = vpop.f32.mrb[0].mxu0
      %848 = vmatprep.mubr.f32.mxu0 %v689
      %849 = vmatmul.mubr.f32.gmra.mrb[0].mxu0 %v687
      %v850 = vpop.f32.mrb[0].mxu0
      %v851 = vadd.f32 0.0, %v850
      %v852 = vpop.f32.mrb[0].mxu0
      %853 = vmatprep.mubr.f32.mxu0 %v693
      %854 = vmatmul.mubr.f32.gmra.mrb[0].mxu0 %v691
      %v855 = vpop.f32.mrb[0].mxu0
      %v856 = vadd.f32 0.0, %v855
      %v857 = vpop.f32.mrb[0].mxu0
      %858 = vmatprep.mubr.f32.mxu0 %v697
      %859 = vmatmul.mubr.f32.gmra.mrb[0].mxu0 %v695
      %v860 = vpop.f32.mrb[0].mxu0
      %v861 = vadd.f32 0.0, %v860
      %v862 = vpop.f32.mrb[0].mxu0
      %863 = vmatprep.mubr.f32.mxu0 %v701
      %864 = vmatmul.mubr.f32.gmra.mrb[0].mxu0 %v699
      %v865 = vpop.f32.mrb[0].mxu0
      %v866 = vadd.f32 0.0, %v865
      %v867 = vpop.f32.mrb[0].mxu0
      %868 = vmatprep.mubr.f32.mxu0 %v705
      %869 = vmatmul.mubr.f32.gmra.mrb[0].mxu0 %v703
      %v870 = vpop.f32.mrb[0].mxu0
      %v871 = vadd.f32 0.0, %v870
      %v872 = vpop.f32.mrb[0].mxu0
      %873 = vmatprep.mubr.f32.mxu0 %v709
      %874 = vmatmul.mubr.f32.gmra.mrb[0].mxu0 %v707
      %v875 = vpop.f32.mrb[0].mxu0
      %v876 = vadd.f32 0.0, %v875
      %v877 = vpop.f32.mrb[0].mxu0
      %878 = vmatprep.mubr.f32.mxu0 %v713
      %879 = vmatmul.mubr.f32.gmra.mrb[0].mxu0 %v711
      %v880 = vpop.f32.mrb[0].mxu0
      %v881 = vadd.f32 0.0, %v880
      %v882 = vpop.f32.mrb[0].mxu0
      %883 = vmatprep.mubr.f32.mxu0 %v717
      %884 = vmatmul.mubr.f32.gmra.mrb[0].mxu0 %v715
      %v885 = vpop.f32.mrb[0].mxu0
      %v886 = vadd.f32 0.0, %v885
      %v887 = vpop.f32.mrb[0].mxu0
      %888 = vmatprep.mubr.f32.mxu0 %v721
      %889 = vmatmul.mubr.f32.gmra.mrb[0].mxu0 %v719
      %v890 = vpop.f32.mrb[0].mxu0
      %v891 = vadd.f32 0.0, %v890
      %v892 = vpop.f32.mrb[0].mxu0
      %893 = vmatprep.mubr.f32.mxu0 %v725
      %894 = vmatmul.mubr.f32.gmra.mrb[0].mxu0 %v723
      %v895 = vpop.f32.mrb[0].mxu0
      %v896 = vadd.f32 0.0, %v895
      %v897 = vpop.f32.mrb[0].mxu0
      %898 = vmatprep.mubr.f32.mxu0 %v729
      %899 = vmatmul.mubr.f32.gmra.mrb[0].mxu0 %v727
      %v900 = vpop.f32.mrb[0].mxu0
      %v901 = vadd.f32 0.0, %v900
      %v902 = vpop.f32.mrb[0].mxu0
      %903 = vmatprep.mubr.f32.mxu0 %v733
      %904 = vmatmul.mubr.f32.gmra.mrb[0].mxu0 %v731
      %v905 = vpop.f32.mrb[0].mxu0
      %v906 = vadd.f32 0.0, %v905
      %v907 = vpop.f32.mrb[0].mxu0
      %908 = vmatprep.mubr.f32.mxu0 %v737
      %909 = vmatmul.mubr.f32.gmra.mrb[0].mxu0 %v735
      %v910 = vpop.f32.mrb[0].mxu0
      %v911 = vadd.f32 0.0, %v910
      %v912 = vpop.f32.mrb[0].mxu0
      %913 = vmatprep.mubr.f32.mxu0 %v741
      %914 = vmatmul.mubr.f32.gmra.mrb[0].mxu0 %v739
      %v915 = vpop.f32.mrb[0].mxu0
      %v916 = vadd.f32 0.0, %v915
      %v917 = vpop.f32.mrb[0].mxu0
      %918 = vdwg.mxu0
      %v919 = vrcp.pop %v841
      %v920 = vmul.f32 1.0, %v919
      %v921 = vrcp.pop %v846
      %v922 = vmul.f32 1.0, %v921
      %v923 = vrcp.pop %v851
      %v924 = vmul.f32 1.0, %v923
      %v925 = vrcp.pop %v856
      %v926 = vmul.f32 1.0, %v925
      %v927 = vrcp.pop %v861
      %v928 = vmul.f32 1.0, %v927
      %v929 = vrcp.pop %v866
      %v930 = vmul.f32 1.0, %v929
      %v931 = vrcp.pop %v871
      %v932 = vmul.f32 1.0, %v931
      %v933 = vrcp.pop %v876
      %v934 = vmul.f32 1.0, %v933
      %v935 = vrcp.pop %v881
      %v936 = vmul.f32 1.0, %v935
      %v937 = vrcp.pop %v886
      %v938 = vmul.f32 1.0, %v937
      %v939 = vrcp.pop %v891
      %v940 = vmul.f32 1.0, %v939
      %v941 = vrcp.pop %v896
      %v942 = vmul.f32 1.0, %v941
      %v943 = vrcp.pop %v901
      %v944 = vmul.f32 1.0, %v943
      %v945 = vrcp.pop %v906
      %v946 = vmul.f32 1.0, %v945
      %v947 = vrcp.pop %v911
      %v948 = vmul.f32 1.0, %v947
      %v949 = vrcp.pop %v916
      %v950 = vmul.f32 1.0, %v949
      %952 = vset.pattern.permute.xlu0 8
      %953 = vperm.xlu0 %952, %v920
      %v954 = vpop.permute.xlu0 %953
      %957 = vset.pattern.permute.xlu0 8
      %958 = vperm.xlu0 %957, %v922
      %v959 = vpop.permute.xlu0 %958
      %962 = vset.pattern.permute.xlu0 8
      %963 = vperm.xlu0 %962, %v924
      %v964 = vpop.permute.xlu0 %963
      %967 = vset.pattern.permute.xlu0 8
      %968 = vperm.xlu0 %967, %v926
      %v969 = vpop.permute.xlu0 %968
      %972 = vset.pattern.permute.xlu0 8
      %973 = vperm.xlu0 %972, %v928
      %v974 = vpop.permute.xlu0 %973
      %977 = vset.pattern.permute.xlu0 8
      %978 = vperm.xlu0 %977, %v930
      %v979 = vpop.permute.xlu0 %978
      %982 = vset.pattern.permute.xlu0 8
      %983 = vperm.xlu0 %982, %v932
      %v984 = vpop.permute.xlu0 %983
      %987 = vset.pattern.permute.xlu0 8
      %988 = vperm.xlu0 %987, %v934
      %v989 = vpop.permute.xlu0 %988
      %992 = vset.pattern.permute.xlu0 8
      %993 = vperm.xlu0 %992, %v936
      %v994 = vpop.permute.xlu0 %993
      %997 = vset.pattern.permute.xlu0 8
      %998 = vperm.xlu0 %997, %v938
      %v999 = vpop.permute.xlu0 %998
      %1002 = vset.pattern.permute.xlu0 8
      %1003 = vperm.xlu0 %1002, %v940
      %v1004 = vpop.permute.xlu0 %1003
      %1007 = vset.pattern.permute.xlu0 8
      %1008 = vperm.xlu0 %1007, %v942
      %v1009 = vpop.permute.xlu0 %1008
      %1012 = vset.pattern.permute.xlu0 8
      %1013 = vperm.xlu0 %1012, %v944
      %v1014 = vpop.permute.xlu0 %1013
      %1017 = vset.pattern.permute.xlu0 8
      %1018 = vperm.xlu0 %1017, %v946
      %v1019 = vpop.permute.xlu0 %1018
      %1022 = vset.pattern.permute.xlu0 8
      %1023 = vperm.xlu0 %1022, %v948
      %v1024 = vpop.permute.xlu0 %1023
      %1027 = vset.pattern.permute.xlu0 8
      %1028 = vperm.xlu0 %1027, %v950
      %v1029 = vpop.permute.xlu0 %1028
      %v1031 = vmul.f32 %v841, %v954
      %v1032 = vmul.f32 %v846, %v959
      %v1033 = vmul.f32 %v851, %v964
      %v1034 = vmul.f32 %v856, %v969
      %v1035 = vmul.f32 %v861, %v974
      %v1036 = vmul.f32 %v866, %v979
      %v1037 = vmul.f32 %v871, %v984
      %v1038 = vmul.f32 %v876, %v989
      %v1039 = vmul.f32 %v881, %v994
      %v1040 = vmul.f32 %v886, %v999
      %v1041 = vmul.f32 %v891, %v1004
      %v1042 = vmul.f32 %v896, %v1009
      %v1043 = vmul.f32 %v901, %v1014
      %v1044 = vmul.f32 %v906, %v1019
      %v1045 = vmul.f32 %v911, %v1024
      %v1046 = vmul.f32 %v916, %v1029
      %vm1047 = vcmask 64512
      %1048 = vst.msk [vmem:[%s224] sm:$0xff] %vm1047, %v1031
      %1049 = vst.msk [vmem:[%s224 + $0x8] sm:$0xff] %vm1047, %v1032
      %1050 = vst.msk [vmem:[%s224 + $0x10] sm:$0xff] %vm1047, %v1033
      %1051 = vst.msk [vmem:[%s224 + $0x18] sm:$0xff] %vm1047, %v1034
      %1052 = vst.msk [vmem:[%s224 + $0x20] sm:$0xff] %vm1047, %v1035
      %1053 = vst.msk [vmem:[%s224 + $0x28] sm:$0xff] %vm1047, %v1036
      %1054 = vst.msk [vmem:[%s224 + $0x30] sm:$0xff] %vm1047, %v1037
      %1055 = vst.msk [vmem:[%s224 + $0x38] sm:$0xff] %vm1047, %v1038
      %1056 = vst.msk [vmem:[%s224 + $0x40] sm:$0xff] %vm1047, %v1039
      %1057 = vst.msk [vmem:[%s224 + $0x48] sm:$0xff] %vm1047, %v1040
      %1058 = vst.msk [vmem:[%s224 + $0x50] sm:$0xff] %vm1047, %v1041
      %1059 = vst.msk [vmem:[%s224 + $0x58] sm:$0xff] %vm1047, %v1042
      %1060 = vst.msk [vmem:[%s224 + $0x60] sm:$0xff] %vm1047, %v1043
      %1061 = vst.msk [vmem:[%s224 + $0x68] sm:$0xff] %vm1047, %v1044
      %1062 = vst.msk [vmem:[%s224 + $0x70] sm:$0xff] %vm1047, %v1045
      %1063 = vst.msk [vmem:[%s224 + $0x78] sm:$0xff] %vm1047, %v1046
      %s1064 = smul.u32 16, %s15
      %p1065 = scmp.lt.s32.totalorder %s1064, 31
      %s1066 = scalar_select %p1065, %s1064, 31
      %s1067 = smul.addr %s1066, 8
      %s1068 = scalar_lea.vmem %s4, %s1067
      // Predicated region
      $region37: #{gat_forward.7} parent=35 // pred_check
        %p1069 = pneg %p127
      $region38: #{gat_forward.7} parent=35 // pred_check_branch
        %1071 = sbr.rel (%p1069) target = $region40
      $region39: #{gat_forward.7} parent=35 // pred_region
        %s1072 = smul.u32 16, %s15
      $region40: #{gat_forward.7} parent=35 // pred_fallthru
        _
    $region36: #{gat_forward.7} parent=5 // pred_fallthru
      _
    %p1073 = scmp.le.s32.totalorder 2, %s10
    // Predicated region
    $region41: #{gat_forward.7} parent=5 // pred_check
      %p1074 = pneg %p1073
    $region42: #{gat_forward.7} parent=5 // pred_check_branch
      %1076 = sbr.rel (%p1074) target = $region44
    $region43: #{gat_forward.7} parent=5 // pred_region
      %s1077 = ssub.s32 %s10, 2
      // Predicated region
      $region45: #{gat_forward.7} parent=43 // pred_check
        %p1078 = pneg %p133
      $region46: #{gat_forward.7} parent=43 // pred_check_branch
        %1080 = sbr.rel (%p1078) target = $region48
      $region47: #{gat_forward.7} parent=43 // pred_region
        %s1081 = smul.u32 16, %s16
        %p1082 = scmp.lt.s32.totalorder %s1081, 31
        %s1083 = scalar_select %p1082, %s1081, 31
        %s1084 = smul.addr %s1083, 8
        %s1085 = scalar_lea.vmem %s4, %s1084
      $region48: #{gat_forward.7} parent=43 // pred_fallthru
        _
    $region44: #{gat_forward.7} parent=5 // pred_fallthru
      _
  $region6: #{gat_forward.7} parent=0 // loop_footer
    %s14 = sadd.s32 1, %s10
  $region7: #{gat_forward.7} parent=0 // loop_footer_branch
    %9 = sbr.rel target = $region3
  $region8: #{gat_forward.7} parent=0 // loop_exit
    _

// kernel: gat_forward.4
$region0: #{gat_forward.4}
  #allocation0 [shape = 'u32[]', space=smem, size = 0x4, offset = 0x4, fixed_abs, tag = 'smem constant byte address 0x4 - core index']
  #allocation1 [shape = 'u32[144,128]{1,0:T(1,128)}', space=vmem, size = 0x12000, scoped, tag = 'internal scratch']
  %s0 = inlined_call_operand.vmem [shape: f32[256,32], index: 0, kind: input, shape index: {}]
  %s1 = inlined_call_operand.vmem [shape: f32[4,32,16], index: 1, kind: input, shape index: {}]
  %s2 = inlined_call_operand.vmem [shape: f32[32,4], index: 2, kind: input, shape index: {}]
  %s3 = inlined_call_operand.vmem [shape: f32[32,4], index: 3, kind: input, shape index: {}]
  %s4 = inlined_call_operand.vmem [shape: bf16[4,256,17], index: 4, kind: output, shape index: {0}]
  %s5 = inlined_call_operand.vmem [shape: f32[256,4], index: 5, kind: output, shape index: {1}]
  %s6 = inlined_call_operand.vmem [shape: f32[256,4], index: 6, kind: output, shape index: {2}]
  %7 = xla_tuple %s4, %s5, %s6
  %s8 = sld [smem:[#allocation0]]
  $region102: #{gat_forward.4} parent=0
    _
  %s10 = ssub.s32 1, %s8
  %s11 = scalar_select 0, %s10, %s8
  $region1: #{gat_forward.4} parent=0
    #allocation2 [shape = 'u8[262144]{0}', space=vmem, size = 0x40000, scoped, tag = 'output window, operand 0']
    loop: start=0, step=1, limit=4
    $region2: #{gat_forward.4} parent=1 // loop_pre_header
      _
    $region3: #{gat_forward.4} parent=1 // loop_header
      %s13 = sphi 0, %s17
      %p14 = scmp.ge.s32.totalorder %s13, 4
      %s23 = sphi 0, %s25
      %s26 = sphi 0, %s23
      %s27 = sphi 0, %s26
      %s43 = sphi 0, %s27
      %s47 = sphi 0, %s47
      %s49 = sphi 0, %s47
      %s50 = sphi 0, %s49
      %s64 = sphi 0, %s50
      %s68 = sphi 0, %s68
      %s70 = sphi 0, %s68
      %s71 = sphi 0, %s70
      %s85 = sphi 0, %s71
      %s89 = sphi 0, %s89
      %s91 = sphi 0, %s89
      %s92 = sphi 0, %s91
      %s106 = sphi 0, %s92
      %s112 = sphi 0, %s114
      %s115 = sphi 0, %s112
      %s116 = sphi 0, %s115
      %s132 = sphi 0, %s116
      %s138 = sphi 0, %s140
      %s141 = sphi 0, %s138
      %s142 = sphi 0, %s141
      %s158 = sphi 0, %s142
      %s164 = sphi 0, %s166
      %s167 = sphi 0, %s164
      %s168 = sphi 0, %s167
      %s184 = sphi 0, %s168
    $region4: #{gat_forward.4} parent=1 // loop_header_branch
      %16 = sbr.rel (%p14) target = $region8
    $region5: #{gat_forward.4} parent=1 // loop_body
      %s18 = ssub.s32 %s13, 1
      %s19 = ssub.s32 %s13, 2
      %s20 = sadd.s32 %s13, 1
      %s21 = ssub.s32 %s13, %s20
      %p22 = scmp.eq.s32.totalorder %s21, 0
      %s24 = sadd.s32 %s23, 1
      %s25 = scalar_select %p22, %s23, %s24
      %p28 = pneg %p22
      %p29 = scmp.eq.s32.totalorder %s13, 1
      %p30 = por %p28, %p29
      %p31 = scmp.ne.s32.totalorder %s23, %s26
      %p32 = scmp.eq.s32.totalorder %s13, 0
      %p33 = por %p31, %p32
      %p34 = scmp.ne.s32.totalorder %s23, %s26
      %p35 = scmp.eq.s32.totalorder %s18, 1
      %p36 = por %p34, %p35
      %p37 = scmp.ne.s32.totalorder %s26, %s27
      %p38 = scmp.eq.s32.totalorder %s18, 0
      %p39 = por %p37, %p38
      %p40 = scmp.ne.s32.totalorder %s26, %s27
      %p41 = scmp.eq.s32.totalorder %s19, 1
      %p42 = por %p40, %p41
      %p44 = scmp.ne.s32.totalorder %s27, %s43
      %p45 = scmp.eq.s32.totalorder %s19, 0
      %p46 = por %p44, %p45
      %s48 = sadd.s32 %s47, 1
      %p51 = scmp.eq.s32.totalorder %s13, 1
      %p52 = scmp.ne.s32.totalorder %s47, %s49
      %p53 = scmp.eq.s32.totalorder %s13, 0
      %p54 = por %p52, %p53
      %p55 = scmp.ne.s32.totalorder %s47, %s49
      %p56 = scmp.eq.s32.totalorder %s18, 1
      %p57 = por %p55, %p56
      %p58 = scmp.ne.s32.totalorder %s49, %s50
      %p59 = scmp.eq.s32.totalorder %s18, 0
      %p60 = por %p58, %p59
      %p61 = scmp.ne.s32.totalorder %s49, %s50
      %p62 = scmp.eq.s32.totalorder %s19, 1
      %p63 = por %p61, %p62
      %p65 = scmp.ne.s32.totalorder %s50, %s64
      %p66 = scmp.eq.s32.totalorder %s19, 0
      %p67 = por %p65, %p66
      %s69 = sadd.s32 %s68, 1
      %p72 = scmp.eq.s32.totalorder %s13, 1
      %p73 = scmp.ne.s32.totalorder %s68, %s70
      %p74 = scmp.eq.s32.totalorder %s13, 0
      %p75 = por %p73, %p74
      %p76 = scmp.ne.s32.totalorder %s68, %s70
      %p77 = scmp.eq.s32.totalorder %s18, 1
      %p78 = por %p76, %p77
      %p79 = scmp.ne.s32.totalorder %s70, %s71
      %p80 = scmp.eq.s32.totalorder %s18, 0
      %p81 = por %p79, %p80
      %p82 = scmp.ne.s32.totalorder %s70, %s71
      %p83 = scmp.eq.s32.totalorder %s19, 1
      %p84 = por %p82, %p83
      %p86 = scmp.ne.s32.totalorder %s71, %s85
      %p87 = scmp.eq.s32.totalorder %s19, 0
      %p88 = por %p86, %p87
      %s90 = sadd.s32 %s89, 1
      %p93 = scmp.eq.s32.totalorder %s13, 1
      %p94 = scmp.ne.s32.totalorder %s89, %s91
      %p95 = scmp.eq.s32.totalorder %s13, 0
      %p96 = por %p94, %p95
      %p97 = scmp.ne.s32.totalorder %s89, %s91
      %p98 = scmp.eq.s32.totalorder %s18, 1
      %p99 = por %p97, %p98
      %p100 = scmp.ne.s32.totalorder %s91, %s92
      %p101 = scmp.eq.s32.totalorder %s18, 0
      %p102 = por %p100, %p101
      %p103 = scmp.ne.s32.totalorder %s91, %s92
      %p104 = scmp.eq.s32.totalorder %s19, 1
      %p105 = por %p103, %p104
      %p107 = scmp.ne.s32.totalorder %s92, %s106
      %p108 = scmp.eq.s32.totalorder %s19, 0
      %p109 = por %p107, %p108
      %s110 = ssub.s32 %s13, %s20
      %p111 = scmp.eq.s32.totalorder %s110, 0
      %s113 = sadd.s32 %s112, 1
      %s114 = scalar_select %p111, %s112, %s113
      %p117 = pneg %p111
      %p118 = scmp.eq.s32.totalorder %s13, 1
      %p119 = por %p117, %p118
      %p120 = scmp.ne.s32.totalorder %s112, %s115
      %p121 = scmp.eq.s32.totalorder %s13, 0
      %p122 = por %p120, %p121
      %p123 = scmp.ne.s32.totalorder %s112, %s115
      %p124 = scmp.eq.s32.totalorder %s18, 1
      %p125 = por %p123, %p124
      %p126 = scmp.ne.s32.totalorder %s115, %s116
      %p127 = scmp.eq.s32.totalorder %s18, 0
      %p128 = por %p126, %p127
      %p129 = scmp.ne.s32.totalorder %s115, %s116
      %p130 = scmp.eq.s32.totalorder %s19, 1
      %p131 = por %p129, %p130
      %p133 = scmp.ne.s32.totalorder %s116, %s132
      %p134 = scmp.eq.s32.totalorder %s19, 0
      %p135 = por %p133, %p134
      %s136 = ssub.s32 %s13, %s20
      %p137 = scmp.eq.s32.totalorder %s136, 0
      %s139 = sadd.s32 %s138, 1
      %s140 = scalar_select %p137, %s138, %s139
      %p143 = pneg %p137
      %p144 = scmp.eq.s32.totalorder %s13, 1
      %p145 = por %p143, %p144
      %p146 = scmp.ne.s32.totalorder %s138, %s141
      %p147 = scmp.eq.s32.totalorder %s13, 0
      %p148 = por %p146, %p147
      %p149 = scmp.ne.s32.totalorder %s138, %s141
      %p150 = scmp.eq.s32.totalorder %s18, 1
      %p151 = por %p149, %p150
      %p152 = scmp.ne.s32.totalorder %s141, %s142
      %p153 = scmp.eq.s32.totalorder %s18, 0
      %p154 = por %p152, %p153
      %p155 = scmp.ne.s32.totalorder %s141, %s142
      %p156 = scmp.eq.s32.totalorder %s19, 1
      %p157 = por %p155, %p156
      %p159 = scmp.ne.s32.totalorder %s142, %s158
      %p160 = scmp.eq.s32.totalorder %s19, 0
      %p161 = por %p159, %p160
      %s162 = ssub.s32 %s13, %s20
      %p163 = scmp.eq.s32.totalorder %s162, 0
      %s165 = sadd.s32 %s164, 1
      %s166 = scalar_select %p163, %s164, %s165
      %p169 = pneg %p163
      %p170 = scmp.eq.s32.totalorder %s13, 1
      %p171 = por %p169, %p170
      %p172 = scmp.ne.s32.totalorder %s164, %s167
      %p173 = scmp.eq.s32.totalorder %s13, 0
      %p174 = por %p172, %p173
      %p175 = scmp.ne.s32.totalorder %s164, %s167
      %p176 = scmp.eq.s32.totalorder %s18, 1
      %p177 = por %p175, %p176
      %p178 = scmp.ne.s32.totalorder %s167, %s168
      %p179 = scmp.eq.s32.totalorder %s18, 0
      %p180 = por %p178, %p179
      %p181 = scmp.ne.s32.totalorder %s167, %s168
      %p182 = scmp.eq.s32.totalorder %s19, 1
      %p183 = por %p181, %p182
      %p185 = scmp.ne.s32.totalorder %s168, %s184
      %p186 = scmp.eq.s32.totalorder %s19, 0
      %p187 = por %p185, %p186
      %p188 = scmp.le.s32.totalorder 1, %s13
      %p189 = scmp.lt.s32.totalorder %s13, 3
      %p190 = pnand %p188, %p189
      %p191 = pneg %p190
      // Predicated region
      $region9: #{gat_forward.4} parent=5 // pred_check
        _
      $region10: #{gat_forward.4} parent=5 // pred_check_branch
        %193 = sbr.rel (%p190) target = $region12
      $region11: #{gat_forward.4} parent=5 // pred_region
        %s194 = ssub.s32 %s13, 1
        // Predicated region
        $region13: #{gat_forward.4} parent=11 // pred_check
          %p195 = pneg %p60
        $region14: #{gat_forward.4} parent=11 // pred_check_branch
          %197 = sbr.rel (%p195) target = $region16
        $region15: #{gat_forward.4} parent=11 // pred_region
          _
        $region16: #{gat_forward.4} parent=11 // pred_fallthru
          _
        // Predicated region
        $region17: #{gat_forward.4} parent=11 // pred_check
          %p198 = pneg %p81
        $region18: #{gat_forward.4} parent=11 // pred_check_branch
          %200 = sbr.rel (%p198) target = $region20
        $region19: #{gat_forward.4} parent=11 // pred_region
          _
        $region20: #{gat_forward.4} parent=11 // pred_fallthru
          _
        // Predicated region
        $region21: #{gat_forward.4} parent=11 // pred_check
          %p201 = pneg %p102
        $region22: #{gat_forward.4} parent=11 // pred_check_branch
          %203 = sbr.rel (%p201) target = $region24
        $region23: #{gat_forward.4} parent=11 // pred_region
          _
        $region24: #{gat_forward.4} parent=11 // pred_fallthru
          _
      $region12: #{gat_forward.4} parent=5 // pred_fallthru
        _
      %p204 = scmp.lt.s32.totalorder %s13, 2
      // Predicated region
      $region25: #{gat_forward.4} parent=5 // pred_check
        %p205 = pneg %p204
      $region26: #{gat_forward.4} parent=5 // pred_check_branch
        %207 = sbr.rel (%p205) target = $region28
      $region27: #{gat_forward.4} parent=5 // pred_region
        // Predicated region
        $region29: #{gat_forward.4} parent=27 // pred_check
          %p208 = pneg %p33
        $region30: #{gat_forward.4} parent=27 // pred_check_branch
          %210 = sbr.rel (%p208) target = $region32
        $region31: #{gat_forward.4} parent=27 // pred_region
          %s211 = smul.u32 16, %s13
          %p212 = scmp.lt.s32.totalorder %s211, 31
          %s213 = scalar_select %p212, %s211, 31
          %s214 = smul.addr %s213, 8
          %s215 = scalar_lea.vmem %s0, %s214
          %s216 = smul.u32 16, %s13
        $region32: #{gat_forward.4} parent=27 // pred_fallthru
          _
      $region28: #{gat_forward.4} parent=5 // pred_fallthru
        _
      %p217 = scmp.le.s32.totalorder 1, %s13
      %p218 = scmp.lt.s32.totalorder %s13, 3
      %p219 = pnand %p217, %p218
      %p220 = pneg %p219
      // Predicated region
      $region33: #{gat_forward.4} parent=5 // pred_check
        _
      $region34: #{gat_forward.4} parent=5 // pred_check_branch
        %222 = sbr.rel (%p219) target = $region36
      $region35: #{gat_forward.4} parent=5 // pred_region
        %s223 = ssub.s32 %s13, 1
        %s224 = smul.u32 16, %s18
        %p225 = scmp.lt.s32.totalorder %s224, 31
        %s226 = scalar_select %p225, %s224, 31
        %s227 = smul.addr %s226, 8
        %s228 = scalar_lea.vmem %s0, %s227
        %p229 = pneg %p39
        %p230 = pneg %p36
        %p231 = pneg %p60
        %p232 = pneg %p57
        %p233 = pneg %p81
        %p234 = pneg %p78
        %p235 = pneg %p102
        %p236 = pneg %p99
        %p237 = pneg %p128
        %p238 = pneg %p125
        %s239 = sand.u32 %s115, 1
        %s240 = sand.u32 %s115, 1
        %s241 = smul.addr %s240, 256
        %s242 = scalar_lea.vmem [#allocation2], %s241
        %p243 = pneg %p154
        %p244 = pneg %p151
        %s245 = smul.u32 16, %s18
        %p246 = scmp.lt.s32.totalorder %s245, 31
        %s247 = scalar_select %p246, %s245, 31
        %s248 = smul.addr %s247, 8
        %s249 = scalar_lea.vmem %s5, %s248
        %p250 = pneg %p180
        %p251 = pneg %p177
        %s252 = smul.u32 16, %s18
        %p253 = scmp.lt.s32.totalorder %s252, 31
        %s254 = scalar_select %p253, %s252, 31
        %s255 = smul.addr %s254, 8
        %s256 = scalar_lea.vmem %s6, %s255
        %s257 = smul.u32 16, %s18
        %p258 = scmp.lt.s32.totalorder %s257, 31
        %s259 = scalar_select %p258, %s257, 31
        %s260 = smul.addr %s259, 8
        %s261 = scalar_lea.vmem %s0, %s260
        %s262 = smul.u32 16, %s18
        %s263 = smul.u32 16, %s18
        %s264 = smul.u32 16, %s18
        %p265 = scmp.lt.s32.totalorder %s264, 31
        %s266 = scalar_select %p265, %s264, 31
        %s267 = smul.addr %s266, 8
        %s268 = scalar_lea.vmem %s5, %s267
        %s269 = smul.u32 16, %s18
        %s270 = smul.u32 16, %s18
        %p271 = scmp.lt.s32.totalorder %s270, 31
        %s272 = scalar_select %p271, %s270, 31
        %s273 = smul.addr %s272, 8
        %s274 = scalar_lea.vmem %s6, %s273
        %s275 = smul.u32 16, %s18
        %v277 = vld [vmem:[%s261] sm:$0xff]
        %v278 = vld [vmem:[%s261 + $0x8] sm:$0xff]
        %v279 = vld [vmem:[%s261 + $0x10] sm:$0xff]
        %v280 = vld [vmem:[%s261 + $0x18] sm:$0xff]
        %v281 = vld [vmem:[%s261 + $0x20] sm:$0xff]
        %v282 = vld [vmem:[%s261 + $0x28] sm:$0xff]
        %v283 = vld [vmem:[%s261 + $0x30] sm:$0xff]
        %v284 = vld [vmem:[%s261 + $0x38] sm:$0xff]
        %v285 = vld [vmem:[%s261 + $0x40] sm:$0xff]
        %v286 = vld [vmem:[%s261 + $0x48] sm:$0xff]
        %v287 = vld [vmem:[%s261 + $0x50] sm:$0xff]
        %v288 = vld [vmem:[%s261 + $0x58] sm:$0xff]
        %v289 = vld [vmem:[%s261 + $0x60] sm:$0xff]
        %v290 = vld [vmem:[%s261 + $0x68] sm:$0xff]
        %v291 = vld [vmem:[%s261 + $0x70] sm:$0xff]
        %v292 = vld [vmem:[%s261 + $0x78] sm:$0xff]
        %v293 = vld [vmem:[%s1] sm:$0xff]
        %v294 = vld [vmem:[%s1 + $0x8] sm:$0xff]
        %v295 = vld [vmem:[%s1 + $0x10] sm:$0xff]
        %v296 = vld [vmem:[%s1 + $0x18] sm:$0xff]
        %vm297 = vcmask 261120
        %v299 = vsel %vm297, %v277, 0
        %v302 = vsel %vm297, %v278, 0
        %v305 = vsel %vm297, %v279, 0
        %v308 = vsel %vm297, %v280, 0
        %v311 = vsel %vm297, %v281, 0
        %v314 = vsel %vm297, %v282, 0
        %v317 = vsel %vm297, %v283, 0
        %v320 = vsel %vm297, %v284, 0
        %v323 = vsel %vm297, %v285, 0
        %v326 = vsel %vm297, %v286, 0
        %v329 = vsel %vm297, %v287, 0
        %v332 = vsel %vm297, %v288, 0
        %v335 = vsel %vm297, %v289, 0
        %v338 = vsel %vm297, %v290, 0
        %v341 = vsel %vm297, %v291, 0
        %v344 = vsel %vm297, %v292, 0
        %346 = vmatprep.subr.mxu0 0.0
        %347 = vmatpush1.msra.mxu0 %v293
        %348 = vmatprep.subr.mxu0 0.0
        %349 = vmatpush1.msra.mxu0 %v294
        %350 = vmatprep.subr.mxu0 0.0
        %351 = vmatpush1.msra.mxu0 %v295
        %352 = vmatprep.subr.mxu0 0.0
        %353 = vmatpush1.msra.mxu0 %v296
        %354 = vmatprep.subr.mxu0 0.0
        %355 = vmatpush1.msra.mxu0 0.0
        %356 = vmatprep.subr.mxu0 0.0
        %357 = vmatpush1.msra.mxu0 0.0
        %358 = vmatprep.subr.mxu0 0.0
        %359 = vmatpush1.msra.mxu0 0.0
        %360 = vmatprep.subr.mxu0 0.0
        %361 = vmatpush1.msra.mxu0 0.0
        %362 = vmatprep.subr.mxu0 0.0
        %363 = vmatpush1.msra.mxu0 0.0
        %364 = vmatprep.subr.mxu0 0.0
        %365 = vmatpush1.msra.mxu0 0.0
        %366 = vmatprep.subr.mxu0 0.0
        %367 = vmatpush1.msra.mxu0 0.0
        %368 = vmatprep.subr.mxu0 0.0
        %369 = vmatpush1.msra.mxu0 0.0
        %370 = vmatprep.subr.mxu0 0.0
        %371 = vmatpush1.msra.mxu0 0.0
        %372 = vmatprep.subr.mxu0 0.0
        %373 = vmatpush1.msra.mxu0 0.0
        %374 = vmatprep.subr.mxu0 0.0
        %375 = vmatpush1.msra.mxu0 0.0
        %376 = vmatprep.subr.mxu0 0.0
        %377 = vmatpush1.msra.mxu0 0.0
        %378 = vmatprep.subr.mxu0 0.0
        %379 = vmatpush1.msra.mxu0 0.0
        %380 = vmatprep.subr.mxu0 0.0
        %381 = vmatpush1.msra.mxu0 0.0
        %382 = vmatprep.subr.mxu0 0.0
        %383 = vmatpush1.msra.mxu0 0.0
        %384 = vmatprep.subr.mxu0 0.0
        %385 = vmatpush1.msra.mxu0 0.0
        %386 = vmatprep.subr.mxu0 0.0
        %387 = vmatpush1.msra.mxu0 0.0
        %388 = vmatprep.subr.mxu0 0.0
        %389 = vmatpush1.msra.mxu0 0.0
        %390 = vmatprep.subr.mxu0 0.0
        %391 = vmatpush1.msra.mxu0 0.0
        %392 = vmatprep.subr.mxu0 0.0
        %393 = vmatpush1.msra.mxu0 0.0
        %394 = vmatprep.subr.mxu0 0.0
        %395 = vmatpush1.msra.mxu0 0.0
        %396 = vmatprep.subr.mxu0 0.0
        %397 = vmatpush1.msra.mxu0 0.0
        %398 = vmatprep.subr.mxu0 0.0
        %399 = vmatpush1.msra.mxu0 0.0
        %400 = vmatprep.subr.mxu0 0.0
        %401 = vmatpush1.msra.mxu0 0.0
        %402 = vmatprep.subr.mxu0 0.0
        %403 = vmatpush1.msra.mxu0 0.0
        %404 = vmatprep.subr.mxu0 0.0
        %405 = vmatpush1.msra.mxu0 0.0
        %406 = vmatprep.subr.mxu0 0.0
        %407 = vmatpush1.msra.mxu0 0.0
        %408 = vmatprep.subr.mxu0 0.0
        %409 = vmatpush1.msra.mxu0 0.0
        %410 = vmatprep.mubr.f32.mxu0 0.0
        %411 = vmatmul.mubr.f32.gmra.mrb[0].mxu0 %v299
        %v412 = vpop.f32.mrb[0].mxu0
        %v413 = vadd.f32 0.0, %v412
        %v414 = vpop.f32.mrb[0].mxu0
        %415 = vmatprep.mubr.f32.mxu0 0.0
        %416 = vmatmul.mubr.f32.gmra.mrb[0].mxu0 %v302
        %v417 = vpop.f32.mrb[0].mxu0
        %v418 = vadd.f32 0.0, %v417
        %v419 = vpop.f32.mrb[0].mxu0
        %420 = vmatprep.mubr.f32.mxu0 0.0
        %421 = vmatmul.mubr.f32.gmra.mrb[0].mxu0 %v305
        %v422 = vpop.f32.mrb[0].mxu0
        %v423 = vadd.f32 0.0, %v422
        %v424 = vpop.f32.mrb[0].mxu0
        %425 = vmatprep.mubr.f32.mxu0 0.0
        %426 = vmatmul.mubr.f32.gmra.mrb[0].mxu0 %v308
        %v427 = vpop.f32.mrb[0].mxu0
        %v428 = vadd.f32 0.0, %v427
        %v429 = vpop.f32.mrb[0].mxu0
        %430 = vmatprep.mubr.f32.mxu0 0.0
        %431 = vmatmul.mubr.f32.gmra.mrb[0].mxu0 %v311
        %v432 = vpop.f32.mrb[0].mxu0
        %v433 = vadd.f32 0.0, %v432
        %v434 = vpop.f32.mrb[0].mxu0
        %435 = vmatprep.mubr.f32.mxu0 0.0
        %436 = vmatmul.mubr.f32.gmra.mrb[0].mxu0 %v314
        %v437 = vpop.f32.mrb[0].mxu0
        %v438 = vadd.f32 0.0, %v437
        %v439 = vpop.f32.mrb[0].mxu0
        %440 = vmatprep.mubr.f32.mxu0 0.0
        %441 = vmatmul.mubr.f32.gmra.mrb[0].mxu0 %v317
        %v442 = vpop.f32.mrb[0].mxu0
        %v443 = vadd.f32 0.0, %v442
        %v444 = vpop.f32.mrb[0].mxu0
        %445 = vmatprep.mubr.f32.mxu0 0.0
        %446 = vmatmul.mubr.f32.gmra.mrb[0].mxu0 %v320
        %v447 = vpop.f32.mrb[0].mxu0
        %v448 = vadd.f32 0.0, %v447
        %v449 = vpop.f32.mrb[0].mxu0
        %450 = vmatprep.mubr.f32.mxu0 0.0
        %451 = vmatmul.mubr.f32.gmra.mrb[0].mxu0 %v323
        %v452 = vpop.f32.mrb[0].mxu0
        %v453 = vadd.f32 0.0, %v452
        %v454 = vpop.f32.mrb[0].mxu0
        %455 = vmatprep.mubr.f32.mxu0 0.0
        %456 = vmatmul.mubr.f32.gmra.mrb[0].mxu0 %v326
        %v457 = vpop.f32.mrb[0].mxu0
        %v458 = vadd.f32 0.0, %v457
        %v459 = vpop.f32.mrb[0].mxu0
        %460 = vmatprep.mubr.f32.mxu0 0.0
        %461 = vmatmul.mubr.f32.gmra.mrb[0].mxu0 %v329
        %v462 = vpop.f32.mrb[0].mxu0
        %v463 = vadd.f32 0.0, %v462
        %v464 = vpop.f32.mrb[0].mxu0
        %465 = vmatprep.mubr.f32.mxu0 0.0
        %466 = vmatmul.mubr.f32.gmra.mrb[0].mxu0 %v332
        %v467 = vpop.f32.mrb[0].mxu0
        %v468 = vadd.f32 0.0, %v467
        %v469 = vpop.f32.mrb[0].mxu0
        %470 = vmatprep.mubr.f32.mxu0 0.0
        %471 = vmatmul.mubr.f32.gmra.mrb[0].mxu0 %v335
        %v472 = vpop.f32.mrb[0].mxu0
        %v473 = vadd.f32 0.0, %v472
        %v474 = vpop.f32.mrb[0].mxu0
        %475 = vmatprep.mubr.f32.mxu0 0.0
        %476 = vmatmul.mubr.f32.gmra.mrb[0].mxu0 %v338
        %v477 = vpop.f32.mrb[0].mxu0
        %v478 = vadd.f32 0.0, %v477
        %v479 = vpop.f32.mrb[0].mxu0
        %480 = vmatprep.mubr.f32.mxu0 0.0
        %481 = vmatmul.mubr.f32.gmra.mrb[0].mxu0 %v341
        %v482 = vpop.f32.mrb[0].mxu0
        %v483 = vadd.f32 0.0, %v482
        %v484 = vpop.f32.mrb[0].mxu0
        %485 = vmatprep.mubr.f32.mxu0 0.0
        %486 = vmatmul.mubr.f32.gmra.mrb[0].mxu0 %v344
        %v487 = vpop.f32.mrb[0].mxu0
        %v488 = vadd.f32 0.0, %v487
        %v489 = vpop.f32.mrb[0].mxu0
        %490 = vdwg.mxu0
        %v491 = vpack.c.bf16 %v418, %v413
        %v492 = vpack.c.bf16 %v428, %v423
        %v493 = vpack.c.bf16 %v438, %v433
        %v494 = vpack.c.bf16 %v448, %v443
        %v495 = vpack.c.bf16 %v458, %v453
        %v496 = vpack.c.bf16 %v468, %v463
        %v497 = vpack.c.bf16 %v478, %v473
        %v498 = vpack.c.bf16 %v488, %v483
        %v507 = vunpack.c.l.b16 %v491
        %v508 = vunpack.c.h.b16 %v491
        %v509 = vunpack.c.l.b16 %v492
        %v510 = vunpack.c.h.b16 %v492
        %v511 = vunpack.c.l.b16 %v493
        %v512 = vunpack.c.h.b16 %v493
        %v513 = vunpack.c.l.b16 %v494
        %v514 = vunpack.c.h.b16 %v494
        %v515 = vunpack.c.l.b16 %v495
        %v516 = vunpack.c.h.b16 %v495
        %v517 = vunpack.c.l.b16 %v496
        %v518 = vunpack.c.h.b16 %v496
        %v519 = vunpack.c.l.b16 %v497
        %v520 = vunpack.c.h.b16 %v497
        %v521 = vunpack.c.l.b16 %v498
        %v522 = vunpack.c.h.b16 %v498
        %v523 = vpack.c.b16 %v507, %v507
        %v524 = vpack.c.b16 %v508, %v508
        %v525 = vpack.c.b16 %v509, %v509
        %v526 = vpack.c.b16 %v510, %v510
        %v527 = vpack.c.b16 %v511, %v511
        %v528 = vpack.c.b16 %v512, %v512
        %v529 = vpack.c.b16 %v513, %v513
        %v530 = vpack.c.b16 %v514, %v514
        %v531 = vpack.c.b16 %v515, %v515
        %v532 = vpack.c.b16 %v516, %v516
        %v533 = vpack.c.b16 %v517, %v517
        %v534 = vpack.c.b16 %v518, %v518
        %v535 = vpack.c.b16 %v519, %v519
        %v536 = vpack.c.b16 %v520, %v520
        %v537 = vpack.c.b16 %v521, %v521
        %v538 = vpack.c.b16 %v522, %v522
        %vm555 = vcmask 125952
        %556 = vst.msk [vmem:[%s242] sm:$0xf] %vm555, %v523
        %557 = vst.msk [vmem:[%s242 + $0x4] sm:$0xf] %vm555, %v524
        %558 = vst.msk [vmem:[%s242 + $0x8] sm:$0xf] %vm555, %v525
        %559 = vst.msk [vmem:[%s242 + $0xc] sm:$0xf] %vm555, %v526
        %560 = vst.msk [vmem:[%s242 + $0x10] sm:$0xf] %vm555, %v527
        %561 = vst.msk [vmem:[%s242 + $0x14] sm:$0xf] %vm555, %v528
        %562 = vst.msk [vmem:[%s242 + $0x18] sm:$0xf] %vm555, %v529
        %563 = vst.msk [vmem:[%s242 + $0x1c] sm:$0xf] %vm555, %v530
        %564 = vst.msk [vmem:[%s242 + $0x20] sm:$0xf] %vm555, %v531
        %565 = vst.msk [vmem:[%s242 + $0x24] sm:$0xf] %vm555, %v532
        %566 = vst.msk [vmem:[%s242 + $0x28] sm:$0xf] %vm555, %v533
        %567 = vst.msk [vmem:[%s242 + $0x2c] sm:$0xf] %vm555, %v534
        %568 = vst.msk [vmem:[%s242 + $0x30] sm:$0xf] %vm555, %v535
        %569 = vst.msk [vmem:[%s242 + $0x34] sm:$0xf] %vm555, %v536
        %570 = vst.msk [vmem:[%s242 + $0x38] sm:$0xf] %vm555, %v537
        %571 = vst.msk [vmem:[%s242 + $0x3c] sm:$0xf] %vm555, %v538
        %vm572 = vcmask 134272
        %573 = vst.msk [vmem:[%s242] sm:$0xf] %vm572, 1065369472
        %574 = vst.msk [vmem:[%s242 + $0x4] sm:$0xf] %vm572, 1065369472
        %575 = vst.msk [vmem:[%s242 + $0x8] sm:$0xf] %vm572, 1065369472
        %576 = vst.msk [vmem:[%s242 + $0xc] sm:$0xf] %vm572, 1065369472
        %577 = vst.msk [vmem:[%s242 + $0x10] sm:$0xf] %vm572, 1065369472
        %578 = vst.msk [vmem:[%s242 + $0x14] sm:$0xf] %vm572, 1065369472
        %579 = vst.msk [vmem:[%s242 + $0x18] sm:$0xf] %vm572, 1065369472
        %580 = vst.msk [vmem:[%s242 + $0x1c] sm:$0xf] %vm572, 1065369472
        %581 = vst.msk [vmem:[%s242 + $0x20] sm:$0xf] %vm572, 1065369472
        %582 = vst.msk [vmem:[%s242 + $0x24] sm:$0xf] %vm572, 1065369472
        %583 = vst.msk [vmem:[%s242 + $0x28] sm:$0xf] %vm572, 1065369472
        %584 = vst.msk [vmem:[%s242 + $0x2c] sm:$0xf] %vm572, 1065369472
        %585 = vst.msk [vmem:[%s242 + $0x30] sm:$0xf] %vm572, 1065369472
        %586 = vst.msk [vmem:[%s242 + $0x34] sm:$0xf] %vm572, 1065369472
        %587 = vst.msk [vmem:[%s242 + $0x38] sm:$0xf] %vm572, 1065369472
        %588 = vst.msk [vmem:[%s242 + $0x3c] sm:$0xf] %vm572, 1065369472
        %s589 = scalar_lea.vmem %s1, 32
        %v590 = vld [vmem:[%s589] sm:$0xff]
        %v591 = vld [vmem:[%s589 + $0x8] sm:$0xff]
        %v592 = vld [vmem:[%s589 + $0x10] sm:$0xff]
        %v593 = vld [vmem:[%s589 + $0x18] sm:$0xff]
        %594 = vmatprep.subr.mxu0 0.0
        %595 = vmatpush1.msra.mxu0 %v590
        %596 = vmatprep.subr.mxu0 0.0
        %597 = vmatpush1.msra.mxu0 %v591
        %598 = vmatprep.subr.mxu0 0.0
        %599 = vmatpush1.msra.mxu0 %v592
        %600 = vmatprep.subr.mxu0 0.0
        %601 = vmatpush1.msra.mxu0 %v593
        %602 = vmatprep.subr.mxu0 0.0
        %603 = vmatpush1.msra.mxu0 0.0
        %604 = vmatprep.subr.mxu0 0.0
        %605 = vmatpush1.msra.mxu0 0.0
        %606 = vmatprep.subr.mxu0 0.0
        %607 = vmatpush1.msra.mxu0 0.0
        %608 = vmatprep.subr.mxu0 0.0
        %609 = vmatpush1.msra.mxu0 0.0
        %610 = vmatprep.subr.mxu0 0.0
        %611 = vmatpush1.msra.mxu0 0.0
        %612 = vmatprep.subr.mxu0 0.0
        %613 = vmatpush1.msra.mxu0 0.0
        %614 = vmatprep.subr.mxu0 0.0
        %615 = vmatpush1.msra.mxu0 0.0
        %616 = vmatprep.subr.mxu0 0.0
        %617 = vmatpush1.msra.mxu0 0.0
        %618 = vmatprep.subr.mxu0 0.0
        %619 = vmatpush1.msra.mxu0 0.0
        %620 = vmatprep.subr.mxu0 0.0
        %621 = vmatpush1.msra.mxu0 0.0
        %622 = vmatprep.subr.mxu0 0.0
        %623 = vmatpush1.msra.mxu0 0.0
        %624 = vmatprep.subr.mxu0 0.0
        %625 = vmatpush1.msra.mxu0 0.0
        %626 = vmatprep.subr.mxu0 0.0
        %627 = vmatpush1.msra.mxu0 0.0
        %628 = vmatprep.subr.mxu0 0.0
        %629 = vmatpush1.msra.mxu0 0.0
        %630 = vmatprep.subr.mxu0 0.0
        %631 = vmatpush1.msra.mxu0 0.0
        %632 = vmatprep.subr.mxu0 0.0
        %633 = vmatpush1.msra.mxu0 0.0
        %634 = vmatprep.subr.mxu0 0.0
        %635 = vmatpush1.msra.mxu0 0.0
        %636 = vmatprep.subr.mxu0 0.0
        %637 = vmatpush1.msra.mxu0 0.0
        %638 = vmatprep.subr.mxu0 0.0
        %639 = vmatpush1.msra.mxu0 0.0
        %640 = vmatprep.subr.mxu0 0.0
        %641 = vmatpush1.msra.mxu0 0.0
        %642 = vmatprep.subr.mxu0 0.0
        %643 = vmatpush1.msra.mxu0 0.0
        %644 = vmatprep.subr.mxu0 0.0
        %645 = vmatpush1.msra.mxu0 0.0
        %646 = vmatprep.subr.mxu0 0.0
        %647 = vmatpush1.msra.mxu0 0.0
        %648 = vmatprep.subr.mxu0 0.0
        %649 = vmatpush1.msra.mxu0 0.0
        %650 = vmatprep.subr.mxu0 0.0
        %651 = vmatpush1.msra.mxu0 0.0
        %652 = vmatprep.subr.mxu0 0.0
        %653 = vmatpush1.msra.mxu0 0.0
        %654 = vmatprep.subr.mxu0 0.0
        %655 = vmatpush1.msra.mxu0 0.0
        %656 = vmatprep.subr.mxu0 0.0
        %657 = vmatpush1.msra.mxu0 0.0
        %658 = vmatprep.mubr.f32.mxu0 0.0
        %659 = vmatmul.mubr.f32.gmra.mrb[0].mxu0 %v299
        %v660 = vpop.f32.mrb[0].mxu0
        %v661 = vadd.f32 0.0, %v660
        %v662 = vpop.f32.mrb[0].mxu0
        %663 = vmatprep.mubr.f32.mxu0 0.0
        %664 = vmatmul.mubr.f32.gmra.mrb[0].mxu0 %v302
        %v665 = vpop.f32.mrb[0].mxu0
        %v666 = vadd.f32 0.0, %v665
        %v667 = vpop.f32.mrb[0].mxu0
        %668 = vmatprep.mubr.f32.mxu0 0.0
        %669 = vmatmul.mubr.f32.gmra.mrb[0].mxu0 %v305
        %v670 = vpop.f32.mrb[0].mxu0
        %v671 = vadd.f32 0.0, %v670
        %v672 = vpop.f32.mrb[0].mxu0
        %673 = vmatprep.mubr.f32.mxu0 0.0
        %674 = vmatmul.mubr.f32.gmra.mrb[0].mxu0 %v308
        %v675 = vpop.f32.mrb[0].mxu0
        %v676 = vadd.f32 0.0, %v675
        %v677 = vpop.f32.mrb[0].mxu0
        %678 = vmatprep.mubr.f32.mxu0 0.0
        %679 = vmatmul.mubr.f32.gmra.mrb[0].mxu0 %v311
        %v680 = vpop.f32.mrb[0].mxu0
        %v681 = vadd.f32 0.0, %v680
        %v682 = vpop.f32.mrb[0].mxu0
        %683 = vmatprep.mubr.f32.mxu0 0.0
        %684 = vmatmul.mubr.f32.gmra.mrb[0].mxu0 %v314
        %v685 = vpop.f32.mrb[0].mxu0
        %v686 = vadd.f32 0.0, %v685
        %v687 = vpop.f32.mrb[0].mxu0
        %688 = vmatprep.mubr.f32.mxu0 0.0
        %689 = vmatmul.mubr.f32.gmra.mrb[0].mxu0 %v317
        %v690 = vpop.f32.mrb[0].mxu0
        %v691 = vadd.f32 0.0, %v690
        %v692 = vpop.f32.mrb[0].mxu0
        %693 = vmatprep.mubr.f32.mxu0 0.0
        %694 = vmatmul.mubr.f32.gmra.mrb[0].mxu0 %v320
        %v695 = vpop.f32.mrb[0].mxu0
        %v696 = vadd.f32 0.0, %v695
        %v697 = vpop.f32.mrb[0].mxu0
        %698 = vmatprep.mubr.f32.mxu0 0.0
        %699 = vmatmul.mubr.f32.gmra.mrb[0].mxu0 %v323
        %v700 = vpop.f32.mrb[0].mxu0
        %v701 = vadd.f32 0.0, %v700
        %v702 = vpop.f32.mrb[0].mxu0
        %703 = vmatprep.mubr.f32.mxu0 0.0
        %704 = vmatmul.mubr.f32.gmra.mrb[0].mxu0 %v326
        %v705 = vpop.f32.mrb[0].mxu0
        %v706 = vadd.f32 0.0, %v705
        %v707 = vpop.f32.mrb[0].mxu0
        %708 = vmatprep.mubr.f32.mxu0 0.0
        %709 = vmatmul.mubr.f32.gmra.mrb[0].mxu0 %v329
        %v710 = vpop.f32.mrb[0].mxu0
        %v711 = vadd.f32 0.0, %v710
        %v712 = vpop.f32.mrb[0].mxu0
        %713 = vmatprep.mubr.f32.mxu0 0.0
        %714 = vmatmul.mubr.f32.gmra.mrb[0].mxu0 %v332
        %v715 = vpop.f32.mrb[0].mxu0
        %v716 = vadd.f32 0.0, %v715
        %v717 = vpop.f32.mrb[0].mxu0
        %718 = vmatprep.mubr.f32.mxu0 0.0
        %719 = vmatmul.mubr.f32.gmra.mrb[0].mxu0 %v335
        %v720 = vpop.f32.mrb[0].mxu0
        %v721 = vadd.f32 0.0, %v720
        %v722 = vpop.f32.mrb[0].mxu0
        %723 = vmatprep.mubr.f32.mxu0 0.0
        %724 = vmatmul.mubr.f32.gmra.mrb[0].mxu0 %v338
        %v725 = vpop.f32.mrb[0].mxu0
        %v726 = vadd.f32 0.0, %v725
        %v727 = vpop.f32.mrb[0].mxu0
        %728 = vmatprep.mubr.f32.mxu0 0.0
        %729 = vmatmul.mubr.f32.gmra.mrb[0].mxu0 %v341
        %v730 = vpop.f32.mrb[0].mxu0
        %v731 = vadd.f32 0.0, %v730
        %v732 = vpop.f32.mrb[0].mxu0
        %733 = vmatprep.mubr.f32.mxu0 0.0
        %734 = vmatmul.mubr.f32.gmra.mrb[0].mxu0 %v344
        %v735 = vpop.f32.mrb[0].mxu0
        %v736 = vadd.f32 0.0, %v735
        %v737 = vpop.f32.mrb[0].mxu0
        %738 = vdwg.mxu0
        %v739 = vpack.c.bf16 %v666, %v661
        %v740 = vpack.c.bf16 %v676, %v671
        %v741 = vpack.c.bf16 %v686, %v681
        %v742 = vpack.c.bf16 %v696, %v691
        %v743 = vpack.c.bf16 %v706, %v701
        %v744 = vpack.c.bf16 %v716, %v711
        %v745 = vpack.c.bf16 %v726, %v721
        %v746 = vpack.c.bf16 %v736, %v731
        %v755 = vunpack.c.l.b16 %v739
        %v756 = vunpack.c.h.b16 %v739
        %v757 = vunpack.c.l.b16 %v740
        %v758 = vunpack.c.h.b16 %v740
        %v759 = vunpack.c.l.b16 %v741
        %v760 = vunpack.c.h.b16 %v741
        %v761 = vunpack.c.l.b16 %v742
        %v762 = vunpack.c.h.b16 %v742
        %v763 = vunpack.c.l.b16 %v743
        %v764 = vunpack.c.h.b16 %v743
        %v765 = vunpack.c.l.b16 %v744
        %v766 = vunpack.c.h.b16 %v744
        %v767 = vunpack.c.l.b16 %v745
        %v768 = vunpack.c.h.b16 %v745
        %v769 = vunpack.c.l.b16 %v746
        %v770 = vunpack.c.h.b16 %v746
        %v771 = vpack.c.b16 %v755, %v755
        %v772 = vpack.c.b16 %v756, %v756
        %v773 = vpack.c.b16 %v757, %v757
        %v774 = vpack.c.b16 %v758, %v758
        %v775 = vpack.c.b16 %v759, %v759
        %v776 = vpack.c.b16 %v760, %v760
        %v777 = vpack.c.b16 %v761, %v761
        %v778 = vpack.c.b16 %v762, %v762
        %v779 = vpack.c.b16 %v763, %v763
        %v780 = vpack.c.b16 %v764, %v764
        %v781 = vpack.c.b16 %v765, %v765
        %v782 = vpack.c.b16 %v766, %v766
        %v783 = vpack.c.b16 %v767, %v767
        %v784 = vpack.c.b16 %v768, %v768
        %v785 = vpack.c.b16 %v769, %v769
        %v786 = vpack.c.b16 %v770, %v770
        %s803 = scalar_lea.vmem %s242, 64 [#allocation2]
        %804 = vst.msk [vmem:[%s803] sm:$0xf] %vm555, %v771
        %805 = vst.msk [vmem:[%s803 + $0x4] sm:$0xf] %vm555, %v772
        %806 = vst.msk [vmem:[%s803 + $0x8] sm:$0xf] %vm555, %v773
        %807 = vst.msk [vmem:[%s803 + $0xc] sm:$0xf] %vm555, %v774
        %808 = vst.msk [vmem:[%s803 + $0x10] sm:$0xf] %vm555, %v775
        %809 = vst.msk [vmem:[%s803 + $0x14] sm:$0xf] %vm555, %v776
        %810 = vst.msk [vmem:[%s803 + $0x18] sm:$0xf] %vm555, %v777
        %811 = vst.msk [vmem:[%s803 + $0x1c] sm:$0xf] %vm555, %v778
        %812 = vst.msk [vmem:[%s803 + $0x20] sm:$0xf] %vm555, %v779
        %813 = vst.msk [vmem:[%s803 + $0x24] sm:$0xf] %vm555, %v780
        %814 = vst.msk [vmem:[%s803 + $0x28] sm:$0xf] %vm555, %v781
        %815 = vst.msk [vmem:[%s803 + $0x2c] sm:$0xf] %vm555, %v782
        %816 = vst.msk [vmem:[%s803 + $0x30] sm:$0xf] %vm555, %v783
        %817 = vst.msk [vmem:[%s803 + $0x34] sm:$0xf] %vm555, %v784
        %818 = vst.msk [vmem:[%s803 + $0x38] sm:$0xf] %vm555, %v785
        %819 = vst.msk [vmem:[%s803 + $0x3c] sm:$0xf] %vm555, %v786
        %820 = vst.msk [vmem:[%s803] sm:$0xf] %vm572, 1065369472
        %821 = vst.msk [vmem:[%s803 + $0x4] sm:$0xf] %vm572, 1065369472
        %822 = vst.msk [vmem:[%s803 + $0x8] sm:$0xf] %vm572, 1065369472
        %823 = vst.msk [vmem:[%s803 + $0xc] sm:$0xf] %vm572, 1065369472
        %824 = vst.msk [vmem:[%s803 + $0x10] sm:$0xf] %vm572, 1065369472
        %825 = vst.msk [vmem:[%s803 + $0x14] sm:$0xf] %vm572, 1065369472
        %826 = vst.msk [vmem:[%s803 + $0x18] sm:$0xf] %vm572, 1065369472
        %827 = vst.msk [vmem:[%s803 + $0x1c] sm:$0xf] %vm572, 1065369472
        %828 = vst.msk [vmem:[%s803 + $0x20] sm:$0xf] %vm572, 1065369472
        %829 = vst.msk [vmem:[%s803 + $0x24] sm:$0xf] %vm572, 1065369472
        %830 = vst.msk [vmem:[%s803 + $0x28] sm:$0xf] %vm572, 1065369472
        %831 = vst.msk [vmem:[%s803 + $0x2c] sm:$0xf] %vm572, 1065369472
        %832 = vst.msk [vmem:[%s803 + $0x30] sm:$0xf] %vm572, 1065369472
        %833 = vst.msk [vmem:[%s803 + $0x34] sm:$0xf] %vm572, 1065369472
        %834 = vst.msk [vmem:[%s803 + $0x38] sm:$0xf] %vm572, 1065369472
        %835 = vst.msk [vmem:[%s803 + $0x3c] sm:$0xf] %vm572, 1065369472
        %s836 = scalar_lea.vmem %s1, 64
        %v837 = vld [vmem:[%s836] sm:$0xff]
        %v838 = vld [vmem:[%s836 + $0x8] sm:$0xff]
        %v839 = vld [vmem:[%s836 + $0x10] sm:$0xff]
        %v840 = vld [vmem:[%s836 + $0x18] sm:$0xff]
        %841 = vmatprep.subr.mxu0 0.0
        %842 = vmatpush1.msra.mxu0 %v837
        %843 = vmatprep.subr.mxu0 0.0
        %844 = vmatpush1.msra.mxu0 %v838
        %845 = vmatprep.subr.mxu0 0.0
        %846 = vmatpush1.msra.mxu0 %v839
        %847 = vmatprep.subr.mxu0 0.0
        %848 = vmatpush1.msra.mxu0 %v840
        %849 = vmatprep.subr.mxu0 0.0
        %850 = vmatpush1.msra.mxu0 0.0
        %851 = vmatprep.subr.mxu0 0.0
        %852 = vmatpush1.msra.mxu0 0.0
        %853 = vmatprep.subr.mxu0 0.0
        %854 = vmatpush1.msra.mxu0 0.0
        %855 = vmatprep.subr.mxu0 0.0
        %856 = vmatpush1.msra.mxu0 0.0
        %857 = vmatprep.subr.mxu0 0.0
        %858 = vmatpush1.msra.mxu0 0.0
        %859 = vmatprep.subr.mxu0 0.0
        %860 = vmatpush1.msra.mxu0 0.0
        %861 = vmatprep.subr.mxu0 0.0
        %862 = vmatpush1.msra.mxu0 0.0
        %863 = vmatprep.subr.mxu0 0.0
        %864 = vmatpush1.msra.mxu0 0.0
        %865 = vmatprep.subr.mxu0 0.0
        %866 = vmatpush1.msra.mxu0 0.0
        %867 = vmatprep.subr.mxu0 0.0
        %868 = vmatpush1.msra.mxu0 0.0
        %869 = vmatprep.subr.mxu0 0.0
        %870 = vmatpush1.msra.mxu0 0.0
        %871 = vmatprep.subr.mxu0 0.0
        %872 = vmatpush1.msra.mxu0 0.0
        %873 = vmatprep.subr.mxu0 0.0
        %874 = vmatpush1.msra.mxu0 0.0
        %875 = vmatprep.subr.mxu0 0.0
        %876 = vmatpush1.msra.mxu0 0.0
        %877 = vmatprep.subr.mxu0 0.0
        %878 = vmatpush1.msra.mxu0 0.0
        %879 = vmatprep.subr.mxu0 0.0
        %880 = vmatpush1.msra.mxu0 0.0
        %881 = vmatprep.subr.mxu0 0.0
        %882 = vmatpush1.msra.mxu0 0.0
        %883 = vmatprep.subr.mxu0 0.0
        %884 = vmatpush1.msra.mxu0 0.0
        %885 = vmatprep.subr.mxu0 0.0
        %886 = vmatpush1.msra.mxu0 0.0
        %887 = vmatprep.subr.mxu0 0.0
        %888 = vmatpush1.msra.mxu0 0.0
        %889 = vmatprep.subr.mxu0 0.0
        %890 = vmatpush1.msra.mxu0 0.0
        %891 = vmatprep.subr.mxu0 0.0
        %892 = vmatpush1.msra.mxu0 0.0
        %893 = vmatprep.subr.mxu0 0.0
        %894 = vmatpush1.msra.mxu0 0.0
        %895 = vmatprep.subr.mxu0 0.0
        %896 = vmatpush1.msra.mxu0 0.0
        %897 = vmatprep.subr.mxu0 0.0
        %898 = vmatpush1.msra.mxu0 0.0
        %899 = vmatprep.subr.mxu0 0.0
        %900 = vmatpush1.msra.mxu0 0.0
        %901 = vmatprep.subr.mxu0 0.0
        %902 = vmatpush1.msra.mxu0 0.0
        %903 = vmatprep.subr.mxu0 0.0
        %904 = vmatpush1.msra.mxu0 0.0
        %905 = vmatprep.mubr.f32.mxu0 0.0
        %906 = vmatmul.mubr.f32.gmra.mrb[0].mxu0 %v299
        %v907 = vpop.f32.mrb[0].mxu0
        %v908 = vadd.f32 0.0, %v907
        %v909 = vpop.f32.mrb[0].mxu0
        %910 = vmatprep.mubr.f32.mxu0 0.0
        %911 = vmatmul.mubr.f32.gmra.mrb[0].mxu0 %v302
        %v912 = vpop.f32.mrb[0].mxu0
        %v913 = vadd.f32 0.0, %v912
        %v914 = vpop.f32.mrb[0].mxu0
        %915 = vmatprep.mubr.f32.mxu0 0.0
        %916 = vmatmul.mubr.f32.gmra.mrb[0].mxu0 %v305
        %v917 = vpop.f32.mrb[0].mxu0
        %v918 = vadd.f32 0.0, %v917
        %v919 = vpop.f32.mrb[0].mxu0
        %920 = vmatprep.mubr.f32.mxu0 0.0
        %921 = vmatmul.mubr.f32.gmra.mrb[0].mxu0 %v308
        %v922 = vpop.f32.mrb[0].mxu0
        %v923 = vadd.f32 0.0, %v922
        %v924 = vpop.f32.mrb[0].mxu0
        %925 = vmatprep.mubr.f32.mxu0 0.0
        %926 = vmatmul.mubr.f32.gmra.mrb[0].mxu0 %v311
        %v927 = vpop.f32.mrb[0].mxu0
        %v928 = vadd.f32 0.0, %v927
        %v929 = vpop.f32.mrb[0].mxu0
        %930 = vmatprep.mubr.f32.mxu0 0.0
        %931 = vmatmul.mubr.f32.gmra.mrb[0].mxu0 %v314
        %v932 = vpop.f32.mrb[0].mxu0
        %v933 = vadd.f32 0.0, %v932
        %v934 = vpop.f32.mrb[0].mxu0
        %935 = vmatprep.mubr.f32.mxu0 0.0
        %936 = vmatmul.mubr.f32.gmra.mrb[0].mxu0 %v317
        %v937 = vpop.f32.mrb[0].mxu0
        %v938 = vadd.f32 0.0, %v937
        %v939 = vpop.f32.mrb[0].mxu0
        %940 = vmatprep.mubr.f32.mxu0 0.0
        %941 = vmatmul.mubr.f32.gmra.mrb[0].mxu0 %v320
        %v942 = vpop.f32.mrb[0].mxu0
        %v943 = vadd.f32 0.0, %v942
        %v944 = vpop.f32.mrb[0].mxu0
        %945 = vmatprep.mubr.f32.mxu0 0.0
        %946 = vmatmul.mubr.f32.gmra.mrb[0].mxu0 %v323
        %v947 = vpop.f32.mrb[0].mxu0
        %v948 = vadd.f32 0.0, %v947
        %v949 = vpop.f32.mrb[0].mxu0
        %950 = vmatprep.mubr.f32.mxu0 0.0
        %951 = vmatmul.mubr.f32.gmra.mrb[0].mxu0 %v326
        %v952 = vpop.f32.mrb[0].mxu0
        %v953 = vadd.f32 0.0, %v952
        %v954 = vpop.f32.mrb[0].mxu0
        %955 = vmatprep.mubr.f32.mxu0 0.0
        %956 = vmatmul.mubr.f32.gmra.mrb[0].mxu0 %v329
        %v957 = vpop.f32.mrb[0].mxu0
        %v958 = vadd.f32 0.0, %v957
        %v959 = vpop.f32.mrb[0].mxu0
        %960 = vmatprep.mubr.f32.mxu0 0.0
        %961 = vmatmul.mubr.f32.gmra.mrb[0].mxu0 %v332
        %v962 = vpop.f32.mrb[0].mxu0
        %v963 = vadd.f32 0.0, %v962
        %v964 = vpop.f32.mrb[0].mxu0
        %965 = vmatprep.mubr.f32.mxu0 0.0
        %966 = vmatmul.mubr.f32.gmra.mrb[0].mxu0 %v335
        %v967 = vpop.f32.mrb[0].mxu0
        %v968 = vadd.f32 0.0, %v967
        %v969 = vpop.f32.mrb[0].mxu0
        %970 = vmatprep.mubr.f32.mxu0 0.0
        %971 = vmatmul.mubr.f32.gmra.mrb[0].mxu0 %v338
        %v972 = vpop.f32.mrb[0].mxu0
        %v973 = vadd.f32 0.0, %v972
        %v974 = vpop.f32.mrb[0].mxu0
        %975 = vmatprep.mubr.f32.mxu0 0.0
        %976 = vmatmul.mubr.f32.gmra.mrb[0].mxu0 %v341
        %v977 = vpop.f32.mrb[0].mxu0
        %v978 = vadd.f32 0.0, %v977
        %v979 = vpop.f32.mrb[0].mxu0
        %980 = vmatprep.mubr.f32.mxu0 0.0
        %981 = vmatmul.mubr.f32.gmra.mrb[0].mxu0 %v344
        %v982 = vpop.f32.mrb[0].mxu0
        %v983 = vadd.f32 0.0, %v982
        %v984 = vpop.f32.mrb[0].mxu0
        %985 = vdwg.mxu0
        %v986 = vpack.c.bf16 %v913, %v908
        %v987 = vpack.c.bf16 %v923, %v918
        %v988 = vpack.c.bf16 %v933, %v928
        %v989 = vpack.c.bf16 %v943, %v938
        %v990 = vpack.c.bf16 %v953, %v948
        %v991 = vpack.c.bf16 %v963, %v958
        %v992 = vpack.c.bf16 %v973, %v968
        %v993 = vpack.c.bf16 %v983, %v978
        %v1002 = vunpack.c.l.b16 %v986
        %v1003 = vunpack.c.h.b16 %v986
        %v1004 = vunpack.c.l.b16 %v987
        %v1005 = vunpack.c.h.b16 %v987
        %v1006 = vunpack.c.l.b16 %v988
        %v1007 = vunpack.c.h.b16 %v988
        %v1008 = vunpack.c.l.b16 %v989
        %v1009 = vunpack.c.h.b16 %v989
        %v1010 = vunpack.c.l.b16 %v990
        %v1011 = vunpack.c.h.b16 %v990
        %v1012 = vunpack.c.l.b16 %v991
        %v1013 = vunpack.c.h.b16 %v991
        %v1014 = vunpack.c.l.b16 %v992
        %v1015 = vunpack.c.h.b16 %v992
        %v1016 = vunpack.c.l.b16 %v993
        %v1017 = vunpack.c.h.b16 %v993
        %v1018 = vpack.c.b16 %v1002, %v1002
        %v1019 = vpack.c.b16 %v1003, %v1003
        %v1020 = vpack.c.b16 %v1004, %v1004
        %v1021 = vpack.c.b16 %v1005, %v1005
        %v1022 = vpack.c.b16 %v1006, %v1006
        %v1023 = vpack.c.b16 %v1007, %v1007
        %v1024 = vpack.c.b16 %v1008, %v1008
        %v1025 = vpack.c.b16 %v1009, %v1009
        %v1026 = vpack.c.b16 %v1010, %v1010
        %v1027 = vpack.c.b16 %v1011, %v1011
        %v1028 = vpack.c.b16 %v1012, %v1012
        %v1029 = vpack.c.b16 %v1013, %v1013
        %v1030 = vpack.c.b16 %v1014, %v1014
        %v1031 = vpack.c.b16 %v1015, %v1015
        %v1032 = vpack.c.b16 %v1016, %v1016
        %v1033 = vpack.c.b16 %v1017, %v1017
        %s1050 = scalar_lea.vmem %s242, 128 [#allocation2]
        %1051 = vst.msk [vmem:[%s1050] sm:$0xf] %vm555, %v1018
        %1052 = vst.msk [vmem:[%s1050 + $0x4] sm:$0xf] %vm555, %v1019
        %1053 = vst.msk [vmem:[%s1050 + $0x8] sm:$0xf] %vm555, %v1020
        %1054 = vst.msk [vmem:[%s1050 + $0xc] sm:$0xf] %vm555, %v1021
        %1055 = vst.msk [vmem:[%s1050 + $0x10] sm:$0xf] %vm555, %v1022
        %1056 = vst.msk [vmem:[%s1050 + $0x14] sm:$0xf] %vm555, %v1023
        %1057 = vst.msk [vmem:[%s1050 + $0x18] sm:$0xf] %vm555, %v1024
        %1058 = vst.msk [vmem:[%s1050 + $0x1c] sm:$0xf] %vm555, %v1025
        %1059 = vst.msk [vmem:[%s1050 + $0x20] sm:$0xf] %vm555, %v1026
        %1060 = vst.msk [vmem:[%s1050 + $0x24] sm:$0xf] %vm555, %v1027
        %1061 = vst.msk [vmem:[%s1050 + $0x28] sm:$0xf] %vm555, %v1028
        %1062 = vst.msk [vmem:[%s1050 + $0x2c] sm:$0xf] %vm555, %v1029
        %1063 = vst.msk [vmem:[%s1050 + $0x30] sm:$0xf] %vm555, %v1030
        %1064 = vst.msk [vmem:[%s1050 + $0x34] sm:$0xf] %vm555, %v1031
        %1065 = vst.msk [vmem:[%s1050 + $0x38] sm:$0xf] %vm555, %v1032
        %1066 = vst.msk [vmem:[%s1050 + $0x3c] sm:$0xf] %vm555, %v1033
        %1067 = vst.msk [vmem:[%s1050] sm:$0xf] %vm572, 1065369472
        %1068 = vst.msk [vmem:[%s1050 + $0x4] sm:$0xf] %vm572, 1065369472
        %1069 = vst.msk [vmem:[%s1050 + $0x8] sm:$0xf] %vm572, 1065369472
        %1070 = vst.msk [vmem:[%s1050 + $0xc] sm:$0xf] %vm572, 1065369472
        %1071 = vst.msk [vmem:[%s1050 + $0x10] sm:$0xf] %vm572, 1065369472
        %1072 = vst.msk [vmem:[%s1050 + $0x14] sm:$0xf] %vm572, 1065369472
        %1073 = vst.msk [vmem:[%s1050 + $0x18] sm:$0xf] %vm572, 1065369472
        %1074 = vst.msk [vmem:[%s1050 + $0x1c] sm:$0xf] %vm572, 1065369472
        %1075 = vst.msk [vmem:[%s1050 + $0x20] sm:$0xf] %vm572, 1065369472
        %1076 = vst.msk [vmem:[%s1050 + $0x24] sm:$0xf] %vm572, 1065369472
        %1077 = vst.msk [vmem:[%s1050 + $0x28] sm:$0xf] %vm572, 1065369472
        %1078 = vst.msk [vmem:[%s1050 + $0x2c] sm:$0xf] %vm572, 1065369472
        %1079 = vst.msk [vmem:[%s1050 + $0x30] sm:$0xf] %vm572, 1065369472
        %1080 = vst.msk [vmem:[%s1050 + $0x34] sm:$0xf] %vm572, 1065369472
        %1081 = vst.msk [vmem:[%s1050 + $0x38] sm:$0xf] %vm572, 1065369472
        %1082 = vst.msk [vmem:[%s1050 + $0x3c] sm:$0xf] %vm572, 1065369472
        %s1083 = scalar_lea.vmem %s1, 96
        %v1084 = vld [vmem:[%s1083] sm:$0xff]
        %v1085 = vld [vmem:[%s1083 + $0x8] sm:$0xff]
        %v1086 = vld [vmem:[%s1083 + $0x10] sm:$0xff]
        %v1087 = vld [vmem:[%s1083 + $0x18] sm:$0xff]
        %1088 = vmatprep.subr.mxu0 0.0
        %1089 = vmatpush1.msra.mxu0 %v1084
        %1090 = vmatprep.subr.mxu0 0.0
        %1091 = vmatpush1.msra.mxu0 %v1085
        %1092 = vmatprep.subr.mxu0 0.0
        %1093 = vmatpush1.msra.mxu0 %v1086
        %1094 = vmatprep.subr.mxu0 0.0
        %1095 = vmatpush1.msra.mxu0 %v1087
        %1096 = vmatprep.subr.mxu0 0.0
        %1097 = vmatpush1.msra.mxu0 0.0
        %1098 = vmatprep.subr.mxu0 0.0
        %1099 = vmatpush1.msra.mxu0 0.0
        %1100 = vmatprep.subr.mxu0 0.0
        %1101 = vmatpush1.msra.mxu0 0.0
        %1102 = vmatprep.subr.mxu0 0.0
        %1103 = vmatpush1.msra.mxu0 0.0
        %1104 = vmatprep.subr.mxu0 0.0
        %1105 = vmatpush1.msra.mxu0 0.0
        %1106 = vmatprep.subr.mxu0 0.0
        %1107 = vmatpush1.msra.mxu0 0.0
        %1108 = vmatprep.subr.mxu0 0.0
        %1109 = vmatpush1.msra.mxu0 0.0
        %1110 = vmatprep.subr.mxu0 0.0
        %1111 = vmatpush1.msra.mxu0 0.0
        %1112 = vmatprep.subr.mxu0 0.0
        %1113 = vmatpush1.msra.mxu0 0.0
        %1114 = vmatprep.subr.mxu0 0.0
        %1115 = vmatpush1.msra.mxu0 0.0
        %1116 = vmatprep.subr.mxu0 0.0
        %1117 = vmatpush1.msra.mxu0 0.0
        %1118 = vmatprep.subr.mxu0 0.0
        %1119 = vmatpush1.msra.mxu0 0.0
        %1120 = vmatprep.subr.mxu0 0.0
        %1121 = vmatpush1.msra.mxu0 0.0
        %1122 = vmatprep.subr.mxu0 0.0
        %1123 = vmatpush1.msra.mxu0 0.0
        %1124 = vmatprep.subr.mxu0 0.0
        %1125 = vmatpush1.msra.mxu0 0.0
        %1126 = vmatprep.subr.mxu0 0.0
        %1127 = vmatpush1.msra.mxu0 0.0
        %1128 = vmatprep.subr.mxu0 0.0
        %1129 = vmatpush1.msra.mxu0 0.0
        %1130 = vmatprep.subr.mxu0 0.0
        %1131 = vmatpush1.msra.mxu0 0.0
        %1132 = vmatprep.subr.mxu0 0.0
        %1133 = vmatpush1.msra.mxu0 0.0
        %1134 = vmatprep.subr.mxu0 0.0
        %1135 = vmatpush1.msra.mxu0 0.0
        %1136 = vmatprep.subr.mxu0 0.0
        %1137 = vmatpush1.msra.mxu0 0.0
        %1138 = vmatprep.subr.mxu0 0.0
        %1139 = vmatpush1.msra.mxu0 0.0
        %1140 = vmatprep.subr.mxu0 0.0
        %1141 = vmatpush1.msra.mxu0 0.0
        %1142 = vmatprep.subr.mxu0 0.0
        %1143 = vmatpush1.msra.mxu0 0.0
        %1144 = vmatprep.subr.mxu0 0.0
        %1145 = vmatpush1.msra.mxu0 0.0
        %1146 = vmatprep.subr.mxu0 0.0
        %1147 = vmatpush1.msra.mxu0 0.0
        %1148 = vmatprep.subr.mxu0 0.0
        %1149 = vmatpush1.msra.mxu0 0.0
        %1150 = vmatprep.subr.mxu0 0.0
        %1151 = vmatpush1.msra.mxu0 0.0
        %1152 = vmatprep.mubr.f32.mxu0 0.0
        %1153 = vmatmul.mubr.f32.gmra.mrb[0].mxu0 %v299
        %v1154 = vpop.f32.mrb[0].mxu0
        %v1155 = vadd.f32 0.0, %v1154
        %v1156 = vpop.f32.mrb[0].mxu0
        %1157 = vmatprep.mubr.f32.mxu0 0.0
        %1158 = vmatmul.mubr.f32.gmra.mrb[0].mxu0 %v302
        %v1159 = vpop.f32.mrb[0].mxu0
        %v1160 = vadd.f32 0.0, %v1159
        %v1161 = vpop.f32.mrb[0].mxu0
        %1162 = vmatprep.mubr.f32.mxu0 0.0
        %1163 = vmatmul.mubr.f32.gmra.mrb[0].mxu0 %v305
        %v1164 = vpop.f32.mrb[0].mxu0
        %v1165 = vadd.f32 0.0, %v1164
        %v1166 = vpop.f32.mrb[0].mxu0
        %1167 = vmatprep.mubr.f32.mxu0 0.0
        %1168 = vmatmul.mubr.f32.gmra.mrb[0].mxu0 %v308
        %v1169 = vpop.f32.mrb[0].mxu0
        %v1170 = vadd.f32 0.0, %v1169
        %v1171 = vpop.f32.mrb[0].mxu0
        %1172 = vmatprep.mubr.f32.mxu0 0.0
        %1173 = vmatmul.mubr.f32.gmra.mrb[0].mxu0 %v311
        %v1174 = vpop.f32.mrb[0].mxu0
        %v1175 = vadd.f32 0.0, %v1174
        %v1176 = vpop.f32.mrb[0].mxu0
        %1177 = vmatprep.mubr.f32.mxu0 0.0
        %1178 = vmatmul.mubr.f32.gmra.mrb[0].mxu0 %v314
        %v1179 = vpop.f32.mrb[0].mxu0
        %v1180 = vadd.f32 0.0, %v1179
        %v1181 = vpop.f32.mrb[0].mxu0
        %1182 = vmatprep.mubr.f32.mxu0 0.0
        %1183 = vmatmul.mubr.f32.gmra.mrb[0].mxu0 %v317
        %v1184 = vpop.f32.mrb[0].mxu0
        %v1185 = vadd.f32 0.0, %v1184
        %v1186 = vpop.f32.mrb[0].mxu0
        %1187 = vmatprep.mubr.f32.mxu0 0.0
        %1188 = vmatmul.mubr.f32.gmra.mrb[0].mxu0 %v320
        %v1189 = vpop.f32.mrb[0].mxu0
        %v1190 = vadd.f32 0.0, %v1189
        %v1191 = vpop.f32.mrb[0].mxu0
        %1192 = vmatprep.mubr.f32.mxu0 0.0
        %1193 = vmatmul.mubr.f32.gmra.mrb[0].mxu0 %v323
        %v1194 = vpop.f32.mrb[0].mxu0
        %v1195 = vadd.f32 0.0, %v1194
        %v1196 = vpop.f32.mrb[0].mxu0
        %1197 = vmatprep.mubr.f32.mxu0 0.0
        %1198 = vmatmul.mubr.f32.gmra.mrb[0].mxu0 %v326
        %v1199 = vpop.f32.mrb[0].mxu0
        %v1200 = vadd.f32 0.0, %v1199
        %v1201 = vpop.f32.mrb[0].mxu0
        %1202 = vmatprep.mubr.f32.mxu0 0.0
        %1203 = vmatmul.mubr.f32.gmra.mrb[0].mxu0 %v329
        %v1204 = vpop.f32.mrb[0].mxu0
        %v1205 = vadd.f32 0.0, %v1204
        %v1206 = vpop.f32.mrb[0].mxu0
        %1207 = vmatprep.mubr.f32.mxu0 0.0
        %1208 = vmatmul.mubr.f32.gmra.mrb[0].mxu0 %v332
        %v1209 = vpop.f32.mrb[0].mxu0
        %v1210 = vadd.f32 0.0, %v1209
        %v1211 = vpop.f32.mrb[0].mxu0
        %1212 = vmatprep.mubr.f32.mxu0 0.0
        %1213 = vmatmul.mubr.f32.gmra.mrb[0].mxu0 %v335
        %v1214 = vpop.f32.mrb[0].mxu0
        %v1215 = vadd.f32 0.0, %v1214
        %v1216 = vpop.f32.mrb[0].mxu0
        %1217 = vmatprep.mubr.f32.mxu0 0.0
        %1218 = vmatmul.mubr.f32.gmra.mrb[0].mxu0 %v338
        %v1219 = vpop.f32.mrb[0].mxu0
        %v1220 = vadd.f32 0.0, %v1219
        %v1221 = vpop.f32.mrb[0].mxu0
        %1222 = vmatprep.mubr.f32.mxu0 0.0
        %1223 = vmatmul.mubr.f32.gmra.mrb[0].mxu0 %v341
        %v1224 = vpop.f32.mrb[0].mxu0
        %v1225 = vadd.f32 0.0, %v1224
        %v1226 = vpop.f32.mrb[0].mxu0
        %1227 = vmatprep.mubr.f32.mxu0 0.0
        %1228 = vmatmul.mubr.f32.gmra.mrb[0].mxu0 %v344
        %v1229 = vpop.f32.mrb[0].mxu0
        %v1230 = vadd.f32 0.0, %v1229
        %v1231 = vpop.f32.mrb[0].mxu0
        %1232 = vdwg.mxu0
        %v1233 = vpack.c.bf16 %v1160, %v1155
        %v1234 = vpack.c.bf16 %v1170, %v1165
        %v1235 = vpack.c.bf16 %v1180, %v1175
        %v1236 = vpack.c.bf16 %v1190, %v1185
        %v1237 = vpack.c.bf16 %v1200, %v1195
        %v1238 = vpack.c.bf16 %v1210, %v1205
        %v1239 = vpack.c.bf16 %v1220, %v1215
        %v1240 = vpack.c.bf16 %v1230, %v1225
        %v1249 = vunpack.c.l.b16 %v1233
        %v1250 = vunpack.c.h.b16 %v1233
        %v1251 = vunpack.c.l.b16 %v1234
        %v1252 = vunpack.c.h.b16 %v1234
        %v1253 = vunpack.c.l.b16 %v1235
        %v1254 = vunpack.c.h.b16 %v1235
        %v1255 = vunpack.c.l.b16 %v1236
        %v1256 = vunpack.c.h.b16 %v1236
        %v1257 = vunpack.c.l.b16 %v1237
        %v1258 = vunpack.c.h.b16 %v1237
        %v1259 = vunpack.c.l.b16 %v1238
        %v1260 = vunpack.c.h.b16 %v1238
        %v1261 = vunpack.c.l.b16 %v1239
        %v1262 = vunpack.c.h.b16 %v1239
        %v1263 = vunpack.c.l.b16 %v1240
        %v1264 = vunpack.c.h.b16 %v1240
        %v1265 = vpack.c.b16 %v1249, %v1249
        %v1266 = vpack.c.b16 %v1250, %v1250
        %v1267 = vpack.c.b16 %v1251, %v1251
        %v1268 = vpack.c.b16 %v1252, %v1252
        %v1269 = vpack.c.b16 %v1253, %v1253
        %v1270 = vpack.c.b16 %v1254, %v1254
        %v1271 = vpack.c.b16 %v1255, %v1255
        %v1272 = vpack.c.b16 %v1256, %v1256
        %v1273 = vpack.c.b16 %v1257, %v1257
        %v1274 = vpack.c.b16 %v1258, %v1258
        %v1275 = vpack.c.b16 %v1259, %v1259
        %v1276 = vpack.c.b16 %v1260, %v1260
        %v1277 = vpack.c.b16 %v1261, %v1261
        %v1278 = vpack.c.b16 %v1262, %v1262
        %v1279 = vpack.c.b16 %v1263, %v1263
        %v1280 = vpack.c.b16 %v1264, %v1264
        %s1297 = scalar_lea.vmem %s242, 192 [#allocation2]
        %1298 = vst.msk [vmem:[%s1297] sm:$0xf] %vm555, %v1265
        %1299 = vst.msk [vmem:[%s1297 + $0x4] sm:$0xf] %vm555, %v1266
        %1300 = vst.msk [vmem:[%s1297 + $0x8] sm:$0xf] %vm555, %v1267
        %1301 = vst.msk [vmem:[%s1297 + $0xc] sm:$0xf] %vm555, %v1268
        %1302 = vst.msk [vmem:[%s1297 + $0x10] sm:$0xf] %vm555, %v1269
        %1303 = vst.msk [vmem:[%s1297 + $0x14] sm:$0xf] %vm555, %v1270
        %1304 = vst.msk [vmem:[%s1297 + $0x18] sm:$0xf] %vm555, %v1271
        %1305 = vst.msk [vmem:[%s1297 + $0x1c] sm:$0xf] %vm555, %v1272
        %1306 = vst.msk [vmem:[%s1297 + $0x20] sm:$0xf] %vm555, %v1273
        %1307 = vst.msk [vmem:[%s1297 + $0x24] sm:$0xf] %vm555, %v1274
        %1308 = vst.msk [vmem:[%s1297 + $0x28] sm:$0xf] %vm555, %v1275
        %1309 = vst.msk [vmem:[%s1297 + $0x2c] sm:$0xf] %vm555, %v1276
        %1310 = vst.msk [vmem:[%s1297 + $0x30] sm:$0xf] %vm555, %v1277
        %1311 = vst.msk [vmem:[%s1297 + $0x34] sm:$0xf] %vm555, %v1278
        %1312 = vst.msk [vmem:[%s1297 + $0x38] sm:$0xf] %vm555, %v1279
        %1313 = vst.msk [vmem:[%s1297 + $0x3c] sm:$0xf] %vm555, %v1280
        %1314 = vst.msk [vmem:[%s1297] sm:$0xf] %vm572, 1065369472
        %1315 = vst.msk [vmem:[%s1297 + $0x4] sm:$0xf] %vm572, 1065369472
        %1316 = vst.msk [vmem:[%s1297 + $0x8] sm:$0xf] %vm572, 1065369472
        %1317 = vst.msk [vmem:[%s1297 + $0xc] sm:$0xf] %vm572, 1065369472
        %1318 = vst.msk [vmem:[%s1297 + $0x10] sm:$0xf] %vm572, 1065369472
        %1319 = vst.msk [vmem:[%s1297 + $0x14] sm:$0xf] %vm572, 1065369472
        %1320 = vst.msk [vmem:[%s1297 + $0x18] sm:$0xf] %vm572, 1065369472
        %1321 = vst.msk [vmem:[%s1297 + $0x1c] sm:$0xf] %vm572, 1065369472
        %1322 = vst.msk [vmem:[%s1297 + $0x20] sm:$0xf] %vm572, 1065369472
        %1323 = vst.msk [vmem:[%s1297 + $0x24] sm:$0xf] %vm572, 1065369472
        %1324 = vst.msk [vmem:[%s1297 + $0x28] sm:$0xf] %vm572, 1065369472
        %1325 = vst.msk [vmem:[%s1297 + $0x2c] sm:$0xf] %vm572, 1065369472
        %1326 = vst.msk [vmem:[%s1297 + $0x30] sm:$0xf] %vm572, 1065369472
        %1327 = vst.msk [vmem:[%s1297 + $0x34] sm:$0xf] %vm572, 1065369472
        %1328 = vst.msk [vmem:[%s1297 + $0x38] sm:$0xf] %vm572, 1065369472
        %1329 = vst.msk [vmem:[%s1297 + $0x3c] sm:$0xf] %vm572, 1065369472
        %v1330 = vld [vmem:[%s2] sm:$0xff]
        %v1331 = vld [vmem:[%s2 + $0x8] sm:$0xff]
        %v1332 = vld [vmem:[%s2 + $0x10] sm:$0xff]
        %v1333 = vld [vmem:[%s2 + $0x18] sm:$0xff]
        %1334 = vmatprep.subr.mxu0 0.0
        %1335 = vmatpush1.msra.mxu0 %v1330
        %1336 = vmatprep.subr.mxu0 0.0
        %1337 = vmatpush1.msra.mxu0 %v1331
        %1338 = vmatprep.subr.mxu0 0.0
        %1339 = vmatpush1.msra.mxu0 %v1332
        %1340 = vmatprep.subr.mxu0 0.0
        %1341 = vmatpush1.msra.mxu0 %v1333
        %1342 = vmatprep.subr.mxu0 0.0
        %1343 = vmatpush1.msra.mxu0 0.0
        %1344 = vmatprep.subr.mxu0 0.0
        %1345 = vmatpush1.msra.mxu0 0.0
        %1346 = vmatprep.subr.mxu0 0.0
        %1347 = vmatpush1.msra.mxu0 0.0
        %1348 = vmatprep.subr.mxu0 0.0
        %1349 = vmatpush1.msra.mxu0 0.0
        %1350 = vmatprep.subr.mxu0 0.0
        %1351 = vmatpush1.msra.mxu0 0.0
        %1352 = vmatprep.subr.mxu0 0.0
        %1353 = vmatpush1.msra.mxu0 0.0
        %1354 = vmatprep.subr.mxu0 0.0
        %1355 = vmatpush1.msra.mxu0 0.0
        %1356 = vmatprep.subr.mxu0 0.0
        %1357 = vmatpush1.msra.mxu0 0.0
        %1358 = vmatprep.subr.mxu0 0.0
        %1359 = vmatpush1.msra.mxu0 0.0
        %1360 = vmatprep.subr.mxu0 0.0
        %1361 = vmatpush1.msra.mxu0 0.0
        %1362 = vmatprep.subr.mxu0 0.0
        %1363 = vmatpush1.msra.mxu0 0.0
        %1364 = vmatprep.subr.mxu0 0.0
        %1365 = vmatpush1.msra.mxu0 0.0
        %1366 = vmatprep.subr.mxu0 0.0
        %1367 = vmatpush1.msra.mxu0 0.0
        %1368 = vmatprep.subr.mxu0 0.0
        %1369 = vmatpush1.msra.mxu0 0.0
        %1370 = vmatprep.subr.mxu0 0.0
        %1371 = vmatpush1.msra.mxu0 0.0
        %1372 = vmatprep.subr.mxu0 0.0
        %1373 = vmatpush1.msra.mxu0 0.0
        %1374 = vmatprep.subr.mxu0 0.0
        %1375 = vmatpush1.msra.mxu0 0.0
        %1376 = vmatprep.subr.mxu0 0.0
        %1377 = vmatpush1.msra.mxu0 0.0
        %1378 = vmatprep.subr.mxu0 0.0
        %1379 = vmatpush1.msra.mxu0 0.0
        %1380 = vmatprep.subr.mxu0 0.0
        %1381 = vmatpush1.msra.mxu0 0.0
        %1382 = vmatprep.subr.mxu0 0.0
        %1383 = vmatpush1.msra.mxu0 0.0
        %1384 = vmatprep.subr.mxu0 0.0
        %1385 = vmatpush1.msra.mxu0 0.0
        %1386 = vmatprep.subr.mxu0 0.0
        %1387 = vmatpush1.msra.mxu0 0.0
        %1388 = vmatprep.subr.mxu0 0.0
        %1389 = vmatpush1.msra.mxu0 0.0
        %1390 = vmatprep.subr.mxu0 0.0
        %1391 = vmatpush1.msra.mxu0 0.0
        %1392 = vmatprep.subr.mxu0 0.0
        %1393 = vmatpush1.msra.mxu0 0.0
        %1394 = vmatprep.subr.mxu0 0.0
        %1395 = vmatpush1.msra.mxu0 0.0
        %1396 = vmatprep.subr.mxu0 0.0
        %1397 = vmatpush1.msra.mxu0 0.0
        %1398 = vmatprep.mubr.f32.mxu0 0.0
        %1399 = vmatmul.mubr.f32.gmra.mrb[0].mxu0 %v299
        %v1400 = vpop.f32.mrb[0].mxu0
        %v1401 = vadd.f32 0.0, %v1400
        %v1402 = vpop.f32.mrb[0].mxu0
        %1403 = vmatprep.mubr.f32.mxu0 0.0
        %1404 = vmatmul.mubr.f32.gmra.mrb[0].mxu0 %v302
        %v1405 = vpop.f32.mrb[0].mxu0
        %v1406 = vadd.f32 0.0, %v1405
        %v1407 = vpop.f32.mrb[0].mxu0
        %1408 = vmatprep.mubr.f32.mxu0 0.0
        %1409 = vmatmul.mubr.f32.gmra.mrb[0].mxu0 %v305
        %v1410 = vpop.f32.mrb[0].mxu0
        %v1411 = vadd.f32 0.0, %v1410
        %v1412 = vpop.f32.mrb[0].mxu0
        %1413 = vmatprep.mubr.f32.mxu0 0.0
        %1414 = vmatmul.mubr.f32.gmra.mrb[0].mxu0 %v308
        %v1415 = vpop.f32.mrb[0].mxu0
        %v1416 = vadd.f32 0.0, %v1415
        %v1417 = vpop.f32.mrb[0].mxu0
        %1418 = vmatprep.mubr.f32.mxu0 0.0
        %1419 = vmatmul.mubr.f32.gmra.mrb[0].mxu0 %v311
        %v1420 = vpop.f32.mrb[0].mxu0
        %v1421 = vadd.f32 0.0, %v1420
        %v1422 = vpop.f32.mrb[0].mxu0
        %1423 = vmatprep.mubr.f32.mxu0 0.0
        %1424 = vmatmul.mubr.f32.gmra.mrb[0].mxu0 %v314
        %v1425 = vpop.f32.mrb[0].mxu0
        %v1426 = vadd.f32 0.0, %v1425
        %v1427 = vpop.f32.mrb[0].mxu0
        %1428 = vmatprep.mubr.f32.mxu0 0.0
        %1429 = vmatmul.mubr.f32.gmra.mrb[0].mxu0 %v317
        %v1430 = vpop.f32.mrb[0].mxu0
        %v1431 = vadd.f32 0.0, %v1430
        %v1432 = vpop.f32.mrb[0].mxu0
        %1433 = vmatprep.mubr.f32.mxu0 0.0
        %1434 = vmatmul.mubr.f32.gmra.mrb[0].mxu0 %v320
        %v1435 = vpop.f32.mrb[0].mxu0
        %v1436 = vadd.f32 0.0, %v1435
        %v1437 = vpop.f32.mrb[0].mxu0
        %1438 = vmatprep.mubr.f32.mxu0 0.0
        %1439 = vmatmul.mubr.f32.gmra.mrb[0].mxu0 %v323
        %v1440 = vpop.f32.mrb[0].mxu0
        %v1441 = vadd.f32 0.0, %v1440
        %v1442 = vpop.f32.mrb[0].mxu0
        %1443 = vmatprep.mubr.f32.mxu0 0.0
        %1444 = vmatmul.mubr.f32.gmra.mrb[0].mxu0 %v326
        %v1445 = vpop.f32.mrb[0].mxu0
        %v1446 = vadd.f32 0.0, %v1445
        %v1447 = vpop.f32.mrb[0].mxu0
        %1448 = vmatprep.mubr.f32.mxu0 0.0
        %1449 = vmatmul.mubr.f32.gmra.mrb[0].mxu0 %v329
        %v1450 = vpop.f32.mrb[0].mxu0
        %v1451 = vadd.f32 0.0, %v1450
        %v1452 = vpop.f32.mrb[0].mxu0
        %1453 = vmatprep.mubr.f32.mxu0 0.0
        %1454 = vmatmul.mubr.f32.gmra.mrb[0].mxu0 %v332
        %v1455 = vpop.f32.mrb[0].mxu0
        %v1456 = vadd.f32 0.0, %v1455
        %v1457 = vpop.f32.mrb[0].mxu0
        %1458 = vmatprep.mubr.f32.mxu0 0.0
        %1459 = vmatmul.mubr.f32.gmra.mrb[0].mxu0 %v335
        %v1460 = vpop.f32.mrb[0].mxu0
        %v1461 = vadd.f32 0.0, %v1460
        %v1462 = vpop.f32.mrb[0].mxu0
        %1463 = vmatprep.mubr.f32.mxu0 0.0
        %1464 = vmatmul.mubr.f32.gmra.mrb[0].mxu0 %v338
        %v1465 = vpop.f32.mrb[0].mxu0
        %v1466 = vadd.f32 0.0, %v1465
        %v1467 = vpop.f32.mrb[0].mxu0
        %1468 = vmatprep.mubr.f32.mxu0 0.0
        %1469 = vmatmul.mubr.f32.gmra.mrb[0].mxu0 %v341
        %v1470 = vpop.f32.mrb[0].mxu0
        %v1471 = vadd.f32 0.0, %v1470
        %v1472 = vpop.f32.mrb[0].mxu0
        %1473 = vmatprep.mubr.f32.mxu0 0.0
        %1474 = vmatmul.mubr.f32.gmra.mrb[0].mxu0 %v344
        %v1475 = vpop.f32.mrb[0].mxu0
        %v1476 = vadd.f32 0.0, %v1475
        %v1477 = vpop.f32.mrb[0].mxu0
        %1478 = vdwg.mxu0
        %vm1479 = vcmask 31744
        %1480 = vst.msk [vmem:[%s268] sm:$0xff] %vm1479, %v1401
        %1481 = vst.msk [vmem:[%s268 + $0x8] sm:$0xff] %vm1479, %v1406
        %1482 = vst.msk [vmem:[%s268 + $0x10] sm:$0xff] %vm1479, %v1411
        %1483 = vst.msk [vmem:[%s268 + $0x18] sm:$0xff] %vm1479, %v1416
        %1484 = vst.msk [vmem:[%s268 + $0x20] sm:$0xff] %vm1479, %v1421
        %1485 = vst.msk [vmem:[%s268 + $0x28] sm:$0xff] %vm1479, %v1426
        %1486 = vst.msk [vmem:[%s268 + $0x30] sm:$0xff] %vm1479, %v1431
        %1487 = vst.msk [vmem:[%s268 + $0x38] sm:$0xff] %vm1479, %v1436
        %1488 = vst.msk [vmem:[%s268 + $0x40] sm:$0xff] %vm1479, %v1441
        %1489 = vst.msk [vmem:[%s268 + $0x48] sm:$0xff] %vm1479, %v1446
        %1490 = vst.msk [vmem:[%s268 + $0x50] sm:$0xff] %vm1479, %v1451
        %1491 = vst.msk [vmem:[%s268 + $0x58] sm:$0xff] %vm1479, %v1456
        %1492 = vst.msk [vmem:[%s268 + $0x60] sm:$0xff] %vm1479, %v1461
        %1493 = vst.msk [vmem:[%s268 + $0x68] sm:$0xff] %vm1479, %v1466
        %1494 = vst.msk [vmem:[%s268 + $0x70] sm:$0xff] %vm1479, %v1471
        %1495 = vst.msk [vmem:[%s268 + $0x78] sm:$0xff] %vm1479, %v1476
        %v1496 = vld [vmem:[%s3] sm:$0xff]
        %v1497 = vld [vmem:[%s3 + $0x8] sm:$0xff]
        %v1498 = vld [vmem:[%s3 + $0x10] sm:$0xff]
        %v1499 = vld [vmem:[%s3 + $0x18] sm:$0xff]
        %1500 = vmatprep.subr.mxu0 0.0
        %1501 = vmatpush1.msra.mxu0 %v1496
        %1502 = vmatprep.subr.mxu0 0.0
        %1503 = vmatpush1.msra.mxu0 %v1497
        %1504 = vmatprep.subr.mxu0 0.0
        %1505 = vmatpush1.msra.mxu0 %v1498
        %1506 = vmatprep.subr.mxu0 0.0
        %1507 = vmatpush1.msra.mxu0 %v1499
        %1508 = vmatprep.subr.mxu0 0.0
        %1509 = vmatpush1.msra.mxu0 0.0
        %1510 = vmatprep.subr.mxu0 0.0
        %1511 = vmatpush1.msra.mxu0 0.0
        %1512 = vmatprep.subr.mxu0 0.0
        %1513 = vmatpush1.msra.mxu0 0.0
        %1514 = vmatprep.subr.mxu0 0.0
        %1515 = vmatpush1.msra.mxu0 0.0
        %1516 = vmatprep.subr.mxu0 0.0
        %1517 = vmatpush1.msra.mxu0 0.0
        %1518 = vmatprep.subr.mxu0 0.0
        %1519 = vmatpush1.msra.mxu0 0.0
        %1520 = vmatprep.subr.mxu0 0.0
        %1521 = vmatpush1.msra.mxu0 0.0
        %1522 = vmatprep.subr.mxu0 0.0
        %1523 = vmatpush1.msra.mxu0 0.0
        %1524 = vmatprep.subr.mxu0 0.0
        %1525 = vmatpush1.msra.mxu0 0.0
        %1526 = vmatprep.subr.mxu0 0.0
        %1527 = vmatpush1.msra.mxu0 0.0
        %1528 = vmatprep.subr.mxu0 0.0
        %1529 = vmatpush1.msra.mxu0 0.0
        %1530 = vmatprep.subr.mxu0 0.0
        %1531 = vmatpush1.msra.mxu0 0.0
        %1532 = vmatprep.subr.mxu0 0.0
        %1533 = vmatpush1.msra.mxu0 0.0
        %1534 = vmatprep.subr.mxu0 0.0
        %1535 = vmatpush1.msra.mxu0 0.0
        %1536 = vmatprep.subr.mxu0 0.0
        %1537 = vmatpush1.msra.mxu0 0.0
        %1538 = vmatprep.subr.mxu0 0.0
        %1539 = vmatpush1.msra.mxu0 0.0
        %1540 = vmatprep.subr.mxu0 0.0
        %1541 = vmatpush1.msra.mxu0 0.0
        %1542 = vmatprep.subr.mxu0 0.0
        %1543 = vmatpush1.msra.mxu0 0.0
        %1544 = vmatprep.subr.mxu0 0.0
        %1545 = vmatpush1.msra.mxu0 0.0
        %1546 = vmatprep.subr.mxu0 0.0
        %1547 = vmatpush1.msra.mxu0 0.0
        %1548 = vmatprep.subr.mxu0 0.0
        %1549 = vmatpush1.msra.mxu0 0.0
        %1550 = vmatprep.subr.mxu0 0.0
        %1551 = vmatpush1.msra.mxu0 0.0
        %1552 = vmatprep.subr.mxu0 0.0
        %1553 = vmatpush1.msra.mxu0 0.0
        %1554 = vmatprep.subr.mxu0 0.0
        %1555 = vmatpush1.msra.mxu0 0.0
        %1556 = vmatprep.subr.mxu0 0.0
        %1557 = vmatpush1.msra.mxu0 0.0
        %1558 = vmatprep.subr.mxu0 0.0
        %1559 = vmatpush1.msra.mxu0 0.0
        %1560 = vmatprep.subr.mxu0 0.0
        %1561 = vmatpush1.msra.mxu0 0.0
        %1562 = vmatprep.subr.mxu0 0.0
        %1563 = vmatpush1.msra.mxu0 0.0
        %1564 = vmatprep.mubr.f32.mxu0 0.0
        %1565 = vmatmul.mubr.f32.gmra.mrb[0].mxu0 %v299
        %v1566 = vpop.f32.mrb[0].mxu0
        %v1567 = vadd.f32 0.0, %v1566
        %v1568 = vpop.f32.mrb[0].mxu0
        %1569 = vmatprep.mubr.f32.mxu0 0.0
        %1570 = vmatmul.mubr.f32.gmra.mrb[0].mxu0 %v302
        %v1571 = vpop.f32.mrb[0].mxu0
        %v1572 = vadd.f32 0.0, %v1571
        %v1573 = vpop.f32.mrb[0].mxu0
        %1574 = vmatprep.mubr.f32.mxu0 0.0
        %1575 = vmatmul.mubr.f32.gmra.mrb[0].mxu0 %v305
        %v1576 = vpop.f32.mrb[0].mxu0
        %v1577 = vadd.f32 0.0, %v1576
        %v1578 = vpop.f32.mrb[0].mxu0
        %1579 = vmatprep.mubr.f32.mxu0 0.0
        %1580 = vmatmul.mubr.f32.gmra.mrb[0].mxu0 %v308
        %v1581 = vpop.f32.mrb[0].mxu0
        %v1582 = vadd.f32 0.0, %v1581
        %v1583 = vpop.f32.mrb[0].mxu0
        %1584 = vmatprep.mubr.f32.mxu0 0.0
        %1585 = vmatmul.mubr.f32.gmra.mrb[0].mxu0 %v311
        %v1586 = vpop.f32.mrb[0].mxu0
        %v1587 = vadd.f32 0.0, %v1586
        %v1588 = vpop.f32.mrb[0].mxu0
        %1589 = vmatprep.mubr.f32.mxu0 0.0
        %1590 = vmatmul.mubr.f32.gmra.mrb[0].mxu0 %v314
        %v1591 = vpop.f32.mrb[0].mxu0
        %v1592 = vadd.f32 0.0, %v1591
        %v1593 = vpop.f32.mrb[0].mxu0
        %1594 = vmatprep.mubr.f32.mxu0 0.0
        %1595 = vmatmul.mubr.f32.gmra.mrb[0].mxu0 %v317
        %v1596 = vpop.f32.mrb[0].mxu0
        %v1597 = vadd.f32 0.0, %v1596
        %v1598 = vpop.f32.mrb[0].mxu0
        %1599 = vmatprep.mubr.f32.mxu0 0.0
        %1600 = vmatmul.mubr.f32.gmra.mrb[0].mxu0 %v320
        %v1601 = vpop.f32.mrb[0].mxu0
        %v1602 = vadd.f32 0.0, %v1601
        %v1603 = vpop.f32.mrb[0].mxu0
        %1604 = vmatprep.mubr.f32.mxu0 0.0
        %1605 = vmatmul.mubr.f32.gmra.mrb[0].mxu0 %v323
        %v1606 = vpop.f32.mrb[0].mxu0
        %v1607 = vadd.f32 0.0, %v1606
        %v1608 = vpop.f32.mrb[0].mxu0
        %1609 = vmatprep.mubr.f32.mxu0 0.0
        %1610 = vmatmul.mubr.f32.gmra.mrb[0].mxu0 %v326
        %v1611 = vpop.f32.mrb[0].mxu0
        %v1612 = vadd.f32 0.0, %v1611
        %v1613 = vpop.f32.mrb[0].mxu0
        %1614 = vmatprep.mubr.f32.mxu0 0.0
        %1615 = vmatmul.mubr.f32.gmra.mrb[0].mxu0 %v329
        %v1616 = vpop.f32.mrb[0].mxu0
        %v1617 = vadd.f32 0.0, %v1616
        %v1618 = vpop.f32.mrb[0].mxu0
        %1619 = vmatprep.mubr.f32.mxu0 0.0
        %1620 = vmatmul.mubr.f32.gmra.mrb[0].mxu0 %v332
        %v1621 = vpop.f32.mrb[0].mxu0
        %v1622 = vadd.f32 0.0, %v1621
        %v1623 = vpop.f32.mrb[0].mxu0
        %1624 = vmatprep.mubr.f32.mxu0 0.0
        %1625 = vmatmul.mubr.f32.gmra.mrb[0].mxu0 %v335
        %v1626 = vpop.f32.mrb[0].mxu0
        %v1627 = vadd.f32 0.0, %v1626
        %v1628 = vpop.f32.mrb[0].mxu0
        %1629 = vmatprep.mubr.f32.mxu0 0.0
        %1630 = vmatmul.mubr.f32.gmra.mrb[0].mxu0 %v338
        %v1631 = vpop.f32.mrb[0].mxu0
        %v1632 = vadd.f32 0.0, %v1631
        %v1633 = vpop.f32.mrb[0].mxu0
        %1634 = vmatprep.mubr.f32.mxu0 0.0
        %1635 = vmatmul.mubr.f32.gmra.mrb[0].mxu0 %v341
        %v1636 = vpop.f32.mrb[0].mxu0
        %v1637 = vadd.f32 0.0, %v1636
        %v1638 = vpop.f32.mrb[0].mxu0
        %1639 = vmatprep.mubr.f32.mxu0 0.0
        %1640 = vmatmul.mubr.f32.gmra.mrb[0].mxu0 %v344
        %v1641 = vpop.f32.mrb[0].mxu0
        %v1642 = vadd.f32 0.0, %v1641
        %v1643 = vpop.f32.mrb[0].mxu0
        %1644 = vdwg.mxu0
        %1645 = vst.msk [vmem:[%s274] sm:$0xff] %vm1479, %v1567
        %1646 = vst.msk [vmem:[%s274 + $0x8] sm:$0xff] %vm1479, %v1572
        %1647 = vst.msk [vmem:[%s274 + $0x10] sm:$0xff] %vm1479, %v1577
        %1648 = vst.msk [vmem:[%s274 + $0x18] sm:$0xff] %vm1479, %v1582
        %1649 = vst.msk [vmem:[%s274 + $0x20] sm:$0xff] %vm1479, %v1587
        %1650 = vst.msk [vmem:[%s274 + $0x28] sm:$0xff] %vm1479, %v1592
        %1651 = vst.msk [vmem:[%s274 + $0x30] sm:$0xff] %vm1479, %v1597
        %1652 = vst.msk [vmem:[%s274 + $0x38] sm:$0xff] %vm1479, %v1602
        %1653 = vst.msk [vmem:[%s274 + $0x40] sm:$0xff] %vm1479, %v1607
        %1654 = vst.msk [vmem:[%s274 + $0x48] sm:$0xff] %vm1479, %v1612
        %1655 = vst.msk [vmem:[%s274 + $0x50] sm:$0xff] %vm1479, %v1617
        %1656 = vst.msk [vmem:[%s274 + $0x58] sm:$0xff] %vm1479, %v1622
        %1657 = vst.msk [vmem:[%s274 + $0x60] sm:$0xff] %vm1479, %v1627
        %1658 = vst.msk [vmem:[%s274 + $0x68] sm:$0xff] %vm1479, %v1632
        %1659 = vst.msk [vmem:[%s274 + $0x70] sm:$0xff] %vm1479, %v1637
        %1660 = vst.msk [vmem:[%s274 + $0x78] sm:$0xff] %vm1479, %v1642
        %s1661 = sand.u32 %s115, 1
        %s1662 = sand.u32 %s115, 1
        %s1663 = smul.addr %s1662, 256
        %s1664 = scalar_lea.vmem [#allocation2], %s1663
        %s1665 = smul.u32 16, %s18
        %p1666 = scmp.lt.s32.totalorder %s1665, 31
        %s1667 = scalar_select %p1666, %s1665, 31
        %s1668 = smul.addr %s1667, 8
        %s1669 = scalar_lea.vmem %s5, %s1668
        %s1670 = smul.u32 16, %s18
        %p1671 = scmp.lt.s32.totalorder %s1670, 31
        %s1672 = scalar_select %p1671, %s1670, 31
        %s1673 = smul.addr %s1672, 8
        %s1674 = scalar_lea.vmem %s6, %s1673
        // Predicated region
        $region37: #{gat_forward.4} parent=35 // pred_check
          %p1675 = pneg %p125
        $region38: #{gat_forward.4} parent=35 // pred_check_branch
          %1677 = sbr.rel (%p1675) target = $region40
        $region39: #{gat_forward.4} parent=35 // pred_region
          %s1678 = smul.u32 16, %s18
          %s1679 = smul.addr %s1678, 4
          %s1680 = scalar_lea.vmem %s4, %s1679
          // Predicated region
          $region41: #{gat_forward.4} parent=39 // pred_check
            _
          $region42: #{gat_forward.4} parent=39 // pred_check_branch
            %1682 = sbr.rel (0) target = $region44
          $region43: #{gat_forward.4} parent=39 // pred_region
            // Predicated region
            $region45: #{gat_forward.4} parent=43 // pred_check
              _
            $region46: #{gat_forward.4} parent=43 // pred_check_branch
              %1684 = sbr.rel target = $region48
            $region47: #{gat_forward.4} parent=43 // pred_region
              // Predicated region
              $region60: #{gat_forward.4} parent=47 // pred_check
                _
              $region61: #{gat_forward.4} parent=47 // pred_check_branch
                %1825 = sbr.rel (0) target = $region63
              $region62: #{gat_forward.4} parent=47 // pred_region
                loop: start=0, step=1, limit=1
                $region64: #{gat_forward.4} parent=62 // loop_pre_header
                  _
                $region65: #{gat_forward.4} parent=62 // loop_header
                  %s1827 = sphi 0, %s1831
                  %p1828 = scmp.ge.s32.totalorder %s1827, 1
                  %s1832 = sphi %s1664, %s1664
                  %s1833 = sphi %s1680, %s1680
                $region66: #{gat_forward.4} parent=62 // loop_header_branch
                  %1830 = sbr.rel (%p1828) target = $region70
                $region67: #{gat_forward.4} parent=62 // loop_body
                  _
                $region68: #{gat_forward.4} parent=62 // loop_footer
                  %s1831 = sadd.s32 1, %s1827
                $region69: #{gat_forward.4} parent=62 // loop_footer_branch
                  %1826 = sbr.rel target = $region65
                $region70: #{gat_forward.4} parent=62 // loop_exit
                  _
                loop: start=0, step=1, limit=1
                $region71: #{gat_forward.4} parent=62 // loop_pre_header
                  _
                $region72: #{gat_forward.4} parent=62 // loop_header
                  %s1836 = sphi 0, %s1840
                  %p1837 = scmp.ge.s32.totalorder %s1836, 1
                  %s1841 = sphi %s1664, %s1664
                  %s1842 = sphi %s1680, %s1680
                $region73: #{gat_forward.4} parent=62 // loop_header_branch
                  %1839 = sbr.rel (%p1837) target = $region77
                $region74: #{gat_forward.4} parent=62 // loop_body
                  %v1843 = vld [vmem:[%s1841] sm:$0xf]
                  %1844 = vst [vmem:[%s1842] sm:$0xf] %v1843
                  %v1845 = vld [vmem:[%s1841 + $0x4] sm:$0xf]
                  %1846 = vst [vmem:[%s1842 + $0x4] sm:$0xf] %v1845
                  %v1847 = vld [vmem:[%s1841 + $0x8] sm:$0xf]
                  %1848 = vst [vmem:[%s1842 + $0x8] sm:$0xf] %v1847
                  %v1849 = vld [vmem:[%s1841 + $0xc] sm:$0xf]
                  %1850 = vst [vmem:[%s1842 + $0xc] sm:$0xf] %v1849
                  %v1851 = vld [vmem:[%s1841 + $0x10] sm:$0xf]
                  %1852 = vst [vmem:[%s1842 + $0x10] sm:$0xf] %v1851
                  %v1853 = vld [vmem:[%s1841 + $0x14] sm:$0xf]
                  %1854 = vst [vmem:[%s1842 + $0x14] sm:$0xf] %v1853
                  %v1855 = vld [vmem:[%s1841 + $0x18] sm:$0xf]
                  %1856 = vst [vmem:[%s1842 + $0x18] sm:$0xf] %v1855
                  %v1857 = vld [vmem:[%s1841 + $0x1c] sm:$0xf]
                  %1858 = vst [vmem:[%s1842 + $0x1c] sm:$0xf] %v1857
                  %v1859 = vld [vmem:[%s1841 + $0x20] sm:$0xf]
                  %1860 = vst [vmem:[%s1842 + $0x20] sm:$0xf] %v1859
                  %v1861 = vld [vmem:[%s1841 + $0x24] sm:$0xf]
                  %1862 = vst [vmem:[%s1842 + $0x24] sm:$0xf] %v1861
                  %v1863 = vld [vmem:[%s1841 + $0x28] sm:$0xf]
                  %1864 = vst [vmem:[%s1842 + $0x28] sm:$0xf] %v1863
                  %v1865 = vld [vmem:[%s1841 + $0x2c] sm:$0xf]
                  %1866 = vst [vmem:[%s1842 + $0x2c] sm:$0xf] %v1865
                  %v1867 = vld [vmem:[%s1841 + $0x30] sm:$0xf]
                  %1868 = vst [vmem:[%s1842 + $0x30] sm:$0xf] %v1867
                  %v1869 = vld [vmem:[%s1841 + $0x34] sm:$0xf]
                  %1870 = vst [vmem:[%s1842 + $0x34] sm:$0xf] %v1869
                  %v1871 = vld [vmem:[%s1841 + $0x38] sm:$0xf]
                  %1872 = vst [vmem:[%s1842 + $0x38] sm:$0xf] %v1871
                  %v1873 = vld [vmem:[%s1841 + $0x3c] sm:$0xf]
                  %1874 = vst [vmem:[%s1842 + $0x3c] sm:$0xf] %v1873
                  %v1875 = vld [vmem:[%s1841 + $0x40] sm:$0xf]
                  %1876 = vst [vmem:[%s1842 + $0x80] sm:$0xf] %v1875
                  %v1877 = vld [vmem:[%s1841 + $0x44] sm:$0xf]
                  %1878 = vst [vmem:[%s1842 + $0x84] sm:$0xf] %v1877
                  %v1879 = vld [vmem:[%s1841 + $0x48] sm:$0xf]
                  %1880 = vst [vmem:[%s1842 + $0x88] sm:$0xf] %v1879
                  %v1881 = vld [vmem:[%s1841 + $0x4c] sm:$0xf]
                  %1882 = vst [vmem:[%s1842 + $0x8c] sm:$0xf] %v1881
                  %v1883 = vld [vmem:[%s1841 + $0x50] sm:$0xf]
                  %1884 = vst [vmem:[%s1842 + $0x90] sm:$0xf] %v1883
                  %v1885 = vld [vmem:[%s1841 + $0x54] sm:$0xf]
                  %1886 = vst [vmem:[%s1842 + $0x94] sm:$0xf] %v1885
                  %v1887 = vld [vmem:[%s1841 + $0x58] sm:$0xf]
                  %1888 = vst [vmem:[%s1842 + $0x98] sm:$0xf] %v1887
                  %v1889 = vld [vmem:[%s1841 + $0x5c] sm:$0xf]
                  %1890 = vst [vmem:[%s1842 + $0x9c] sm:$0xf] %v1889
                  %v1891 = vld [vmem:[%s1841 + $0x60] sm:$0xf]
                  %1892 = vst [vmem:[%s1842 + $0xa0] sm:$0xf] %v1891
                  %v1893 = vld [vmem:[%s1841 + $0x64] sm:$0xf]
                  %1894 = vst [vmem:[%s1842 + $0xa4] sm:$0xf] %v1893
                  %v1895 = vld [vmem:[%s1841 + $0x68] sm:$0xf]
                  %1896 = vst [vmem:[%s1842 + $0xa8] sm:$0xf] %v1895
                  %v1897 = vld [vmem:[%s1841 + $0x6c] sm:$0xf]
                  %1898 = vst [vmem:[%s1842 + $0xac] sm:$0xf] %v1897
                  %v1899 = vld [vmem:[%s1841 + $0x70] sm:$0xf]
                  %1900 = vst [vmem:[%s1842 + $0xb0] sm:$0xf] %v1899
                  %v1901 = vld [vmem:[%s1841 + $0x74] sm:$0xf]
                  %1902 = vst [vmem:[%s1842 + $0xb4] sm:$0xf] %v1901
                  %v1903 = vld [vmem:[%s1841 + $0x78] sm:$0xf]
                  %1904 = vst [vmem:[%s1842 + $0xb8] sm:$0xf] %v1903
                  %v1905 = vld [vmem:[%s1841 + $0x7c] sm:$0xf]
                  %1906 = vst [vmem:[%s1842 + $0xbc] sm:$0xf] %v1905
                  %v1907 = vld [vmem:[%s1841 + $0x80] sm:$0xf]
                  %1908 = vst [vmem:[%s1842 + $0x100] sm:$0xf] %v1907
                  %v1909 = vld [vmem:[%s1841 + $0x84] sm:$0xf]
                  %1910 = vst [vmem:[%s1842 + $0x104] sm:$0xf] %v1909
                  %v1911 = vld [vmem:[%s1841 + $0x88] sm:$0xf]
                  %1912 = vst [vmem:[%s1842 + $0x108] sm:$0xf] %v1911
                  %v1913 = vld [vmem:[%s1841 + $0x8c] sm:$0xf]
                  %1914 = vst [vmem:[%s1842 + $0x10c] sm:$0xf] %v1913
                  %v1915 = vld [vmem:[%s1841 + $0x90] sm:$0xf]
                  %1916 = vst [vmem:[%s1842 + $0x110] sm:$0xf] %v1915
                  %v1917 = vld [vmem:[%s1841 + $0x94] sm:$0xf]
                  %1918 = vst [vmem:[%s1842 + $0x114] sm:$0xf] %v1917
                  %v1919 = vld [vmem:[%s1841 + $0x98] sm:$0xf]
                  %1920 = vst [vmem:[%s1842 + $0x118] sm:$0xf] %v1919
                  %v1921 = vld [vmem:[%s1841 + $0x9c] sm:$0xf]
                  %1922 = vst [vmem:[%s1842 + $0x11c] sm:$0xf] %v1921
                  %v1923 = vld [vmem:[%s1841 + $0xa0] sm:$0xf]
                  %1924 = vst [vmem:[%s1842 + $0x120] sm:$0xf] %v1923
                  %v1925 = vld [vmem:[%s1841 + $0xa4] sm:$0xf]
                  %1926 = vst [vmem:[%s1842 + $0x124] sm:$0xf] %v1925
                  %v1927 = vld [vmem:[%s1841 + $0xa8] sm:$0xf]
                  %1928 = vst [vmem:[%s1842 + $0x128] sm:$0xf] %v1927
                  %v1929 = vld [vmem:[%s1841 + $0xac] sm:$0xf]
                  %1930 = vst [vmem:[%s1842 + $0x12c] sm:$0xf] %v1929
                  %v1931 = vld [vmem:[%s1841 + $0xb0] sm:$0xf]
                  %1932 = vst [vmem:[%s1842 + $0x130] sm:$0xf] %v1931
                  %v1933 = vld [vmem:[%s1841 + $0xb4] sm:$0xf]
                  %1934 = vst [vmem:[%s1842 + $0x134] sm:$0xf] %v1933
                  %v1935 = vld [vmem:[%s1841 + $0xb8] sm:$0xf]
                  %1936 = vst [vmem:[%s1842 + $0x138] sm:$0xf] %v1935
                  %v1937 = vld [vmem:[%s1841 + $0xbc] sm:$0xf]
                  %1938 = vst [vmem:[%s1842 + $0x13c] sm:$0xf] %v1937
                  %v1939 = vld [vmem:[%s1841 + $0xc0] sm:$0xf]
                  %1940 = vst [vmem:[%s1842 + $0x180] sm:$0xf] %v1939
                  %v1941 = vld [vmem:[%s1841 + $0xc4] sm:$0xf]
                  %1942 = vst [vmem:[%s1842 + $0x184] sm:$0xf] %v1941
                  %v1943 = vld [vmem:[%s1841 + $0xc8] sm:$0xf]
                  %1944 = vst [vmem:[%s1842 + $0x188] sm:$0xf] %v1943
                  %v1945 = vld [vmem:[%s1841 + $0xcc] sm:$0xf]
                  %1946 = vst [vmem:[%s1842 + $0x18c] sm:$0xf] %v1945
                  %v1947 = vld [vmem:[%s1841 + $0xd0] sm:$0xf]
                  %1948 = vst [vmem:[%s1842 + $0x190] sm:$0xf] %v1947
                  %v1949 = vld [vmem:[%s1841 + $0xd4] sm:$0xf]
                  %1950 = vst [vmem:[%s1842 + $0x194] sm:$0xf] %v1949
                  %v1951 = vld [vmem:[%s1841 + $0xd8] sm:$0xf]
                  %1952 = vst [vmem:[%s1842 + $0x198] sm:$0xf] %v1951
                  %v1953 = vld [vmem:[%s1841 + $0xdc] sm:$0xf]
                  %1954 = vst [vmem:[%s1842 + $0x19c] sm:$0xf] %v1953
                  %v1955 = vld [vmem:[%s1841 + $0xe0] sm:$0xf]
                  %1956 = vst [vmem:[%s1842 + $0x1a0] sm:$0xf] %v1955
                  %v1957 = vld [vmem:[%s1841 + $0xe4] sm:$0xf]
                  %1958 = vst [vmem:[%s1842 + $0x1a4] sm:$0xf] %v1957
                  %v1959 = vld [vmem:[%s1841 + $0xe8] sm:$0xf]
                  %1960 = vst [vmem:[%s1842 + $0x1a8] sm:$0xf] %v1959
                  %v1961 = vld [vmem:[%s1841 + $0xec] sm:$0xf]
                  %1962 = vst [vmem:[%s1842 + $0x1ac] sm:$0xf] %v1961
                  %v1963 = vld [vmem:[%s1841 + $0xf0] sm:$0xf]
                  %1964 = vst [vmem:[%s1842 + $0x1b0] sm:$0xf] %v1963
                  %v1965 = vld [vmem:[%s1841 + $0xf4] sm:$0xf]
                  %1966 = vst [vmem:[%s1842 + $0x1b4] sm:$0xf] %v1965
                  %v1967 = vld [vmem:[%s1841 + $0xf8] sm:$0xf]
                  %1968 = vst [vmem:[%s1842 + $0x1b8] sm:$0xf] %v1967
                  %v1969 = vld [vmem:[%s1841 + $0xfc] sm:$0xf]
                  %1970 = vst [vmem:[%s1842 + $0x1bc] sm:$0xf] %v1969
                $region75: #{gat_forward.4} parent=62 // loop_footer
                  %s1840 = sadd.s32 1, %s1836
                $region76: #{gat_forward.4} parent=62 // loop_footer_branch
                  %1835 = sbr.rel target = $region72
                $region77: #{gat_forward.4} parent=62 // loop_exit
                  _
              $region63: #{gat_forward.4} parent=47 // pred_fallthru
                _
            $region48: #{gat_forward.4} parent=43 // pred_fallthru
              _
            // Predicated region
            $region49: #{gat_forward.4} parent=43 // pred_check
              _
            $region50: #{gat_forward.4} parent=43 // pred_check_branch
              %1686 = sbr.rel (0) target = $region52
            $region51: #{gat_forward.4} parent=43 // pred_region
              loop: start=0, step=1, limit=1
              $region53: #{gat_forward.4} parent=51 // loop_pre_header
                _
              $region54: #{gat_forward.4} parent=51 // loop_header
                %s1689 = sphi 0, %s1693
                %p1690 = scmp.ge.s32.totalorder %s1689, 1
                %s1694 = sphi %s1664, %s1664
                %s1695 = sphi %s1680, %s1680
              $region55: #{gat_forward.4} parent=51 // loop_header_branch
                %1692 = sbr.rel (%p1690) target = $region59
              $region56: #{gat_forward.4} parent=51 // loop_body
                %v1696 = vld [vmem:[%s1694] sm:$0xf]
                %1697 = vst [vmem:[%s1695] sm:$0xf] %v1696
                %v1698 = vld [vmem:[%s1694 + $0x4] sm:$0xf]
                %1699 = vst [vmem:[%s1695 + $0x4] sm:$0xf] %v1698
                %v1700 = vld [vmem:[%s1694 + $0x8] sm:$0xf]
                %1701 = vst [vmem:[%s1695 + $0x8] sm:$0xf] %v1700
                %v1702 = vld [vmem:[%s1694 + $0xc] sm:$0xf]
                %1703 = vst [vmem:[%s1695 + $0xc] sm:$0xf] %v1702
                %v1704 = vld [vmem:[%s1694 + $0x10] sm:$0xf]
                %1705 = vst [vmem:[%s1695 + $0x10] sm:$0xf] %v1704
                %v1706 = vld [vmem:[%s1694 + $0x14] sm:$0xf]
                %1707 = vst [vmem:[%s1695 + $0x14] sm:$0xf] %v1706
                %v1708 = vld [vmem:[%s1694 + $0x18] sm:$0xf]
                %1709 = vst [vmem:[%s1695 + $0x18] sm:$0xf] %v1708
                %v1710 = vld [vmem:[%s1694 + $0x1c] sm:$0xf]
                %1711 = vst [vmem:[%s1695 + $0x1c] sm:$0xf] %v1710
                %v1712 = vld [vmem:[%s1694 + $0x20] sm:$0xf]
                %1713 = vst [vmem:[%s1695 + $0x20] sm:$0xf] %v1712
                %v1714 = vld [vmem:[%s1694 + $0x24] sm:$0xf]
                %1715 = vst [vmem:[%s1695 + $0x24] sm:$0xf] %v1714
                %v1716 = vld [vmem:[%s1694 + $0x28] sm:$0xf]
                %1717 = vst [vmem:[%s1695 + $0x28] sm:$0xf] %v1716
                %v1718 = vld [vmem:[%s1694 + $0x2c] sm:$0xf]
                %1719 = vst [vmem:[%s1695 + $0x2c] sm:$0xf] %v1718
                %v1720 = vld [vmem:[%s1694 + $0x30] sm:$0xf]
                %1721 = vst [vmem:[%s1695 + $0x30] sm:$0xf] %v1720
                %v1722 = vld [vmem:[%s1694 + $0x34] sm:$0xf]
                %1723 = vst [vmem:[%s1695 + $0x34] sm:$0xf] %v1722
                %v1724 = vld [vmem:[%s1694 + $0x38] sm:$0xf]
                %1725 = vst [vmem:[%s1695 + $0x38] sm:$0xf] %v1724
                %v1726 = vld [vmem:[%s1694 + $0x3c] sm:$0xf]
                %1727 = vst [vmem:[%s1695 + $0x3c] sm:$0xf] %v1726
                %v1728 = vld [vmem:[%s1694 + $0x40] sm:$0xf]
                %1729 = vst [vmem:[%s1695 + $0x80] sm:$0xf] %v1728
                %v1730 = vld [vmem:[%s1694 + $0x44] sm:$0xf]
                %1731 = vst [vmem:[%s1695 + $0x84] sm:$0xf] %v1730
                %v1732 = vld [vmem:[%s1694 + $0x48] sm:$0xf]
                %1733 = vst [vmem:[%s1695 + $0x88] sm:$0xf] %v1732
                %v1734 = vld [vmem:[%s1694 + $0x4c] sm:$0xf]
                %1735 = vst [vmem:[%s1695 + $0x8c] sm:$0xf] %v1734
                %v1736 = vld [vmem:[%s1694 + $0x50] sm:$0xf]
                %1737 = vst [vmem:[%s1695 + $0x90] sm:$0xf] %v1736
                %v1738 = vld [vmem:[%s1694 + $0x54] sm:$0xf]
                %1739 = vst [vmem:[%s1695 + $0x94] sm:$0xf] %v1738
                %v1740 = vld [vmem:[%s1694 + $0x58] sm:$0xf]
                %1741 = vst [vmem:[%s1695 + $0x98] sm:$0xf] %v1740
                %v1742 = vld [vmem:[%s1694 + $0x5c] sm:$0xf]
                %1743 = vst [vmem:[%s1695 + $0x9c] sm:$0xf] %v1742
                %v1744 = vld [vmem:[%s1694 + $0x60] sm:$0xf]
                %1745 = vst [vmem:[%s1695 + $0xa0] sm:$0xf] %v1744
                %v1746 = vld [vmem:[%s1694 + $0x64] sm:$0xf]
                %1747 = vst [vmem:[%s1695 + $0xa4] sm:$0xf] %v1746
                %v1748 = vld [vmem:[%s1694 + $0x68] sm:$0xf]
                %1749 = vst [vmem:[%s1695 + $0xa8] sm:$0xf] %v1748
                %v1750 = vld [vmem:[%s1694 + $0x6c] sm:$0xf]
                %1751 = vst [vmem:[%s1695 + $0xac] sm:$0xf] %v1750
                %v1752 = vld [vmem:[%s1694 + $0x70] sm:$0xf]
                %1753 = vst [vmem:[%s1695 + $0xb0] sm:$0xf] %v1752
                %v1754 = vld [vmem:[%s1694 + $0x74] sm:$0xf]
                %1755 = vst [vmem:[%s1695 + $0xb4] sm:$0xf] %v1754
                %v1756 = vld [vmem:[%s1694 + $0x78] sm:$0xf]
                %1757 = vst [vmem:[%s1695 + $0xb8] sm:$0xf] %v1756
                %v1758 = vld [vmem:[%s1694 + $0x7c] sm:$0xf]
                %1759 = vst [vmem:[%s1695 + $0xbc] sm:$0xf] %v1758
                %v1760 = vld [vmem:[%s1694 + $0x80] sm:$0xf]
                %1761 = vst [vmem:[%s1695 + $0x100] sm:$0xf] %v1760
                %v1762 = vld [vmem:[%s1694 + $0x84] sm:$0xf]
                %1763 = vst [vmem:[%s1695 + $0x104] sm:$0xf] %v1762
                %v1764 = vld [vmem:[%s1694 + $0x88] sm:$0xf]
                %1765 = vst [vmem:[%s1695 + $0x108] sm:$0xf] %v1764
                %v1766 = vld [vmem:[%s1694 + $0x8c] sm:$0xf]
                %1767 = vst [vmem:[%s1695 + $0x10c] sm:$0xf] %v1766
                %v1768 = vld [vmem:[%s1694 + $0x90] sm:$0xf]
                %1769 = vst [vmem:[%s1695 + $0x110] sm:$0xf] %v1768
                %v1770 = vld [vmem:[%s1694 + $0x94] sm:$0xf]
                %1771 = vst [vmem:[%s1695 + $0x114] sm:$0xf] %v1770
                %v1772 = vld [vmem:[%s1694 + $0x98] sm:$0xf]
                %1773 = vst [vmem:[%s1695 + $0x118] sm:$0xf] %v1772
                %v1774 = vld [vmem:[%s1694 + $0x9c] sm:$0xf]
                %1775 = vst [vmem:[%s1695 + $0x11c] sm:$0xf] %v1774
                %v1776 = vld [vmem:[%s1694 + $0xa0] sm:$0xf]
                %1777 = vst [vmem:[%s1695 + $0x120] sm:$0xf] %v1776
                %v1778 = vld [vmem:[%s1694 + $0xa4] sm:$0xf]
                %1779 = vst [vmem:[%s1695 + $0x124] sm:$0xf] %v1778
                %v1780 = vld [vmem:[%s1694 + $0xa8] sm:$0xf]
                %1781 = vst [vmem:[%s1695 + $0x128] sm:$0xf] %v1780
                %v1782 = vld [vmem:[%s1694 + $0xac] sm:$0xf]
                %1783 = vst [vmem:[%s1695 + $0x12c] sm:$0xf] %v1782
                %v1784 = vld [vmem:[%s1694 + $0xb0] sm:$0xf]
                %1785 = vst [vmem:[%s1695 + $0x130] sm:$0xf] %v1784
                %v1786 = vld [vmem:[%s1694 + $0xb4] sm:$0xf]
                %1787 = vst [vmem:[%s1695 + $0x134] sm:$0xf] %v1786
                %v1788 = vld [vmem:[%s1694 + $0xb8] sm:$0xf]
                %1789 = vst [vmem:[%s1695 + $0x138] sm:$0xf] %v1788
                %v1790 = vld [vmem:[%s1694 + $0xbc] sm:$0xf]
                %1791 = vst [vmem:[%s1695 + $0x13c] sm:$0xf] %v1790
                %v1792 = vld [vmem:[%s1694 + $0xc0] sm:$0xf]
                %1793 = vst [vmem:[%s1695 + $0x180] sm:$0xf] %v1792
                %v1794 = vld [vmem:[%s1694 + $0xc4] sm:$0xf]
                %1795 = vst [vmem:[%s1695 + $0x184] sm:$0xf] %v1794
                %v1796 = vld [vmem:[%s1694 + $0xc8] sm:$0xf]
                %1797 = vst [vmem:[%s1695 + $0x188] sm:$0xf] %v1796
                %v1798 = vld [vmem:[%s1694 + $0xcc] sm:$0xf]
                %1799 = vst [vmem:[%s1695 + $0x18c] sm:$0xf] %v1798
                %v1800 = vld [vmem:[%s1694 + $0xd0] sm:$0xf]
                %1801 = vst [vmem:[%s1695 + $0x190] sm:$0xf] %v1800
                %v1802 = vld [vmem:[%s1694 + $0xd4] sm:$0xf]
                %1803 = vst [vmem:[%s1695 + $0x194] sm:$0xf] %v1802
                %v1804 = vld [vmem:[%s1694 + $0xd8] sm:$0xf]
                %1805 = vst [vmem:[%s1695 + $0x198] sm:$0xf] %v1804
                %v1806 = vld [vmem:[%s1694 + $0xdc] sm:$0xf]
                %1807 = vst [vmem:[%s1695 + $0x19c] sm:$0xf] %v1806
                %v1808 = vld [vmem:[%s1694 + $0xe0] sm:$0xf]
                %1809 = vst [vmem:[%s1695 + $0x1a0] sm:$0xf] %v1808
                %v1810 = vld [vmem:[%s1694 + $0xe4] sm:$0xf]
                %1811 = vst [vmem:[%s1695 + $0x1a4] sm:$0xf] %v1810
                %v1812 = vld [vmem:[%s1694 + $0xe8] sm:$0xf]
                %1813 = vst [vmem:[%s1695 + $0x1a8] sm:$0xf] %v1812
                %v1814 = vld [vmem:[%s1694 + $0xec] sm:$0xf]
                %1815 = vst [vmem:[%s1695 + $0x1ac] sm:$0xf] %v1814
                %v1816 = vld [vmem:[%s1694 + $0xf0] sm:$0xf]
                %1817 = vst [vmem:[%s1695 + $0x1b0] sm:$0xf] %v1816
                %v1818 = vld [vmem:[%s1694 + $0xf4] sm:$0xf]
                %1819 = vst [vmem:[%s1695 + $0x1b4] sm:$0xf] %v1818
                %v1820 = vld [vmem:[%s1694 + $0xf8] sm:$0xf]
                %1821 = vst [vmem:[%s1695 + $0x1b8] sm:$0xf] %v1820
                %v1822 = vld [vmem:[%s1694 + $0xfc] sm:$0xf]
                %1823 = vst [vmem:[%s1695 + $0x1bc] sm:$0xf] %v1822
              $region57: #{gat_forward.4} parent=51 // loop_footer
                %s1693 = sadd.s32 1, %s1689
              $region58: #{gat_forward.4} parent=51 // loop_footer_branch
                %1688 = sbr.rel target = $region54
              $region59: #{gat_forward.4} parent=51 // loop_exit
                _
            $region52: #{gat_forward.4} parent=43 // pred_fallthru
              _
          $region44: #{gat_forward.4} parent=39 // pred_fallthru
            _
          %1971 = vnop
        $region40: #{gat_forward.4} parent=35 // pred_fallthru
          _
        // Predicated region
        $region78: #{gat_forward.4} parent=35 // pred_check
          %p1972 = pneg %p151
        $region79: #{gat_forward.4} parent=35 // pred_check_branch
          %1974 = sbr.rel (%p1972) target = $region81
        $region80: #{gat_forward.4} parent=35 // pred_region
          %s1975 = smul.u32 16, %s18
        $region81: #{gat_forward.4} parent=35 // pred_fallthru
          _
        // Predicated region
        $region82: #{gat_forward.4} parent=35 // pred_check
          %p1976 = pneg %p177
        $region83: #{gat_forward.4} parent=35 // pred_check_branch
          %1978 = sbr.rel (%p1976) target = $region85
        $region84: #{gat_forward.4} parent=35 // pred_region
          %s1979 = smul.u32 16, %s18
        $region85: #{gat_forward.4} parent=35 // pred_fallthru
          _
      $region36: #{gat_forward.4} parent=5 // pred_fallthru
        _
      %p1980 = scmp.le.s32.totalorder 2, %s13
      // Predicated region
      $region86: #{gat_forward.4} parent=5 // pred_check
        %p1981 = pneg %p1980
      $region87: #{gat_forward.4} parent=5 // pred_check_branch
        %1983 = sbr.rel (%p1981) target = $region89
      $region88: #{gat_forward.4} parent=5 // pred_region
        %s1984 = ssub.s32 %s13, 2
        // Predicated region
        $region90: #{gat_forward.4} parent=88 // pred_check
          %p1985 = pneg %p131
        $region91: #{gat_forward.4} parent=88 // pred_check_branch
          %1987 = sbr.rel (%p1985) target = $region93
        $region92: #{gat_forward.4} parent=88 // pred_region
          %s1988 = sand.u32 %s116, 1
          %s1989 = sand.u32 %s116, 1
          %s1990 = smul.addr %s1989, 256
          %s1991 = scalar_lea.vmem [#allocation2], %s1990
        $region93: #{gat_forward.4} parent=88 // pred_fallthru
          _
        // Predicated region
        $region94: #{gat_forward.4} parent=88 // pred_check
          %p1992 = pneg %p157
        $region95: #{gat_forward.4} parent=88 // pred_check_branch
          %1994 = sbr.rel (%p1992) target = $region97
        $region96: #{gat_forward.4} parent=88 // pred_region
          %s1995 = smul.u32 16, %s19
          %p1996 = scmp.lt.s32.totalorder %s1995, 31
          %s1997 = scalar_select %p1996, %s1995, 31
          %s1998 = smul.addr %s1997, 8
          %s1999 = scalar_lea.vmem %s5, %s1998
        $region97: #{gat_forward.4} parent=88 // pred_fallthru
          _
        // Predicated region
        $region98: #{gat_forward.4} parent=88 // pred_check
          %p2000 = pneg %p183
        $region99: #{gat_forward.4} parent=88 // pred_check_branch
          %2002 = sbr.rel (%p2000) target = $region101
        $region100: #{gat_forward.4} parent=88 // pred_region
          %s2003 = smul.u32 16, %s19
          %p2004 = scmp.lt.s32.totalorder %s2003, 31
          %s2005 = scalar_select %p2004, %s2003, 31
          %s2006 = smul.addr %s2005, 8
          %s2007 = scalar_lea.vmem %s6, %s2006
        $region101: #{gat_forward.4} parent=88 // pred_fallthru
          _
      $region89: #{gat_forward.4} parent=5 // pred_fallthru
        _
    $region6: #{gat_forward.4} parent=1 // loop_footer
      %s17 = sadd.s32 1, %s13
    $region7: #{gat_forward.4} parent=1 // loop_footer_branch
      %12 = sbr.rel target = $region3
    $region8: #{gat_forward.4} parent=1 // loop_exit
      _

// kernel: gat_forward.5
$region0: #{gat_forward.5}
  #allocation0 [shape = 'u32[]', space=smem, size = 0x4, offset = 0x4, fixed_abs, tag = 'smem constant byte address 0x4 - core index']
  #allocation1 [shape = 'u32[144,128]{1,0:T(1,128)}', space=vmem, size = 0x12000, scoped, tag = 'internal scratch']
  %s0 = inlined_call_operand.vmem [shape: s8[256,256], index: 0, kind: input, shape index: {}]
  %s1 = inlined_call_operand.vmem [shape: bf16[4,256,17], index: 1, kind: input, shape index: {}]
  %s2 = inlined_call_operand.vmem [shape: f32[256,4], index: 2, kind: input, shape index: {}]
  %s3 = inlined_call_operand.vmem [shape: f32[4,256], index: 3, kind: input, shape index: {}]
  %s4 = inlined_call_operand.vmem [shape: f32[256,64], index: 4, kind: output, shape index: {}]
  %s5 = sld [smem:[#allocation0]]
  $region49: #{gat_forward.5} parent=0
    _
  %s7 = ssub.s32 1, %s5
  %s8 = scalar_select 0, %s7, %s5
  loop: start=0, step=1, limit=4
  $region2: #{gat_forward.5} parent=0 // loop_pre_header
    _
  $region3: #{gat_forward.5} parent=0 // loop_header
    %s10 = sphi 0, %s14
    %p11 = scmp.ge.s32.totalorder %s10, 4
    %s20 = sphi 0, %s22
    %s23 = sphi 0, %s20
    %s24 = sphi 0, %s23
    %s40 = sphi 0, %s24
    %s44 = sphi 0, %s44
    %s46 = sphi 0, %s44
    %s47 = sphi 0, %s46
    %s61 = sphi 0, %s47
    %s67 = sphi 0, %s69
    %s70 = sphi 0, %s67
    %s71 = sphi 0, %s70
    %s87 = sphi 0, %s71
    %s91 = sphi 0, %s91
    %s93 = sphi 0, %s91
    %s94 = sphi 0, %s93
    %s108 = sphi 0, %s94
    %s114 = sphi 0, %s116
    %s117 = sphi 0, %s114
    %s118 = sphi 0, %s117
    %s134 = sphi 0, %s118
  $region4: #{gat_forward.5} parent=0 // loop_header_branch
    %13 = sbr.rel (%p11) target = $region8
  $region5: #{gat_forward.5} parent=0 // loop_body
    %s15 = ssub.s32 %s10, 1
    %s16 = ssub.s32 %s10, 2
    %s17 = sadd.s32 %s10, 1
    %s18 = ssub.s32 %s10, %s17
    %p19 = scmp.eq.s32.totalorder %s18, 0
    %s21 = sadd.s32 %s20, 1
    %s22 = scalar_select %p19, %s20, %s21
    %p25 = pneg %p19
    %p26 = scmp.eq.s32.totalorder %s10, 1
    %p27 = por %p25, %p26
    %p28 = scmp.ne.s32.totalorder %s20, %s23
    %p29 = scmp.eq.s32.totalorder %s10, 0
    %p30 = por %p28, %p29
    %p31 = scmp.ne.s32.totalorder %s20, %s23
    %p32 = scmp.eq.s32.totalorder %s15, 1
    %p33 = por %p31, %p32
    %p34 = scmp.ne.s32.totalorder %s23, %s24
    %p35 = scmp.eq.s32.totalorder %s15, 0
    %p36 = por %p34, %p35
    %p37 = scmp.ne.s32.totalorder %s23, %s24
    %p38 = scmp.eq.s32.totalorder %s16, 1
    %p39 = por %p37, %p38
    %p41 = scmp.ne.s32.totalorder %s24, %s40
    %p42 = scmp.eq.s32.totalorder %s16, 0
    %p43 = por %p41, %p42
    %s45 = sadd.s32 %s44, 1
    %p48 = scmp.eq.s32.totalorder %s10, 1
    %p49 = scmp.ne.s32.totalorder %s44, %s46
    %p50 = scmp.eq.s32.totalorder %s10, 0
    %p51 = por %p49, %p50
    %p52 = scmp.ne.s32.totalorder %s44, %s46
    %p53 = scmp.eq.s32.totalorder %s15, 1
    %p54 = por %p52, %p53
    %p55 = scmp.ne.s32.totalorder %s46, %s47
    %p56 = scmp.eq.s32.totalorder %s15, 0
    %p57 = por %p55, %p56
    %p58 = scmp.ne.s32.totalorder %s46, %s47
    %p59 = scmp.eq.s32.totalorder %s16, 1
    %p60 = por %p58, %p59
    %p62 = scmp.ne.s32.totalorder %s47, %s61
    %p63 = scmp.eq.s32.totalorder %s16, 0
    %p64 = por %p62, %p63
    %s65 = ssub.s32 %s10, %s17
    %p66 = scmp.eq.s32.totalorder %s65, 0
    %s68 = sadd.s32 %s67, 1
    %s69 = scalar_select %p66, %s67, %s68
    %p72 = pneg %p66
    %p73 = scmp.eq.s32.totalorder %s10, 1
    %p74 = por %p72, %p73
    %p75 = scmp.ne.s32.totalorder %s67, %s70
    %p76 = scmp.eq.s32.totalorder %s10, 0
    %p77 = por %p75, %p76
    %p78 = scmp.ne.s32.totalorder %s67, %s70
    %p79 = scmp.eq.s32.totalorder %s15, 1
    %p80 = por %p78, %p79
    %p81 = scmp.ne.s32.totalorder %s70, %s71
    %p82 = scmp.eq.s32.totalorder %s15, 0
    %p83 = por %p81, %p82
    %p84 = scmp.ne.s32.totalorder %s70, %s71
    %p85 = scmp.eq.s32.totalorder %s16, 1
    %p86 = por %p84, %p85
    %p88 = scmp.ne.s32.totalorder %s71, %s87
    %p89 = scmp.eq.s32.totalorder %s16, 0
    %p90 = por %p88, %p89
    %s92 = sadd.s32 %s91, 1
    %p95 = scmp.eq.s32.totalorder %s10, 1
    %p96 = scmp.ne.s32.totalorder %s91, %s93
    %p97 = scmp.eq.s32.totalorder %s10, 0
    %p98 = por %p96, %p97
    %p99 = scmp.ne.s32.totalorder %s91, %s93
    %p100 = scmp.eq.s32.totalorder %s15, 1
    %p101 = por %p99, %p100
    %p102 = scmp.ne.s32.totalorder %s93, %s94
    %p103 = scmp.eq.s32.totalorder %s15, 0
    %p104 = por %p102, %p103
    %p105 = scmp.ne.s32.totalorder %s93, %s94
    %p106 = scmp.eq.s32.totalorder %s16, 1
    %p107 = por %p105, %p106
    %p109 = scmp.ne.s32.totalorder %s94, %s108
    %p110 = scmp.eq.s32.totalorder %s16, 0
    %p111 = por %p109, %p110
    %s112 = ssub.s32 %s10, %s17
    %p113 = scmp.eq.s32.totalorder %s112, 0
    %s115 = sadd.s32 %s114, 1
    %s116 = scalar_select %p113, %s114, %s115
    %p119 = pneg %p113
    %p120 = scmp.eq.s32.totalorder %s10, 1
    %p121 = por %p119, %p120
    %p122 = scmp.ne.s32.totalorder %s114, %s117
    %p123 = scmp.eq.s32.totalorder %s10, 0
    %p124 = por %p122, %p123
    %p125 = scmp.ne.s32.totalorder %s114, %s117
    %p126 = scmp.eq.s32.totalorder %s15, 1
    %p127 = por %p125, %p126
    %p128 = scmp.ne.s32.totalorder %s117, %s118
    %p129 = scmp.eq.s32.totalorder %s15, 0
    %p130 = por %p128, %p129
    %p131 = scmp.ne.s32.totalorder %s117, %s118
    %p132 = scmp.eq.s32.totalorder %s16, 1
    %p133 = por %p131, %p132
    %p135 = scmp.ne.s32.totalorder %s118, %s134
    %p136 = scmp.eq.s32.totalorder %s16, 0
    %p137 = por %p135, %p136
    %p138 = scmp.le.s32.totalorder 1, %s10
    %p139 = scmp.lt.s32.totalorder %s10, 3
    %p140 = pnand %p138, %p139
    %p141 = pneg %p140
    // Predicated region
    $region9: #{gat_forward.5} parent=5 // pred_check
      _
    $region10: #{gat_forward.5} parent=5 // pred_check_branch
      %143 = sbr.rel (%p140) target = $region12
    $region11: #{gat_forward.5} parent=5 // pred_region
      %s144 = ssub.s32 %s10, 1
      // Predicated region
      $region13: #{gat_forward.5} parent=11 // pred_check
        %p145 = pneg %p57
      $region14: #{gat_forward.5} parent=11 // pred_check_branch
        %147 = sbr.rel (%p145) target = $region16
      $region15: #{gat_forward.5} parent=11 // pred_region
        _
      $region16: #{gat_forward.5} parent=11 // pred_fallthru
        _
      // Predicated region
      $region17: #{gat_forward.5} parent=11 // pred_check
        %p148 = pneg %p104
      $region18: #{gat_forward.5} parent=11 // pred_check_branch
        %150 = sbr.rel (%p148) target = $region20
      $region19: #{gat_forward.5} parent=11 // pred_region
        _
      $region20: #{gat_forward.5} parent=11 // pred_fallthru
        _
    $region12: #{gat_forward.5} parent=5 // pred_fallthru
      _
    %p151 = scmp.lt.s32.totalorder %s10, 2
    // Predicated region
    $region21: #{gat_forward.5} parent=5 // pred_check
      %p152 = pneg %p151
    $region22: #{gat_forward.5} parent=5 // pred_check_branch
      %154 = sbr.rel (%p152) target = $region24
    $region23: #{gat_forward.5} parent=5 // pred_region
      // Predicated region
      $region25: #{gat_forward.5} parent=23 // pred_check
        %p155 = pneg %p30
      $region26: #{gat_forward.5} parent=23 // pred_check_branch
        %157 = sbr.rel (%p155) target = $region28
      $region27: #{gat_forward.5} parent=23 // pred_region
        %s158 = smul.u32 4, %s10
        %p159 = scmp.lt.s32.totalorder %s158, 7
        %s160 = scalar_select %p159, %s158, 7
        %s161 = smul.addr %s160, 2
        %s162 = smul.addr %s161, 8
        %s163 = scalar_lea.vmem %s0, %s162
        %s164 = smul.u32 4, %s10
      $region28: #{gat_forward.5} parent=23 // pred_fallthru
        _
      // Predicated region
      $region29: #{gat_forward.5} parent=23 // pred_check
        %p165 = pneg %p77
      $region30: #{gat_forward.5} parent=23 // pred_check_branch
        %167 = sbr.rel (%p165) target = $region32
      $region31: #{gat_forward.5} parent=23 // pred_region
        %s168 = smul.u32 16, %s10
        %p169 = scmp.lt.s32.totalorder %s168, 31
        %s170 = scalar_select %p169, %s168, 31
        %s171 = smul.addr %s170, 8
        %s172 = scalar_lea.vmem %s2, %s171
        %s173 = smul.u32 16, %s10
      $region32: #{gat_forward.5} parent=23 // pred_fallthru
        _
    $region24: #{gat_forward.5} parent=5 // pred_fallthru
      _
    %p174 = scmp.le.s32.totalorder 1, %s10
    %p175 = scmp.lt.s32.totalorder %s10, 3
    %p176 = pnand %p174, %p175
    %p177 = pneg %p176
    // Predicated region
    $region33: #{gat_forward.5} parent=5 // pred_check
      _
    $region34: #{gat_forward.5} parent=5 // pred_check_branch
      %179 = sbr.rel (%p176) target = $region36
    $region35: #{gat_forward.5} parent=5 // pred_region
      %s180 = ssub.s32 %s10, 1
      %s181 = smul.u32 4, %s15
      %p182 = scmp.lt.s32.totalorder %s181, 7
      %s183 = scalar_select %p182, %s181, 7
      %s184 = smul.addr %s183, 2
      %s185 = smul.addr %s184, 8
      %s186 = scalar_lea.vmem %s0, %s185
      %p187 = pneg %p36
      %p188 = pneg %p33
      %p189 = pneg %p57
      %p190 = pneg %p54
      %s191 = smul.u32 16, %s15
      %p192 = scmp.lt.s32.totalorder %s191, 31
      %s193 = scalar_select %p192, %s191, 31
      %s194 = smul.addr %s193, 8
      %s195 = scalar_lea.vmem %s2, %s194
      %p196 = pneg %p83
      %p197 = pneg %p80
      %p198 = pneg %p104
      %p199 = pneg %p101
      %p200 = pneg %p130
      %p201 = pneg %p127
      %s202 = smul.u32 16, %s15
      %p203 = scmp.lt.s32.totalorder %s202, 31
      %s204 = scalar_select %p203, %s202, 31
      %s205 = smul.addr %s204, 8
      %s206 = scalar_lea.vmem %s4, %s205
      %s207 = smul.u32 4, %s15
      %p208 = scmp.lt.s32.totalorder %s207, 7
      %s209 = scalar_select %p208, %s207, 7
      %s210 = smul.addr %s209, 2
      %s211 = smul.addr %s210, 8
      %s212 = scalar_lea.vmem %s0, %s211
      %s213 = smul.u32 4, %s15
      %s214 = smul.u32 16, %s15
      %p215 = scmp.lt.s32.totalorder %s214, 31
      %s216 = scalar_select %p215, %s214, 31
      %s217 = smul.addr %s216, 8
      %s218 = scalar_lea.vmem %s2, %s217
      %s219 = smul.u32 16, %s15
      %s220 = smul.u32 16, %s15
      %p221 = scmp.lt.s32.totalorder %s220, 31
      %s222 = scalar_select %p221, %s220, 31
      %s223 = smul.addr %s222, 8
      %s224 = scalar_lea.vmem %s4, %s223
      %s225 = smul.u32 16, %s15
      %v226 = vld [vmem:[%s212] sm:$0xff]
      %v227 = vld [vmem:[%s212 + $0x8] sm:$0xff]
      %v228 = vld [vmem:[%s212 + $0x10] sm:$0xff]
      %v229 = vld [vmem:[%s212 + $0x18] sm:$0xff]
      %v230 = vld [vmem:[%s212 + $0x20] sm:$0xff]
      %v231 = vld [vmem:[%s212 + $0x28] sm:$0xff]
      %v232 = vld [vmem:[%s212 + $0x30] sm:$0xff]
      %v233 = vld [vmem:[%s212 + $0x38] sm:$0xff]
      %v234 = vunpack.c.0.s8 %v226
      %v235 = vunpack.c.0.s8 %v227
      %v236 = vunpack.c.1.s8 %v226
      %v237 = vunpack.c.1.s8 %v227
      %v238 = vunpack.c.2.s8 %v226
      %v239 = vunpack.c.2.s8 %v227
      %v240 = vunpack.c.3.s8 %v226
      %v241 = vunpack.c.3.s8 %v227
      %v242 = vunpack.c.0.s8 %v228
      %v243 = vunpack.c.0.s8 %v229
      %v244 = vunpack.c.1.s8 %v228
      %v245 = vunpack.c.1.s8 %v229
      %v246 = vunpack.c.2.s8 %v228
      %v247 = vunpack.c.2.s8 %v229
      %v248 = vunpack.c.3.s8 %v228
      %v249 = vunpack.c.3.s8 %v229
      %v250 = vunpack.c.0.s8 %v230
      %v251 = vunpack.c.0.s8 %v231
      %v252 = vunpack.c.1.s8 %v230
      %v253 = vunpack.c.1.s8 %v231
      %v254 = vunpack.c.2.s8 %v230
      %v255 = vunpack.c.2.s8 %v231
      %v256 = vunpack.c.3.s8 %v230
      %v257 = vunpack.c.3.s8 %v231
      %v258 = vunpack.c.0.s8 %v232
      %v259 = vunpack.c.0.s8 %v233
      %v260 = vunpack.c.1.s8 %v232
      %v261 = vunpack.c.1.s8 %v233
      %v262 = vunpack.c.2.s8 %v232
      %v263 = vunpack.c.2.s8 %v233
      %v264 = vunpack.c.3.s8 %v232
      %v265 = vunpack.c.3.s8 %v233
      %vm266 = vcmp.gt.s32.totalorder %v234, 0
      %vm267 = vcmp.gt.s32.totalorder %v235, 0
      %vm268 = vcmp.gt.s32.totalorder %v236, 0
      %vm269 = vcmp.gt.s32.totalorder %v237, 0
      %vm270 = vcmp.gt.s32.totalorder %v238, 0
      %vm271 = vcmp.gt.s32.totalorder %v239, 0
      %vm272 = vcmp.gt.s32.totalorder %v240, 0
      %vm273 = vcmp.gt.s32.totalorder %v241, 0
      %vm274 = vcmp.gt.s32.totalorder %v242, 0
      %vm275 = vcmp.gt.s32.totalorder %v243, 0
      %vm276 = vcmp.gt.s32.totalorder %v244, 0
      %vm277 = vcmp.gt.s32.totalorder %v245, 0
      %vm278 = vcmp.gt.s32.totalorder %v246, 0
      %vm279 = vcmp.gt.s32.totalorder %v247, 0
      %vm280 = vcmp.gt.s32.totalorder %v248, 0
      %vm281 = vcmp.gt.s32.totalorder %v249, 0
      %vm282 = vcmp.gt.s32.totalorder %v250, 0
      %vm283 = vcmp.gt.s32.totalorder %v251, 0
      %vm284 = vcmp.gt.s32.totalorder %v252, 0
      %vm285 = vcmp.gt.s32.totalorder %v253, 0
      %vm286 = vcmp.gt.s32.totalorder %v254, 0
      %vm287 = vcmp.gt.s32.totalorder %v255, 0
      %vm288 = vcmp.gt.s32.totalorder %v256, 0
      %vm289 = vcmp.gt.s32.totalorder %v257, 0
      %vm290 = vcmp.gt.s32.totalorder %v258, 0
      %vm291 = vcmp.gt.s32.totalorder %v259, 0
      %vm292 = vcmp.gt.s32.totalorder %v260, 0
      %vm293 = vcmp.gt.s32.totalorder %v261, 0
      %vm294 = vcmp.gt.s32.totalorder %v262, 0
      %vm295 = vcmp.gt.s32.totalorder %v263, 0
      %vm296 = vcmp.gt.s32.totalorder %v264, 0
      %vm297 = vcmp.gt.s32.totalorder %v265, 0
      %v298 = vsel %vm266, 0.0, -9e+15
      %v299 = vsel %vm267, 0.0, -9e+15
      %v300 = vsel %vm268, 0.0, -9e+15
      %v301 = vsel %vm269, 0.0, -9e+15
      %v302 = vsel %vm270, 0.0, -9e+15
      %v303 = vsel %vm271, 0.0, -9e+15
      %v304 = vsel %vm272, 0.0, -9e+15
      %v305 = vsel %vm273, 0.0, -9e+15
      %v306 = vsel %vm274, 0.0, -9e+15
      %v307 = vsel %vm275, 0.0, -9e+15
      %v308 = vsel %vm276, 0.0, -9e+15
      %v309 = vsel %vm277, 0.0, -9e+15
      %v310 = vsel %vm278, 0.0, -9e+15
      %v311 = vsel %vm279, 0.0, -9e+15
      %v312 = vsel %vm280, 0.0, -9e+15
      %v313 = vsel %vm281, 0.0, -9e+15
      %v314 = vsel %vm282, 0.0, -9e+15
      %v315 = vsel %vm283, 0.0, -9e+15
      %v316 = vsel %vm284, 0.0, -9e+15
      %v317 = vsel %vm285, 0.0, -9e+15
      %v318 = vsel %vm286, 0.0, -9e+15
      %v319 = vsel %vm287, 0.0, -9e+15
      %v320 = vsel %vm288, 0.0, -9e+15
      %v321 = vsel %vm289, 0.0, -9e+15
      %v322 = vsel %vm290, 0.0, -9e+15
      %v323 = vsel %vm291, 0.0, -9e+15
      %v324 = vsel %vm292, 0.0, -9e+15
      %v325 = vsel %vm293, 0.0, -9e+15
      %v326 = vsel %vm294, 0.0, -9e+15
      %v327 = vsel %vm295, 0.0, -9e+15
      %v328 = vsel %vm296, 0.0, -9e+15
      %v329 = vsel %vm297, 0.0, -9e+15
      %v330 = vld [vmem:[%s218] sm:$0xff]
      %v331 = vld [vmem:[%s218 + $0x8] sm:$0xff]
      %v332 = vld [vmem:[%s218 + $0x10] sm:$0xff]
      %v333 = vld [vmem:[%s218 + $0x18] sm:$0xff]
      %v334 = vld [vmem:[%s218 + $0x20] sm:$0xff]
      %v335 = vld [vmem:[%s218 + $0x28] sm:$0xff]
      %v336 = vld [vmem:[%s218 + $0x30] sm:$0xff]
      %v337 = vld [vmem:[%s218 + $0x38] sm:$0xff]
      %v338 = vld [vmem:[%s218 + $0x40] sm:$0xff]
      %v339 = vld [vmem:[%s218 + $0x48] sm:$0xff]
      %v340 = vld [vmem:[%s218 + $0x50] sm:$0xff]
      %v341 = vld [vmem:[%s218 + $0x58] sm:$0xff]
      %v342 = vld [vmem:[%s218 + $0x60] sm:$0xff]
      %v343 = vld [vmem:[%s218 + $0x68] sm:$0xff]
      %v344 = vld [vmem:[%s218 + $0x70] sm:$0xff]
      %v345 = vld [vmem:[%s218 + $0x78] sm:$0xff]
      %v346 = vld [vmem:[%s3] ss:$4 sm:$0x3]
      %348 = vset.pattern.permute.xlu0 0
      %349 = vperm.xlu0 %348, %v330
      %v350 = vpop.permute.xlu0 %349
      %353 = vset.pattern.permute.xlu0 0
      %354 = vperm.xlu0 %353, %v331
      %v355 = vpop.permute.xlu0 %354
      %358 = vset.pattern.permute.xlu0 0
      %359 = vperm.xlu0 %358, %v332
      %v360 = vpop.permute.xlu0 %359
      %363 = vset.pattern.permute.xlu0 0
      %364 = vperm.xlu0 %363, %v333
      %v365 = vpop.permute.xlu0 %364
      %368 = vset.pattern.permute.xlu0 0
      %369 = vperm.xlu0 %368, %v334
      %v370 = vpop.permute.xlu0 %369
      %373 = vset.pattern.permute.xlu0 0
      %374 = vperm.xlu0 %373, %v335
      %v375 = vpop.permute.xlu0 %374
      %378 = vset.pattern.permute.xlu0 0
      %379 = vperm.xlu0 %378, %v336
      %v380 = vpop.permute.xlu0 %379
      %383 = vset.pattern.permute.xlu0 0
      %384 = vperm.xlu0 %383, %v337
      %v385 = vpop.permute.xlu0 %384
      %388 = vset.pattern.permute.xlu0 0
      %389 = vperm.xlu0 %388, %v338
      %v390 = vpop.permute.xlu0 %389
      %393 = vset.pattern.permute.xlu0 0
      %394 = vperm.xlu0 %393, %v339
      %v395 = vpop.permute.xlu0 %394
      %398 = vset.pattern.permute.xlu0 0
      %399 = vperm.xlu0 %398, %v340
      %v400 = vpop.permute.xlu0 %399
      %403 = vset.pattern.permute.xlu0 0
      %404 = vperm.xlu0 %403, %v341
      %v405 = vpop.permute.xlu0 %404
      %408 = vset.pattern.permute.xlu0 0
      %409 = vperm.xlu0 %408, %v342
      %v410 = vpop.permute.xlu0 %409
      %413 = vset.pattern.permute.xlu0 0
      %414 = vperm.xlu0 %413, %v343
      %v415 = vpop.permute.xlu0 %414
      %418 = vset.pattern.permute.xlu0 0
      %419 = vperm.xlu0 %418, %v344
      %v420 = vpop.permute.xlu0 %419
      %423 = vset.pattern.permute.xlu0 0
      %424 = vperm.xlu0 %423, %v345
      %v425 = vpop.permute.xlu0 %424
      %v428 = vlaneseq
      %v429 = vshrl.u32 %v428, 7
      %v430 = vsub.s32 0, %v429
      %v431 = vrot.slane %v346, %v430
      %v432 = vlaneseq
      %v433 = vshrl.u32 %v432, 7
      %v434 = vsub.s32 1, %v433
      %v435 = vrot.slane %v346, %v434
      %v438 = vadd.f32 %v350, %v431
      %v439 = vadd.f32 %v350, %v435
      %v440 = vadd.f32 %v355, %v431
      %v441 = vadd.f32 %v355, %v435
      %v442 = vadd.f32 %v360, %v431
      %v443 = vadd.f32 %v360, %v435
      %v444 = vadd.f32 %v365, %v431
      %v445 = vadd.f32 %v365, %v435
      %v446 = vadd.f32 %v370, %v431
      %v447 = vadd.f32 %v370, %v435
      %v448 = vadd.f32 %v375, %v431
      %v449 = vadd.f32 %v375, %v435
      %v450 = vadd.f32 %v380, %v431
      %v451 = vadd.f32 %v380, %v435
      %v452 = vadd.f32 %v385, %v431
      %v453 = vadd.f32 %v385, %v435
      %v454 = vadd.f32 %v390, %v431
      %v455 = vadd.f32 %v390, %v435
      %v456 = vadd.f32 %v395, %v431
      %v457 = vadd.f32 %v395, %v435
      %v458 = vadd.f32 %v400, %v431
      %v459 = vadd.f32 %v400, %v435
      %v460 = vadd.f32 %v405, %v431
      %v461 = vadd.f32 %v405, %v435
      %v462 = vadd.f32 %v410, %v431
      %v463 = vadd.f32 %v410, %v435
      %v464 = vadd.f32 %v415, %v431
      %v465 = vadd.f32 %v415, %v435
      %v466 = vadd.f32 %v420, %v431
      %v467 = vadd.f32 %v420, %v435
      %v468 = vadd.f32 %v425, %v431
      %v469 = vadd.f32 %v425, %v435
      %vm470 = vcmp.gt.f32.partialorder %v438, 0.0
      %vm471 = vcmp.gt.f32.partialorder %v439, 0.0
      %vm472 = vcmp.gt.f32.partialorder %v440, 0.0
      %vm473 = vcmp.gt.f32.partialorder %v441, 0.0
      %vm474 = vcmp.gt.f32.partialorder %v442, 0.0
      %vm475 = vcmp.gt.f32.partialorder %v443, 0.0
      %vm476 = vcmp.gt.f32.partialorder %v444, 0.0
      %vm477 = vcmp.gt.f32.partialorder %v445, 0.0
      %vm478 = vcmp.gt.f32.partialorder %v446, 0.0
      %vm479 = vcmp.gt.f32.partialorder %v447, 0.0
      %vm480 = vcmp.gt.f32.partialorder %v448, 0.0
      %vm481 = vcmp.gt.f32.partialorder %v449, 0.0
      %vm482 = vcmp.gt.f32.partialorder %v450, 0.0
      %vm483 = vcmp.gt.f32.partialorder %v451, 0.0
      %vm484 = vcmp.gt.f32.partialorder %v452, 0.0
      %vm485 = vcmp.gt.f32.partialorder %v453, 0.0
      %vm486 = vcmp.gt.f32.partialorder %v454, 0.0
      %vm487 = vcmp.gt.f32.partialorder %v455, 0.0
      %vm488 = vcmp.gt.f32.partialorder %v456, 0.0
      %vm489 = vcmp.gt.f32.partialorder %v457, 0.0
      %vm490 = vcmp.gt.f32.partialorder %v458, 0.0
      %vm491 = vcmp.gt.f32.partialorder %v459, 0.0
      %vm492 = vcmp.gt.f32.partialorder %v460, 0.0
      %vm493 = vcmp.gt.f32.partialorder %v461, 0.0
      %vm494 = vcmp.gt.f32.partialorder %v462, 0.0
      %vm495 = vcmp.gt.f32.partialorder %v463, 0.0
      %vm496 = vcmp.gt.f32.partialorder %v464, 0.0
      %vm497 = vcmp.gt.f32.partialorder %v465, 0.0
      %vm498 = vcmp.gt.f32.partialorder %v466, 0.0
      %vm499 = vcmp.gt.f32.partialorder %v467, 0.0
      %vm500 = vcmp.gt.f32.partialorder %v468, 0.0
      %vm501 = vcmp.gt.f32.partialorder %v469, 0.0
      %v502 = vmul.f32 %v438, 0.2
      %v503 = vmul.f32 %v439, 0.2
      %v504 = vmul.f32 %v440, 0.2
      %v505 = vmul.f32 %v441, 0.2
      %v506 = vmul.f32 %v442, 0.2
      %v507 = vmul.f32 %v443, 0.2
      %v508 = vmul.f32 %v444, 0.2
      %v509 = vmul.f32 %v445, 0.2
      %v510 = vmul.f32 %v446, 0.2
      %v511 = vmul.f32 %v447, 0.2
      %v512 = vmul.f32 %v448, 0.2
      %v513 = vmul.f32 %v449, 0.2
      %v514 = vmul.f32 %v450, 0.2
      %v515 = vmul.f32 %v451, 0.2
      %v516 = vmul.f32 %v452, 0.2
      %v517 = vmul.f32 %v453, 0.2
      %v518 = vmul.f32 %v454, 0.2
      %v519 = vmul.f32 %v455, 0.2
      %v520 = vmul.f32 %v456, 0.2
      %v521 = vmul.f32 %v457, 0.2
      %v522 = vmul.f32 %v458, 0.2
      %v523 = vmul.f32 %v459, 0.2
      %v524 = vmul.f32 %v460, 0.2
      %v525 = vmul.f32 %v461, 0.2
      %v526 = vmul.f32 %v462, 0.2
      %v527 = vmul.f32 %v463, 0.2
      %v528 = vmul.f32 %v464, 0.2
      %v529 = vmul.f32 %v465, 0.2
      %v530 = vmul.f32 %v466, 0.2
      %v531 = vmul.f32 %v467, 0.2
      %v532 = vmul.f32 %v468, 0.2
      %v533 = vmul.f32 %v469, 0.2
      %v534 = vsel %vm470, %v438, %v502
      %v535 = vsel %vm471, %v439, %v503
      %v536 = vsel %vm472, %v440, %v504
      %v537 = vsel %vm473, %v441, %v505
      %v538 = vsel %vm474, %v442, %v506
      %v539 = vsel %vm475, %v443, %v507
      %v540 = vsel %vm476, %v444, %v508
      %v541 = vsel %vm477, %v445, %v509
      %v542 = vsel %vm478, %v446, %v510
      %v543 = vsel %vm479, %v447, %v511
      %v544 = vsel %vm480, %v448, %v512
      %v545 = vsel %vm481, %v449, %v513
      %v546 = vsel %vm482, %v450, %v514
      %v547 = vsel %vm483, %v451, %v515
      %v548 = vsel %vm484, %v452, %v516
      %v549 = vsel %vm485, %v453, %v517
      %v550 = vsel %vm486, %v454, %v518
      %v551 = vsel %vm487, %v455, %v519
      %v552 = vsel %vm488, %v456, %v520
      %v553 = vsel %vm489, %v457, %v521
      %v554 = vsel %vm490, %v458, %v522
      %v555 = vsel %vm491, %v459, %v523
      %v556 = vsel %vm492, %v460, %v524
      %v557 = vsel %vm493, %v461, %v525
      %v558 = vsel %vm494, %v462, %v526
      %v559 = vsel %vm495, %v463, %v527
      %v560 = vsel %vm496, %v464, %v528
      %v561 = vsel %vm497, %v465, %v529
      %v562 = vsel %vm498, %v466, %v530
      %v563 = vsel %vm499, %v467, %v531
      %v564 = vsel %vm500, %v468, %v532
      %v565 = vsel %vm501, %v469, %v533
      %v566 = vadd.f32 %v534, %v298
      %v567 = vadd.f32 %v535, %v299
      %v568 = vadd.f32 %v536, %v300
      %v569 = vadd.f32 %v537, %v301
      %v570 = vadd.f32 %v538, %v302
      %v571 = vadd.f32 %v539, %v303
      %v572 = vadd.f32 %v540, %v304
      %v573 = vadd.f32 %v541, %v305
      %v574 = vadd.f32 %v542, %v306
      %v575 = vadd.f32 %v543, %v307
      %v576 = vadd.f32 %v544, %v308
      %v577 = vadd.f32 %v545, %v309
      %v578 = vadd.f32 %v546, %v310
      %v579 = vadd.f32 %v547, %v311
      %v580 = vadd.f32 %v548, %v312
      %v581 = vadd.f32 %v549, %v313
      %v582 = vadd.f32 %v550, %v314
      %v583 = vadd.f32 %v551, %v315
      %v584 = vadd.f32 %v552, %v316
      %v585 = vadd.f32 %v553, %v317
      %v586 = vadd.f32 %v554, %v318
      %v587 = vadd.f32 %v555, %v319
      %v588 = vadd.f32 %v556, %v320
      %v589 = vadd.f32 %v557, %v321
      %v590 = vadd.f32 %v558, %v322
      %v591 = vadd.f32 %v559, %v323
      %v592 = vadd.f32 %v560, %v324
      %v593 = vadd.f32 %v561, %v325
      %v594 = vadd.f32 %v562, %v326
      %v595 = vadd.f32 %v563, %v327
      %v596 = vadd.f32 %v564, %v328
      %v597 = vadd.f32 %v565, %v329
      %v598 = vmax.f32 %v566, %v567
      %599 = vmax.xlane.f32.xlu0 %v598
      %v600 = vpop.xlane.xlu0 %599
      %v601 = vmax.f32 %v568, %v569
      %602 = vmax.xlane.f32.xlu0 %v601
      %v603 = vpop.xlane.xlu0 %602
      %v604 = vmax.f32 %v570, %v571
      %605 = vmax.xlane.f32.xlu0 %v604
      %v606 = vpop.xlane.xlu0 %605
      %v607 = vmax.f32 %v572, %v573
      %608 = vmax.xlane.f32.xlu0 %v607
      %v609 = vpop.xlane.xlu0 %608
      %v610 = vmax.f32 %v574, %v575
      %611 = vmax.xlane.f32.xlu0 %v610
      %v612 = vpop.xlane.xlu0 %611
      %v613 = vmax.f32 %v576, %v577
      %614 = vmax.xlane.f32.xlu0 %v613
      %v615 = vpop.xlane.xlu0 %614
      %v616 = vmax.f32 %v578, %v579
      %617 = vmax.xlane.f32.xlu0 %v616
      %v618 = vpop.xlane.xlu0 %617
      %v619 = vmax.f32 %v580, %v581
      %620 = vmax.xlane.f32.xlu0 %v619
      %v621 = vpop.xlane.xlu0 %620
      %v622 = vmax.f32 %v582, %v583
      %623 = vmax.xlane.f32.xlu0 %v622
      %v624 = vpop.xlane.xlu0 %623
      %v625 = vmax.f32 %v584, %v585
      %626 = vmax.xlane.f32.xlu0 %v625
      %v627 = vpop.xlane.xlu0 %626
      %v628 = vmax.f32 %v586, %v587
      %629 = vmax.xlane.f32.xlu0 %v628
      %v630 = vpop.xlane.xlu0 %629
      %v631 = vmax.f32 %v588, %v589
      %632 = vmax.xlane.f32.xlu0 %v631
      %v633 = vpop.xlane.xlu0 %632
      %v634 = vmax.f32 %v590, %v591
      %635 = vmax.xlane.f32.xlu0 %v634
      %v636 = vpop.xlane.xlu0 %635
      %v637 = vmax.f32 %v592, %v593
      %638 = vmax.xlane.f32.xlu0 %v637
      %v639 = vpop.xlane.xlu0 %638
      %v640 = vmax.f32 %v594, %v595
      %641 = vmax.xlane.f32.xlu0 %v640
      %v642 = vpop.xlane.xlu0 %641
      %v643 = vmax.f32 %v596, %v597
      %644 = vmax.xlane.f32.xlu0 %v643
      %v645 = vpop.xlane.xlu0 %644
      %v646 = vsub.f32 %v566, %v600
      %v647 = vsub.f32 %v567, %v600
      %v648 = vsub.f32 %v568, %v603
      %v649 = vsub.f32 %v569, %v603
      %v650 = vsub.f32 %v570, %v606
      %v651 = vsub.f32 %v571, %v606
      %v652 = vsub.f32 %v572, %v609
      %v653 = vsub.f32 %v573, %v609
      %v654 = vsub.f32 %v574, %v612
      %v655 = vsub.f32 %v575, %v612
      %v656 = vsub.f32 %v576, %v615
      %v657 = vsub.f32 %v577, %v615
      %v658 = vsub.f32 %v578, %v618
      %v659 = vsub.f32 %v579, %v618
      %v660 = vsub.f32 %v580, %v621
      %v661 = vsub.f32 %v581, %v621
      %v662 = vsub.f32 %v582, %v624
      %v663 = vsub.f32 %v583, %v624
      %v664 = vsub.f32 %v584, %v627
      %v665 = vsub.f32 %v585, %v627
      %v666 = vsub.f32 %v586, %v630
      %v667 = vsub.f32 %v587, %v630
      %v668 = vsub.f32 %v588, %v633
      %v669 = vsub.f32 %v589, %v633
      %v670 = vsub.f32 %v590, %v636
      %v671 = vsub.f32 %v591, %v636
      %v672 = vsub.f32 %v592, %v639
      %v673 = vsub.f32 %v593, %v639
      %v674 = vsub.f32 %v594, %v642
      %v675 = vsub.f32 %v595, %v642
      %v676 = vsub.f32 %v596, %v645
      %v677 = vsub.f32 %v597, %v645
      %v678 = vmul.f32 %v646, 1.442695
      %v679 = vpow.pop %v678
      %v680 = vmul.f32 %v647, 1.442695
      %v681 = vpow.pop %v680
      %v682 = vmul.f32 %v648, 1.442695
      %v683 = vpow.pop %v682
      %v684 = vmul.f32 %v649, 1.442695
      %v685 = vpow.pop %v684
      %v686 = vmul.f32 %v650, 1.442695
      %v687 = vpow.pop %v686
      %v688 = vmul.f32 %v651, 1.442695
      %v689 = vpow.pop %v688
      %v690 = vmul.f32 %v652, 1.442695
      %v691 = vpow.pop %v690
      %v692 = vmul.f32 %v653, 1.442695
      %v693 = vpow.pop %v692
      %v694 = vmul.f32 %v654, 1.442695
      %v695 = vpow.pop %v694
      %v696 = vmul.f32 %v655, 1.442695
      %v697 = vpow.pop %v696
      %v698 = vmul.f32 %v656, 1.442695
      %v699 = vpow.pop %v698
      %v700 = vmul.f32 %v657, 1.442695
      %v701 = vpow.pop %v700
      %v702 = vmul.f32 %v658, 1.442695
      %v703 = vpow.pop %v702
      %v704 = vmul.f32 %v659, 1.442695
      %v705 = vpow.pop %v704
      %v706 = vmul.f32 %v660, 1.442695
      %v707 = vpow.pop %v706
      %v708 = vmul.f32 %v661, 1.442695
      %v709 = vpow.pop %v708
      %v710 = vmul.f32 %v662, 1.442695
      %v711 = vpow.pop %v710
      %v712 = vmul.f32 %v663, 1.442695
      %v713 = vpow.pop %v712
      %v714 = vmul.f32 %v664, 1.442695
      %v715 = vpow.pop %v714
      %v716 = vmul.f32 %v665, 1.442695
      %v717 = vpow.pop %v716
      %v718 = vmul.f32 %v666, 1.442695
      %v719 = vpow.pop %v718
      %v720 = vmul.f32 %v667, 1.442695
      %v721 = vpow.pop %v720
      %v722 = vmul.f32 %v668, 1.442695
      %v723 = vpow.pop %v722
      %v724 = vmul.f32 %v669, 1.442695
      %v725 = vpow.pop %v724
      %v726 = vmul.f32 %v670, 1.442695
      %v727 = vpow.pop %v726
      %v728 = vmul.f32 %v671, 1.442695
      %v729 = vpow.pop %v728
      %v730 = vmul.f32 %v672, 1.442695
      %v731 = vpow.pop %v730
      %v732 = vmul.f32 %v673, 1.442695
      %v733 = vpow.pop %v732
      %v734 = vmul.f32 %v674, 1.442695
      %v735 = vpow.pop %v734
      %v736 = vmul.f32 %v675, 1.442695
      %v737 = vpow.pop %v736
      %v738 = vmul.f32 %v676, 1.442695
      %v739 = vpow.pop %v738
      %v740 = vmul.f32 %v677, 1.442695
      %v741 = vpow.pop %v740
      %v742 = vld [vmem:[%s1] sm:$0xf]
      %v743 = vld [vmem:[%s1 + $0x4] sm:$0xf]
      %v744 = vld [vmem:[%s1 + $0x8] sm:$0xf]
      %v745 = vld [vmem:[%s1 + $0xc] sm:$0xf]
      %v746 = vld [vmem:[%s1 + $0x10] sm:$0xf]
      %v747 = vld [vmem:[%s1 + $0x14] sm:$0xf]
      %v748 = vld [vmem:[%s1 + $0x18] sm:$0xf]
      %v749 = vld [vmem:[%s1 + $0x1c] sm:$0xf]
      %v750 = vld [vmem:[%s1 + $0x20] sm:$0xf]
      %v751 = vld [vmem:[%s1 + $0x24] sm:$0xf]
      %v752 = vld [vmem:[%s1 + $0x28] sm:$0xf]
      %v753 = vld [vmem:[%s1 + $0x2c] sm:$0xf]
      %v754 = vld [vmem:[%s1 + $0x30] sm:$0xf]
      %v755 = vld [vmem:[%s1 + $0x34] sm:$0xf]
      %v756 = vld [vmem:[%s1 + $0x38] sm:$0xf]
      %v757 = vld [vmem:[%s1 + $0x3c] sm:$0xf]
      %v758 = vld [vmem:[%s1 + $0x40] sm:$0xf]
      %v759 = vld [vmem:[%s1 + $0x44] sm:$0xf]
      %v760 = vld [vmem:[%s1 + $0x48] sm:$0xf]
      %v761 = vld [vmem:[%s1 + $0x4c] sm:$0xf]
      %v762 = vld [vmem:[%s1 + $0x50] sm:$0xf]
      %v763 = vld [vmem:[%s1 + $0x54] sm:$0xf]
      %v764 = vld [vmem:[%s1 + $0x58] sm:$0xf]
      %v765 = vld [vmem:[%s1 + $0x5c] sm:$0xf]
      %v766 = vld [vmem:[%s1 + $0x60] sm:$0xf]
      %v767 = vld [vmem:[%s1 + $0x64] sm:$0xf]
      %v768 = vld [vmem:[%s1 + $0x68] sm:$0xf]
      %v769 = vld [vmem:[%s1 + $0x6c] sm:$0xf]
      %v770 = vld [vmem:[%s1 + $0x70] sm:$0xf]
      %v771 = vld [vmem:[%s1 + $0x74] sm:$0xf]
      %v772 = vld [vmem:[%s1 + $0x78] sm:$0xf]
      %v773 = vld [vmem:[%s1 + $0x7c] sm:$0xf]
      %v774 = vunpack.c.l.bf16 %v742
      %v775 = vunpack.c.l.bf16 %v743
      %v776 = vunpack.c.l.bf16 %v744
      %v777 = vunpack.c.l.bf16 %v745
      %v778 = vunpack.c.l.bf16 %v746
      %v779 = vunpack.c.l.bf16 %v747
      %v780 = vunpack.c.l.bf16 %v748
      %v781 = vunpack.c.l.bf16 %v749
      %v782 = vunpack.c.l.bf16 %v750
      %v783 = vunpack.c.l.bf16 %v751
      %v784 = vunpack.c.l.bf16 %v752
      %v785 = vunpack.c.l.bf16 %v753
      %v786 = vunpack.c.l.bf16 %v754
      %v787 = vunpack.c.l.bf16 %v755
      %v788 = vunpack.c.l.bf16 %v756
      %v789 = vunpack.c.l.bf16 %v757
      %v790 = vunpack.c.l.bf16 %v758
      %v791 = vunpack.c.l.bf16 %v759
      %v792 = vunpack.c.l.bf16 %v760
      %v793 = vunpack.c.l.bf16 %v761
      %v794 = vunpack.c.l.bf16 %v762
      %v795 = vunpack.c.l.bf16 %v763
      %v796 = vunpack.c.l.bf16 %v764
      %v797 = vunpack.c.l.bf16 %v765
      %v798 = vunpack.c.l.bf16 %v766
      %v799 = vunpack.c.l.bf16 %v767
      %v800 = vunpack.c.l.bf16 %v768
      %v801 = vunpack.c.l.bf16 %v769
      %v802 = vunpack.c.l.bf16 %v770
      %v803 = vunpack.c.l.bf16 %v771
      %v804 = vunpack.c.l.bf16 %v772
      %v805 = vunpack.c.l.bf16 %v773
      %806 = vmatprep.subr.mxu0 0.0
      %807 = vmatpush1.msra.mxu0 %v774
      %808 = vmatprep.subr.mxu0 0.0
      %809 = vmatpush1.msra.mxu0 %v775
      %810 = vmatprep.subr.mxu0 0.0
      %811 = vmatpush1.msra.mxu0 %v776
      %812 = vmatprep.subr.mxu0 0.0
      %813 = vmatpush1.msra.mxu0 %v777
      %814 = vmatprep.subr.mxu0 0.0
      %815 = vmatpush1.msra.mxu0 %v778
      %816 = vmatprep.subr.mxu0 0.0
      %817 = vmatpush1.msra.mxu0 %v779
      %818 = vmatprep.subr.mxu0 0.0
      %819 = vmatpush1.msra.mxu0 %v780
      %820 = vmatprep.subr.mxu0 0.0
      %821 = vmatpush1.msra.mxu0 %v781
      %822 = vmatprep.subr.mxu0 0.0
      %823 = vmatpush1.msra.mxu0 %v782
      %824 = vmatprep.subr.mxu0 0.0
      %825 = vmatpush1.msra.mxu0 %v783
      %826 = vmatprep.subr.mxu0 0.0
      %827 = vmatpush1.msra.mxu0 %v784
      %828 = vmatprep.subr.mxu0 0.0
      %829 = vmatpush1.msra.mxu0 %v785
      %830 = vmatprep.subr.mxu0 0.0
      %831 = vmatpush1.msra.mxu0 %v786
      %832 = vmatprep.subr.mxu0 0.0
      %833 = vmatpush1.msra.mxu0 %v787
      %834 = vmatprep.subr.mxu0 0.0
      %835 = vmatpush1.msra.mxu0 %v788
      %836 = vmatprep.subr.mxu0 0.0
      %837 = vmatpush1.msra.mxu0 %v789
      %838 = vmatprep.subr.mxu0 0.0
      %839 = vmatpush1.msra.mxu0 %v790
      %840 = vmatprep.subr.mxu0 0.0
      %841 = vmatpush1.msra.mxu0 %v791
      %842 = vmatprep.subr.mxu0 0.0
      %843 = vmatpush1.msra.mxu0 %v792
      %844 = vmatprep.subr.mxu0 0.0
      %845 = vmatpush1.msra.mxu0 %v793
      %846 = vmatprep.subr.mxu0 0.0
      %847 = vmatpush1.msra.mxu0 %v794
      %848 = vmatprep.subr.mxu0 0.0
      %849 = vmatpush1.msra.mxu0 %v795
      %850 = vmatprep.subr.mxu0 0.0
      %851 = vmatpush1.msra.mxu0 %v796
      %852 = vmatprep.subr.mxu0 0.0
      %853 = vmatpush1.msra.mxu0 %v797
      %854 = vmatprep.subr.mxu0 0.0
      %855 = vmatpush1.msra.mxu0 %v798
      %856 = vmatprep.subr.mxu0 0.0
      %857 = vmatpush1.msra.mxu0 %v799
      %858 = vmatprep.subr.mxu0 0.0
      %859 = vmatpush1.msra.mxu0 %v800
      %860 = vmatprep.subr.mxu0 0.0
      %861 = vmatpush1.msra.mxu0 %v801
      %862 = vmatprep.subr.mxu0 0.0
      %863 = vmatpush1.msra.mxu0 %v802
      %864 = vmatprep.subr.mxu0 0.0
      %865 = vmatpush1.msra.mxu0 %v803
      %866 = vmatprep.subr.mxu0 0.0
      %867 = vmatpush1.msra.mxu0 %v804
      %868 = vmatprep.subr.mxu0 0.0
      %869 = vmatpush1.msra.mxu0 %v805
      %870 = vmatprep.mubr.f32.mxu0 %v681
      %871 = vmatmul.mubr.f32.gmra.mrb[0].mxu0 %v679
      %v872 = vpop.f32.mrb[0].mxu0
      %v873 = vadd.f32 0.0, %v872
      %v874 = vpop.f32.mrb[0].mxu0
      %875 = vmatprep.mubr.f32.mxu0 %v685
      %876 = vmatmul.mubr.f32.gmra.mrb[0].mxu0 %v683
      %v877 = vpop.f32.mrb[0].mxu0
      %v878 = vadd.f32 0.0, %v877
      %v879 = vpop.f32.mrb[0].mxu0
      %880 = vmatprep.mubr.f32.mxu0 %v689
      %881 = vmatmul.mubr.f32.gmra.mrb[0].mxu0 %v687
      %v882 = vpop.f32.mrb[0].mxu0
      %v883 = vadd.f32 0.0, %v882
      %v884 = vpop.f32.mrb[0].mxu0
      %885 = vmatprep.mubr.f32.mxu0 %v693
      %886 = vmatmul.mubr.f32.gmra.mrb[0].mxu0 %v691
      %v887 = vpop.f32.mrb[0].mxu0
      %v888 = vadd.f32 0.0, %v887
      %v889 = vpop.f32.mrb[0].mxu0
      %890 = vmatprep.mubr.f32.mxu0 %v697
      %891 = vmatmul.mubr.f32.gmra.mrb[0].mxu0 %v695
      %v892 = vpop.f32.mrb[0].mxu0
      %v893 = vadd.f32 0.0, %v892
      %v894 = vpop.f32.mrb[0].mxu0
      %895 = vmatprep.mubr.f32.mxu0 %v701
      %896 = vmatmul.mubr.f32.gmra.mrb[0].mxu0 %v699
      %v897 = vpop.f32.mrb[0].mxu0
      %v898 = vadd.f32 0.0, %v897
      %v899 = vpop.f32.mrb[0].mxu0
      %900 = vmatprep.mubr.f32.mxu0 %v705
      %901 = vmatmul.mubr.f32.gmra.mrb[0].mxu0 %v703
      %v902 = vpop.f32.mrb[0].mxu0
      %v903 = vadd.f32 0.0, %v902
      %v904 = vpop.f32.mrb[0].mxu0
      %905 = vmatprep.mubr.f32.mxu0 %v709
      %906 = vmatmul.mubr.f32.gmra.mrb[0].mxu0 %v707
      %v907 = vpop.f32.mrb[0].mxu0
      %v908 = vadd.f32 0.0, %v907
      %v909 = vpop.f32.mrb[0].mxu0
      %910 = vmatprep.mubr.f32.mxu0 %v713
      %911 = vmatmul.mubr.f32.gmra.mrb[0].mxu0 %v711
      %v912 = vpop.f32.mrb[0].mxu0
      %v913 = vadd.f32 0.0, %v912
      %v914 = vpop.f32.mrb[0].mxu0
      %915 = vmatprep.mubr.f32.mxu0 %v717
      %916 = vmatmul.mubr.f32.gmra.mrb[0].mxu0 %v715
      %v917 = vpop.f32.mrb[0].mxu0
      %v918 = vadd.f32 0.0, %v917
      %v919 = vpop.f32.mrb[0].mxu0
      %920 = vmatprep.mubr.f32.mxu0 %v721
      %921 = vmatmul.mubr.f32.gmra.mrb[0].mxu0 %v719
      %v922 = vpop.f32.mrb[0].mxu0
      %v923 = vadd.f32 0.0, %v922
      %v924 = vpop.f32.mrb[0].mxu0
      %925 = vmatprep.mubr.f32.mxu0 %v725
      %926 = vmatmul.mubr.f32.gmra.mrb[0].mxu0 %v723
      %v927 = vpop.f32.mrb[0].mxu0
      %v928 = vadd.f32 0.0, %v927
      %v929 = vpop.f32.mrb[0].mxu0
      %930 = vmatprep.mubr.f32.mxu0 %v729
      %931 = vmatmul.mubr.f32.gmra.mrb[0].mxu0 %v727
      %v932 = vpop.f32.mrb[0].mxu0
      %v933 = vadd.f32 0.0, %v932
      %v934 = vpop.f32.mrb[0].mxu0
      %935 = vmatprep.mubr.f32.mxu0 %v733
      %936 = vmatmul.mubr.f32.gmra.mrb[0].mxu0 %v731
      %v937 = vpop.f32.mrb[0].mxu0
      %v938 = vadd.f32 0.0, %v937
      %v939 = vpop.f32.mrb[0].mxu0
      %940 = vmatprep.mubr.f32.mxu0 %v737
      %941 = vmatmul.mubr.f32.gmra.mrb[0].mxu0 %v735
      %v942 = vpop.f32.mrb[0].mxu0
      %v943 = vadd.f32 0.0, %v942
      %v944 = vpop.f32.mrb[0].mxu0
      %945 = vmatprep.mubr.f32.mxu0 %v741
      %946 = vmatmul.mubr.f32.gmra.mrb[0].mxu0 %v739
      %v947 = vpop.f32.mrb[0].mxu0
      %v948 = vadd.f32 0.0, %v947
      %v949 = vpop.f32.mrb[0].mxu0
      %950 = vdwg.mxu0
      %v951 = vrcp.pop %v873
      %v952 = vmul.f32 1.0, %v951
      %v953 = vrcp.pop %v878
      %v954 = vmul.f32 1.0, %v953
      %v955 = vrcp.pop %v883
      %v956 = vmul.f32 1.0, %v955
      %v957 = vrcp.pop %v888
      %v958 = vmul.f32 1.0, %v957
      %v959 = vrcp.pop %v893
      %v960 = vmul.f32 1.0, %v959
      %v961 = vrcp.pop %v898
      %v962 = vmul.f32 1.0, %v961
      %v963 = vrcp.pop %v903
      %v964 = vmul.f32 1.0, %v963
      %v965 = vrcp.pop %v908
      %v966 = vmul.f32 1.0, %v965
      %v967 = vrcp.pop %v913
      %v968 = vmul.f32 1.0, %v967
      %v969 = vrcp.pop %v918
      %v970 = vmul.f32 1.0, %v969
      %v971 = vrcp.pop %v923
      %v972 = vmul.f32 1.0, %v971
      %v973 = vrcp.pop %v928
      %v974 = vmul.f32 1.0, %v973
      %v975 = vrcp.pop %v933
      %v976 = vmul.f32 1.0, %v975
      %v977 = vrcp.pop %v938
      %v978 = vmul.f32 1.0, %v977
      %v979 = vrcp.pop %v943
      %v980 = vmul.f32 1.0, %v979
      %v981 = vrcp.pop %v948
      %v982 = vmul.f32 1.0, %v981
      %984 = vset.pattern.permute.xlu0 16
      %985 = vperm.xlu0 %984, %v952
      %v986 = vpop.permute.xlu0 %985
      %989 = vset.pattern.permute.xlu0 16
      %990 = vperm.xlu0 %989, %v954
      %v991 = vpop.permute.xlu0 %990
      %994 = vset.pattern.permute.xlu0 16
      %995 = vperm.xlu0 %994, %v956
      %v996 = vpop.permute.xlu0 %995
      %999 = vset.pattern.permute.xlu0 16
      %1000 = vperm.xlu0 %999, %v958
      %v1001 = vpop.permute.xlu0 %1000
      %1004 = vset.pattern.permute.xlu0 16
      %1005 = vperm.xlu0 %1004, %v960
      %v1006 = vpop.permute.xlu0 %1005
      %1009 = vset.pattern.permute.xlu0 16
      %1010 = vperm.xlu0 %1009, %v962
      %v1011 = vpop.permute.xlu0 %1010
      %1014 = vset.pattern.permute.xlu0 16
      %1015 = vperm.xlu0 %1014, %v964
      %v1016 = vpop.permute.xlu0 %1015
      %1019 = vset.pattern.permute.xlu0 16
      %1020 = vperm.xlu0 %1019, %v966
      %v1021 = vpop.permute.xlu0 %1020
      %1024 = vset.pattern.permute.xlu0 16
      %1025 = vperm.xlu0 %1024, %v968
      %v1026 = vpop.permute.xlu0 %1025
      %1029 = vset.pattern.permute.xlu0 16
      %1030 = vperm.xlu0 %1029, %v970
      %v1031 = vpop.permute.xlu0 %1030
      %1034 = vset.pattern.permute.xlu0 16
      %1035 = vperm.xlu0 %1034, %v972
      %v1036 = vpop.permute.xlu0 %1035
      %1039 = vset.pattern.permute.xlu0 16
      %1040 = vperm.xlu0 %1039, %v974
      %v1041 = vpop.permute.xlu0 %1040
      %1044 = vset.pattern.permute.xlu0 16
      %1045 = vperm.xlu0 %1044, %v976
      %v1046 = vpop.permute.xlu0 %1045
      %1049 = vset.pattern.permute.xlu0 16
      %1050 = vperm.xlu0 %1049, %v978
      %v1051 = vpop.permute.xlu0 %1050
      %1054 = vset.pattern.permute.xlu0 16
      %1055 = vperm.xlu0 %1054, %v980
      %v1056 = vpop.permute.xlu0 %1055
      %1059 = vset.pattern.permute.xlu0 16
      %1060 = vperm.xlu0 %1059, %v982
      %v1061 = vpop.permute.xlu0 %1060
      %v1063 = vmul.f32 %v873, %v986
      %v1064 = vmul.f32 %v878, %v991
      %v1065 = vmul.f32 %v883, %v996
      %v1066 = vmul.f32 %v888, %v1001
      %v1067 = vmul.f32 %v893, %v1006
      %v1068 = vmul.f32 %v898, %v1011
      %v1069 = vmul.f32 %v903, %v1016
      %v1070 = vmul.f32 %v908, %v1021
      %v1071 = vmul.f32 %v913, %v1026
      %v1072 = vmul.f32 %v918, %v1031
      %v1073 = vmul.f32 %v923, %v1036
      %v1074 = vmul.f32 %v928, %v1041
      %v1075 = vmul.f32 %v933, %v1046
      %v1076 = vmul.f32 %v938, %v1051
      %v1077 = vmul.f32 %v943, %v1056
      %v1078 = vmul.f32 %v948, %v1061
      %vm1079 = vcmp.gt.f32.partialorder %v1063, 0.0
      %vm1080 = vcmp.gt.f32.partialorder %v1064, 0.0
      %vm1081 = vcmp.gt.f32.partialorder %v1065, 0.0
      %vm1082 = vcmp.gt.f32.partialorder %v1066, 0.0
      %vm1083 = vcmp.gt.f32.partialorder %v1067, 0.0
      %vm1084 = vcmp.gt.f32.partialorder %v1068, 0.0
      %vm1085 = vcmp.gt.f32.partialorder %v1069, 0.0
      %vm1086 = vcmp.gt.f32.partialorder %v1070, 0.0
      %vm1087 = vcmp.gt.f32.partialorder %v1071, 0.0
      %vm1088 = vcmp.gt.f32.partialorder %v1072, 0.0
      %vm1089 = vcmp.gt.f32.partialorder %v1073, 0.0
      %vm1090 = vcmp.gt.f32.partialorder %v1074, 0.0
      %vm1091 = vcmp.gt.f32.partialorder %v1075, 0.0
      %vm1092 = vcmp.gt.f32.partialorder %v1076, 0.0
      %vm1093 = vcmp.gt.f32.partialorder %v1077, 0.0
      %vm1094 = vcmp.gt.f32.partialorder %v1078, 0.0
      %v1095 = vmin.f32 %v1063, 0.0
      %v1096 = vmin.f32 %v1064, 0.0
      %v1097 = vmin.f32 %v1065, 0.0
      %v1098 = vmin.f32 %v1066, 0.0
      %v1099 = vmin.f32 %v1067, 0.0
      %v1100 = vmin.f32 %v1068, 0.0
      %v1101 = vmin.f32 %v1069, 0.0
      %v1102 = vmin.f32 %v1070, 0.0
      %v1103 = vmin.f32 %v1071, 0.0
      %v1104 = vmin.f32 %v1072, 0.0
      %v1105 = vmin.f32 %v1073, 0.0
      %v1106 = vmin.f32 %v1074, 0.0
      %v1107 = vmin.f32 %v1075, 0.0
      %v1108 = vmin.f32 %v1076, 0.0
      %v1109 = vmin.f32 %v1077, 0.0
      %v1110 = vmin.f32 %v1078, 0.0
      %v1111 = vmul.f32 %v1095, 1.442695
      %v1112 = vpow.pop %v1111
      %v1113 = vmul.f32 %v1096, 1.442695
      %v1114 = vpow.pop %v1113
      %v1115 = vmul.f32 %v1097, 1.442695
      %v1116 = vpow.pop %v1115
      %v1117 = vmul.f32 %v1098, 1.442695
      %v1118 = vpow.pop %v1117
      %v1119 = vmul.f32 %v1099, 1.442695
      %v1120 = vpow.pop %v1119
      %v1121 = vmul.f32 %v1100, 1.442695
      %v1122 = vpow.pop %v1121
      %v1123 = vmul.f32 %v1101, 1.442695
      %v1124 = vpow.pop %v1123
      %v1125 = vmul.f32 %v1102, 1.442695
      %v1126 = vpow.pop %v1125
      %v1127 = vmul.f32 %v1103, 1.442695
      %v1128 = vpow.pop %v1127
      %v1129 = vmul.f32 %v1104, 1.442695
      %v1130 = vpow.pop %v1129
      %v1131 = vmul.f32 %v1105, 1.442695
      %v1132 = vpow.pop %v1131
      %v1133 = vmul.f32 %v1106, 1.442695
      %v1134 = vpow.pop %v1133
      %v1135 = vmul.f32 %v1107, 1.442695
      %v1136 = vpow.pop %v1135
      %v1137 = vmul.f32 %v1108, 1.442695
      %v1138 = vpow.pop %v1137
      %v1139 = vmul.f32 %v1109, 1.442695
      %v1140 = vpow.pop %v1139
      %v1141 = vmul.f32 %v1110, 1.442695
      %v1142 = vpow.pop %v1141
      %v1143 = vsub.f32 %v1112, 1.0
      %v1144 = vsub.f32 %v1114, 1.0
      %v1145 = vsub.f32 %v1116, 1.0
      %v1146 = vsub.f32 %v1118, 1.0
      %v1147 = vsub.f32 %v1120, 1.0
      %v1148 = vsub.f32 %v1122, 1.0
      %v1149 = vsub.f32 %v1124, 1.0
      %v1150 = vsub.f32 %v1126, 1.0
      %v1151 = vsub.f32 %v1128, 1.0
      %v1152 = vsub.f32 %v1130, 1.0
      %v1153 = vsub.f32 %v1132, 1.0
      %v1154 = vsub.f32 %v1134, 1.0
      %v1155 = vsub.f32 %v1136, 1.0
      %v1156 = vsub.f32 %v1138, 1.0
      %v1157 = vsub.f32 %v1140, 1.0
      %v1158 = vsub.f32 %v1142, 1.0
      %v1159 = vsel %vm1079, %v1063, %v1143
      %v1160 = vsel %vm1080, %v1064, %v1144
      %v1161 = vsel %vm1081, %v1065, %v1145
      %v1162 = vsel %vm1082, %v1066, %v1146
      %v1163 = vsel %vm1083, %v1067, %v1147
      %v1164 = vsel %vm1084, %v1068, %v1148
      %v1165 = vsel %vm1085, %v1069, %v1149
      %v1166 = vsel %vm1086, %v1070, %v1150
      %v1167 = vsel %vm1087, %v1071, %v1151
      %v1168 = vsel %vm1088, %v1072, %v1152
      %v1169 = vsel %vm1089, %v1073, %v1153
      %v1170 = vsel %vm1090, %v1074, %v1154
      %v1171 = vsel %vm1091, %v1075, %v1155
      %v1172 = vsel %vm1092, %v1076, %v1156
      %v1173 = vsel %vm1093, %v1077, %v1157
      %v1174 = vsel %vm1094, %v1078, %v1158
      %vm1175 = vcmask 130048
      %1176 = vst.msk [vmem:[%s224] sm:$0xff] %vm1175, %v1159
      %1177 = vst.msk [vmem:[%s224 + $0x8] sm:$0xff] %vm1175, %v1160
      %1178 = vst.msk [vmem:[%s224 + $0x10] sm:$0xff] %vm1175, %v1161
      %1179 = vst.msk [vmem:[%s224 + $0x18] sm:$0xff] %vm1175, %v1162
      %1180 = vst.msk [vmem:[%s224 + $0x20] sm:$0xff] %vm1175, %v1163
      %1181 = vst.msk [vmem:[%s224 + $0x28] sm:$0xff] %vm1175, %v1164
      %1182 = vst.msk [vmem:[%s224 + $0x30] sm:$0xff] %vm1175, %v1165
      %1183 = vst.msk [vmem:[%s224 + $0x38] sm:$0xff] %vm1175, %v1166
      %1184 = vst.msk [vmem:[%s224 + $0x40] sm:$0xff] %vm1175, %v1167
      %1185 = vst.msk [vmem:[%s224 + $0x48] sm:$0xff] %vm1175, %v1168
      %1186 = vst.msk [vmem:[%s224 + $0x50] sm:$0xff] %vm1175, %v1169
      %1187 = vst.msk [vmem:[%s224 + $0x58] sm:$0xff] %vm1175, %v1170
      %1188 = vst.msk [vmem:[%s224 + $0x60] sm:$0xff] %vm1175, %v1171
      %1189 = vst.msk [vmem:[%s224 + $0x68] sm:$0xff] %vm1175, %v1172
      %1190 = vst.msk [vmem:[%s224 + $0x70] sm:$0xff] %vm1175, %v1173
      %1191 = vst.msk [vmem:[%s224 + $0x78] sm:$0xff] %vm1175, %v1174
      %v1192 = vld [vmem:[%s218] sm:$0xff]
      %v1193 = vld [vmem:[%s218 + $0x8] sm:$0xff]
      %v1194 = vld [vmem:[%s218 + $0x10] sm:$0xff]
      %v1195 = vld [vmem:[%s218 + $0x18] sm:$0xff]
      %v1196 = vld [vmem:[%s218 + $0x20] sm:$0xff]
      %v1197 = vld [vmem:[%s218 + $0x28] sm:$0xff]
      %v1198 = vld [vmem:[%s218 + $0x30] sm:$0xff]
      %v1199 = vld [vmem:[%s218 + $0x38] sm:$0xff]
      %v1200 = vld [vmem:[%s218 + $0x40] sm:$0xff]
      %v1201 = vld [vmem:[%s218 + $0x48] sm:$0xff]
      %v1202 = vld [vmem:[%s218 + $0x50] sm:$0xff]
      %v1203 = vld [vmem:[%s218 + $0x58] sm:$0xff]
      %v1204 = vld [vmem:[%s218 + $0x60] sm:$0xff]
      %v1205 = vld [vmem:[%s218 + $0x68] sm:$0xff]
      %v1206 = vld [vmem:[%s218 + $0x70] sm:$0xff]
      %v1207 = vld [vmem:[%s218 + $0x78] sm:$0xff]
      %s1208 = scalar_lea.vmem %s3, 1
      %v1209 = vld [vmem:[%s1208] ss:$4 sm:$0x3]
      %1211 = vset.pattern.permute.xlu0 1
      %1212 = vperm.xlu0 %1211, %v1192
      %v1213 = vpop.permute.xlu0 %1212
      %1216 = vset.pattern.permute.xlu0 1
      %1217 = vperm.xlu0 %1216, %v1193
      %v1218 = vpop.permute.xlu0 %1217
      %1221 = vset.pattern.permute.xlu0 1
      %1222 = vperm.xlu0 %1221, %v1194
      %v1223 = vpop.permute.xlu0 %1222
      %1226 = vset.pattern.permute.xlu0 1
      %1227 = vperm.xlu0 %1226, %v1195
      %v1228 = vpop.permute.xlu0 %1227
      %1231 = vset.pattern.permute.xlu0 1
      %1232 = vperm.xlu0 %1231, %v1196
      %v1233 = vpop.permute.xlu0 %1232
      %1236 = vset.pattern.permute.xlu0 1
      %1237 = vperm.xlu0 %1236, %v1197
      %v1238 = vpop.permute.xlu0 %1237
      %1241 = vset.pattern.permute.xlu0 1
      %1242 = vperm.xlu0 %1241, %v1198
      %v1243 = vpop.permute.xlu0 %1242
      %1246 = vset.pattern.permute.xlu0 1
      %1247 = vperm.xlu0 %1246, %v1199
      %v1248 = vpop.permute.xlu0 %1247
      %1251 = vset.pattern.permute.xlu0 1
      %1252 = vperm.xlu0 %1251, %v1200
      %v1253 = vpop.permute.xlu0 %1252
      %1256 = vset.pattern.permute.xlu0 1
      %1257 = vperm.xlu0 %1256, %v1201
      %v1258 = vpop.permute.xlu0 %1257
      %1261 = vset.pattern.permute.xlu0 1
      %1262 = vperm.xlu0 %1261, %v1202
      %v1263 = vpop.permute.xlu0 %1262
      %1266 = vset.pattern.permute.xlu0 1
      %1267 = vperm.xlu0 %1266, %v1203
      %v1268 = vpop.permute.xlu0 %1267
      %1271 = vset.pattern.permute.xlu0 1
      %1272 = vperm.xlu0 %1271, %v1204
      %v1273 = vpop.permute.xlu0 %1272
      %1276 = vset.pattern.permute.xlu0 1
      %1277 = vperm.xlu0 %1276, %v1205
      %v1278 = vpop.permute.xlu0 %1277
      %1281 = vset.pattern.permute.xlu0 1
      %1282 = vperm.xlu0 %1281, %v1206
      %v1283 = vpop.permute.xlu0 %1282
      %1286 = vset.pattern.permute.xlu0 1
      %1287 = vperm.xlu0 %1286, %v1207
      %v1288 = vpop.permute.xlu0 %1287
      %v1291 = vlaneseq
      %v1292 = vshrl.u32 %v1291, 7
      %v1293 = vsub.s32 0, %v1292
      %v1294 = vrot.slane %v1209, %v1293
      %v1295 = vlaneseq
      %v1296 = vshrl.u32 %v1295, 7
      %v1297 = vsub.s32 1, %v1296
      %v1298 = vrot.slane %v1209, %v1297
      %v1301 = vadd.f32 %v1213, %v1294
      %v1302 = vadd.f32 %v1213, %v1298
      %v1303 = vadd.f32 %v1218, %v1294
      %v1304 = vadd.f32 %v1218, %v1298
      %v1305 = vadd.f32 %v1223, %v1294
      %v1306 = vadd.f32 %v1223, %v1298
      %v1307 = vadd.f32 %v1228, %v1294
      %v1308 = vadd.f32 %v1228, %v1298
      %v1309 = vadd.f32 %v1233, %v1294
      %v1310 = vadd.f32 %v1233, %v1298
      %v1311 = vadd.f32 %v1238, %v1294
      %v1312 = vadd.f32 %v1238, %v1298
      %v1313 = vadd.f32 %v1243, %v1294
      %v1314 = vadd.f32 %v1243, %v1298
      %v1315 = vadd.f32 %v1248, %v1294
      %v1316 = vadd.f32 %v1248, %v1298
      %v1317 = vadd.f32 %v1253, %v1294
      %v1318 = vadd.f32 %v1253, %v1298
      %v1319 = vadd.f32 %v1258, %v1294
      %v1320 = vadd.f32 %v1258, %v1298
      %v1321 = vadd.f32 %v1263, %v1294
      %v1322 = vadd.f32 %v1263, %v1298
      %v1323 = vadd.f32 %v1268, %v1294
      %v1324 = vadd.f32 %v1268, %v1298
      %v1325 = vadd.f32 %v1273, %v1294
      %v1326 = vadd.f32 %v1273, %v1298
      %v1327 = vadd.f32 %v1278, %v1294
      %v1328 = vadd.f32 %v1278, %v1298
      %v1329 = vadd.f32 %v1283, %v1294
      %v1330 = vadd.f32 %v1283, %v1298
      %v1331 = vadd.f32 %v1288, %v1294
      %v1332 = vadd.f32 %v1288, %v1298
      %vm1333 = vcmp.gt.f32.partialorder %v1301, 0.0
      %vm1334 = vcmp.gt.f32.partialorder %v1302, 0.0
      %vm1335 = vcmp.gt.f32.partialorder %v1303, 0.0
      %vm1336 = vcmp.gt.f32.partialorder %v1304, 0.0
      %vm1337 = vcmp.gt.f32.partialorder %v1305, 0.0
      %vm1338 = vcmp.gt.f32.partialorder %v1306, 0.0
      %vm1339 = vcmp.gt.f32.partialorder %v1307, 0.0
      %vm1340 = vcmp.gt.f32.partialorder %v1308, 0.0
      %vm1341 = vcmp.gt.f32.partialorder %v1309, 0.0
      %vm1342 = vcmp.gt.f32.partialorder %v1310, 0.0
      %vm1343 = vcmp.gt.f32.partialorder %v1311, 0.0
      %vm1344 = vcmp.gt.f32.partialorder %v1312, 0.0
      %vm1345 = vcmp.gt.f32.partialorder %v1313, 0.0
      %vm1346 = vcmp.gt.f32.partialorder %v1314, 0.0
      %vm1347 = vcmp.gt.f32.partialorder %v1315, 0.0
      %vm1348 = vcmp.gt.f32.partialorder %v1316, 0.0
      %vm1349 = vcmp.gt.f32.partialorder %v1317, 0.0
      %vm1350 = vcmp.gt.f32.partialorder %v1318, 0.0
      %vm1351 = vcmp.gt.f32.partialorder %v1319, 0.0
      %vm1352 = vcmp.gt.f32.partialorder %v1320, 0.0
      %vm1353 = vcmp.gt.f32.partialorder %v1321, 0.0
      %vm1354 = vcmp.gt.f32.partialorder %v1322, 0.0
      %vm1355 = vcmp.gt.f32.partialorder %v1323, 0.0
      %vm1356 = vcmp.gt.f32.partialorder %v1324, 0.0
      %vm1357 = vcmp.gt.f32.partialorder %v1325, 0.0
      %vm1358 = vcmp.gt.f32.partialorder %v1326, 0.0
      %vm1359 = vcmp.gt.f32.partialorder %v1327, 0.0
      %vm1360 = vcmp.gt.f32.partialorder %v1328, 0.0
      %vm1361 = vcmp.gt.f32.partialorder %v1329, 0.0
      %vm1362 = vcmp.gt.f32.partialorder %v1330, 0.0
      %vm1363 = vcmp.gt.f32.partialorder %v1331, 0.0
      %vm1364 = vcmp.gt.f32.partialorder %v1332, 0.0
      %v1365 = vmul.f32 %v1301, 0.2
      %v1366 = vmul.f32 %v1302, 0.2
      %v1367 = vmul.f32 %v1303, 0.2
      %v1368 = vmul.f32 %v1304, 0.2
      %v1369 = vmul.f32 %v1305, 0.2
      %v1370 = vmul.f32 %v1306, 0.2
      %v1371 = vmul.f32 %v1307, 0.2
      %v1372 = vmul.f32 %v1308, 0.2
      %v1373 = vmul.f32 %v1309, 0.2
      %v1374 = vmul.f32 %v1310, 0.2
      %v1375 = vmul.f32 %v1311, 0.2
      %v1376 = vmul.f32 %v1312, 0.2
      %v1377 = vmul.f32 %v1313, 0.2
      %v1378 = vmul.f32 %v1314, 0.2
      %v1379 = vmul.f32 %v1315, 0.2
      %v1380 = vmul.f32 %v1316, 0.2
      %v1381 = vmul.f32 %v1317, 0.2
      %v1382 = vmul.f32 %v1318, 0.2
      %v1383 = vmul.f32 %v1319, 0.2
      %v1384 = vmul.f32 %v1320, 0.2
      %v1385 = vmul.f32 %v1321, 0.2
      %v1386 = vmul.f32 %v1322, 0.2
      %v1387 = vmul.f32 %v1323, 0.2
      %v1388 = vmul.f32 %v1324, 0.2
      %v1389 = vmul.f32 %v1325, 0.2
      %v1390 = vmul.f32 %v1326, 0.2
      %v1391 = vmul.f32 %v1327, 0.2
      %v1392 = vmul.f32 %v1328, 0.2
      %v1393 = vmul.f32 %v1329, 0.2
      %v1394 = vmul.f32 %v1330, 0.2
      %v1395 = vmul.f32 %v1331, 0.2
      %v1396 = vmul.f32 %v1332, 0.2
      %v1397 = vsel %vm1333, %v1301, %v1365
      %v1398 = vsel %vm1334, %v1302, %v1366
      %v1399 = vsel %vm1335, %v1303, %v1367
      %v1400 = vsel %vm1336, %v1304, %v1368
      %v1401 = vsel %vm1337, %v1305, %v1369
      %v1402 = vsel %vm1338, %v1306, %v1370
      %v1403 = vsel %vm1339, %v1307, %v1371
      %v1404 = vsel %vm1340, %v1308, %v1372
      %v1405 = vsel %vm1341, %v1309, %v1373
      %v1406 = vsel %vm1342, %v1310, %v1374
      %v1407 = vsel %vm1343, %v1311, %v1375
      %v1408 = vsel %vm1344, %v1312, %v1376
      %v1409 = vsel %vm1345, %v1313, %v1377
      %v1410 = vsel %vm1346, %v1314, %v1378
      %v1411 = vsel %vm1347, %v1315, %v1379
      %v1412 = vsel %vm1348, %v1316, %v1380
      %v1413 = vsel %vm1349, %v1317, %v1381
      %v1414 = vsel %vm1350, %v1318, %v1382
      %v1415 = vsel %vm1351, %v1319, %v1383
      %v1416 = vsel %vm1352, %v1320, %v1384
      %v1417 = vsel %vm1353, %v1321, %v1385
      %v1418 = vsel %vm1354, %v1322, %v1386
      %v1419 = vsel %vm1355, %v1323, %v1387
      %v1420 = vsel %vm1356, %v1324, %v1388
      %v1421 = vsel %vm1357, %v1325, %v1389
      %v1422 = vsel %vm1358, %v1326, %v1390
      %v1423 = vsel %vm1359, %v1327, %v1391
      %v1424 = vsel %vm1360, %v1328, %v1392
      %v1425 = vsel %vm1361, %v1329, %v1393
      %v1426 = vsel %vm1362, %v1330, %v1394
      %v1427 = vsel %vm1363, %v1331, %v1395
      %v1428 = vsel %vm1364, %v1332, %v1396
      %v1429 = vadd.f32 %v1397, %v298
      %v1430 = vadd.f32 %v1398, %v299
      %v1431 = vadd.f32 %v1399, %v300
      %v1432 = vadd.f32 %v1400, %v301
      %v1433 = vadd.f32 %v1401, %v302
      %v1434 = vadd.f32 %v1402, %v303
      %v1435 = vadd.f32 %v1403, %v304
      %v1436 = vadd.f32 %v1404, %v305
      %v1437 = vadd.f32 %v1405, %v306
      %v1438 = vadd.f32 %v1406, %v307
      %v1439 = vadd.f32 %v1407, %v308
      %v1440 = vadd.f32 %v1408, %v309
      %v1441 = vadd.f32 %v1409, %v310
      %v1442 = vadd.f32 %v1410, %v311
      %v1443 = vadd.f32 %v1411, %v312
      %v1444 = vadd.f32 %v1412, %v313
      %v1445 = vadd.f32 %v1413, %v314
      %v1446 = vadd.f32 %v1414, %v315
      %v1447 = vadd.f32 %v1415, %v316
      %v1448 = vadd.f32 %v1416, %v317
      %v1449 = vadd.f32 %v1417, %v318
      %v1450 = vadd.f32 %v1418, %v319
      %v1451 = vadd.f32 %v1419, %v320
      %v1452 = vadd.f32 %v1420, %v321
      %v1453 = vadd.f32 %v1421, %v322
      %v1454 = vadd.f32 %v1422, %v323
      %v1455 = vadd.f32 %v1423, %v324
      %v1456 = vadd.f32 %v1424, %v325
      %v1457 = vadd.f32 %v1425, %v326
      %v1458 = vadd.f32 %v1426, %v327
      %v1459 = vadd.f32 %v1427, %v328
      %v1460 = vadd.f32 %v1428, %v329
      %v1461 = vmax.f32 %v1429, %v1430
      %1462 = vmax.xlane.f32.xlu0 %v1461
      %v1463 = vpop.xlane.xlu0 %1462
      %v1464 = vmax.f32 %v1431, %v1432
      %1465 = vmax.xlane.f32.xlu0 %v1464
      %v1466 = vpop.xlane.xlu0 %1465
      %v1467 = vmax.f32 %v1433, %v1434
      %1468 = vmax.xlane.f32.xlu0 %v1467
      %v1469 = vpop.xlane.xlu0 %1468
      %v1470 = vmax.f32 %v1435, %v1436
      %1471 = vmax.xlane.f32.xlu0 %v1470
      %v1472 = vpop.xlane.xlu0 %1471
      %v1473 = vmax.f32 %v1437, %v1438
      %1474 = vmax.xlane.f32.xlu0 %v1473
      %v1475 = vpop.xlane.xlu0 %1474
      %v1476 = vmax.f32 %v1439, %v1440
      %1477 = vmax.xlane.f32.xlu0 %v1476
      %v1478 = vpop.xlane.xlu0 %1477
      %v1479 = vmax.f32 %v1441, %v1442
      %1480 = vmax.xlane.f32.xlu0 %v1479
      %v1481 = vpop.xlane.xlu0 %1480
      %v1482 = vmax.f32 %v1443, %v1444
      %1483 = vmax.xlane.f32.xlu0 %v1482
      %v1484 = vpop.xlane.xlu0 %1483
      %v1485 = vmax.f32 %v1445, %v1446
      %1486 = vmax.xlane.f32.xlu0 %v1485
      %v1487 = vpop.xlane.xlu0 %1486
      %v1488 = vmax.f32 %v1447, %v1448
      %1489 = vmax.xlane.f32.xlu0 %v1488
      %v1490 = vpop.xlane.xlu0 %1489
      %v1491 = vmax.f32 %v1449, %v1450
      %1492 = vmax.xlane.f32.xlu0 %v1491
      %v1493 = vpop.xlane.xlu0 %1492
      %v1494 = vmax.f32 %v1451, %v1452
      %1495 = vmax.xlane.f32.xlu0 %v1494
      %v1496 = vpop.xlane.xlu0 %1495
      %v1497 = vmax.f32 %v1453, %v1454
      %1498 = vmax.xlane.f32.xlu0 %v1497
      %v1499 = vpop.xlane.xlu0 %1498
      %v1500 = vmax.f32 %v1455, %v1456
      %1501 = vmax.xlane.f32.xlu0 %v1500
      %v1502 = vpop.xlane.xlu0 %1501
      %v1503 = vmax.f32 %v1457, %v1458
      %1504 = vmax.xlane.f32.xlu0 %v1503
      %v1505 = vpop.xlane.xlu0 %1504
      %v1506 = vmax.f32 %v1459, %v1460
      %1507 = vmax.xlane.f32.xlu0 %v1506
      %v1508 = vpop.xlane.xlu0 %1507
      %v1509 = vsub.f32 %v1429, %v1463
      %v1510 = vsub.f32 %v1430, %v1463
      %v1511 = vsub.f32 %v1431, %v1466
      %v1512 = vsub.f32 %v1432, %v1466
      %v1513 = vsub.f32 %v1433, %v1469
      %v1514 = vsub.f32 %v1434, %v1469
      %v1515 = vsub.f32 %v1435, %v1472
      %v1516 = vsub.f32 %v1436, %v1472
      %v1517 = vsub.f32 %v1437, %v1475
      %v1518 = vsub.f32 %v1438, %v1475
      %v1519 = vsub.f32 %v1439, %v1478
      %v1520 = vsub.f32 %v1440, %v1478
      %v1521 = vsub.f32 %v1441, %v1481
      %v1522 = vsub.f32 %v1442, %v1481
      %v1523 = vsub.f32 %v1443, %v1484
      %v1524 = vsub.f32 %v1444, %v1484
      %v1525 = vsub.f32 %v1445, %v1487
      %v1526 = vsub.f32 %v1446, %v1487
      %v1527 = vsub.f32 %v1447, %v1490
      %v1528 = vsub.f32 %v1448, %v1490
      %v1529 = vsub.f32 %v1449, %v1493
      %v1530 = vsub.f32 %v1450, %v1493
      %v1531 = vsub.f32 %v1451, %v1496
      %v1532 = vsub.f32 %v1452, %v1496
      %v1533 = vsub.f32 %v1453, %v1499
      %v1534 = vsub.f32 %v1454, %v1499
      %v1535 = vsub.f32 %v1455, %v1502
      %v1536 = vsub.f32 %v1456, %v1502
      %v1537 = vsub.f32 %v1457, %v1505
      %v1538 = vsub.f32 %v1458, %v1505
      %v1539 = vsub.f32 %v1459, %v1508
      %v1540 = vsub.f32 %v1460, %v1508
      %v1541 = vmul.f32 %v1509, 1.442695
      %v1542 = vpow.pop %v1541
      %v1543 = vmul.f32 %v1510, 1.442695
      %v1544 = vpow.pop %v1543
      %v1545 = vmul.f32 %v1511, 1.442695
      %v1546 = vpow.pop %v1545
      %v1547 = vmul.f32 %v1512, 1.442695
      %v1548 = vpow.pop %v1547
      %v1549 = vmul.f32 %v1513, 1.442695
      %v1550 = vpow.pop %v1549
      %v1551 = vmul.f32 %v1514, 1.442695
      %v1552 = vpow.pop %v1551
      %v1553 = vmul.f32 %v1515, 1.442695
      %v1554 = vpow.pop %v1553
      %v1555 = vmul.f32 %v1516, 1.442695
      %v1556 = vpow.pop %v1555
      %v1557 = vmul.f32 %v1517, 1.442695
      %v1558 = vpow.pop %v1557
      %v1559 = vmul.f32 %v1518, 1.442695
      %v1560 = vpow.pop %v1559
      %v1561 = vmul.f32 %v1519, 1.442695
      %v1562 = vpow.pop %v1561
      %v1563 = vmul.f32 %v1520, 1.442695
      %v1564 = vpow.pop %v1563
      %v1565 = vmul.f32 %v1521, 1.442695
      %v1566 = vpow.pop %v1565
      %v1567 = vmul.f32 %v1522, 1.442695
      %v1568 = vpow.pop %v1567
      %v1569 = vmul.f32 %v1523, 1.442695
      %v1570 = vpow.pop %v1569
      %v1571 = vmul.f32 %v1524, 1.442695
      %v1572 = vpow.pop %v1571
      %v1573 = vmul.f32 %v1525, 1.442695
      %v1574 = vpow.pop %v1573
      %v1575 = vmul.f32 %v1526, 1.442695
      %v1576 = vpow.pop %v1575
      %v1577 = vmul.f32 %v1527, 1.442695
      %v1578 = vpow.pop %v1577
      %v1579 = vmul.f32 %v1528, 1.442695
      %v1580 = vpow.pop %v1579
      %v1581 = vmul.f32 %v1529, 1.442695
      %v1582 = vpow.pop %v1581
      %v1583 = vmul.f32 %v1530, 1.442695
      %v1584 = vpow.pop %v1583
      %v1585 = vmul.f32 %v1531, 1.442695
      %v1586 = vpow.pop %v1585
      %v1587 = vmul.f32 %v1532, 1.442695
      %v1588 = vpow.pop %v1587
      %v1589 = vmul.f32 %v1533, 1.442695
      %v1590 = vpow.pop %v1589
      %v1591 = vmul.f32 %v1534, 1.442695
      %v1592 = vpow.pop %v1591
      %v1593 = vmul.f32 %v1535, 1.442695
      %v1594 = vpow.pop %v1593
      %v1595 = vmul.f32 %v1536, 1.442695
      %v1596 = vpow.pop %v1595
      %v1597 = vmul.f32 %v1537, 1.442695
      %v1598 = vpow.pop %v1597
      %v1599 = vmul.f32 %v1538, 1.442695
      %v1600 = vpow.pop %v1599
      %v1601 = vmul.f32 %v1539, 1.442695
      %v1602 = vpow.pop %v1601
      %v1603 = vmul.f32 %v1540, 1.442695
      %v1604 = vpow.pop %v1603
      %s1605 = scalar_lea.vmem %s1, 128
      %v1606 = vld [vmem:[%s1605] sm:$0xf]
      %v1607 = vld [vmem:[%s1605 + $0x4] sm:$0xf]
      %v1608 = vld [vmem:[%s1605 + $0x8] sm:$0xf]
      %v1609 = vld [vmem:[%s1605 + $0xc] sm:$0xf]
      %v1610 = vld [vmem:[%s1605 + $0x10] sm:$0xf]
      %v1611 = vld [vmem:[%s1605 + $0x14] sm:$0xf]
      %v1612 = vld [vmem:[%s1605 + $0x18] sm:$0xf]
      %v1613 = vld [vmem:[%s1605 + $0x1c] sm:$0xf]
      %v1614 = vld [vmem:[%s1605 + $0x20] sm:$0xf]
      %v1615 = vld [vmem:[%s1605 + $0x24] sm:$0xf]
      %v1616 = vld [vmem:[%s1605 + $0x28] sm:$0xf]
      %v1617 = vld [vmem:[%s1605 + $0x2c] sm:$0xf]
      %v1618 = vld [vmem:[%s1605 + $0x30] sm:$0xf]
      %v1619 = vld [vmem:[%s1605 + $0x34] sm:$0xf]
      %v1620 = vld [vmem:[%s1605 + $0x38] sm:$0xf]
      %v1621 = vld [vmem:[%s1605 + $0x3c] sm:$0xf]
      %v1622 = vld [vmem:[%s1605 + $0x40] sm:$0xf]
      %v1623 = vld [vmem:[%s1605 + $0x44] sm:$0xf]
      %v1624 = vld [vmem:[%s1605 + $0x48] sm:$0xf]
      %v1625 = vld [vmem:[%s1605 + $0x4c] sm:$0xf]
      %v1626 = vld [vmem:[%s1605 + $0x50] sm:$0xf]
      %v1627 = vld [vmem:[%s1605 + $0x54] sm:$0xf]
      %v1628 = vld [vmem:[%s1605 + $0x58] sm:$0xf]
      %v1629 = vld [vmem:[%s1605 + $0x5c] sm:$0xf]
      %v1630 = vld [vmem:[%s1605 + $0x60] sm:$0xf]
      %v1631 = vld [vmem:[%s1605 + $0x64] sm:$0xf]
      %v1632 = vld [vmem:[%s1605 + $0x68] sm:$0xf]
      %v1633 = vld [vmem:[%s1605 + $0x6c] sm:$0xf]
      %v1634 = vld [vmem:[%s1605 + $0x70] sm:$0xf]
      %v1635 = vld [vmem:[%s1605 + $0x74] sm:$0xf]
      %v1636 = vld [vmem:[%s1605 + $0x78] sm:$0xf]
      %v1637 = vld [vmem:[%s1605 + $0x7c] sm:$0xf]
      %v1638 = vunpack.c.l.bf16 %v1606
      %v1639 = vunpack.c.l.bf16 %v1607
      %v1640 = vunpack.c.l.bf16 %v1608
      %v1641 = vunpack.c.l.bf16 %v1609
      %v1642 = vunpack.c.l.bf16 %v1610
      %v1643 = vunpack.c.l.bf16 %v1611
      %v1644 = vunpack.c.l.bf16 %v1612
      %v1645 = vunpack.c.l.bf16 %v1613
      %v1646 = vunpack.c.l.bf16 %v1614
      %v1647 = vunpack.c.l.bf16 %v1615
      %v1648 = vunpack.c.l.bf16 %v1616
      %v1649 = vunpack.c.l.bf16 %v1617
      %v1650 = vunpack.c.l.bf16 %v1618
      %v1651 = vunpack.c.l.bf16 %v1619
      %v1652 = vunpack.c.l.bf16 %v1620
      %v1653 = vunpack.c.l.bf16 %v1621
      %v1654 = vunpack.c.l.bf16 %v1622
      %v1655 = vunpack.c.l.bf16 %v1623
      %v1656 = vunpack.c.l.bf16 %v1624
      %v1657 = vunpack.c.l.bf16 %v1625
      %v1658 = vunpack.c.l.bf16 %v1626
      %v1659 = vunpack.c.l.bf16 %v1627
      %v1660 = vunpack.c.l.bf16 %v1628
      %v1661 = vunpack.c.l.bf16 %v1629
      %v1662 = vunpack.c.l.bf16 %v1630
      %v1663 = vunpack.c.l.bf16 %v1631
      %v1664 = vunpack.c.l.bf16 %v1632
      %v1665 = vunpack.c.l.bf16 %v1633
      %v1666 = vunpack.c.l.bf16 %v1634
      %v1667 = vunpack.c.l.bf16 %v1635
      %v1668 = vunpack.c.l.bf16 %v1636
      %v1669 = vunpack.c.l.bf16 %v1637
      %1670 = vmatprep.subr.mxu0 0.0
      %1671 = vmatpush1.msra.mxu0 %v1638
      %1672 = vmatprep.subr.mxu0 0.0
      %1673 = vmatpush1.msra.mxu0 %v1639
      %1674 = vmatprep.subr.mxu0 0.0
      %1675 = vmatpush1.msra.mxu0 %v1640
      %1676 = vmatprep.subr.mxu0 0.0
      %1677 = vmatpush1.msra.mxu0 %v1641
      %1678 = vmatprep.subr.mxu0 0.0
      %1679 = vmatpush1.msra.mxu0 %v1642
      %1680 = vmatprep.subr.mxu0 0.0
      %1681 = vmatpush1.msra.mxu0 %v1643
      %1682 = vmatprep.subr.mxu0 0.0
      %1683 = vmatpush1.msra.mxu0 %v1644
      %1684 = vmatprep.subr.mxu0 0.0
      %1685 = vmatpush1.msra.mxu0 %v1645
      %1686 = vmatprep.subr.mxu0 0.0
      %1687 = vmatpush1.msra.mxu0 %v1646
      %1688 = vmatprep.subr.mxu0 0.0
      %1689 = vmatpush1.msra.mxu0 %v1647
      %1690 = vmatprep.subr.mxu0 0.0
      %1691 = vmatpush1.msra.mxu0 %v1648
      %1692 = vmatprep.subr.mxu0 0.0
      %1693 = vmatpush1.msra.mxu0 %v1649
      %1694 = vmatprep.subr.mxu0 0.0
      %1695 = vmatpush1.msra.mxu0 %v1650
      %1696 = vmatprep.subr.mxu0 0.0
      %1697 = vmatpush1.msra.mxu0 %v1651
      %1698 = vmatprep.subr.mxu0 0.0
      %1699 = vmatpush1.msra.mxu0 %v1652
      %1700 = vmatprep.subr.mxu0 0.0
      %1701 = vmatpush1.msra.mxu0 %v1653
      %1702 = vmatprep.subr.mxu0 0.0
      %1703 = vmatpush1.msra.mxu0 %v1654
      %1704 = vmatprep.subr.mxu0 0.0
      %1705 = vmatpush1.msra.mxu0 %v1655
      %1706 = vmatprep.subr.mxu0 0.0
      %1707 = vmatpush1.msra.mxu0 %v1656
      %1708 = vmatprep.subr.mxu0 0.0
      %1709 = vmatpush1.msra.mxu0 %v1657
      %1710 = vmatprep.subr.mxu0 0.0
      %1711 = vmatpush1.msra.mxu0 %v1658
      %1712 = vmatprep.subr.mxu0 0.0
      %1713 = vmatpush1.msra.mxu0 %v1659
      %1714 = vmatprep.subr.mxu0 0.0
      %1715 = vmatpush1.msra.mxu0 %v1660
      %1716 = vmatprep.subr.mxu0 0.0
      %1717 = vmatpush1.msra.mxu0 %v1661
      %1718 = vmatprep.subr.mxu0 0.0
      %1719 = vmatpush1.msra.mxu0 %v1662
      %1720 = vmatprep.subr.mxu0 0.0
      %1721 = vmatpush1.msra.mxu0 %v1663
      %1722 = vmatprep.subr.mxu0 0.0
      %1723 = vmatpush1.msra.mxu0 %v1664
      %1724 = vmatprep.subr.mxu0 0.0
      %1725 = vmatpush1.msra.mxu0 %v1665
      %1726 = vmatprep.subr.mxu0 0.0
      %1727 = vmatpush1.msra.mxu0 %v1666
      %1728 = vmatprep.subr.mxu0 0.0
      %1729 = vmatpush1.msra.mxu0 %v1667
      %1730 = vmatprep.subr.mxu0 0.0
      %1731 = vmatpush1.msra.mxu0 %v1668
      %1732 = vmatprep.subr.mxu0 0.0
      %1733 = vmatpush1.msra.mxu0 %v1669
      %1734 = vmatprep.mubr.f32.mxu0 %v1544
      %1735 = vmatmul.mubr.f32.gmra.mrb[0].mxu0 %v1542
      %v1736 = vpop.f32.mrb[0].mxu0
      %v1737 = vadd.f32 0.0, %v1736
      %v1738 = vpop.f32.mrb[0].mxu0
      %1739 = vmatprep.mubr.f32.mxu0 %v1548
      %1740 = vmatmul.mubr.f32.gmra.mrb[0].mxu0 %v1546
      %v1741 = vpop.f32.mrb[0].mxu0
      %v1742 = vadd.f32 0.0, %v1741
      %v1743 = vpop.f32.mrb[0].mxu0
      %1744 = vmatprep.mubr.f32.mxu0 %v1552
      %1745 = vmatmul.mubr.f32.gmra.mrb[0].mxu0 %v1550
      %v1746 = vpop.f32.mrb[0].mxu0
      %v1747 = vadd.f32 0.0, %v1746
      %v1748 = vpop.f32.mrb[0].mxu0
      %1749 = vmatprep.mubr.f32.mxu0 %v1556
      %1750 = vmatmul.mubr.f32.gmra.mrb[0].mxu0 %v1554
      %v1751 = vpop.f32.mrb[0].mxu0
      %v1752 = vadd.f32 0.0, %v1751
      %v1753 = vpop.f32.mrb[0].mxu0
      %1754 = vmatprep.mubr.f32.mxu0 %v1560
      %1755 = vmatmul.mubr.f32.gmra.mrb[0].mxu0 %v1558
      %v1756 = vpop.f32.mrb[0].mxu0
      %v1757 = vadd.f32 0.0, %v1756
      %v1758 = vpop.f32.mrb[0].mxu0
      %1759 = vmatprep.mubr.f32.mxu0 %v1564
      %1760 = vmatmul.mubr.f32.gmra.mrb[0].mxu0 %v1562
      %v1761 = vpop.f32.mrb[0].mxu0
      %v1762 = vadd.f32 0.0, %v1761
      %v1763 = vpop.f32.mrb[0].mxu0
      %1764 = vmatprep.mubr.f32.mxu0 %v1568
      %1765 = vmatmul.mubr.f32.gmra.mrb[0].mxu0 %v1566
      %v1766 = vpop.f32.mrb[0].mxu0
      %v1767 = vadd.f32 0.0, %v1766
      %v1768 = vpop.f32.mrb[0].mxu0
      %1769 = vmatprep.mubr.f32.mxu0 %v1572
      %1770 = vmatmul.mubr.f32.gmra.mrb[0].mxu0 %v1570
      %v1771 = vpop.f32.mrb[0].mxu0
      %v1772 = vadd.f32 0.0, %v1771
      %v1773 = vpop.f32.mrb[0].mxu0
      %1774 = vmatprep.mubr.f32.mxu0 %v1576
      %1775 = vmatmul.mubr.f32.gmra.mrb[0].mxu0 %v1574
      %v1776 = vpop.f32.mrb[0].mxu0
      %v1777 = vadd.f32 0.0, %v1776
      %v1778 = vpop.f32.mrb[0].mxu0
      %1779 = vmatprep.mubr.f32.mxu0 %v1580
      %1780 = vmatmul.mubr.f32.gmra.mrb[0].mxu0 %v1578
      %v1781 = vpop.f32.mrb[0].mxu0
      %v1782 = vadd.f32 0.0, %v1781
      %v1783 = vpop.f32.mrb[0].mxu0
      %1784 = vmatprep.mubr.f32.mxu0 %v1584
      %1785 = vmatmul.mubr.f32.gmra.mrb[0].mxu0 %v1582
      %v1786 = vpop.f32.mrb[0].mxu0
      %v1787 = vadd.f32 0.0, %v1786
      %v1788 = vpop.f32.mrb[0].mxu0
      %1789 = vmatprep.mubr.f32.mxu0 %v1588
      %1790 = vmatmul.mubr.f32.gmra.mrb[0].mxu0 %v1586
      %v1791 = vpop.f32.mrb[0].mxu0
      %v1792 = vadd.f32 0.0, %v1791
      %v1793 = vpop.f32.mrb[0].mxu0
      %1794 = vmatprep.mubr.f32.mxu0 %v1592
      %1795 = vmatmul.mubr.f32.gmra.mrb[0].mxu0 %v1590
      %v1796 = vpop.f32.mrb[0].mxu0
      %v1797 = vadd.f32 0.0, %v1796
      %v1798 = vpop.f32.mrb[0].mxu0
      %1799 = vmatprep.mubr.f32.mxu0 %v1596
      %1800 = vmatmul.mubr.f32.gmra.mrb[0].mxu0 %v1594
      %v1801 = vpop.f32.mrb[0].mxu0
      %v1802 = vadd.f32 0.0, %v1801
      %v1803 = vpop.f32.mrb[0].mxu0
      %1804 = vmatprep.mubr.f32.mxu0 %v1600
      %1805 = vmatmul.mubr.f32.gmra.mrb[0].mxu0 %v1598
      %v1806 = vpop.f32.mrb[0].mxu0
      %v1807 = vadd.f32 0.0, %v1806
      %v1808 = vpop.f32.mrb[0].mxu0
      %1809 = vmatprep.mubr.f32.mxu0 %v1604
      %1810 = vmatmul.mubr.f32.gmra.mrb[0].mxu0 %v1602
      %v1811 = vpop.f32.mrb[0].mxu0
      %v1812 = vadd.f32 0.0, %v1811
      %v1813 = vpop.f32.mrb[0].mxu0
      %1814 = vdwg.mxu0
      %v1815 = vrcp.pop %v1737
      %v1816 = vmul.f32 1.0, %v1815
      %v1817 = vrcp.pop %v1742
      %v1818 = vmul.f32 1.0, %v1817
      %v1819 = vrcp.pop %v1747
      %v1820 = vmul.f32 1.0, %v1819
      %v1821 = vrcp.pop %v1752
      %v1822 = vmul.f32 1.0, %v1821
      %v1823 = vrcp.pop %v1757
      %v1824 = vmul.f32 1.0, %v1823
      %v1825 = vrcp.pop %v1762
      %v1826 = vmul.f32 1.0, %v1825
      %v1827 = vrcp.pop %v1767
      %v1828 = vmul.f32 1.0, %v1827
      %v1829 = vrcp.pop %v1772
      %v1830 = vmul.f32 1.0, %v1829
      %v1831 = vrcp.pop %v1777
      %v1832 = vmul.f32 1.0, %v1831
      %v1833 = vrcp.pop %v1782
      %v1834 = vmul.f32 1.0, %v1833
      %v1835 = vrcp.pop %v1787
      %v1836 = vmul.f32 1.0, %v1835
      %v1837 = vrcp.pop %v1792
      %v1838 = vmul.f32 1.0, %v1837
      %v1839 = vrcp.pop %v1797
      %v1840 = vmul.f32 1.0, %v1839
      %v1841 = vrcp.pop %v1802
      %v1842 = vmul.f32 1.0, %v1841
      %v1843 = vrcp.pop %v1807
      %v1844 = vmul.f32 1.0, %v1843
      %v1845 = vrcp.pop %v1812
      %v1846 = vmul.f32 1.0, %v1845
      %1848 = vset.pattern.permute.xlu0 16
      %1849 = vperm.xlu0 %1848, %v1816
      %v1850 = vpop.permute.xlu0 %1849
      %1853 = vset.pattern.permute.xlu0 16
      %1854 = vperm.xlu0 %1853, %v1818
      %v1855 = vpop.permute.xlu0 %1854
      %1858 = vset.pattern.permute.xlu0 16
      %1859 = vperm.xlu0 %1858, %v1820
      %v1860 = vpop.permute.xlu0 %1859
      %1863 = vset.pattern.permute.xlu0 16
      %1864 = vperm.xlu0 %1863, %v1822
      %v1865 = vpop.permute.xlu0 %1864
      %1868 = vset.pattern.permute.xlu0 16
      %1869 = vperm.xlu0 %1868, %v1824
      %v1870 = vpop.permute.xlu0 %1869
      %1873 = vset.pattern.permute.xlu0 16
      %1874 = vperm.xlu0 %1873, %v1826
      %v1875 = vpop.permute.xlu0 %1874
      %1878 = vset.pattern.permute.xlu0 16
      %1879 = vperm.xlu0 %1878, %v1828
      %v1880 = vpop.permute.xlu0 %1879
      %1883 = vset.pattern.permute.xlu0 16
      %1884 = vperm.xlu0 %1883, %v1830
      %v1885 = vpop.permute.xlu0 %1884
      %1888 = vset.pattern.permute.xlu0 16
      %1889 = vperm.xlu0 %1888, %v1832
      %v1890 = vpop.permute.xlu0 %1889
      %1893 = vset.pattern.permute.xlu0 16
      %1894 = vperm.xlu0 %1893, %v1834
      %v1895 = vpop.permute.xlu0 %1894
      %1898 = vset.pattern.permute.xlu0 16
      %1899 = vperm.xlu0 %1898, %v1836
      %v1900 = vpop.permute.xlu0 %1899
      %1903 = vset.pattern.permute.xlu0 16
      %1904 = vperm.xlu0 %1903, %v1838
      %v1905 = vpop.permute.xlu0 %1904
      %1908 = vset.pattern.permute.xlu0 16
      %1909 = vperm.xlu0 %1908, %v1840
      %v1910 = vpop.permute.xlu0 %1909
      %1913 = vset.pattern.permute.xlu0 16
      %1914 = vperm.xlu0 %1913, %v1842
      %v1915 = vpop.permute.xlu0 %1914
      %1918 = vset.pattern.permute.xlu0 16
      %1919 = vperm.xlu0 %1918, %v1844
      %v1920 = vpop.permute.xlu0 %1919
      %1923 = vset.pattern.permute.xlu0 16
      %1924 = vperm.xlu0 %1923, %v1846
      %v1925 = vpop.permute.xlu0 %1924
      %v1927 = vmul.f32 %v1737, %v1850
      %v1928 = vmul.f32 %v1742, %v1855
      %v1929 = vmul.f32 %v1747, %v1860
      %v1930 = vmul.f32 %v1752, %v1865
      %v1931 = vmul.f32 %v1757, %v1870
      %v1932 = vmul.f32 %v1762, %v1875
      %v1933 = vmul.f32 %v1767, %v1880
      %v1934 = vmul.f32 %v1772, %v1885
      %v1935 = vmul.f32 %v1777, %v1890
      %v1936 = vmul.f32 %v1782, %v1895
      %v1937 = vmul.f32 %v1787, %v1900
      %v1938 = vmul.f32 %v1792, %v1905
      %v1939 = vmul.f32 %v1797, %v1910
      %v1940 = vmul.f32 %v1802, %v1915
      %v1941 = vmul.f32 %v1807, %v1920
      %v1942 = vmul.f32 %v1812, %v1925
      %vm1943 = vcmp.gt.f32.partialorder %v1927, 0.0
      %vm1944 = vcmp.gt.f32.partialorder %v1928, 0.0
      %vm1945 = vcmp.gt.f32.partialorder %v1929, 0.0
      %vm1946 = vcmp.gt.f32.partialorder %v1930, 0.0
      %vm1947 = vcmp.gt.f32.partialorder %v1931, 0.0
      %vm1948 = vcmp.gt.f32.partialorder %v1932, 0.0
      %vm1949 = vcmp.gt.f32.partialorder %v1933, 0.0
      %vm1950 = vcmp.gt.f32.partialorder %v1934, 0.0
      %vm1951 = vcmp.gt.f32.partialorder %v1935, 0.0
      %vm1952 = vcmp.gt.f32.partialorder %v1936, 0.0
      %vm1953 = vcmp.gt.f32.partialorder %v1937, 0.0
      %vm1954 = vcmp.gt.f32.partialorder %v1938, 0.0
      %vm1955 = vcmp.gt.f32.partialorder %v1939, 0.0
      %vm1956 = vcmp.gt.f32.partialorder %v1940, 0.0
      %vm1957 = vcmp.gt.f32.partialorder %v1941, 0.0
      %vm1958 = vcmp.gt.f32.partialorder %v1942, 0.0
      %v1959 = vmin.f32 %v1927, 0.0
      %v1960 = vmin.f32 %v1928, 0.0
      %v1961 = vmin.f32 %v1929, 0.0
      %v1962 = vmin.f32 %v1930, 0.0
      %v1963 = vmin.f32 %v1931, 0.0
      %v1964 = vmin.f32 %v1932, 0.0
      %v1965 = vmin.f32 %v1933, 0.0
      %v1966 = vmin.f32 %v1934, 0.0
      %v1967 = vmin.f32 %v1935, 0.0
      %v1968 = vmin.f32 %v1936, 0.0
      %v1969 = vmin.f32 %v1937, 0.0
      %v1970 = vmin.f32 %v1938, 0.0
      %v1971 = vmin.f32 %v1939, 0.0
      %v1972 = vmin.f32 %v1940, 0.0
      %v1973 = vmin.f32 %v1941, 0.0
      %v1974 = vmin.f32 %v1942, 0.0
      %v1975 = vmul.f32 %v1959, 1.442695
      %v1976 = vpow.pop %v1975
      %v1977 = vmul.f32 %v1960, 1.442695
      %v1978 = vpow.pop %v1977
      %v1979 = vmul.f32 %v1961, 1.442695
      %v1980 = vpow.pop %v1979
      %v1981 = vmul.f32 %v1962, 1.442695
      %v1982 = vpow.pop %v1981
      %v1983 = vmul.f32 %v1963, 1.442695
      %v1984 = vpow.pop %v1983
      %v1985 = vmul.f32 %v1964, 1.442695
      %v1986 = vpow.pop %v1985
      %v1987 = vmul.f32 %v1965, 1.442695
      %v1988 = vpow.pop %v1987
      %v1989 = vmul.f32 %v1966, 1.442695
      %v1990 = vpow.pop %v1989
      %v1991 = vmul.f32 %v1967, 1.442695
      %v1992 = vpow.pop %v1991
      %v1993 = vmul.f32 %v1968, 1.442695
      %v1994 = vpow.pop %v1993
      %v1995 = vmul.f32 %v1969, 1.442695
      %v1996 = vpow.pop %v1995
      %v1997 = vmul.f32 %v1970, 1.442695
      %v1998 = vpow.pop %v1997
      %v1999 = vmul.f32 %v1971, 1.442695
      %v2000 = vpow.pop %v1999
      %v2001 = vmul.f32 %v1972, 1.442695
      %v2002 = vpow.pop %v2001
      %v2003 = vmul.f32 %v1973, 1.442695
      %v2004 = vpow.pop %v2003
      %v2005 = vmul.f32 %v1974, 1.442695
      %v2006 = vpow.pop %v2005
      %v2007 = vsub.f32 %v1976, 1.0
      %v2008 = vsub.f32 %v1978, 1.0
      %v2009 = vsub.f32 %v1980, 1.0
      %v2010 = vsub.f32 %v1982, 1.0
      %v2011 = vsub.f32 %v1984, 1.0
      %v2012 = vsub.f32 %v1986, 1.0
      %v2013 = vsub.f32 %v1988, 1.0
      %v2014 = vsub.f32 %v1990, 1.0
      %v2015 = vsub.f32 %v1992, 1.0
      %v2016 = vsub.f32 %v1994, 1.0
      %v2017 = vsub.f32 %v1996, 1.0
      %v2018 = vsub.f32 %v1998, 1.0
      %v2019 = vsub.f32 %v2000, 1.0
      %v2020 = vsub.f32 %v2002, 1.0
      %v2021 = vsub.f32 %v2004, 1.0
      %v2022 = vsub.f32 %v2006, 1.0
      %v2023 = vsel %vm1943, %v1927, %v2007
      %v2024 = vsel %vm1944, %v1928, %v2008
      %v2025 = vsel %vm1945, %v1929, %v2009
      %v2026 = vsel %vm1946, %v1930, %v2010
      %v2027 = vsel %vm1947, %v1931, %v2011
      %v2028 = vsel %vm1948, %v1932, %v2012
      %v2029 = vsel %vm1949, %v1933, %v2013
      %v2030 = vsel %vm1950, %v1934, %v2014
      %v2031 = vsel %vm1951, %v1935, %v2015
      %v2032 = vsel %vm1952, %v1936, %v2016
      %v2033 = vsel %vm1953, %v1937, %v2017
      %v2034 = vsel %vm1954, %v1938, %v2018
      %v2035 = vsel %vm1955, %v1939, %v2019
      %v2036 = vsel %vm1956, %v1940, %v2020
      %v2037 = vsel %vm1957, %v1941, %v2021
      %v2038 = vsel %vm1958, %v1942, %v2022
      %2055 = vrot.lane.b32.xlu0 %v2023, 16
      %v2056 = vpop.permute.xlu0 %2055
      %2057 = vrot.lane.b32.xlu0 %v2024, 16
      %v2058 = vpop.permute.xlu0 %2057
      %2059 = vrot.lane.b32.xlu0 %v2025, 16
      %v2060 = vpop.permute.xlu0 %2059
      %2061 = vrot.lane.b32.xlu0 %v2026, 16
      %v2062 = vpop.permute.xlu0 %2061
      %2063 = vrot.lane.b32.xlu0 %v2027, 16
      %v2064 = vpop.permute.xlu0 %2063
      %2065 = vrot.lane.b32.xlu0 %v2028, 16
      %v2066 = vpop.permute.xlu0 %2065
      %2067 = vrot.lane.b32.xlu0 %v2029, 16
      %v2068 = vpop.permute.xlu0 %2067
      %2069 = vrot.lane.b32.xlu0 %v2030, 16
      %v2070 = vpop.permute.xlu0 %2069
      %2071 = vrot.lane.b32.xlu0 %v2031, 16
      %v2072 = vpop.permute.xlu0 %2071
      %2073 = vrot.lane.b32.xlu0 %v2032, 16
      %v2074 = vpop.permute.xlu0 %2073
      %2075 = vrot.lane.b32.xlu0 %v2033, 16
      %v2076 = vpop.permute.xlu0 %2075
      %2077 = vrot.lane.b32.xlu0 %v2034, 16
      %v2078 = vpop.permute.xlu0 %2077
      %2079 = vrot.lane.b32.xlu0 %v2035, 16
      %v2080 = vpop.permute.xlu0 %2079
      %2081 = vrot.lane.b32.xlu0 %v2036, 16
      %v2082 = vpop.permute.xlu0 %2081
      %2083 = vrot.lane.b32.xlu0 %v2037, 16
      %v2084 = vpop.permute.xlu0 %2083
      %2085 = vrot.lane.b32.xlu0 %v2038, 16
      %v2086 = vpop.permute.xlu0 %2085
      %vm2103 = vcmask 261248
      %2104 = vst.msk [vmem:[%s224] sm:$0xff] %vm2103, %v2056
      %2105 = vst.msk [vmem:[%s224 + $0x8] sm:$0xff] %vm2103, %v2058
      %2106 = vst.msk [vmem:[%s224 + $0x10] sm:$0xff] %vm2103, %v2060
      %2107 = vst.msk [vmem:[%s224 + $0x18] sm:$0xff] %vm2103, %v2062
      %2108 = vst.msk [vmem:[%s224 + $0x20] sm:$0xff] %vm2103, %v2064
      %2109 = vst.msk [vmem:[%s224 + $0x28] sm:$0xff] %vm2103, %v2066
      %2110 = vst.msk [vmem:[%s224 + $0x30] sm:$0xff] %vm2103, %v2068
      %2111 = vst.msk [vmem:[%s224 + $0x38] sm:$0xff] %vm2103, %v2070
      %2112 = vst.msk [vmem:[%s224 + $0x40] sm:$0xff] %vm2103, %v2072
      %2113 = vst.msk [vmem:[%s224 + $0x48] sm:$0xff] %vm2103, %v2074
      %2114 = vst.msk [vmem:[%s224 + $0x50] sm:$0xff] %vm2103, %v2076
      %2115 = vst.msk [vmem:[%s224 + $0x58] sm:$0xff] %vm2103, %v2078
      %2116 = vst.msk [vmem:[%s224 + $0x60] sm:$0xff] %vm2103, %v2080
      %2117 = vst.msk [vmem:[%s224 + $0x68] sm:$0xff] %vm2103, %v2082
      %2118 = vst.msk [vmem:[%s224 + $0x70] sm:$0xff] %vm2103, %v2084
      %2119 = vst.msk [vmem:[%s224 + $0x78] sm:$0xff] %vm2103, %v2086
      %v2120 = vld [vmem:[%s218] sm:$0xff]
      %v2121 = vld [vmem:[%s218 + $0x8] sm:$0xff]
      %v2122 = vld [vmem:[%s218 + $0x10] sm:$0xff]
      %v2123 = vld [vmem:[%s218 + $0x18] sm:$0xff]
      %v2124 = vld [vmem:[%s218 + $0x20] sm:$0xff]
      %v2125 = vld [vmem:[%s218 + $0x28] sm:$0xff]
      %v2126 = vld [vmem:[%s218 + $0x30] sm:$0xff]
      %v2127 = vld [vmem:[%s218 + $0x38] sm:$0xff]
      %v2128 = vld [vmem:[%s218 + $0x40] sm:$0xff]
      %v2129 = vld [vmem:[%s218 + $0x48] sm:$0xff]
      %v2130 = vld [vmem:[%s218 + $0x50] sm:$0xff]
      %v2131 = vld [vmem:[%s218 + $0x58] sm:$0xff]
      %v2132 = vld [vmem:[%s218 + $0x60] sm:$0xff]
      %v2133 = vld [vmem:[%s218 + $0x68] sm:$0xff]
      %v2134 = vld [vmem:[%s218 + $0x70] sm:$0xff]
      %v2135 = vld [vmem:[%s218 + $0x78] sm:$0xff]
      %s2136 = scalar_lea.vmem %s3, 2
      %v2137 = vld [vmem:[%s2136] ss:$4 sm:$0x3]
      %2139 = vset.pattern.permute.xlu0 2
      %2140 = vperm.xlu0 %2139, %v2120
      %v2141 = vpop.permute.xlu0 %2140
      %2144 = vset.pattern.permute.xlu0 2
      %2145 = vperm.xlu0 %2144, %v2121
      %v2146 = vpop.permute.xlu0 %2145
      %2149 = vset.pattern.permute.xlu0 2
      %2150 = vperm.xlu0 %2149, %v2122
      %v2151 = vpop.permute.xlu0 %2150
      %2154 = vset.pattern.permute.xlu0 2
      %2155 = vperm.xlu0 %2154, %v2123
      %v2156 = vpop.permute.xlu0 %2155
      %2159 = vset.pattern.permute.xlu0 2
      %2160 = vperm.xlu0 %2159, %v2124
      %v2161 = vpop.permute.xlu0 %2160
      %2164 = vset.pattern.permute.xlu0 2
      %2165 = vperm.xlu0 %2164, %v2125
      %v2166 = vpop.permute.xlu0 %2165
      %2169 = vset.pattern.permute.xlu0 2
      %2170 = vperm.xlu0 %2169, %v2126
      %v2171 = vpop.permute.xlu0 %2170
      %2174 = vset.pattern.permute.xlu0 2
      %2175 = vperm.xlu0 %2174, %v2127
      %v2176 = vpop.permute.xlu0 %2175
      %2179 = vset.pattern.permute.xlu0 2
      %2180 = vperm.xlu0 %2179, %v2128
      %v2181 = vpop.permute.xlu0 %2180
      %2184 = vset.pattern.permute.xlu0 2
      %2185 = vperm.xlu0 %2184, %v2129
      %v2186 = vpop.permute.xlu0 %2185
      %2189 = vset.pattern.permute.xlu0 2
      %2190 = vperm.xlu0 %2189, %v2130
      %v2191 = vpop.permute.xlu0 %2190
      %2194 = vset.pattern.permute.xlu0 2
      %2195 = vperm.xlu0 %2194, %v2131
      %v2196 = vpop.permute.xlu0 %2195
      %2199 = vset.pattern.permute.xlu0 2
      %2200 = vperm.xlu0 %2199, %v2132
      %v2201 = vpop.permute.xlu0 %2200
      %2204 = vset.pattern.permute.xlu0 2
      %2205 = vperm.xlu0 %2204, %v2133
      %v2206 = vpop.permute.xlu0 %2205
      %2209 = vset.pattern.permute.xlu0 2
      %2210 = vperm.xlu0 %2209, %v2134
      %v2211 = vpop.permute.xlu0 %2210
      %2214 = vset.pattern.permute.xlu0 2
      %2215 = vperm.xlu0 %2214, %v2135
      %v2216 = vpop.permute.xlu0 %2215
      %v2219 = vlaneseq
      %v2220 = vshrl.u32 %v2219, 7
      %v2221 = vsub.s32 0, %v2220
      %v2222 = vrot.slane %v2137, %v2221
      %v2223 = vlaneseq
      %v2224 = vshrl.u32 %v2223, 7
      %v2225 = vsub.s32 1, %v2224
      %v2226 = vrot.slane %v2137, %v2225
      %v2229 = vadd.f32 %v2141, %v2222
      %v2230 = vadd.f32 %v2141, %v2226
      %v2231 = vadd.f32 %v2146, %v2222
      %v2232 = vadd.f32 %v2146, %v2226
      %v2233 = vadd.f32 %v2151, %v2222
      %v2234 = vadd.f32 %v2151, %v2226
      %v2235 = vadd.f32 %v2156, %v2222
      %v2236 = vadd.f32 %v2156, %v2226
      %v2237 = vadd.f32 %v2161, %v2222
      %v2238 = vadd.f32 %v2161, %v2226
      %v2239 = vadd.f32 %v2166, %v2222
      %v2240 = vadd.f32 %v2166, %v2226
      %v2241 = vadd.f32 %v2171, %v2222
      %v2242 = vadd.f32 %v2171, %v2226
      %v2243 = vadd.f32 %v2176, %v2222
      %v2244 = vadd.f32 %v2176, %v2226
      %v2245 = vadd.f32 %v2181, %v2222
      %v2246 = vadd.f32 %v2181, %v2226
      %v2247 = vadd.f32 %v2186, %v2222
      %v2248 = vadd.f32 %v2186, %v2226
      %v2249 = vadd.f32 %v2191, %v2222
      %v2250 = vadd.f32 %v2191, %v2226
      %v2251 = vadd.f32 %v2196, %v2222
      %v2252 = vadd.f32 %v2196, %v2226
      %v2253 = vadd.f32 %v2201, %v2222
      %v2254 = vadd.f32 %v2201, %v2226
      %v2255 = vadd.f32 %v2206, %v2222
      %v2256 = vadd.f32 %v2206, %v2226
      %v2257 = vadd.f32 %v2211, %v2222
      %v2258 = vadd.f32 %v2211, %v2226
      %v2259 = vadd.f32 %v2216, %v2222
      %v2260 = vadd.f32 %v2216, %v2226
      %vm2261 = vcmp.gt.f32.partialorder %v2229, 0.0
      %vm2262 = vcmp.gt.f32.partialorder %v2230, 0.0
      %vm2263 = vcmp.gt.f32.partialorder %v2231, 0.0
      %vm2264 = vcmp.gt.f32.partialorder %v2232, 0.0
      %vm2265 = vcmp.gt.f32.partialorder %v2233, 0.0
      %vm2266 = vcmp.gt.f32.partialorder %v2234, 0.0
      %vm2267 = vcmp.gt.f32.partialorder %v2235, 0.0
      %vm2268 = vcmp.gt.f32.partialorder %v2236, 0.0
      %vm2269 = vcmp.gt.f32.partialorder %v2237, 0.0
      %vm2270 = vcmp.gt.f32.partialorder %v2238, 0.0
      %vm2271 = vcmp.gt.f32.partialorder %v2239, 0.0
      %vm2272 = vcmp.gt.f32.partialorder %v2240, 0.0
      %vm2273 = vcmp.gt.f32.partialorder %v2241, 0.0
      %vm2274 = vcmp.gt.f32.partialorder %v2242, 0.0
      %vm2275 = vcmp.gt.f32.partialorder %v2243, 0.0
      %vm2276 = vcmp.gt.f32.partialorder %v2244, 0.0
      %vm2277 = vcmp.gt.f32.partialorder %v2245, 0.0
      %vm2278 = vcmp.gt.f32.partialorder %v2246, 0.0
      %vm2279 = vcmp.gt.f32.partialorder %v2247, 0.0
      %vm2280 = vcmp.gt.f32.partialorder %v2248, 0.0
      %vm2281 = vcmp.gt.f32.partialorder %v2249, 0.0
      %vm2282 = vcmp.gt.f32.partialorder %v2250, 0.0
      %vm2283 = vcmp.gt.f32.partialorder %v2251, 0.0
      %vm2284 = vcmp.gt.f32.partialorder %v2252, 0.0
      %vm2285 = vcmp.gt.f32.partialorder %v2253, 0.0
      %vm2286 = vcmp.gt.f32.partialorder %v2254, 0.0
      %vm2287 = vcmp.gt.f32.partialorder %v2255, 0.0
      %vm2288 = vcmp.gt.f32.partialorder %v2256, 0.0
      %vm2289 = vcmp.gt.f32.partialorder %v2257, 0.0
      %vm2290 = vcmp.gt.f32.partialorder %v2258, 0.0
      %vm2291 = vcmp.gt.f32.partialorder %v2259, 0.0
      %vm2292 = vcmp.gt.f32.partialorder %v2260, 0.0
      %v2293 = vmul.f32 %v2229, 0.2
      %v2294 = vmul.f32 %v2230, 0.2
      %v2295 = vmul.f32 %v2231, 0.2
      %v2296 = vmul.f32 %v2232, 0.2
      %v2297 = vmul.f32 %v2233, 0.2
      %v2298 = vmul.f32 %v2234, 0.2
      %v2299 = vmul.f32 %v2235, 0.2
      %v2300 = vmul.f32 %v2236, 0.2
      %v2301 = vmul.f32 %v2237, 0.2
      %v2302 = vmul.f32 %v2238, 0.2
      %v2303 = vmul.f32 %v2239, 0.2
      %v2304 = vmul.f32 %v2240, 0.2
      %v2305 = vmul.f32 %v2241, 0.2
      %v2306 = vmul.f32 %v2242, 0.2
      %v2307 = vmul.f32 %v2243, 0.2
      %v2308 = vmul.f32 %v2244, 0.2
      %v2309 = vmul.f32 %v2245, 0.2
      %v2310 = vmul.f32 %v2246, 0.2
      %v2311 = vmul.f32 %v2247, 0.2
      %v2312 = vmul.f32 %v2248, 0.2
      %v2313 = vmul.f32 %v2249, 0.2
      %v2314 = vmul.f32 %v2250, 0.2
      %v2315 = vmul.f32 %v2251, 0.2
      %v2316 = vmul.f32 %v2252, 0.2
      %v2317 = vmul.f32 %v2253, 0.2
      %v2318 = vmul.f32 %v2254, 0.2
      %v2319 = vmul.f32 %v2255, 0.2
      %v2320 = vmul.f32 %v2256, 0.2
      %v2321 = vmul.f32 %v2257, 0.2
      %v2322 = vmul.f32 %v2258, 0.2
      %v2323 = vmul.f32 %v2259, 0.2
      %v2324 = vmul.f32 %v2260, 0.2
      %v2325 = vsel %vm2261, %v2229, %v2293
      %v2326 = vsel %vm2262, %v2230, %v2294
      %v2327 = vsel %vm2263, %v2231, %v2295
      %v2328 = vsel %vm2264, %v2232, %v2296
      %v2329 = vsel %vm2265, %v2233, %v2297
      %v2330 = vsel %vm2266, %v2234, %v2298
      %v2331 = vsel %vm2267, %v2235, %v2299
      %v2332 = vsel %vm2268, %v2236, %v2300
      %v2333 = vsel %vm2269, %v2237, %v2301
      %v2334 = vsel %vm2270, %v2238, %v2302
      %v2335 = vsel %vm2271, %v2239, %v2303
      %v2336 = vsel %vm2272, %v2240, %v2304
      %v2337 = vsel %vm2273, %v2241, %v2305
      %v2338 = vsel %vm2274, %v2242, %v2306
      %v2339 = vsel %vm2275, %v2243, %v2307
      %v2340 = vsel %vm2276, %v2244, %v2308
      %v2341 = vsel %vm2277, %v2245, %v2309
      %v2342 = vsel %vm2278, %v2246, %v2310
      %v2343 = vsel %vm2279, %v2247, %v2311
      %v2344 = vsel %vm2280, %v2248, %v2312
      %v2345 = vsel %vm2281, %v2249, %v2313
      %v2346 = vsel %vm2282, %v2250, %v2314
      %v2347 = vsel %vm2283, %v2251, %v2315
      %v2348 = vsel %vm2284, %v2252, %v2316
      %v2349 = vsel %vm2285, %v2253, %v2317
      %v2350 = vsel %vm2286, %v2254, %v2318
      %v2351 = vsel %vm2287, %v2255, %v2319
      %v2352 = vsel %vm2288, %v2256, %v2320
      %v2353 = vsel %vm2289, %v2257, %v2321
      %v2354 = vsel %vm2290, %v2258, %v2322
      %v2355 = vsel %vm2291, %v2259, %v2323
      %v2356 = vsel %vm2292, %v2260, %v2324
      %v2357 = vadd.f32 %v2325, %v298
      %v2358 = vadd.f32 %v2326, %v299
      %v2359 = vadd.f32 %v2327, %v300
      %v2360 = vadd.f32 %v2328, %v301
      %v2361 = vadd.f32 %v2329, %v302
      %v2362 = vadd.f32 %v2330, %v303
      %v2363 = vadd.f32 %v2331, %v304
      %v2364 = vadd.f32 %v2332, %v305
      %v2365 = vadd.f32 %v2333, %v306
      %v2366 = vadd.f32 %v2334, %v307
      %v2367 = vadd.f32 %v2335, %v308
      %v2368 = vadd.f32 %v2336, %v309
      %v2369 = vadd.f32 %v2337, %v310
      %v2370 = vadd.f32 %v2338, %v311
      %v2371 = vadd.f32 %v2339, %v312
      %v2372 = vadd.f32 %v2340, %v313
      %v2373 = vadd.f32 %v2341, %v314
      %v2374 = vadd.f32 %v2342, %v315
      %v2375 = vadd.f32 %v2343, %v316
      %v2376 = vadd.f32 %v2344, %v317
      %v2377 = vadd.f32 %v2345, %v318
      %v2378 = vadd.f32 %v2346, %v319
      %v2379 = vadd.f32 %v2347, %v320
      %v2380 = vadd.f32 %v2348, %v321
      %v2381 = vadd.f32 %v2349, %v322
      %v2382 = vadd.f32 %v2350, %v323
      %v2383 = vadd.f32 %v2351, %v324
      %v2384 = vadd.f32 %v2352, %v325
      %v2385 = vadd.f32 %v2353, %v326
      %v2386 = vadd.f32 %v2354, %v327
      %v2387 = vadd.f32 %v2355, %v328
      %v2388 = vadd.f32 %v2356, %v329
      %v2389 = vmax.f32 %v2357, %v2358
      %2390 = vmax.xlane.f32.xlu0 %v2389
      %v2391 = vpop.xlane.xlu0 %2390
      %v2392 = vmax.f32 %v2359, %v2360
      %2393 = vmax.xlane.f32.xlu0 %v2392
      %v2394 = vpop.xlane.xlu0 %2393
      %v2395 = vmax.f32 %v2361, %v2362
      %2396 = vmax.xlane.f32.xlu0 %v2395
      %v2397 = vpop.xlane.xlu0 %2396
      %v2398 = vmax.f32 %v2363, %v2364
      %2399 = vmax.xlane.f32.xlu0 %v2398
      %v2400 = vpop.xlane.xlu0 %2399
      %v2401 = vmax.f32 %v2365, %v2366
      %2402 = vmax.xlane.f32.xlu0 %v2401
      %v2403 = vpop.xlane.xlu0 %2402
      %v2404 = vmax.f32 %v2367, %v2368
      %2405 = vmax.xlane.f32.xlu0 %v2404
      %v2406 = vpop.xlane.xlu0 %2405
      %v2407 = vmax.f32 %v2369, %v2370
      %2408 = vmax.xlane.f32.xlu0 %v2407
      %v2409 = vpop.xlane.xlu0 %2408
      %v2410 = vmax.f32 %v2371, %v2372
      %2411 = vmax.xlane.f32.xlu0 %v2410
      %v2412 = vpop.xlane.xlu0 %2411
      %v2413 = vmax.f32 %v2373, %v2374
      %2414 = vmax.xlane.f32.xlu0 %v2413
      %v2415 = vpop.xlane.xlu0 %2414
      %v2416 = vmax.f32 %v2375, %v2376
      %2417 = vmax.xlane.f32.xlu0 %v2416
      %v2418 = vpop.xlane.xlu0 %2417
      %v2419 = vmax.f32 %v2377, %v2378
      %2420 = vmax.xlane.f32.xlu0 %v2419
      %v2421 = vpop.xlane.xlu0 %2420
      %v2422 = vmax.f32 %v2379, %v2380
      %2423 = vmax.xlane.f32.xlu0 %v2422
      %v2424 = vpop.xlane.xlu0 %2423
      %v2425 = vmax.f32 %v2381, %v2382
      %2426 = vmax.xlane.f32.xlu0 %v2425
      %v2427 = vpop.xlane.xlu0 %2426
      %v2428 = vmax.f32 %v2383, %v2384
      %2429 = vmax.xlane.f32.xlu0 %v2428
      %v2430 = vpop.xlane.xlu0 %2429
      %v2431 = vmax.f32 %v2385, %v2386
      %2432 = vmax.xlane.f32.xlu0 %v2431
      %v2433 = vpop.xlane.xlu0 %2432
      %v2434 = vmax.f32 %v2387, %v2388
      %2435 = vmax.xlane.f32.xlu0 %v2434
      %v2436 = vpop.xlane.xlu0 %2435
      %v2437 = vsub.f32 %v2357, %v2391
      %v2438 = vsub.f32 %v2358, %v2391
      %v2439 = vsub.f32 %v2359, %v2394
      %v2440 = vsub.f32 %v2360, %v2394
      %v2441 = vsub.f32 %v2361, %v2397
      %v2442 = vsub.f32 %v2362, %v2397
      %v2443 = vsub.f32 %v2363, %v2400
      %v2444 = vsub.f32 %v2364, %v2400
      %v2445 = vsub.f32 %v2365, %v2403
      %v2446 = vsub.f32 %v2366, %v2403
      %v2447 = vsub.f32 %v2367, %v2406
      %v2448 = vsub.f32 %v2368, %v2406
      %v2449 = vsub.f32 %v2369, %v2409
      %v2450 = vsub.f32 %v2370, %v2409
      %v2451 = vsub.f32 %v2371, %v2412
      %v2452 = vsub.f32 %v2372, %v2412
      %v2453 = vsub.f32 %v2373, %v2415
      %v2454 = vsub.f32 %v2374, %v2415
      %v2455 = vsub.f32 %v2375, %v2418
      %v2456 = vsub.f32 %v2376, %v2418
      %v2457 = vsub.f32 %v2377, %v2421
      %v2458 = vsub.f32 %v2378, %v2421
      %v2459 = vsub.f32 %v2379, %v2424
      %v2460 = vsub.f32 %v2380, %v2424
      %v2461 = vsub.f32 %v2381, %v2427
      %v2462 = vsub.f32 %v2382, %v2427
      %v2463 = vsub.f32 %v2383, %v2430
      %v2464 = vsub.f32 %v2384, %v2430
      %v2465 = vsub.f32 %v2385, %v2433
      %v2466 = vsub.f32 %v2386, %v2433
      %v2467 = vsub.f32 %v2387, %v2436
      %v2468 = vsub.f32 %v2388, %v2436
      %v2469 = vmul.f32 %v2437, 1.442695
      %v2470 = vpow.pop %v2469
      %v2471 = vmul.f32 %v2438, 1.442695
      %v2472 = vpow.pop %v2471
      %v2473 = vmul.f32 %v2439, 1.442695
      %v2474 = vpow.pop %v2473
      %v2475 = vmul.f32 %v2440, 1.442695
      %v2476 = vpow.pop %v2475
      %v2477 = vmul.f32 %v2441, 1.442695
      %v2478 = vpow.pop %v2477
      %v2479 = vmul.f32 %v2442, 1.442695
      %v2480 = vpow.pop %v2479
      %v2481 = vmul.f32 %v2443, 1.442695
      %v2482 = vpow.pop %v2481
      %v2483 = vmul.f32 %v2444, 1.442695
      %v2484 = vpow.pop %v2483
      %v2485 = vmul.f32 %v2445, 1.442695
      %v2486 = vpow.pop %v2485
      %v2487 = vmul.f32 %v2446, 1.442695
      %v2488 = vpow.pop %v2487
      %v2489 = vmul.f32 %v2447, 1.442695
      %v2490 = vpow.pop %v2489
      %v2491 = vmul.f32 %v2448, 1.442695
      %v2492 = vpow.pop %v2491
      %v2493 = vmul.f32 %v2449, 1.442695
      %v2494 = vpow.pop %v2493
      %v2495 = vmul.f32 %v2450, 1.442695
      %v2496 = vpow.pop %v2495
      %v2497 = vmul.f32 %v2451, 1.442695
      %v2498 = vpow.pop %v2497
      %v2499 = vmul.f32 %v2452, 1.442695
      %v2500 = vpow.pop %v2499
      %v2501 = vmul.f32 %v2453, 1.442695
      %v2502 = vpow.pop %v2501
      %v2503 = vmul.f32 %v2454, 1.442695
      %v2504 = vpow.pop %v2503
      %v2505 = vmul.f32 %v2455, 1.442695
      %v2506 = vpow.pop %v2505
      %v2507 = vmul.f32 %v2456, 1.442695
      %v2508 = vpow.pop %v2507
      %v2509 = vmul.f32 %v2457, 1.442695
      %v2510 = vpow.pop %v2509
      %v2511 = vmul.f32 %v2458, 1.442695
      %v2512 = vpow.pop %v2511
      %v2513 = vmul.f32 %v2459, 1.442695
      %v2514 = vpow.pop %v2513
      %v2515 = vmul.f32 %v2460, 1.442695
      %v2516 = vpow.pop %v2515
      %v2517 = vmul.f32 %v2461, 1.442695
      %v2518 = vpow.pop %v2517
      %v2519 = vmul.f32 %v2462, 1.442695
      %v2520 = vpow.pop %v2519
      %v2521 = vmul.f32 %v2463, 1.442695
      %v2522 = vpow.pop %v2521
      %v2523 = vmul.f32 %v2464, 1.442695
      %v2524 = vpow.pop %v2523
      %v2525 = vmul.f32 %v2465, 1.442695
      %v2526 = vpow.pop %v2525
      %v2527 = vmul.f32 %v2466, 1.442695
      %v2528 = vpow.pop %v2527
      %v2529 = vmul.f32 %v2467, 1.442695
      %v2530 = vpow.pop %v2529
      %v2531 = vmul.f32 %v2468, 1.442695
      %v2532 = vpow.pop %v2531
      %s2533 = scalar_lea.vmem %s1, 256
      %v2534 = vld [vmem:[%s2533] sm:$0xf]
      %v2535 = vld [vmem:[%s2533 + $0x4] sm:$0xf]
      %v2536 = vld [vmem:[%s2533 + $0x8] sm:$0xf]
      %v2537 = vld [vmem:[%s2533 + $0xc] sm:$0xf]
      %v2538 = vld [vmem:[%s2533 + $0x10] sm:$0xf]
      %v2539 = vld [vmem:[%s2533 + $0x14] sm:$0xf]
      %v2540 = vld [vmem:[%s2533 + $0x18] sm:$0xf]
      %v2541 = vld [vmem:[%s2533 + $0x1c] sm:$0xf]
      %v2542 = vld [vmem:[%s2533 + $0x20] sm:$0xf]
      %v2543 = vld [vmem:[%s2533 + $0x24] sm:$0xf]
      %v2544 = vld [vmem:[%s2533 + $0x28] sm:$0xf]
      %v2545 = vld [vmem:[%s2533 + $0x2c] sm:$0xf]
      %v2546 = vld [vmem:[%s2533 + $0x30] sm:$0xf]
      %v2547 = vld [vmem:[%s2533 + $0x34] sm:$0xf]
      %v2548 = vld [vmem:[%s2533 + $0x38] sm:$0xf]
      %v2549 = vld [vmem:[%s2533 + $0x3c] sm:$0xf]
      %v2550 = vld [vmem:[%s2533 + $0x40] sm:$0xf]
      %v2551 = vld [vmem:[%s2533 + $0x44] sm:$0xf]
      %v2552 = vld [vmem:[%s2533 + $0x48] sm:$0xf]
      %v2553 = vld [vmem:[%s2533 + $0x4c] sm:$0xf]
      %v2554 = vld [vmem:[%s2533 + $0x50] sm:$0xf]
      %v2555 = vld [vmem:[%s2533 + $0x54] sm:$0xf]
      %v2556 = vld [vmem:[%s2533 + $0x58] sm:$0xf]
      %v2557 = vld [vmem:[%s2533 + $0x5c] sm:$0xf]
      %v2558 = vld [vmem:[%s2533 + $0x60] sm:$0xf]
      %v2559 = vld [vmem:[%s2533 + $0x64] sm:$0xf]
      %v2560 = vld [vmem:[%s2533 + $0x68] sm:$0xf]
      %v2561 = vld [vmem:[%s2533 + $0x6c] sm:$0xf]
      %v2562 = vld [vmem:[%s2533 + $0x70] sm:$0xf]
      %v2563 = vld [vmem:[%s2533 + $0x74] sm:$0xf]
      %v2564 = vld [vmem:[%s2533 + $0x78] sm:$0xf]
      %v2565 = vld [vmem:[%s2533 + $0x7c] sm:$0xf]
      %v2566 = vunpack.c.l.bf16 %v2534
      %v2567 = vunpack.c.l.bf16 %v2535
      %v2568 = vunpack.c.l.bf16 %v2536
      %v2569 = vunpack.c.l.bf16 %v2537
      %v2570 = vunpack.c.l.bf16 %v2538
      %v2571 = vunpack.c.l.bf16 %v2539
      %v2572 = vunpack.c.l.bf16 %v2540
      %v2573 = vunpack.c.l.bf16 %v2541
      %v2574 = vunpack.c.l.bf16 %v2542
      %v2575 = vunpack.c.l.bf16 %v2543
      %v2576 = vunpack.c.l.bf16 %v2544
      %v2577 = vunpack.c.l.bf16 %v2545
      %v2578 = vunpack.c.l.bf16 %v2546
      %v2579 = vunpack.c.l.bf16 %v2547
      %v2580 = vunpack.c.l.bf16 %v2548
      %v2581 = vunpack.c.l.bf16 %v2549
      %v2582 = vunpack.c.l.bf16 %v2550
      %v2583 = vunpack.c.l.bf16 %v2551
      %v2584 = vunpack.c.l.bf16 %v2552
      %v2585 = vunpack.c.l.bf16 %v2553
      %v2586 = vunpack.c.l.bf16 %v2554
      %v2587 = vunpack.c.l.bf16 %v2555
      %v2588 = vunpack.c.l.bf16 %v2556
      %v2589 = vunpack.c.l.bf16 %v2557
      %v2590 = vunpack.c.l.bf16 %v2558
      %v2591 = vunpack.c.l.bf16 %v2559
      %v2592 = vunpack.c.l.bf16 %v2560
      %v2593 = vunpack.c.l.bf16 %v2561
      %v2594 = vunpack.c.l.bf16 %v2562
      %v2595 = vunpack.c.l.bf16 %v2563
      %v2596 = vunpack.c.l.bf16 %v2564
      %v2597 = vunpack.c.l.bf16 %v2565
      %2598 = vmatprep.subr.mxu0 0.0
      %2599 = vmatpush1.msra.mxu0 %v2566
      %2600 = vmatprep.subr.mxu0 0.0
      %2601 = vmatpush1.msra.mxu0 %v2567
      %2602 = vmatprep.subr.mxu0 0.0
      %2603 = vmatpush1.msra.mxu0 %v2568
      %2604 = vmatprep.subr.mxu0 0.0
      %2605 = vmatpush1.msra.mxu0 %v2569
      %2606 = vmatprep.subr.mxu0 0.0
      %2607 = vmatpush1.msra.mxu0 %v2570
      %2608 = vmatprep.subr.mxu0 0.0
      %2609 = vmatpush1.msra.mxu0 %v2571
      %2610 = vmatprep.subr.mxu0 0.0
      %2611 = vmatpush1.msra.mxu0 %v2572
      %2612 = vmatprep.subr.mxu0 0.0
      %2613 = vmatpush1.msra.mxu0 %v2573
      %2614 = vmatprep.subr.mxu0 0.0
      %2615 = vmatpush1.msra.mxu0 %v2574
      %2616 = vmatprep.subr.mxu0 0.0
      %2617 = vmatpush1.msra.mxu0 %v2575
      %2618 = vmatprep.subr.mxu0 0.0
      %2619 = vmatpush1.msra.mxu0 %v2576
      %2620 = vmatprep.subr.mxu0 0.0
      %2621 = vmatpush1.msra.mxu0 %v2577
      %2622 = vmatprep.subr.mxu0 0.0
      %2623 = vmatpush1.msra.mxu0 %v2578
      %2624 = vmatprep.subr.mxu0 0.0
      %2625 = vmatpush1.msra.mxu0 %v2579
      %2626 = vmatprep.subr.mxu0 0.0
      %2627 = vmatpush1.msra.mxu0 %v2580
      %2628 = vmatprep.subr.mxu0 0.0
      %2629 = vmatpush1.msra.mxu0 %v2581
      %2630 = vmatprep.subr.mxu0 0.0
      %2631 = vmatpush1.msra.mxu0 %v2582
      %2632 = vmatprep.subr.mxu0 0.0
      %2633 = vmatpush1.msra.mxu0 %v2583
      %2634 = vmatprep.subr.mxu0 0.0
      %2635 = vmatpush1.msra.mxu0 %v2584
      %2636 = vmatprep.subr.mxu0 0.0
      %2637 = vmatpush1.msra.mxu0 %v2585
      %2638 = vmatprep.subr.mxu0 0.0
      %2639 = vmatpush1.msra.mxu0 %v2586
      %2640 = vmatprep.subr.mxu0 0.0
      %2641 = vmatpush1.msra.mxu0 %v2587
      %2642 = vmatprep.subr.mxu0 0.0
      %2643 = vmatpush1.msra.mxu0 %v2588
      %2644 = vmatprep.subr.mxu0 0.0
      %2645 = vmatpush1.msra.mxu0 %v2589
      %2646 = vmatprep.subr.mxu0 0.0
      %2647 = vmatpush1.msra.mxu0 %v2590
      %2648 = vmatprep.subr.mxu0 0.0
      %2649 = vmatpush1.msra.mxu0 %v2591
      %2650 = vmatprep.subr.mxu0 0.0
      %2651 = vmatpush1.msra.mxu0 %v2592
      %2652 = vmatprep.subr.mxu0 0.0
      %2653 = vmatpush1.msra.mxu0 %v2593
      %2654 = vmatprep.subr.mxu0 0.0
      %2655 = vmatpush1.msra.mxu0 %v2594
      %2656 = vmatprep.subr.mxu0 0.0
      %2657 = vmatpush1.msra.mxu0 %v2595
      %2658 = vmatprep.subr.mxu0 0.0
      %2659 = vmatpush1.msra.mxu0 %v2596
      %2660 = vmatprep.subr.mxu0 0.0
      %2661 = vmatpush1.msra.mxu0 %v2597
      %2662 = vmatprep.mubr.f32.mxu0 %v2472
      %2663 = vmatmul.mubr.f32.gmra.mrb[0].mxu0 %v2470
      %v2664 = vpop.f32.mrb[0].mxu0
      %v2665 = vadd.f32 0.0, %v2664
      %v2666 = vpop.f32.mrb[0].mxu0
      %2667 = vmatprep.mubr.f32.mxu0 %v2476
      %2668 = vmatmul.mubr.f32.gmra.mrb[0].mxu0 %v2474
      %v2669 = vpop.f32.mrb[0].mxu0
      %v2670 = vadd.f32 0.0, %v2669
      %v2671 = vpop.f32.mrb[0].mxu0
      %2672 = vmatprep.mubr.f32.mxu0 %v2480
      %2673 = vmatmul.mubr.f32.gmra.mrb[0].mxu0 %v2478
      %v2674 = vpop.f32.mrb[0].mxu0
      %v2675 = vadd.f32 0.0, %v2674
      %v2676 = vpop.f32.mrb[0].mxu0
      %2677 = vmatprep.mubr.f32.mxu0 %v2484
      %2678 = vmatmul.mubr.f32.gmra.mrb[0].mxu0 %v2482
      %v2679 = vpop.f32.mrb[0].mxu0
      %v2680 = vadd.f32 0.0, %v2679
      %v2681 = vpop.f32.mrb[0].mxu0
      %2682 = vmatprep.mubr.f32.mxu0 %v2488
      %2683 = vmatmul.mubr.f32.gmra.mrb[0].mxu0 %v2486
      %v2684 = vpop.f32.mrb[0].mxu0
      %v2685 = vadd.f32 0.0, %v2684
      %v2686 = vpop.f32.mrb[0].mxu0
      %2687 = vmatprep.mubr.f32.mxu0 %v2492
      %2688 = vmatmul.mubr.f32.gmra.mrb[0].mxu0 %v2490
      %v2689 = vpop.f32.mrb[0].mxu0
      %v2690 = vadd.f32 0.0, %v2689
      %v2691 = vpop.f32.mrb[0].mxu0
      %2692 = vmatprep.mubr.f32.mxu0 %v2496
      %2693 = vmatmul.mubr.f32.gmra.mrb[0].mxu0 %v2494
      %v2694 = vpop.f32.mrb[0].mxu0
      %v2695 = vadd.f32 0.0, %v2694
      %v2696 = vpop.f32.mrb[0].mxu0
      %2697 = vmatprep.mubr.f32.mxu0 %v2500
      %2698 = vmatmul.mubr.f32.gmra.mrb[0].mxu0 %v2498
      %v2699 = vpop.f32.mrb[0].mxu0
      %v2700 = vadd.f32 0.0, %v2699
      %v2701 = vpop.f32.mrb[0].mxu0
      %2702 = vmatprep.mubr.f32.mxu0 %v2504
      %2703 = vmatmul.mubr.f32.gmra.mrb[0].mxu0 %v2502
      %v2704 = vpop.f32.mrb[0].mxu0
      %v2705 = vadd.f32 0.0, %v2704
      %v2706 = vpop.f32.mrb[0].mxu0
      %2707 = vmatprep.mubr.f32.mxu0 %v2508
      %2708 = vmatmul.mubr.f32.gmra.mrb[0].mxu0 %v2506
      %v2709 = vpop.f32.mrb[0].mxu0
      %v2710 = vadd.f32 0.0, %v2709
      %v2711 = vpop.f32.mrb[0].mxu0
      %2712 = vmatprep.mubr.f32.mxu0 %v2512
      %2713 = vmatmul.mubr.f32.gmra.mrb[0].mxu0 %v2510
      %v2714 = vpop.f32.mrb[0].mxu0
      %v2715 = vadd.f32 0.0, %v2714
      %v2716 = vpop.f32.mrb[0].mxu0
      %2717 = vmatprep.mubr.f32.mxu0 %v2516
      %2718 = vmatmul.mubr.f32.gmra.mrb[0].mxu0 %v2514
      %v2719 = vpop.f32.mrb[0].mxu0
      %v2720 = vadd.f32 0.0, %v2719
      %v2721 = vpop.f32.mrb[0].mxu0
      %2722 = vmatprep.mubr.f32.mxu0 %v2520
      %2723 = vmatmul.mubr.f32.gmra.mrb[0].mxu0 %v2518
      %v2724 = vpop.f32.mrb[0].mxu0
      %v2725 = vadd.f32 0.0, %v2724
      %v2726 = vpop.f32.mrb[0].mxu0
      %2727 = vmatprep.mubr.f32.mxu0 %v2524
      %2728 = vmatmul.mubr.f32.gmra.mrb[0].mxu0 %v2522
      %v2729 = vpop.f32.mrb[0].mxu0
      %v2730 = vadd.f32 0.0, %v2729
      %v2731 = vpop.f32.mrb[0].mxu0
      %2732 = vmatprep.mubr.f32.mxu0 %v2528
      %2733 = vmatmul.mubr.f32.gmra.mrb[0].mxu0 %v2526
      %v2734 = vpop.f32.mrb[0].mxu0
      %v2735 = vadd.f32 0.0, %v2734
      %v2736 = vpop.f32.mrb[0].mxu0
      %2737 = vmatprep.mubr.f32.mxu0 %v2532
      %2738 = vmatmul.mubr.f32.gmra.mrb[0].mxu0 %v2530
      %v2739 = vpop.f32.mrb[0].mxu0
      %v2740 = vadd.f32 0.0, %v2739
      %v2741 = vpop.f32.mrb[0].mxu0
      %2742 = vdwg.mxu0
      %v2743 = vrcp.pop %v2665
      %v2744 = vmul.f32 1.0, %v2743
      %v2745 = vrcp.pop %v2670
      %v2746 = vmul.f32 1.0, %v2745
      %v2747 = vrcp.pop %v2675
      %v2748 = vmul.f32 1.0, %v2747
      %v2749 = vrcp.pop %v2680
      %v2750 = vmul.f32 1.0, %v2749
      %v2751 = vrcp.pop %v2685
      %v2752 = vmul.f32 1.0, %v2751
      %v2753 = vrcp.pop %v2690
      %v2754 = vmul.f32 1.0, %v2753
      %v2755 = vrcp.pop %v2695
      %v2756 = vmul.f32 1.0, %v2755
      %v2757 = vrcp.pop %v2700
      %v2758 = vmul.f32 1.0, %v2757
      %v2759 = vrcp.pop %v2705
      %v2760 = vmul.f32 1.0, %v2759
      %v2761 = vrcp.pop %v2710
      %v2762 = vmul.f32 1.0, %v2761
      %v2763 = vrcp.pop %v2715
      %v2764 = vmul.f32 1.0, %v2763
      %v2765 = vrcp.pop %v2720
      %v2766 = vmul.f32 1.0, %v2765
      %v2767 = vrcp.pop %v2725
      %v2768 = vmul.f32 1.0, %v2767
      %v2769 = vrcp.pop %v2730
      %v2770 = vmul.f32 1.0, %v2769
      %v2771 = vrcp.pop %v2735
      %v2772 = vmul.f32 1.0, %v2771
      %v2773 = vrcp.pop %v2740
      %v2774 = vmul.f32 1.0, %v2773
      %2776 = vset.pattern.permute.xlu0 16
      %2777 = vperm.xlu0 %2776, %v2744
      %v2778 = vpop.permute.xlu0 %2777
      %2781 = vset.pattern.permute.xlu0 16
      %2782 = vperm.xlu0 %2781, %v2746
      %v2783 = vpop.permute.xlu0 %2782
      %2786 = vset.pattern.permute.xlu0 16
      %2787 = vperm.xlu0 %2786, %v2748
      %v2788 = vpop.permute.xlu0 %2787
      %2791 = vset.pattern.permute.xlu0 16
      %2792 = vperm.xlu0 %2791, %v2750
      %v2793 = vpop.permute.xlu0 %2792
      %2796 = vset.pattern.permute.xlu0 16
      %2797 = vperm.xlu0 %2796, %v2752
      %v2798 = vpop.permute.xlu0 %2797
      %2801 = vset.pattern.permute.xlu0 16
      %2802 = vperm.xlu0 %2801, %v2754
      %v2803 = vpop.permute.xlu0 %2802
      %2806 = vset.pattern.permute.xlu0 16
      %2807 = vperm.xlu0 %2806, %v2756
      %v2808 = vpop.permute.xlu0 %2807
      %2811 = vset.pattern.permute.xlu0 16
      %2812 = vperm.xlu0 %2811, %v2758
      %v2813 = vpop.permute.xlu0 %2812
      %2816 = vset.pattern.permute.xlu0 16
      %2817 = vperm.xlu0 %2816, %v2760
      %v2818 = vpop.permute.xlu0 %2817
      %2821 = vset.pattern.permute.xlu0 16
      %2822 = vperm.xlu0 %2821, %v2762
      %v2823 = vpop.permute.xlu0 %2822
      %2826 = vset.pattern.permute.xlu0 16
      %2827 = vperm.xlu0 %2826, %v2764
      %v2828 = vpop.permute.xlu0 %2827
      %2831 = vset.pattern.permute.xlu0 16
      %2832 = vperm.xlu0 %2831, %v2766
      %v2833 = vpop.permute.xlu0 %2832
      %2836 = vset.pattern.permute.xlu0 16
      %2837 = vperm.xlu0 %2836, %v2768
      %v2838 = vpop.permute.xlu0 %2837
      %2841 = vset.pattern.permute.xlu0 16
      %2842 = vperm.xlu0 %2841, %v2770
      %v2843 = vpop.permute.xlu0 %2842
      %2846 = vset.pattern.permute.xlu0 16
      %2847 = vperm.xlu0 %2846, %v2772
      %v2848 = vpop.permute.xlu0 %2847
      %2851 = vset.pattern.permute.xlu0 16
      %2852 = vperm.xlu0 %2851, %v2774
      %v2853 = vpop.permute.xlu0 %2852
      %v2855 = vmul.f32 %v2665, %v2778
      %v2856 = vmul.f32 %v2670, %v2783
      %v2857 = vmul.f32 %v2675, %v2788
      %v2858 = vmul.f32 %v2680, %v2793
      %v2859 = vmul.f32 %v2685, %v2798
      %v2860 = vmul.f32 %v2690, %v2803
      %v2861 = vmul.f32 %v2695, %v2808
      %v2862 = vmul.f32 %v2700, %v2813
      %v2863 = vmul.f32 %v2705, %v2818
      %v2864 = vmul.f32 %v2710, %v2823
      %v2865 = vmul.f32 %v2715, %v2828
      %v2866 = vmul.f32 %v2720, %v2833
      %v2867 = vmul.f32 %v2725, %v2838
      %v2868 = vmul.f32 %v2730, %v2843
      %v2869 = vmul.f32 %v2735, %v2848
      %v2870 = vmul.f32 %v2740, %v2853
      %vm2871 = vcmp.gt.f32.partialorder %v2855, 0.0
      %vm2872 = vcmp.gt.f32.partialorder %v2856, 0.0
      %vm2873 = vcmp.gt.f32.partialorder %v2857, 0.0
      %vm2874 = vcmp.gt.f32.partialorder %v2858, 0.0
      %vm2875 = vcmp.gt.f32.partialorder %v2859, 0.0
      %vm2876 = vcmp.gt.f32.partialorder %v2860, 0.0
      %vm2877 = vcmp.gt.f32.partialorder %v2861, 0.0
      %vm2878 = vcmp.gt.f32.partialorder %v2862, 0.0
      %vm2879 = vcmp.gt.f32.partialorder %v2863, 0.0
      %vm2880 = vcmp.gt.f32.partialorder %v2864, 0.0
      %vm2881 = vcmp.gt.f32.partialorder %v2865, 0.0
      %vm2882 = vcmp.gt.f32.partialorder %v2866, 0.0
      %vm2883 = vcmp.gt.f32.partialorder %v2867, 0.0
      %vm2884 = vcmp.gt.f32.partialorder %v2868, 0.0
      %vm2885 = vcmp.gt.f32.partialorder %v2869, 0.0
      %vm2886 = vcmp.gt.f32.partialorder %v2870, 0.0
      %v2887 = vmin.f32 %v2855, 0.0
      %v2888 = vmin.f32 %v2856, 0.0
      %v2889 = vmin.f32 %v2857, 0.0
      %v2890 = vmin.f32 %v2858, 0.0
      %v2891 = vmin.f32 %v2859, 0.0
      %v2892 = vmin.f32 %v2860, 0.0
      %v2893 = vmin.f32 %v2861, 0.0
      %v2894 = vmin.f32 %v2862, 0.0
      %v2895 = vmin.f32 %v2863, 0.0
      %v2896 = vmin.f32 %v2864, 0.0
      %v2897 = vmin.f32 %v2865, 0.0
      %v2898 = vmin.f32 %v2866, 0.0
      %v2899 = vmin.f32 %v2867, 0.0
      %v2900 = vmin.f32 %v2868, 0.0
      %v2901 = vmin.f32 %v2869, 0.0
      %v2902 = vmin.f32 %v2870, 0.0
      %v2903 = vmul.f32 %v2887, 1.442695
      %v2904 = vpow.pop %v2903
      %v2905 = vmul.f32 %v2888, 1.442695
      %v2906 = vpow.pop %v2905
      %v2907 = vmul.f32 %v2889, 1.442695
      %v2908 = vpow.pop %v2907
      %v2909 = vmul.f32 %v2890, 1.442695
      %v2910 = vpow.pop %v2909
      %v2911 = vmul.f32 %v2891, 1.442695
      %v2912 = vpow.pop %v2911
      %v2913 = vmul.f32 %v2892, 1.442695
      %v2914 = vpow.pop %v2913
      %v2915 = vmul.f32 %v2893, 1.442695
      %v2916 = vpow.pop %v2915
      %v2917 = vmul.f32 %v2894, 1.442695
      %v2918 = vpow.pop %v2917
      %v2919 = vmul.f32 %v2895, 1.442695
      %v2920 = vpow.pop %v2919
      %v2921 = vmul.f32 %v2896, 1.442695
      %v2922 = vpow.pop %v2921
      %v2923 = vmul.f32 %v2897, 1.442695
      %v2924 = vpow.pop %v2923
      %v2925 = vmul.f32 %v2898, 1.442695
      %v2926 = vpow.pop %v2925
      %v2927 = vmul.f32 %v2899, 1.442695
      %v2928 = vpow.pop %v2927
      %v2929 = vmul.f32 %v2900, 1.442695
      %v2930 = vpow.pop %v2929
      %v2931 = vmul.f32 %v2901, 1.442695
      %v2932 = vpow.pop %v2931
      %v2933 = vmul.f32 %v2902, 1.442695
      %v2934 = vpow.pop %v2933
      %v2935 = vsub.f32 %v2904, 1.0
      %v2936 = vsub.f32 %v2906, 1.0
      %v2937 = vsub.f32 %v2908, 1.0
      %v2938 = vsub.f32 %v2910, 1.0
      %v2939 = vsub.f32 %v2912, 1.0
      %v2940 = vsub.f32 %v2914, 1.0
      %v2941 = vsub.f32 %v2916, 1.0
      %v2942 = vsub.f32 %v2918, 1.0
      %v2943 = vsub.f32 %v2920, 1.0
      %v2944 = vsub.f32 %v2922, 1.0
      %v2945 = vsub.f32 %v2924, 1.0
      %v2946 = vsub.f32 %v2926, 1.0
      %v2947 = vsub.f32 %v2928, 1.0
      %v2948 = vsub.f32 %v2930, 1.0
      %v2949 = vsub.f32 %v2932, 1.0
      %v2950 = vsub.f32 %v2934, 1.0
      %v2951 = vsel %vm2871, %v2855, %v2935
      %v2952 = vsel %vm2872, %v2856, %v2936
      %v2953 = vsel %vm2873, %v2857, %v2937
      %v2954 = vsel %vm2874, %v2858, %v2938
      %v2955 = vsel %vm2875, %v2859, %v2939
      %v2956 = vsel %vm2876, %v2860, %v2940
      %v2957 = vsel %vm2877, %v2861, %v2941
      %v2958 = vsel %vm2878, %v2862, %v2942
      %v2959 = vsel %vm2879, %v2863, %v2943
      %v2960 = vsel %vm2880, %v2864, %v2944
      %v2961 = vsel %vm2881, %v2865, %v2945
      %v2962 = vsel %vm2882, %v2866, %v2946
      %v2963 = vsel %vm2883, %v2867, %v2947
      %v2964 = vsel %vm2884, %v2868, %v2948
      %v2965 = vsel %vm2885, %v2869, %v2949
      %v2966 = vsel %vm2886, %v2870, %v2950
      %2983 = vrot.lane.b32.xlu0 %v2951, 32
      %v2984 = vpop.permute.xlu0 %2983
      %2985 = vrot.lane.b32.xlu0 %v2952, 32
      %v2986 = vpop.permute.xlu0 %2985
      %2987 = vrot.lane.b32.xlu0 %v2953, 32
      %v2988 = vpop.permute.xlu0 %2987
      %2989 = vrot.lane.b32.xlu0 %v2954, 32
      %v2990 = vpop.permute.xlu0 %2989
      %2991 = vrot.lane.b32.xlu0 %v2955, 32
      %v2992 = vpop.permute.xlu0 %2991
      %2993 = vrot.lane.b32.xlu0 %v2956, 32
      %v2994 = vpop.permute.xlu0 %2993
      %2995 = vrot.lane.b32.xlu0 %v2957, 32
      %v2996 = vpop.permute.xlu0 %2995
      %2997 = vrot.lane.b32.xlu0 %v2958, 32
      %v2998 = vpop.permute.xlu0 %2997
      %2999 = vrot.lane.b32.xlu0 %v2959, 32
      %v3000 = vpop.permute.xlu0 %2999
      %3001 = vrot.lane.b32.xlu0 %v2960, 32
      %v3002 = vpop.permute.xlu0 %3001
      %3003 = vrot.lane.b32.xlu0 %v2961, 32
      %v3004 = vpop.permute.xlu0 %3003
      %3005 = vrot.lane.b32.xlu0 %v2962, 32
      %v3006 = vpop.permute.xlu0 %3005
      %3007 = vrot.lane.b32.xlu0 %v2963, 32
      %v3008 = vpop.permute.xlu0 %3007
      %3009 = vrot.lane.b32.xlu0 %v2964, 32
      %v3010 = vpop.permute.xlu0 %3009
      %3011 = vrot.lane.b32.xlu0 %v2965, 32
      %v3012 = vpop.permute.xlu0 %3011
      %3013 = vrot.lane.b32.xlu0 %v2966, 32
      %v3014 = vpop.permute.xlu0 %3013
      %vm3031 = vcmask 392448
      %3032 = vst.msk [vmem:[%s224] sm:$0xff] %vm3031, %v2984
      %3033 = vst.msk [vmem:[%s224 + $0x8] sm:$0xff] %vm3031, %v2986
      %3034 = vst.msk [vmem:[%s224 + $0x10] sm:$0xff] %vm3031, %v2988
      %3035 = vst.msk [vmem:[%s224 + $0x18] sm:$0xff] %vm3031, %v2990
      %3036 = vst.msk [vmem:[%s224 + $0x20] sm:$0xff] %vm3031, %v2992
      %3037 = vst.msk [vmem:[%s224 + $0x28] sm:$0xff] %vm3031, %v2994
      %3038 = vst.msk [vmem:[%s224 + $0x30] sm:$0xff] %vm3031, %v2996
      %3039 = vst.msk [vmem:[%s224 + $0x38] sm:$0xff] %vm3031, %v2998
      %3040 = vst.msk [vmem:[%s224 + $0x40] sm:$0xff] %vm3031, %v3000
      %3041 = vst.msk [vmem:[%s224 + $0x48] sm:$0xff] %vm3031, %v3002
      %3042 = vst.msk [vmem:[%s224 + $0x50] sm:$0xff] %vm3031, %v3004
      %3043 = vst.msk [vmem:[%s224 + $0x58] sm:$0xff] %vm3031, %v3006
      %3044 = vst.msk [vmem:[%s224 + $0x60] sm:$0xff] %vm3031, %v3008
      %3045 = vst.msk [vmem:[%s224 + $0x68] sm:$0xff] %vm3031, %v3010
      %3046 = vst.msk [vmem:[%s224 + $0x70] sm:$0xff] %vm3031, %v3012
      %3047 = vst.msk [vmem:[%s224 + $0x78] sm:$0xff] %vm3031, %v3014
      %v3048 = vld [vmem:[%s218] sm:$0xff]
      %v3049 = vld [vmem:[%s218 + $0x8] sm:$0xff]
      %v3050 = vld [vmem:[%s218 + $0x10] sm:$0xff]
      %v3051 = vld [vmem:[%s218 + $0x18] sm:$0xff]
      %v3052 = vld [vmem:[%s218 + $0x20] sm:$0xff]
      %v3053 = vld [vmem:[%s218 + $0x28] sm:$0xff]
      %v3054 = vld [vmem:[%s218 + $0x30] sm:$0xff]
      %v3055 = vld [vmem:[%s218 + $0x38] sm:$0xff]
      %v3056 = vld [vmem:[%s218 + $0x40] sm:$0xff]
      %v3057 = vld [vmem:[%s218 + $0x48] sm:$0xff]
      %v3058 = vld [vmem:[%s218 + $0x50] sm:$0xff]
      %v3059 = vld [vmem:[%s218 + $0x58] sm:$0xff]
      %v3060 = vld [vmem:[%s218 + $0x60] sm:$0xff]
      %v3061 = vld [vmem:[%s218 + $0x68] sm:$0xff]
      %v3062 = vld [vmem:[%s218 + $0x70] sm:$0xff]
      %v3063 = vld [vmem:[%s218 + $0x78] sm:$0xff]
      %s3064 = scalar_lea.vmem %s3, 3
      %v3065 = vld [vmem:[%s3064] ss:$4 sm:$0x3]
      %3067 = vset.pattern.permute.xlu0 3
      %3068 = vperm.xlu0 %3067, %v3048
      %v3069 = vpop.permute.xlu0 %3068
      %3072 = vset.pattern.permute.xlu0 3
      %3073 = vperm.xlu0 %3072, %v3049
      %v3074 = vpop.permute.xlu0 %3073
      %3077 = vset.pattern.permute.xlu0 3
      %3078 = vperm.xlu0 %3077, %v3050
      %v3079 = vpop.permute.xlu0 %3078
      %3082 = vset.pattern.permute.xlu0 3
      %3083 = vperm.xlu0 %3082, %v3051
      %v3084 = vpop.permute.xlu0 %3083
      %3087 = vset.pattern.permute.xlu0 3
      %3088 = vperm.xlu0 %3087, %v3052
      %v3089 = vpop.permute.xlu0 %3088
      %3092 = vset.pattern.permute.xlu0 3
      %3093 = vperm.xlu0 %3092, %v3053
      %v3094 = vpop.permute.xlu0 %3093
      %3097 = vset.pattern.permute.xlu0 3
      %3098 = vperm.xlu0 %3097, %v3054
      %v3099 = vpop.permute.xlu0 %3098
      %3102 = vset.pattern.permute.xlu0 3
      %3103 = vperm.xlu0 %3102, %v3055
      %v3104 = vpop.permute.xlu0 %3103
      %3107 = vset.pattern.permute.xlu0 3
      %3108 = vperm.xlu0 %3107, %v3056
      %v3109 = vpop.permute.xlu0 %3108
      %3112 = vset.pattern.permute.xlu0 3
      %3113 = vperm.xlu0 %3112, %v3057
      %v3114 = vpop.permute.xlu0 %3113
      %3117 = vset.pattern.permute.xlu0 3
      %3118 = vperm.xlu0 %3117, %v3058
      %v3119 = vpop.permute.xlu0 %3118
      %3122 = vset.pattern.permute.xlu0 3
      %3123 = vperm.xlu0 %3122, %v3059
      %v3124 = vpop.permute.xlu0 %3123
      %3127 = vset.pattern.permute.xlu0 3
      %3128 = vperm.xlu0 %3127, %v3060
      %v3129 = vpop.permute.xlu0 %3128
      %3132 = vset.pattern.permute.xlu0 3
      %3133 = vperm.xlu0 %3132, %v3061
      %v3134 = vpop.permute.xlu0 %3133
      %3137 = vset.pattern.permute.xlu0 3
      %3138 = vperm.xlu0 %3137, %v3062
      %v3139 = vpop.permute.xlu0 %3138
      %3142 = vset.pattern.permute.xlu0 3
      %3143 = vperm.xlu0 %3142, %v3063
      %v3144 = vpop.permute.xlu0 %3143
      %v3147 = vlaneseq
      %v3148 = vshrl.u32 %v3147, 7
      %v3149 = vsub.s32 0, %v3148
      %v3150 = vrot.slane %v3065, %v3149
      %v3151 = vlaneseq
      %v3152 = vshrl.u32 %v3151, 7
      %v3153 = vsub.s32 1, %v3152
      %v3154 = vrot.slane %v3065, %v3153
      %v3157 = vadd.f32 %v3069, %v3150
      %v3158 = vadd.f32 %v3069, %v3154
      %v3159 = vadd.f32 %v3074, %v3150
      %v3160 = vadd.f32 %v3074, %v3154
      %v3161 = vadd.f32 %v3079, %v3150
      %v3162 = vadd.f32 %v3079, %v3154
      %v3163 = vadd.f32 %v3084, %v3150
      %v3164 = vadd.f32 %v3084, %v3154
      %v3165 = vadd.f32 %v3089, %v3150
      %v3166 = vadd.f32 %v3089, %v3154
      %v3167 = vadd.f32 %v3094, %v3150
      %v3168 = vadd.f32 %v3094, %v3154
      %v3169 = vadd.f32 %v3099, %v3150
      %v3170 = vadd.f32 %v3099, %v3154
      %v3171 = vadd.f32 %v3104, %v3150
      %v3172 = vadd.f32 %v3104, %v3154
      %v3173 = vadd.f32 %v3109, %v3150
      %v3174 = vadd.f32 %v3109, %v3154
      %v3175 = vadd.f32 %v3114, %v3150
      %v3176 = vadd.f32 %v3114, %v3154
      %v3177 = vadd.f32 %v3119, %v3150
      %v3178 = vadd.f32 %v3119, %v3154
      %v3179 = vadd.f32 %v3124, %v3150
      %v3180 = vadd.f32 %v3124, %v3154
      %v3181 = vadd.f32 %v3129, %v3150
      %v3182 = vadd.f32 %v3129, %v3154
      %v3183 = vadd.f32 %v3134, %v3150
      %v3184 = vadd.f32 %v3134, %v3154
      %v3185 = vadd.f32 %v3139, %v3150
      %v3186 = vadd.f32 %v3139, %v3154
      %v3187 = vadd.f32 %v3144, %v3150
      %v3188 = vadd.f32 %v3144, %v3154
      %vm3189 = vcmp.gt.f32.partialorder %v3157, 0.0
      %vm3190 = vcmp.gt.f32.partialorder %v3158, 0.0
      %vm3191 = vcmp.gt.f32.partialorder %v3159, 0.0
      %vm3192 = vcmp.gt.f32.partialorder %v3160, 0.0
      %vm3193 = vcmp.gt.f32.partialorder %v3161, 0.0
      %vm3194 = vcmp.gt.f32.partialorder %v3162, 0.0
      %vm3195 = vcmp.gt.f32.partialorder %v3163, 0.0
      %vm3196 = vcmp.gt.f32.partialorder %v3164, 0.0
      %vm3197 = vcmp.gt.f32.partialorder %v3165, 0.0
      %vm3198 = vcmp.gt.f32.partialorder %v3166, 0.0
      %vm3199 = vcmp.gt.f32.partialorder %v3167, 0.0
      %vm3200 = vcmp.gt.f32.partialorder %v3168, 0.0
      %vm3201 = vcmp.gt.f32.partialorder %v3169, 0.0
      %vm3202 = vcmp.gt.f32.partialorder %v3170, 0.0
      %vm3203 = vcmp.gt.f32.partialorder %v3171, 0.0
      %vm3204 = vcmp.gt.f32.partialorder %v3172, 0.0
      %vm3205 = vcmp.gt.f32.partialorder %v3173, 0.0
      %vm3206 = vcmp.gt.f32.partialorder %v3174, 0.0
      %vm3207 = vcmp.gt.f32.partialorder %v3175, 0.0
      %vm3208 = vcmp.gt.f32.partialorder %v3176, 0.0
      %vm3209 = vcmp.gt.f32.partialorder %v3177, 0.0
      %vm3210 = vcmp.gt.f32.partialorder %v3178, 0.0
      %vm3211 = vcmp.gt.f32.partialorder %v3179, 0.0
      %vm3212 = vcmp.gt.f32.partialorder %v3180, 0.0
      %vm3213 = vcmp.gt.f32.partialorder %v3181, 0.0
      %vm3214 = vcmp.gt.f32.partialorder %v3182, 0.0
      %vm3215 = vcmp.gt.f32.partialorder %v3183, 0.0
      %vm3216 = vcmp.gt.f32.partialorder %v3184, 0.0
      %vm3217 = vcmp.gt.f32.partialorder %v3185, 0.0
      %vm3218 = vcmp.gt.f32.partialorder %v3186, 0.0
      %vm3219 = vcmp.gt.f32.partialorder %v3187, 0.0
      %vm3220 = vcmp.gt.f32.partialorder %v3188, 0.0
      %v3221 = vmul.f32 %v3157, 0.2
      %v3222 = vmul.f32 %v3158, 0.2
      %v3223 = vmul.f32 %v3159, 0.2
      %v3224 = vmul.f32 %v3160, 0.2
      %v3225 = vmul.f32 %v3161, 0.2
      %v3226 = vmul.f32 %v3162, 0.2
      %v3227 = vmul.f32 %v3163, 0.2
      %v3228 = vmul.f32 %v3164, 0.2
      %v3229 = vmul.f32 %v3165, 0.2
      %v3230 = vmul.f32 %v3166, 0.2
      %v3231 = vmul.f32 %v3167, 0.2
      %v3232 = vmul.f32 %v3168, 0.2
      %v3233 = vmul.f32 %v3169, 0.2
      %v3234 = vmul.f32 %v3170, 0.2
      %v3235 = vmul.f32 %v3171, 0.2
      %v3236 = vmul.f32 %v3172, 0.2
      %v3237 = vmul.f32 %v3173, 0.2
      %v3238 = vmul.f32 %v3174, 0.2
      %v3239 = vmul.f32 %v3175, 0.2
      %v3240 = vmul.f32 %v3176, 0.2
      %v3241 = vmul.f32 %v3177, 0.2
      %v3242 = vmul.f32 %v3178, 0.2
      %v3243 = vmul.f32 %v3179, 0.2
      %v3244 = vmul.f32 %v3180, 0.2
      %v3245 = vmul.f32 %v3181, 0.2
      %v3246 = vmul.f32 %v3182, 0.2
      %v3247 = vmul.f32 %v3183, 0.2
      %v3248 = vmul.f32 %v3184, 0.2
      %v3249 = vmul.f32 %v3185, 0.2
      %v3250 = vmul.f32 %v3186, 0.2
      %v3251 = vmul.f32 %v3187, 0.2
      %v3252 = vmul.f32 %v3188, 0.2
      %v3253 = vsel %vm3189, %v3157, %v3221
      %v3254 = vsel %vm3190, %v3158, %v3222
      %v3255 = vsel %vm3191, %v3159, %v3223
      %v3256 = vsel %vm3192, %v3160, %v3224
      %v3257 = vsel %vm3193, %v3161, %v3225
      %v3258 = vsel %vm3194, %v3162, %v3226
      %v3259 = vsel %vm3195, %v3163, %v3227
      %v3260 = vsel %vm3196, %v3164, %v3228
      %v3261 = vsel %vm3197, %v3165, %v3229
      %v3262 = vsel %vm3198, %v3166, %v3230
      %v3263 = vsel %vm3199, %v3167, %v3231
      %v3264 = vsel %vm3200, %v3168, %v3232
      %v3265 = vsel %vm3201, %v3169, %v3233
      %v3266 = vsel %vm3202, %v3170, %v3234
      %v3267 = vsel %vm3203, %v3171, %v3235
      %v3268 = vsel %vm3204, %v3172, %v3236
      %v3269 = vsel %vm3205, %v3173, %v3237
      %v3270 = vsel %vm3206, %v3174, %v3238
      %v3271 = vsel %vm3207, %v3175, %v3239
      %v3272 = vsel %vm3208, %v3176, %v3240
      %v3273 = vsel %vm3209, %v3177, %v3241
      %v3274 = vsel %vm3210, %v3178, %v3242
      %v3275 = vsel %vm3211, %v3179, %v3243
      %v3276 = vsel %vm3212, %v3180, %v3244
      %v3277 = vsel %vm3213, %v3181, %v3245
      %v3278 = vsel %vm3214, %v3182, %v3246
      %v3279 = vsel %vm3215, %v3183, %v3247
      %v3280 = vsel %vm3216, %v3184, %v3248
      %v3281 = vsel %vm3217, %v3185, %v3249
      %v3282 = vsel %vm3218, %v3186, %v3250
      %v3283 = vsel %vm3219, %v3187, %v3251
      %v3284 = vsel %vm3220, %v3188, %v3252
      %v3285 = vadd.f32 %v3253, %v298
      %v3286 = vadd.f32 %v3254, %v299
      %v3287 = vadd.f32 %v3255, %v300
      %v3288 = vadd.f32 %v3256, %v301
      %v3289 = vadd.f32 %v3257, %v302
      %v3290 = vadd.f32 %v3258, %v303
      %v3291 = vadd.f32 %v3259, %v304
      %v3292 = vadd.f32 %v3260, %v305
      %v3293 = vadd.f32 %v3261, %v306
      %v3294 = vadd.f32 %v3262, %v307
      %v3295 = vadd.f32 %v3263, %v308
      %v3296 = vadd.f32 %v3264, %v309
      %v3297 = vadd.f32 %v3265, %v310
      %v3298 = vadd.f32 %v3266, %v311
      %v3299 = vadd.f32 %v3267, %v312
      %v3300 = vadd.f32 %v3268, %v313
      %v3301 = vadd.f32 %v3269, %v314
      %v3302 = vadd.f32 %v3270, %v315
      %v3303 = vadd.f32 %v3271, %v316
      %v3304 = vadd.f32 %v3272, %v317
      %v3305 = vadd.f32 %v3273, %v318
      %v3306 = vadd.f32 %v3274, %v319
      %v3307 = vadd.f32 %v3275, %v320
      %v3308 = vadd.f32 %v3276, %v321
      %v3309 = vadd.f32 %v3277, %v322
      %v3310 = vadd.f32 %v3278, %v323
      %v3311 = vadd.f32 %v3279, %v324
      %v3312 = vadd.f32 %v3280, %v325
      %v3313 = vadd.f32 %v3281, %v326
      %v3314 = vadd.f32 %v3282, %v327
      %v3315 = vadd.f32 %v3283, %v328
      %v3316 = vadd.f32 %v3284, %v329
      %v3317 = vmax.f32 %v3285, %v3286
      %3318 = vmax.xlane.f32.xlu0 %v3317
      %v3319 = vpop.xlane.xlu0 %3318
      %v3320 = vmax.f32 %v3287, %v3288
      %3321 = vmax.xlane.f32.xlu0 %v3320
      %v3322 = vpop.xlane.xlu0 %3321
      %v3323 = vmax.f32 %v3289, %v3290
      %3324 = vmax.xlane.f32.xlu0 %v3323
      %v3325 = vpop.xlane.xlu0 %3324
      %v3326 = vmax.f32 %v3291, %v3292
      %3327 = vmax.xlane.f32.xlu0 %v3326
      %v3328 = vpop.xlane.xlu0 %3327
      %v3329 = vmax.f32 %v3293, %v3294
      %3330 = vmax.xlane.f32.xlu0 %v3329
      %v3331 = vpop.xlane.xlu0 %3330
      %v3332 = vmax.f32 %v3295, %v3296
      %3333 = vmax.xlane.f32.xlu0 %v3332
      %v3334 = vpop.xlane.xlu0 %3333
      %v3335 = vmax.f32 %v3297, %v3298
      %3336 = vmax.xlane.f32.xlu0 %v3335
      %v3337 = vpop.xlane.xlu0 %3336
      %v3338 = vmax.f32 %v3299, %v3300
      %3339 = vmax.xlane.f32.xlu0 %v3338
      %v3340 = vpop.xlane.xlu0 %3339
      %v3341 = vmax.f32 %v3301, %v3302
      %3342 = vmax.xlane.f32.xlu0 %v3341
      %v3343 = vpop.xlane.xlu0 %3342
      %v3344 = vmax.f32 %v3303, %v3304
      %3345 = vmax.xlane.f32.xlu0 %v3344
      %v3346 = vpop.xlane.xlu0 %3345
      %v3347 = vmax.f32 %v3305, %v3306
      %3348 = vmax.xlane.f32.xlu0 %v3347
      %v3349 = vpop.xlane.xlu0 %3348
      %v3350 = vmax.f32 %v3307, %v3308
      %3351 = vmax.xlane.f32.xlu0 %v3350
      %v3352 = vpop.xlane.xlu0 %3351
      %v3353 = vmax.f32 %v3309, %v3310
      %3354 = vmax.xlane.f32.xlu0 %v3353
      %v3355 = vpop.xlane.xlu0 %3354
      %v3356 = vmax.f32 %v3311, %v3312
      %3357 = vmax.xlane.f32.xlu0 %v3356
      %v3358 = vpop.xlane.xlu0 %3357
      %v3359 = vmax.f32 %v3313, %v3314
      %3360 = vmax.xlane.f32.xlu0 %v3359
      %v3361 = vpop.xlane.xlu0 %3360
      %v3362 = vmax.f32 %v3315, %v3316
      %3363 = vmax.xlane.f32.xlu0 %v3362
      %v3364 = vpop.xlane.xlu0 %3363
      %v3365 = vsub.f32 %v3285, %v3319
      %v3366 = vsub.f32 %v3286, %v3319
      %v3367 = vsub.f32 %v3287, %v3322
      %v3368 = vsub.f32 %v3288, %v3322
      %v3369 = vsub.f32 %v3289, %v3325
      %v3370 = vsub.f32 %v3290, %v3325
      %v3371 = vsub.f32 %v3291, %v3328
      %v3372 = vsub.f32 %v3292, %v3328
      %v3373 = vsub.f32 %v3293, %v3331
      %v3374 = vsub.f32 %v3294, %v3331
      %v3375 = vsub.f32 %v3295, %v3334
      %v3376 = vsub.f32 %v3296, %v3334
      %v3377 = vsub.f32 %v3297, %v3337
      %v3378 = vsub.f32 %v3298, %v3337
      %v3379 = vsub.f32 %v3299, %v3340
      %v3380 = vsub.f32 %v3300, %v3340
      %v3381 = vsub.f32 %v3301, %v3343
      %v3382 = vsub.f32 %v3302, %v3343
      %v3383 = vsub.f32 %v3303, %v3346
      %v3384 = vsub.f32 %v3304, %v3346
      %v3385 = vsub.f32 %v3305, %v3349
      %v3386 = vsub.f32 %v3306, %v3349
      %v3387 = vsub.f32 %v3307, %v3352
      %v3388 = vsub.f32 %v3308, %v3352
      %v3389 = vsub.f32 %v3309, %v3355
      %v3390 = vsub.f32 %v3310, %v3355
      %v3391 = vsub.f32 %v3311, %v3358
      %v3392 = vsub.f32 %v3312, %v3358
      %v3393 = vsub.f32 %v3313, %v3361
      %v3394 = vsub.f32 %v3314, %v3361
      %v3395 = vsub.f32 %v3315, %v3364
      %v3396 = vsub.f32 %v3316, %v3364
      %v3397 = vmul.f32 %v3365, 1.442695
      %v3398 = vpow.pop %v3397
      %v3399 = vmul.f32 %v3366, 1.442695
      %v3400 = vpow.pop %v3399
      %v3401 = vmul.f32 %v3367, 1.442695
      %v3402 = vpow.pop %v3401
      %v3403 = vmul.f32 %v3368, 1.442695
      %v3404 = vpow.pop %v3403
      %v3405 = vmul.f32 %v3369, 1.442695
      %v3406 = vpow.pop %v3405
      %v3407 = vmul.f32 %v3370, 1.442695
      %v3408 = vpow.pop %v3407
      %v3409 = vmul.f32 %v3371, 1.442695
      %v3410 = vpow.pop %v3409
      %v3411 = vmul.f32 %v3372, 1.442695
      %v3412 = vpow.pop %v3411
      %v3413 = vmul.f32 %v3373, 1.442695
      %v3414 = vpow.pop %v3413
      %v3415 = vmul.f32 %v3374, 1.442695
      %v3416 = vpow.pop %v3415
      %v3417 = vmul.f32 %v3375, 1.442695
      %v3418 = vpow.pop %v3417
      %v3419 = vmul.f32 %v3376, 1.442695
      %v3420 = vpow.pop %v3419
      %v3421 = vmul.f32 %v3377, 1.442695
      %v3422 = vpow.pop %v3421
      %v3423 = vmul.f32 %v3378, 1.442695
      %v3424 = vpow.pop %v3423
      %v3425 = vmul.f32 %v3379, 1.442695
      %v3426 = vpow.pop %v3425
      %v3427 = vmul.f32 %v3380, 1.442695
      %v3428 = vpow.pop %v3427
      %v3429 = vmul.f32 %v3381, 1.442695
      %v3430 = vpow.pop %v3429
      %v3431 = vmul.f32 %v3382, 1.442695
      %v3432 = vpow.pop %v3431
      %v3433 = vmul.f32 %v3383, 1.442695
      %v3434 = vpow.pop %v3433
      %v3435 = vmul.f32 %v3384, 1.442695
      %v3436 = vpow.pop %v3435
      %v3437 = vmul.f32 %v3385, 1.442695
      %v3438 = vpow.pop %v3437
      %v3439 = vmul.f32 %v3386, 1.442695
      %v3440 = vpow.pop %v3439
      %v3441 = vmul.f32 %v3387, 1.442695
      %v3442 = vpow.pop %v3441
      %v3443 = vmul.f32 %v3388, 1.442695
      %v3444 = vpow.pop %v3443
      %v3445 = vmul.f32 %v3389, 1.442695
      %v3446 = vpow.pop %v3445
      %v3447 = vmul.f32 %v3390, 1.442695
      %v3448 = vpow.pop %v3447
      %v3449 = vmul.f32 %v3391, 1.442695
      %v3450 = vpow.pop %v3449
      %v3451 = vmul.f32 %v3392, 1.442695
      %v3452 = vpow.pop %v3451
      %v3453 = vmul.f32 %v3393, 1.442695
      %v3454 = vpow.pop %v3453
      %v3455 = vmul.f32 %v3394, 1.442695
      %v3456 = vpow.pop %v3455
      %v3457 = vmul.f32 %v3395, 1.442695
      %v3458 = vpow.pop %v3457
      %v3459 = vmul.f32 %v3396, 1.442695
      %v3460 = vpow.pop %v3459
      %s3461 = scalar_lea.vmem %s1, 384
      %v3462 = vld [vmem:[%s3461] sm:$0xf]
      %v3463 = vld [vmem:[%s3461 + $0x4] sm:$0xf]
      %v3464 = vld [vmem:[%s3461 + $0x8] sm:$0xf]
      %v3465 = vld [vmem:[%s3461 + $0xc] sm:$0xf]
      %v3466 = vld [vmem:[%s3461 + $0x10] sm:$0xf]
      %v3467 = vld [vmem:[%s3461 + $0x14] sm:$0xf]
      %v3468 = vld [vmem:[%s3461 + $0x18] sm:$0xf]
      %v3469 = vld [vmem:[%s3461 + $0x1c] sm:$0xf]
      %v3470 = vld [vmem:[%s3461 + $0x20] sm:$0xf]
      %v3471 = vld [vmem:[%s3461 + $0x24] sm:$0xf]
      %v3472 = vld [vmem:[%s3461 + $0x28] sm:$0xf]
      %v3473 = vld [vmem:[%s3461 + $0x2c] sm:$0xf]
      %v3474 = vld [vmem:[%s3461 + $0x30] sm:$0xf]
      %v3475 = vld [vmem:[%s3461 + $0x34] sm:$0xf]
      %v3476 = vld [vmem:[%s3461 + $0x38] sm:$0xf]
      %v3477 = vld [vmem:[%s3461 + $0x3c] sm:$0xf]
      %v3478 = vld [vmem:[%s3461 + $0x40] sm:$0xf]
      %v3479 = vld [vmem:[%s3461 + $0x44] sm:$0xf]
      %v3480 = vld [vmem:[%s3461 + $0x48] sm:$0xf]
      %v3481 = vld [vmem:[%s3461 + $0x4c] sm:$0xf]
      %v3482 = vld [vmem:[%s3461 + $0x50] sm:$0xf]
      %v3483 = vld [vmem:[%s3461 + $0x54] sm:$0xf]
      %v3484 = vld [vmem:[%s3461 + $0x58] sm:$0xf]
      %v3485 = vld [vmem:[%s3461 + $0x5c] sm:$0xf]
      %v3486 = vld [vmem:[%s3461 + $0x60] sm:$0xf]
      %v3487 = vld [vmem:[%s3461 + $0x64] sm:$0xf]
      %v3488 = vld [vmem:[%s3461 + $0x68] sm:$0xf]
      %v3489 = vld [vmem:[%s3461 + $0x6c] sm:$0xf]
      %v3490 = vld [vmem:[%s3461 + $0x70] sm:$0xf]
      %v3491 = vld [vmem:[%s3461 + $0x74] sm:$0xf]
      %v3492 = vld [vmem:[%s3461 + $0x78] sm:$0xf]
      %v3493 = vld [vmem:[%s3461 + $0x7c] sm:$0xf]
      %v3494 = vunpack.c.l.bf16 %v3462
      %v3495 = vunpack.c.l.bf16 %v3463
      %v3496 = vunpack.c.l.bf16 %v3464
      %v3497 = vunpack.c.l.bf16 %v3465
      %v3498 = vunpack.c.l.bf16 %v3466
      %v3499 = vunpack.c.l.bf16 %v3467
      %v3500 = vunpack.c.l.bf16 %v3468
      %v3501 = vunpack.c.l.bf16 %v3469
      %v3502 = vunpack.c.l.bf16 %v3470
      %v3503 = vunpack.c.l.bf16 %v3471
      %v3504 = vunpack.c.l.bf16 %v3472
      %v3505 = vunpack.c.l.bf16 %v3473
      %v3506 = vunpack.c.l.bf16 %v3474
      %v3507 = vunpack.c.l.bf16 %v3475
      %v3508 = vunpack.c.l.bf16 %v3476
      %v3509 = vunpack.c.l.bf16 %v3477
      %v3510 = vunpack.c.l.bf16 %v3478
      %v3511 = vunpack.c.l.bf16 %v3479
      %v3512 = vunpack.c.l.bf16 %v3480
      %v3513 = vunpack.c.l.bf16 %v3481
      %v3514 = vunpack.c.l.bf16 %v3482
      %v3515 = vunpack.c.l.bf16 %v3483
      %v3516 = vunpack.c.l.bf16 %v3484
      %v3517 = vunpack.c.l.bf16 %v3485
      %v3518 = vunpack.c.l.bf16 %v3486
      %v3519 = vunpack.c.l.bf16 %v3487
      %v3520 = vunpack.c.l.bf16 %v3488
      %v3521 = vunpack.c.l.bf16 %v3489
      %v3522 = vunpack.c.l.bf16 %v3490
      %v3523 = vunpack.c.l.bf16 %v3491
      %v3524 = vunpack.c.l.bf16 %v3492
      %v3525 = vunpack.c.l.bf16 %v3493
      %3526 = vmatprep.subr.mxu0 0.0
      %3527 = vmatpush1.msra.mxu0 %v3494
      %3528 = vmatprep.subr.mxu0 0.0
      %3529 = vmatpush1.msra.mxu0 %v3495
      %3530 = vmatprep.subr.mxu0 0.0
      %3531 = vmatpush1.msra.mxu0 %v3496
      %3532 = vmatprep.subr.mxu0 0.0
      %3533 = vmatpush1.msra.mxu0 %v3497
      %3534 = vmatprep.subr.mxu0 0.0
      %3535 = vmatpush1.msra.mxu0 %v3498
      %3536 = vmatprep.subr.mxu0 0.0
      %3537 = vmatpush1.msra.mxu0 %v3499
      %3538 = vmatprep.subr.mxu0 0.0
      %3539 = vmatpush1.msra.mxu0 %v3500
      %3540 = vmatprep.subr.mxu0 0.0
      %3541 = vmatpush1.msra.mxu0 %v3501
      %3542 = vmatprep.subr.mxu0 0.0
      %3543 = vmatpush1.msra.mxu0 %v3502
      %3544 = vmatprep.subr.mxu0 0.0
      %3545 = vmatpush1.msra.mxu0 %v3503
      %3546 = vmatprep.subr.mxu0 0.0
      %3547 = vmatpush1.msra.mxu0 %v3504
      %3548 = vmatprep.subr.mxu0 0.0
      %3549 = vmatpush1.msra.mxu0 %v3505
      %3550 = vmatprep.subr.mxu0 0.0
      %3551 = vmatpush1.msra.mxu0 %v3506
      %3552 = vmatprep.subr.mxu0 0.0
      %3553 = vmatpush1.msra.mxu0 %v3507
      %3554 = vmatprep.subr.mxu0 0.0
      %3555 = vmatpush1.msra.mxu0 %v3508
      %3556 = vmatprep.subr.mxu0 0.0
      %3557 = vmatpush1.msra.mxu0 %v3509
      %3558 = vmatprep.subr.mxu0 0.0
      %3559 = vmatpush1.msra.mxu0 %v3510
      %3560 = vmatprep.subr.mxu0 0.0
      %3561 = vmatpush1.msra.mxu0 %v3511
      %3562 = vmatprep.subr.mxu0 0.0
      %3563 = vmatpush1.msra.mxu0 %v3512
      %3564 = vmatprep.subr.mxu0 0.0
      %3565 = vmatpush1.msra.mxu0 %v3513
      %3566 = vmatprep.subr.mxu0 0.0
      %3567 = vmatpush1.msra.mxu0 %v3514
      %3568 = vmatprep.subr.mxu0 0.0
      %3569 = vmatpush1.msra.mxu0 %v3515
      %3570 = vmatprep.subr.mxu0 0.0
      %3571 = vmatpush1.msra.mxu0 %v3516
      %3572 = vmatprep.subr.mxu0 0.0
      %3573 = vmatpush1.msra.mxu0 %v3517
      %3574 = vmatprep.subr.mxu0 0.0
      %3575 = vmatpush1.msra.mxu0 %v3518
      %3576 = vmatprep.subr.mxu0 0.0
      %3577 = vmatpush1.msra.mxu0 %v3519
      %3578 = vmatprep.subr.mxu0 0.0
      %3579 = vmatpush1.msra.mxu0 %v3520
      %3580 = vmatprep.subr.mxu0 0.0
      %3581 = vmatpush1.msra.mxu0 %v3521
      %3582 = vmatprep.subr.mxu0 0.0
      %3583 = vmatpush1.msra.mxu0 %v3522
      %3584 = vmatprep.subr.mxu0 0.0
      %3585 = vmatpush1.msra.mxu0 %v3523
      %3586 = vmatprep.subr.mxu0 0.0
      %3587 = vmatpush1.msra.mxu0 %v3524
      %3588 = vmatprep.subr.mxu0 0.0
      %3589 = vmatpush1.msra.mxu0 %v3525
      %3590 = vmatprep.mubr.f32.mxu0 %v3400
      %3591 = vmatmul.mubr.f32.gmra.mrb[0].mxu0 %v3398
      %v3592 = vpop.f32.mrb[0].mxu0
      %v3593 = vadd.f32 0.0, %v3592
      %v3594 = vpop.f32.mrb[0].mxu0
      %3595 = vmatprep.mubr.f32.mxu0 %v3404
      %3596 = vmatmul.mubr.f32.gmra.mrb[0].mxu0 %v3402
      %v3597 = vpop.f32.mrb[0].mxu0
      %v3598 = vadd.f32 0.0, %v3597
      %v3599 = vpop.f32.mrb[0].mxu0
      %3600 = vmatprep.mubr.f32.mxu0 %v3408
      %3601 = vmatmul.mubr.f32.gmra.mrb[0].mxu0 %v3406
      %v3602 = vpop.f32.mrb[0].mxu0
      %v3603 = vadd.f32 0.0, %v3602
      %v3604 = vpop.f32.mrb[0].mxu0
      %3605 = vmatprep.mubr.f32.mxu0 %v3412
      %3606 = vmatmul.mubr.f32.gmra.mrb[0].mxu0 %v3410
      %v3607 = vpop.f32.mrb[0].mxu0
      %v3608 = vadd.f32 0.0, %v3607
      %v3609 = vpop.f32.mrb[0].mxu0
      %3610 = vmatprep.mubr.f32.mxu0 %v3416
      %3611 = vmatmul.mubr.f32.gmra.mrb[0].mxu0 %v3414
      %v3612 = vpop.f32.mrb[0].mxu0
      %v3613 = vadd.f32 0.0, %v3612
      %v3614 = vpop.f32.mrb[0].mxu0
      %3615 = vmatprep.mubr.f32.mxu0 %v3420
      %3616 = vmatmul.mubr.f32.gmra.mrb[0].mxu0 %v3418
      %v3617 = vpop.f32.mrb[0].mxu0
      %v3618 = vadd.f32 0.0, %v3617
      %v3619 = vpop.f32.mrb[0].mxu0
      %3620 = vmatprep.mubr.f32.mxu0 %v3424
      %3621 = vmatmul.mubr.f32.gmra.mrb[0].mxu0 %v3422
      %v3622 = vpop.f32.mrb[0].mxu0
      %v3623 = vadd.f32 0.0, %v3622
      %v3624 = vpop.f32.mrb[0].mxu0
      %3625 = vmatprep.mubr.f32.mxu0 %v3428
      %3626 = vmatmul.mubr.f32.gmra.mrb[0].mxu0 %v3426
      %v3627 = vpop.f32.mrb[0].mxu0
      %v3628 = vadd.f32 0.0, %v3627
      %v3629 = vpop.f32.mrb[0].mxu0
      %3630 = vmatprep.mubr.f32.mxu0 %v3432
      %3631 = vmatmul.mubr.f32.gmra.mrb[0].mxu0 %v3430
      %v3632 = vpop.f32.mrb[0].mxu0
      %v3633 = vadd.f32 0.0, %v3632
      %v3634 = vpop.f32.mrb[0].mxu0
      %3635 = vmatprep.mubr.f32.mxu0 %v3436
      %3636 = vmatmul.mubr.f32.gmra.mrb[0].mxu0 %v3434
      %v3637 = vpop.f32.mrb[0].mxu0
      %v3638 = vadd.f32 0.0, %v3637
      %v3639 = vpop.f32.mrb[0].mxu0
      %3640 = vmatprep.mubr.f32.mxu0 %v3440
      %3641 = vmatmul.mubr.f32.gmra.mrb[0].mxu0 %v3438
      %v3642 = vpop.f32.mrb[0].mxu0
      %v3643 = vadd.f32 0.0, %v3642
      %v3644 = vpop.f32.mrb[0].mxu0
      %3645 = vmatprep.mubr.f32.mxu0 %v3444
      %3646 = vmatmul.mubr.f32.gmra.mrb[0].mxu0 %v3442
      %v3647 = vpop.f32.mrb[0].mxu0
      %v3648 = vadd.f32 0.0, %v3647
      %v3649 = vpop.f32.mrb[0].mxu0
      %3650 = vmatprep.mubr.f32.mxu0 %v3448
      %3651 = vmatmul.mubr.f32.gmra.mrb[0].mxu0 %v3446
      %v3652 = vpop.f32.mrb[0].mxu0
      %v3653 = vadd.f32 0.0, %v3652
      %v3654 = vpop.f32.mrb[0].mxu0
      %3655 = vmatprep.mubr.f32.mxu0 %v3452
      %3656 = vmatmul.mubr.f32.gmra.mrb[0].mxu0 %v3450
      %v3657 = vpop.f32.mrb[0].mxu0
      %v3658 = vadd.f32 0.0, %v3657
      %v3659 = vpop.f32.mrb[0].mxu0
      %3660 = vmatprep.mubr.f32.mxu0 %v3456
      %3661 = vmatmul.mubr.f32.gmra.mrb[0].mxu0 %v3454
      %v3662 = vpop.f32.mrb[0].mxu0
      %v3663 = vadd.f32 0.0, %v3662
      %v3664 = vpop.f32.mrb[0].mxu0
      %3665 = vmatprep.mubr.f32.mxu0 %v3460
      %3666 = vmatmul.mubr.f32.gmra.mrb[0].mxu0 %v3458
      %v3667 = vpop.f32.mrb[0].mxu0
      %v3668 = vadd.f32 0.0, %v3667
      %v3669 = vpop.f32.mrb[0].mxu0
      %3670 = vdwg.mxu0
      %v3671 = vrcp.pop %v3593
      %v3672 = vmul.f32 1.0, %v3671
      %v3673 = vrcp.pop %v3598
      %v3674 = vmul.f32 1.0, %v3673
      %v3675 = vrcp.pop %v3603
      %v3676 = vmul.f32 1.0, %v3675
      %v3677 = vrcp.pop %v3608
      %v3678 = vmul.f32 1.0, %v3677
      %v3679 = vrcp.pop %v3613
      %v3680 = vmul.f32 1.0, %v3679
      %v3681 = vrcp.pop %v3618
      %v3682 = vmul.f32 1.0, %v3681
      %v3683 = vrcp.pop %v3623
      %v3684 = vmul.f32 1.0, %v3683
      %v3685 = vrcp.pop %v3628
      %v3686 = vmul.f32 1.0, %v3685
      %v3687 = vrcp.pop %v3633
      %v3688 = vmul.f32 1.0, %v3687
      %v3689 = vrcp.pop %v3638
      %v3690 = vmul.f32 1.0, %v3689
      %v3691 = vrcp.pop %v3643
      %v3692 = vmul.f32 1.0, %v3691
      %v3693 = vrcp.pop %v3648
      %v3694 = vmul.f32 1.0, %v3693
      %v3695 = vrcp.pop %v3653
      %v3696 = vmul.f32 1.0, %v3695
      %v3697 = vrcp.pop %v3658
      %v3698 = vmul.f32 1.0, %v3697
      %v3699 = vrcp.pop %v3663
      %v3700 = vmul.f32 1.0, %v3699
      %v3701 = vrcp.pop %v3668
      %v3702 = vmul.f32 1.0, %v3701
      %3704 = vset.pattern.permute.xlu0 16
      %3705 = vperm.xlu0 %3704, %v3672
      %v3706 = vpop.permute.xlu0 %3705
      %3709 = vset.pattern.permute.xlu0 16
      %3710 = vperm.xlu0 %3709, %v3674
      %v3711 = vpop.permute.xlu0 %3710
      %3714 = vset.pattern.permute.xlu0 16
      %3715 = vperm.xlu0 %3714, %v3676
      %v3716 = vpop.permute.xlu0 %3715
      %3719 = vset.pattern.permute.xlu0 16
      %3720 = vperm.xlu0 %3719, %v3678
      %v3721 = vpop.permute.xlu0 %3720
      %3724 = vset.pattern.permute.xlu0 16
      %3725 = vperm.xlu0 %3724, %v3680
      %v3726 = vpop.permute.xlu0 %3725
      %3729 = vset.pattern.permute.xlu0 16
      %3730 = vperm.xlu0 %3729, %v3682
      %v3731 = vpop.permute.xlu0 %3730
      %3734 = vset.pattern.permute.xlu0 16
      %3735 = vperm.xlu0 %3734, %v3684
      %v3736 = vpop.permute.xlu0 %3735
      %3739 = vset.pattern.permute.xlu0 16
      %3740 = vperm.xlu0 %3739, %v3686
      %v3741 = vpop.permute.xlu0 %3740
      %3744 = vset.pattern.permute.xlu0 16
      %3745 = vperm.xlu0 %3744, %v3688
      %v3746 = vpop.permute.xlu0 %3745
      %3749 = vset.pattern.permute.xlu0 16
      %3750 = vperm.xlu0 %3749, %v3690
      %v3751 = vpop.permute.xlu0 %3750
      %3754 = vset.pattern.permute.xlu0 16
      %3755 = vperm.xlu0 %3754, %v3692
      %v3756 = vpop.permute.xlu0 %3755
      %3759 = vset.pattern.permute.xlu0 16
      %3760 = vperm.xlu0 %3759, %v3694
      %v3761 = vpop.permute.xlu0 %3760
      %3764 = vset.pattern.permute.xlu0 16
      %3765 = vperm.xlu0 %3764, %v3696
      %v3766 = vpop.permute.xlu0 %3765
      %3769 = vset.pattern.permute.xlu0 16
      %3770 = vperm.xlu0 %3769, %v3698
      %v3771 = vpop.permute.xlu0 %3770
      %3774 = vset.pattern.permute.xlu0 16
      %3775 = vperm.xlu0 %3774, %v3700
      %v3776 = vpop.permute.xlu0 %3775
      %3779 = vset.pattern.permute.xlu0 16
      %3780 = vperm.xlu0 %3779, %v3702
      %v3781 = vpop.permute.xlu0 %3780
      %v3783 = vmul.f32 %v3593, %v3706
      %v3784 = vmul.f32 %v3598, %v3711
      %v3785 = vmul.f32 %v3603, %v3716
      %v3786 = vmul.f32 %v3608, %v3721
      %v3787 = vmul.f32 %v3613, %v3726
      %v3788 = vmul.f32 %v3618, %v3731
      %v3789 = vmul.f32 %v3623, %v3736
      %v3790 = vmul.f32 %v3628, %v3741
      %v3791 = vmul.f32 %v3633, %v3746
      %v3792 = vmul.f32 %v3638, %v3751
      %v3793 = vmul.f32 %v3643, %v3756
      %v3794 = vmul.f32 %v3648, %v3761
      %v3795 = vmul.f32 %v3653, %v3766
      %v3796 = vmul.f32 %v3658, %v3771
      %v3797 = vmul.f32 %v3663, %v3776
      %v3798 = vmul.f32 %v3668, %v3781
      %vm3799 = vcmp.gt.f32.partialorder %v3783, 0.0
      %vm3800 = vcmp.gt.f32.partialorder %v3784, 0.0
      %vm3801 = vcmp.gt.f32.partialorder %v3785, 0.0
      %vm3802 = vcmp.gt.f32.partialorder %v3786, 0.0
      %vm3803 = vcmp.gt.f32.partialorder %v3787, 0.0
      %vm3804 = vcmp.gt.f32.partialorder %v3788, 0.0
      %vm3805 = vcmp.gt.f32.partialorder %v3789, 0.0
      %vm3806 = vcmp.gt.f32.partialorder %v3790, 0.0
      %vm3807 = vcmp.gt.f32.partialorder %v3791, 0.0
      %vm3808 = vcmp.gt.f32.partialorder %v3792, 0.0
      %vm3809 = vcmp.gt.f32.partialorder %v3793, 0.0
      %vm3810 = vcmp.gt.f32.partialorder %v3794, 0.0
      %vm3811 = vcmp.gt.f32.partialorder %v3795, 0.0
      %vm3812 = vcmp.gt.f32.partialorder %v3796, 0.0
      %vm3813 = vcmp.gt.f32.partialorder %v3797, 0.0
      %vm3814 = vcmp.gt.f32.partialorder %v3798, 0.0
      %v3815 = vmin.f32 %v3783, 0.0
      %v3816 = vmin.f32 %v3784, 0.0
      %v3817 = vmin.f32 %v3785, 0.0
      %v3818 = vmin.f32 %v3786, 0.0
      %v3819 = vmin.f32 %v3787, 0.0
      %v3820 = vmin.f32 %v3788, 0.0
      %v3821 = vmin.f32 %v3789, 0.0
      %v3822 = vmin.f32 %v3790, 0.0
      %v3823 = vmin.f32 %v3791, 0.0
      %v3824 = vmin.f32 %v3792, 0.0
      %v3825 = vmin.f32 %v3793, 0.0
      %v3826 = vmin.f32 %v3794, 0.0
      %v3827 = vmin.f32 %v3795, 0.0
      %v3828 = vmin.f32 %v3796, 0.0
      %v3829 = vmin.f32 %v3797, 0.0
      %v3830 = vmin.f32 %v3798, 0.0
      %v3831 = vmul.f32 %v3815, 1.442695
      %v3832 = vpow.pop %v3831
      %v3833 = vmul.f32 %v3816, 1.442695
      %v3834 = vpow.pop %v3833
      %v3835 = vmul.f32 %v3817, 1.442695
      %v3836 = vpow.pop %v3835
      %v3837 = vmul.f32 %v3818, 1.442695
      %v3838 = vpow.pop %v3837
      %v3839 = vmul.f32 %v3819, 1.442695
      %v3840 = vpow.pop %v3839
      %v3841 = vmul.f32 %v3820, 1.442695
      %v3842 = vpow.pop %v3841
      %v3843 = vmul.f32 %v3821, 1.442695
      %v3844 = vpow.pop %v3843
      %v3845 = vmul.f32 %v3822, 1.442695
      %v3846 = vpow.pop %v3845
      %v3847 = vmul.f32 %v3823, 1.442695
      %v3848 = vpow.pop %v3847
      %v3849 = vmul.f32 %v3824, 1.442695
      %v3850 = vpow.pop %v3849
      %v3851 = vmul.f32 %v3825, 1.442695
      %v3852 = vpow.pop %v3851
      %v3853 = vmul.f32 %v3826, 1.442695
      %v3854 = vpow.pop %v3853
      %v3855 = vmul.f32 %v3827, 1.442695
      %v3856 = vpow.pop %v3855
      %v3857 = vmul.f32 %v3828, 1.442695
      %v3858 = vpow.pop %v3857
      %v3859 = vmul.f32 %v3829, 1.442695
      %v3860 = vpow.pop %v3859
      %v3861 = vmul.f32 %v3830, 1.442695
      %v3862 = vpow.pop %v3861
      %v3863 = vsub.f32 %v3832, 1.0
      %v3864 = vsub.f32 %v3834, 1.0
      %v3865 = vsub.f32 %v3836, 1.0
      %v3866 = vsub.f32 %v3838, 1.0
      %v3867 = vsub.f32 %v3840, 1.0
      %v3868 = vsub.f32 %v3842, 1.0
      %v3869 = vsub.f32 %v3844, 1.0
      %v3870 = vsub.f32 %v3846, 1.0
      %v3871 = vsub.f32 %v3848, 1.0
      %v3872 = vsub.f32 %v3850, 1.0
      %v3873 = vsub.f32 %v3852, 1.0
      %v3874 = vsub.f32 %v3854, 1.0
      %v3875 = vsub.f32 %v3856, 1.0
      %v3876 = vsub.f32 %v3858, 1.0
      %v3877 = vsub.f32 %v3860, 1.0
      %v3878 = vsub.f32 %v3862, 1.0
      %v3879 = vsel %vm3799, %v3783, %v3863
      %v3880 = vsel %vm3800, %v3784, %v3864
      %v3881 = vsel %vm3801, %v3785, %v3865
      %v3882 = vsel %vm3802, %v3786, %v3866
      %v3883 = vsel %vm3803, %v3787, %v3867
      %v3884 = vsel %vm3804, %v3788, %v3868
      %v3885 = vsel %vm3805, %v3789, %v3869
      %v3886 = vsel %vm3806, %v3790, %v3870
      %v3887 = vsel %vm3807, %v3791, %v3871
      %v3888 = vsel %vm3808, %v3792, %v3872
      %v3889 = vsel %vm3809, %v3793, %v3873
      %v3890 = vsel %vm3810, %v3794, %v3874
      %v3891 = vsel %vm3811, %v3795, %v3875
      %v3892 = vsel %vm3812, %v3796, %v3876
      %v3893 = vsel %vm3813, %v3797, %v3877
      %v3894 = vsel %vm3814, %v3798, %v3878
      %3911 = vrot.lane.b32.xlu0 %v3879, 48
      %v3912 = vpop.permute.xlu0 %3911
      %3913 = vrot.lane.b32.xlu0 %v3880, 48
      %v3914 = vpop.permute.xlu0 %3913
      %3915 = vrot.lane.b32.xlu0 %v3881, 48
      %v3916 = vpop.permute.xlu0 %3915
      %3917 = vrot.lane.b32.xlu0 %v3882, 48
      %v3918 = vpop.permute.xlu0 %3917
      %3919 = vrot.lane.b32.xlu0 %v3883, 48
      %v3920 = vpop.permute.xlu0 %3919
      %3921 = vrot.lane.b32.xlu0 %v3884, 48
      %v3922 = vpop.permute.xlu0 %3921
      %3923 = vrot.lane.b32.xlu0 %v3885, 48
      %v3924 = vpop.permute.xlu0 %3923
      %3925 = vrot.lane.b32.xlu0 %v3886, 48
      %v3926 = vpop.permute.xlu0 %3925
      %3927 = vrot.lane.b32.xlu0 %v3887, 48
      %v3928 = vpop.permute.xlu0 %3927
      %3929 = vrot.lane.b32.xlu0 %v3888, 48
      %v3930 = vpop.permute.xlu0 %3929
      %3931 = vrot.lane.b32.xlu0 %v3889, 48
      %v3932 = vpop.permute.xlu0 %3931
      %3933 = vrot.lane.b32.xlu0 %v3890, 48
      %v3934 = vpop.permute.xlu0 %3933
      %3935 = vrot.lane.b32.xlu0 %v3891, 48
      %v3936 = vpop.permute.xlu0 %3935
      %3937 = vrot.lane.b32.xlu0 %v3892, 48
      %v3938 = vpop.permute.xlu0 %3937
      %3939 = vrot.lane.b32.xlu0 %v3893, 48
      %v3940 = vpop.permute.xlu0 %3939
      %3941 = vrot.lane.b32.xlu0 %v3894, 48
      %v3942 = vpop.permute.xlu0 %3941
      %vm3959 = vcmask 523648
      %3960 = vst.msk [vmem:[%s224] sm:$0xff] %vm3959, %v3912
      %3961 = vst.msk [vmem:[%s224 + $0x8] sm:$0xff] %vm3959, %v3914
      %3962 = vst.msk [vmem:[%s224 + $0x10] sm:$0xff] %vm3959, %v3916
      %3963 = vst.msk [vmem:[%s224 + $0x18] sm:$0xff] %vm3959, %v3918
      %3964 = vst.msk [vmem:[%s224 + $0x20] sm:$0xff] %vm3959, %v3920
      %3965 = vst.msk [vmem:[%s224 + $0x28] sm:$0xff] %vm3959, %v3922
      %3966 = vst.msk [vmem:[%s224 + $0x30] sm:$0xff] %vm3959, %v3924
      %3967 = vst.msk [vmem:[%s224 + $0x38] sm:$0xff] %vm3959, %v3926
      %3968 = vst.msk [vmem:[%s224 + $0x40] sm:$0xff] %vm3959, %v3928
      %3969 = vst.msk [vmem:[%s224 + $0x48] sm:$0xff] %vm3959, %v3930
      %3970 = vst.msk [vmem:[%s224 + $0x50] sm:$0xff] %vm3959, %v3932
      %3971 = vst.msk [vmem:[%s224 + $0x58] sm:$0xff] %vm3959, %v3934
      %3972 = vst.msk [vmem:[%s224 + $0x60] sm:$0xff] %vm3959, %v3936
      %3973 = vst.msk [vmem:[%s224 + $0x68] sm:$0xff] %vm3959, %v3938
      %3974 = vst.msk [vmem:[%s224 + $0x70] sm:$0xff] %vm3959, %v3940
      %3975 = vst.msk [vmem:[%s224 + $0x78] sm:$0xff] %vm3959, %v3942
      %s3976 = smul.u32 16, %s15
      %p3977 = scmp.lt.s32.totalorder %s3976, 31
      %s3978 = scalar_select %p3977, %s3976, 31
      %s3979 = smul.addr %s3978, 8
      %s3980 = scalar_lea.vmem %s4, %s3979
      // Predicated region
      $region37: #{gat_forward.5} parent=35 // pred_check
        %p3981 = pneg %p127
      $region38: #{gat_forward.5} parent=35 // pred_check_branch
        %3983 = sbr.rel (%p3981) target = $region40
      $region39: #{gat_forward.5} parent=35 // pred_region
        %s3984 = smul.u32 16, %s15
      $region40: #{gat_forward.5} parent=35 // pred_fallthru
        _
    $region36: #{gat_forward.5} parent=5 // pred_fallthru
      _
    %p3985 = scmp.le.s32.totalorder 2, %s10
    // Predicated region
    $region41: #{gat_forward.5} parent=5 // pred_check
      %p3986 = pneg %p3985
    $region42: #{gat_forward.5} parent=5 // pred_check_branch
      %3988 = sbr.rel (%p3986) target = $region44
    $region43: #{gat_forward.5} parent=5 // pred_region
      %s3989 = ssub.s32 %s10, 2
      // Predicated region
      $region45: #{gat_forward.5} parent=43 // pred_check
        %p3990 = pneg %p133
      $region46: #{gat_forward.5} parent=43 // pred_check_branch
        %3992 = sbr.rel (%p3990) target = $region48
      $region47: #{gat_forward.5} parent=43 // pred_region
        %s3993 = smul.u32 16, %s16
        %p3994 = scmp.lt.s32.totalorder %s3993, 31
        %s3995 = scalar_select %p3994, %s3993, 31
        %s3996 = smul.addr %s3995, 8
        %s3997 = scalar_lea.vmem %s4, %s3996
      $region48: #{gat_forward.5} parent=43 // pred_fallthru
        _
    $region44: #{gat_forward.5} parent=5 // pred_fallthru
      _
  $region6: #{gat_forward.5} parent=0 // loop_footer
    %s14 = sadd.s32 1, %s10
  $region7: #{gat_forward.5} parent=0 // loop_footer_branch
    %9 = sbr.rel target = $region3
  $region8: #{gat_forward.5} parent=0 // loop_exit
    _

</llo_original>
